<compile_context>
chip_gen: v6e
topology: v6e:2x2x1
jax: 0.10.0
libtpu: 0.0.40
codegen_flags: <defaults>
</compile_context>

<pallas_src>
import jax
import jax.numpy as jnp
from jax import lax
from jax.experimental import pallas as pl
from jax.experimental.pallas import tpu as pltpu

GROUPS = 32      # normalization(channels) == GroupNorm32(32, channels)
GN_EPS = 1e-5    # PyTorch GroupNorm default eps
LN_EPS = 1e-6    # LayerNorm2d (channel-wise LayerNorm per pixel), ConvNeXt-style eps
# TODO(synk): confirm exact eps used by ddbm_fixed LayerNorm2d (1e-6 assumed).


def _conv3x3(h, pad_ref, taps_ref, H, W, Cin):
    """3x3 SAME conv: h (HW, Cin) f32 -> (HW, Cout) f32.

    The kx taps are fused into one K=3*Cin contraction per ky (3 MXU dots,
    bf16 operands, f32 accumulation).  The im2col slab lives in a bf16 scratch
    padded only along H so every scratch store/load is a full-width row slab
    whose offset is in the major dim (layout-trivial, no masked interior write).
    """
    HW = H * W
    hb = h.astype(jnp.bfloat16).reshape(H, W, Cin)
    zcol = jnp.zeros((H, 1, Cin), jnp.bfloat16)
    left = jnp.concatenate([zcol, hb[:, :W - 1, :]], axis=1)      # x-1 samples
    right = jnp.concatenate([hb[:, 1:, :], zcol], axis=1)         # x+1 samples
    trip = jnp.concatenate([left, hb, right], axis=-1)            # (H, W, 3*Cin)
    zrow = jnp.zeros((1, W, 3 * Cin), jnp.bfloat16)
    # One aligned store writes the whole padded slab (zero halo rows included),
    # so no persistent-scratch zero-init is needed (megacore-safe).
    pad_ref[...] = jnp.concatenate([zrow, trip, zrow], axis=0)    # (H+2, W, 3*Cin)

    acc = None
    for ky in range(3):                                           # 3 dots, K = 3*Cin
        win = pad_ref[ky:ky + H, :, :].reshape(HW, 3 * Cin)       # bf16 row slab
        d = jnp.dot(win, taps_ref[ky], preferred_element_type=jnp.float32)
        acc = d if acc is None else acc + d                       # chained sum of dots
    return acc


def _resblock_kernel(x_ref, emb_ref, m_ref, mt_ref,
                     gnw_ref, gnb_ref, w1_ref, b1_ref,
                     ew_ref, eb_ref, lnw_ref, lnb_ref,
                     w2_ref, b2_ref,
                     o_ref,
                     pad1, pad2):
    _, H, W, C = x_ref.shape
    Cout = o_ref.shape[-1]
    HW = H * W

    x = x_ref[...].reshape(HW, C)                                  # (HW, C) f32

    # ---- GroupNorm(32, C): stats via MXU (ones-vector matmuls) -------------
    ones_hw = jnp.ones((1, HW), jnp.float32)
    s1 = jnp.dot(ones_hw, x, preferred_element_type=jnp.float32)        # (1, C)
    s2 = jnp.dot(ones_hw, x * x, preferred_element_type=jnp.float32)    # (1, C)
    gs1 = jnp.dot(s1, m_ref[...], preferred_element_type=jnp.float32)   # (1, G)
    gs2 = jnp.dot(s2, m_ref[...], preferred_element_type=jnp.float32)   # (1, G)
    cnt = float(HW * (C // GROUPS))
    mean_g = gs1 / cnt
    var_g = gs2 / cnt - mean_g * mean_g
    inv_g = lax.rsqrt(var_g + GN_EPS)
    mean_c = jnp.dot(mean_g, mt_ref[...], preferred_element_type=jnp.float32)  # (1, C)
    inv_c = jnp.dot(inv_g, mt_ref[...], preferred_element_type=jnp.float32)    # (1, C)
    # fold affine: 2 VPU ops per element instead of 4
    a_c = inv_c * gnw_ref[...]
    b_c = gnb_ref[...] - mean_c * a_c
    h = x * a_c + b_c
    h = h * jax.nn.sigmoid(h)                                      # SiLU (EUP)

    # ---- conv1: 3x3, padding=1, C -> Cout (bf16 MXU, K = 3*C) --------------
    h1 = _conv3x3(h, pad1, w1_ref, H, W, C) + b1_ref[...]          # (HW, Cout)

    # ---- emb_layers: SiLU -> Linear, broadcast over spatial ----------------
    e = emb_ref[0]                                                 # (1, E)
    e = e * jax.nn.sigmoid(e)
    e = jnp.dot(e, ew_ref[...], preferred_element_type=jnp.float32) + eb_ref[...]
    h1 = h1 + e                                                    # broadcast over HW

    # ---- LayerNorm2d: normalize over channels per pixel (stats on MXU) -----
    ones_c = jnp.ones((Cout, 1), jnp.float32)
    mu = jnp.dot(h1, ones_c, preferred_element_type=jnp.float32) * (1.0 / Cout)       # (HW,1)
    ms = jnp.dot(h1 * h1, ones_c, preferred_element_type=jnp.float32) * (1.0 / Cout)  # (HW,1)
    inv = lax.rsqrt(ms - mu * mu + LN_EPS)                         # (HW, 1)
    hn = (h1 * inv - mu * inv) * lnw_ref[...] + lnb_ref[...]
    hn = hn * jax.nn.sigmoid(hn)                                   # SiLU; Dropout(p=0) = identity

    # ---- conv2: 3x3, padding=1, Cout -> Cout (bf16 MXU, K = 3*Cout) --------
    h2 = _conv3x3(hn, pad2, w2_ref, H, W, Cout) + b2_ref[...]

    # ---- skip connection (identity: out_channels == channels) --------------
    o_ref[...] = (x + h2).reshape(1, H, W, Cout)


def resblock_forward(x_nchw, emb, p):
    N, C, H, W = x_nchw.shape
    Cout = p["b1"].shape[-1]
    E = emb.shape[-1]
    assert Cout == C, "identity skip path requires out_channels == channels"

    x_nhwc = jnp.transpose(x_nchw, (0, 2, 3, 1))        # NCHW -> NHWC
    emb3 = emb.reshape(N, 1, E)

    def full(shape):                                    # whole-array (untiled) spec
        return pl.BlockSpec(shape, lambda n: tuple(0 for _ in shape))

    in_specs = [
        pl.BlockSpec((1, H, W, C), lambda n: (n, 0, 0, 0)),   # x
        pl.BlockSpec((1, 1, E), lambda n: (n, 0, 0)),         # emb
        full((C, GROUPS)), full((GROUPS, C)),                 # group membership M, M^T
        full((1, C)), full((1, C)),                           # GroupNorm gamma, beta
        full((3, 3 * C, Cout)), full((1, Cout)),              # conv1 fused taps (bf16), bias
        full((E, Cout)), full((1, Cout)),                     # emb linear W^T, bias
        full((1, Cout)), full((1, Cout)),                     # LayerNorm2d gamma, beta
        full((3, 3 * Cout, Cout)), full((1, Cout)),           # conv2 fused taps (bf16), bias
    ]

    out_nhwc = pl.pallas_call(
        _resblock_kernel,
        out_shape=jax.ShapeDtypeStruct((N, H, W, Cout), jnp.float32),
        grid_spec=pltpu.PrefetchScalarGridSpec(
            num_scalar_prefetch=0,
            grid=(N,),
            in_specs=in_specs,
            out_specs=pl.BlockSpec((1, H, W, Cout), lambda n: (n, 0, 0, 0)),
            scratch_shapes=[
                pltpu.VMEM((H + 2, W, 3 * C), jnp.bfloat16),     # conv1 im2col slab
                pltpu.VMEM((H + 2, W, 3 * Cout), jnp.bfloat16),  # conv2 im2col slab
            ]),
        compiler_params=pltpu.CompilerParams(dimension_semantics=("parallel",)),
    )(x_nhwc, emb3, p["M"], p["Mt"], p["gn_w"], p["gn_b"],
      p["w1_taps"], p["b1"], p["We"], p["be"],
      p["ln_w"], p["ln_b"], p["w2_taps"], p["b2"])

    return jnp.transpose(out_nhwc, (0, 3, 1, 2))        # NHWC -> NCHW


# ---------------------------- pure-JAX reference -----------------------------
def ref_forward(x, emb, p):
    N, C, H, W = x.shape
    Cg = C // GROUPS
    xg = x.reshape(N, GROUPS, Cg, H, W)
    mean = xg.mean(axis=(2, 3, 4), keepdims=True)
    var = ((xg - mean) ** 2).mean(axis=(2, 3, 4), keepdims=True)
    h = ((xg - mean) / jnp.sqrt(var + GN_EPS)).reshape(N, C, H, W)
    h = h * p["gn_w"].reshape(1, C, 1, 1) + p["gn_b"].reshape(1, C, 1, 1)
    h = h * jax.nn.sigmoid(h)
    h = lax.conv_general_dilated(h, p["w1_oihw"], (1, 1), "SAME",
                                 dimension_numbers=("NCHW", "OIHW", "NCHW"))
    h = h + p["b1"].reshape(1, -1, 1, 1)
    e = emb * jax.nn.sigmoid(emb)
    e = e @ p["We"] + p["be"]
    h = h + e.reshape(N, -1, 1, 1)
    mu = h.mean(axis=1, keepdims=True)
    var = ((h - mu) ** 2).mean(axis=1, keepdims=True)
    hn = (h - mu) / jnp.sqrt(var + LN_EPS)
    hn = hn * p["ln_w"].reshape(1, -1, 1, 1) + p["ln_b"].reshape(1, -1, 1, 1)
    hn = hn * jax.nn.sigmoid(hn)
    h2 = lax.conv_general_dilated(hn, p["w2_oihw"], (1, 1), "SAME",
                                  dimension_numbers=("NCHW", "OIHW", "NCHW"))
    h2 = h2 + p["b2"].reshape(1, -1, 1, 1)
    return x + h2


if __name__ == "__main__":
    N, C, H, W = 2, 64, 16, 16          # channels must be divisible by 32 (GroupNorm32)
    E = 32                              # emb_channels
    Cout = C                            # out_channels == channels -> identity skip

    key = jax.random.PRNGKey(0)
    keys = jax.random.split(key, 12)
    x = jax.random.normal(keys[0], (N, C, H, W), jnp.float32)
    emb = jax.random.normal(keys[1], (N, E), jnp.float32)

    # Deterministic parameter init (module __init__ shapes).
    # NOTE: the reference zero-inits the final conv via zero_module(); we use
    # small random weights so the kernel's second conv path is exercised.
    gn_w = 1.0 + 0.05 * jax.random.normal(keys[2], (1, C), jnp.float32)
    gn_b = 0.05 * jax.random.normal(keys[3], (1, C), jnp.float32)
    w1_oihw = 0.05 * jax.random.normal(keys[4], (Cout, C, 3, 3), jnp.float32)
    b1 = 0.05 * jax.random.normal(keys[5], (1, Cout), jnp.float32)
    We_t = 0.05 * jax.random.normal(keys[6], (Cout, E), jnp.float32)   # torch linear weight
    be = 0.05 * jax.random.normal(keys[7], (1, Cout), jnp.float32)
    ln_w = 1.0 + 0.05 * jax.random.normal(keys[8], (1, Cout), jnp.float32)
    ln_b = 0.05 * jax.random.normal(keys[9], (1, Cout), jnp.float32)
    w2_oihw = 0.05 * jax.random.normal(keys[10], (Cout, Cout, 3, 3), jnp.float32)
    b2 = 0.05 * jax.random.normal(keys[11], (1, Cout), jnp.float32)

    Cg = C // GROUPS
    M = (jnp.arange(C)[:, None] // Cg == jnp.arange(GROUPS)[None, :]).astype(jnp.float32)

    # Conv taps packed for the in-kernel fused-K matmuls:
    #   (ky, kx, Cin, Cout) -> (3, 3*Cin, Cout), K index = kx*Cin + cin, in bf16.
    w1_taps = jnp.transpose(w1_oihw, (2, 3, 1, 0)).reshape(3, 3 * C, Cout).astype(jnp.bfloat16)
    w2_taps = jnp.transpose(w2_oihw, (2, 3, 1, 0)).reshape(3, 3 * Cout, Cout).astype(jnp.bfloat16)

    params = dict(
        gn_w=gn_w, gn_b=gn_b,
        w1_oihw=w1_oihw, b1=b1,
        We=We_t.T, be=be,
        ln_w=ln_w, ln_b=ln_b,
        w2_oihw=w2_oihw, b2=b2,
        M=M, Mt=M.T,
        w1_taps=w1_taps, w2_taps=w2_taps,
    )

    out = jax.block_until_ready(resblock_forward(x, emb, params))
    ref = jax.block_until_ready(ref_forward(x, emb, params))

    assert out.shape == (N, Cout, H, W) and out.dtype == jnp.float32
    # Tolerance accounts for bf16 MXU matmuls in the kernel vs f32 convs in the
    # pure-JAX reference (f32 accumulation in both).
    assert jnp.allclose(out, ref, rtol=1e-2, atol=2e-2), \
        f"max abs err {float(jnp.max(jnp.abs(out - ref)))}"
    print("KERNEL_OK")
</pallas_src>

<mosaic_0001>
module attributes {stable_mosaic.version = 11 : i64} {
  func.func @_resblock_kernel(%arg0: i32, %arg1: memref<1x16x16x64xf32, #tpu.memory_space<vmem>>, %arg2: memref<1x1x32xf32, #tpu.memory_space<vmem>>, %arg3: memref<64x32xf32, #tpu.memory_space<vmem>>, %arg4: memref<32x64xf32, #tpu.memory_space<vmem>>, %arg5: memref<1x64xf32, #tpu.memory_space<vmem>>, %arg6: memref<1x64xf32, #tpu.memory_space<vmem>>, %arg7: memref<3x192x64xbf16, #tpu.memory_space<vmem>>, %arg8: memref<1x64xf32, #tpu.memory_space<vmem>>, %arg9: memref<32x64xf32, #tpu.memory_space<vmem>>, %arg10: memref<1x64xf32, #tpu.memory_space<vmem>>, %arg11: memref<1x64xf32, #tpu.memory_space<vmem>>, %arg12: memref<1x64xf32, #tpu.memory_space<vmem>>, %arg13: memref<3x192x64xbf16, #tpu.memory_space<vmem>>, %arg14: memref<1x64xf32, #tpu.memory_space<vmem>>, %arg15: memref<1x16x16x64xf32, #tpu.memory_space<vmem>>, %arg16: memref<18x16x192xbf16, #tpu.memory_space<vmem>>, %arg17: memref<18x16x192xbf16, #tpu.memory_space<vmem>>) attributes {dimension_semantics = [#tpu.dimension_semantics<parallel>], iteration_bounds = array<i64: 2>, scalar_prefetch = 0 : i64, scratch_operands = 2 : i64, tpu.core_type = #tpu.core_type<tc>, window_params = [{transform_indices = @transform_0, window_bounds = array<i64: 1, 16, 16, 64>}, {transform_indices = @transform_1, window_bounds = array<i64: 1, 1, 32>}, {pipeline_mode = #tpu.pipeline_mode<synchronous>, transform_indices = @transform_2, window_bounds = array<i64: 64, 32>}, {pipeline_mode = #tpu.pipeline_mode<synchronous>, transform_indices = @transform_3, window_bounds = array<i64: 32, 64>}, {pipeline_mode = #tpu.pipeline_mode<synchronous>, transform_indices = @transform_4, window_bounds = array<i64: 1, 64>}, {pipeline_mode = #tpu.pipeline_mode<synchronous>, transform_indices = @transform_5, window_bounds = array<i64: 1, 64>}, {pipeline_mode = #tpu.pipeline_mode<synchronous>, transform_indices = @transform_6, window_bounds = array<i64: 3, 192, 64>}, {pipeline_mode = #tpu.pipeline_mode<synchronous>, transform_indices = @transform_7, window_bounds = array<i64: 1, 64>}, {pipeline_mode = #tpu.pipeline_mode<synchronous>, transform_indices = @transform_8, window_bounds = array<i64: 32, 64>}, {pipeline_mode = #tpu.pipeline_mode<synchronous>, transform_indices = @transform_9, window_bounds = array<i64: 1, 64>}, {pipeline_mode = #tpu.pipeline_mode<synchronous>, transform_indices = @transform_10, window_bounds = array<i64: 1, 64>}, {pipeline_mode = #tpu.pipeline_mode<synchronous>, transform_indices = @transform_11, window_bounds = array<i64: 1, 64>}, {pipeline_mode = #tpu.pipeline_mode<synchronous>, transform_indices = @transform_12, window_bounds = array<i64: 3, 192, 64>}, {pipeline_mode = #tpu.pipeline_mode<synchronous>, transform_indices = @transform_13, window_bounds = array<i64: 1, 64>}, {transform_indices = @transform_14, window_bounds = array<i64: 1, 16, 16, 64>}]} {
    %c0 = arith.constant 0 : index
    %c0_0 = arith.constant 0 : index
    %c0_1 = arith.constant 0 : index
    %c0_2 = arith.constant 0 : index
    %0 = vector.load %arg1[%c0, %c0_0, %c0_1, %c0_2] : memref<1x16x16x64xf32, #tpu.memory_space<vmem>>, vector<1x16x16x64xf32>
    %1 = vector.shape_cast %0 : vector<1x16x16x64xf32> to vector<256x64xf32>
    %cst = arith.constant 1.000000e+00 : f32
    %2 = vector.broadcast %cst : f32 to vector<1x256xf32>
    %cst_3 = arith.constant dense<0.000000e+00> : vector<1x64xf32>
    %3 = tpu.matmul %2, %1, %cst_3 {dimension_numbers = #tpu.dot_dimension_numbers<[1], [0], [0], [1], [0, 0, 1, 1], [], []>} : vector<1x256xf32>, vector<256x64xf32>, vector<1x64xf32> -> vector<1x64xf32>
    %4 = arith.mulf %1, %1 : vector<256x64xf32>
    %cst_4 = arith.constant dense<0.000000e+00> : vector<1x64xf32>
    %5 = tpu.matmul %2, %4, %cst_4 {dimension_numbers = #tpu.dot_dimension_numbers<[1], [0], [0], [1], [0, 0, 1, 1], [], []>} : vector<1x256xf32>, vector<256x64xf32>, vector<1x64xf32> -> vector<1x64xf32>
    %c0_5 = arith.constant 0 : index
    %c0_6 = arith.constant 0 : index
    %6 = vector.load %arg3[%c0_5, %c0_6] : memref<64x32xf32, #tpu.memory_space<vmem>>, vector<64x32xf32>
    %cst_7 = arith.constant dense<0.000000e+00> : vector<1x32xf32>
    %7 = tpu.matmul %3, %6, %cst_7 {dimension_numbers = #tpu.dot_dimension_numbers<[1], [0], [0], [1], [0, 0, 1, 1], [], []>} : vector<1x64xf32>, vector<64x32xf32>, vector<1x32xf32> -> vector<1x32xf32>
    %c0_8 = arith.constant 0 : index
    %c0_9 = arith.constant 0 : index
    %8 = vector.load %arg3[%c0_8, %c0_9] : memref<64x32xf32, #tpu.memory_space<vmem>>, vector<64x32xf32>
    %cst_10 = arith.constant dense<0.000000e+00> : vector<1x32xf32>
    %9 = tpu.matmul %5, %8, %cst_10 {dimension_numbers = #tpu.dot_dimension_numbers<[1], [0], [0], [1], [0, 0, 1, 1], [], []>} : vector<1x64xf32>, vector<64x32xf32>, vector<1x32xf32> -> vector<1x32xf32>
    %cst_11 = arith.constant 5.120000e+02 : f32
    %10 = vector.broadcast %cst_11 : f32 to vector<1x32xf32>
    %11 = arith.divf %7, %10 : vector<1x32xf32>
    %cst_12 = arith.constant 5.120000e+02 : f32
    %12 = vector.broadcast %cst_12 : f32 to vector<1x32xf32>
    %13 = arith.divf %9, %12 : vector<1x32xf32>
    %14 = arith.mulf %11, %11 : vector<1x32xf32>
    %15 = arith.subf %13, %14 : vector<1x32xf32>
    %cst_13 = arith.constant 9.99999974E-6 : f32
    %16 = vector.broadcast %cst_13 : f32 to vector<1x32xf32>
    %17 = arith.addf %15, %16 : vector<1x32xf32>
    %18 = math.rsqrt %17 : vector<1x32xf32>
    %c0_14 = arith.constant 0 : index
    %c0_15 = arith.constant 0 : index
    %19 = vector.load %arg4[%c0_14, %c0_15] : memref<32x64xf32, #tpu.memory_space<vmem>>, vector<32x64xf32>
    %cst_16 = arith.constant dense<0.000000e+00> : vector<1x64xf32>
    %20 = tpu.matmul %11, %19, %cst_16 {dimension_numbers = #tpu.dot_dimension_numbers<[1], [0], [0], [1], [0, 0, 1, 1], [], []>} : vector<1x32xf32>, vector<32x64xf32>, vector<1x64xf32> -> vector<1x64xf32>
    %c0_17 = arith.constant 0 : index
    %c0_18 = arith.constant 0 : index
    %21 = vector.load %arg4[%c0_17, %c0_18] : memref<32x64xf32, #tpu.memory_space<vmem>>, vector<32x64xf32>
    %cst_19 = arith.constant dense<0.000000e+00> : vector<1x64xf32>
    %22 = tpu.matmul %18, %21, %cst_19 {dimension_numbers = #tpu.dot_dimension_numbers<[1], [0], [0], [1], [0, 0, 1, 1], [], []>} : vector<1x32xf32>, vector<32x64xf32>, vector<1x64xf32> -> vector<1x64xf32>
    %c0_20 = arith.constant 0 : index
    %c0_21 = arith.constant 0 : index
    %23 = vector.load %arg5[%c0_20, %c0_21] : memref<1x64xf32, #tpu.memory_space<vmem>>, vector<1x64xf32>
    %24 = arith.mulf %22, %23 : vector<1x64xf32>
    %c0_22 = arith.constant 0 : index
    %c0_23 = arith.constant 0 : index
    %25 = vector.load %arg6[%c0_22, %c0_23] : memref<1x64xf32, #tpu.memory_space<vmem>>, vector<1x64xf32>
    %26 = arith.mulf %20, %24 : vector<1x64xf32>
    %27 = arith.subf %25, %26 : vector<1x64xf32>
    %28 = vector.broadcast %24 : vector<1x64xf32> to vector<256x64xf32>
    %29 = arith.mulf %1, %28 : vector<256x64xf32>
    %30 = vector.broadcast %27 : vector<1x64xf32> to vector<256x64xf32>
    %31 = arith.addf %29, %30 : vector<256x64xf32>
    %32 = arith.negf %31 : vector<256x64xf32>
    %33 = math.exp %32 : vector<256x64xf32>
    %cst_24 = arith.constant 1.000000e+00 : f32
    %34 = vector.broadcast %cst_24 : f32 to vector<256x64xf32>
    %35 = arith.addf %34, %33 : vector<256x64xf32>
    %36 = arith.divf %34, %35 : vector<256x64xf32>
    %37 = arith.mulf %31, %36 : vector<256x64xf32>
    %38 = arith.truncf %37 : vector<256x64xf32> to vector<256x64xbf16>
    %39 = vector.shape_cast %38 : vector<256x64xbf16> to vector<16x16x64xbf16>
    %cst_25 = arith.constant 0.000000e+00 : bf16
    %40 = vector.broadcast %cst_25 : bf16 to vector<16x1x64xbf16>
    %41 = vector.extract_strided_slice %39 {offsets = [0, 0, 0], sizes = [16, 15, 64], strides = [1, 1, 1]} : vector<16x16x64xbf16> to vector<16x15x64xbf16>
    %42 = tpu.concatenate %40, %41 in 1 : vector<16x1x64xbf16>, vector<16x15x64xbf16> -> vector<16x16x64xbf16>
    %43 = vector.extract_strided_slice %39 {offsets = [0, 1, 0], sizes = [16, 15, 64], strides = [1, 1, 1]} : vector<16x16x64xbf16> to vector<16x15x64xbf16>
    %44 = tpu.concatenate %43, %40 in 1 : vector<16x15x64xbf16>, vector<16x1x64xbf16> -> vector<16x16x64xbf16>
    %45 = tpu.concatenate %42, %39, %44 in 2 : vector<16x16x64xbf16>, vector<16x16x64xbf16>, vector<16x16x64xbf16> -> vector<16x16x192xbf16>
    %cst_26 = arith.constant 0.000000e+00 : bf16
    %46 = vector.broadcast %cst_26 : bf16 to vector<1x16x192xbf16>
    %47 = tpu.concatenate %46, %45, %46 in 0 : vector<1x16x192xbf16>, vector<16x16x192xbf16>, vector<1x16x192xbf16> -> vector<18x16x192xbf16>
    %c0_27 = arith.constant 0 : index
    %c0_28 = arith.constant 0 : index
    %c0_29 = arith.constant 0 : index
    %48 = vector.load %arg16[%c0_27, %c0_28, %c0_29] : memref<18x16x192xbf16, #tpu.memory_space<vmem>>, vector<18x16x192xbf16>
    tpu.vector_store %arg16[%c0_27, %c0_28, %c0_29], %47 {strides = array<i32>} : memref<18x16x192xbf16, #tpu.memory_space<vmem>>, vector<18x16x192xbf16>,
    %c0_30 = arith.constant 0 : index
    %c0_31 = arith.constant 0 : index
    %c0_32 = arith.constant 0 : index
    %49 = vector.load %arg16[%c0_30, %c0_31, %c0_32] : memref<18x16x192xbf16, #tpu.memory_space<vmem>>, vector<16x16x192xbf16>
    %50 = vector.shape_cast %49 : vector<16x16x192xbf16> to vector<256x192xbf16>
    %c0_33 = arith.constant 0 : index
    %c0_34 = arith.constant 0 : index
    %c0_35 = arith.constant 0 : index
    %51 = vector.load %arg7[%c0_33, %c0_34, %c0_35] : memref<3x192x64xbf16, #tpu.memory_space<vmem>>, vector<1x192x64xbf16>
    %52 = vector.shape_cast %51 : vector<1x192x64xbf16> to vector<192x64xbf16>
    %cst_36 = arith.constant dense<0.000000e+00> : vector<256x64xf32>
    %53 = tpu.matmul %50, %52, %cst_36 {dimension_numbers = #tpu.dot_dimension_numbers<[1], [0], [0], [1], [0, 0, 1, 1], [], []>} : vector<256x192xbf16>, vector<192x64xbf16>, vector<256x64xf32> -> vector<256x64xf32>
    %c1 = arith.constant 1 : index
    %c0_37 = arith.constant 0 : index
    %c0_38 = arith.constant 0 : index
    %54 = vector.load %arg16[%c1, %c0_37, %c0_38] : memref<18x16x192xbf16, #tpu.memory_space<vmem>>, vector<16x16x192xbf16>
    %55 = vector.shape_cast %54 : vector<16x16x192xbf16> to vector<256x192xbf16>
    %c1_39 = arith.constant 1 : index
    %c0_40 = arith.constant 0 : index
    %c0_41 = arith.constant 0 : index
    %56 = vector.load %arg7[%c1_39, %c0_40, %c0_41] : memref<3x192x64xbf16, #tpu.memory_space<vmem>>, vector<1x192x64xbf16>
    %57 = vector.shape_cast %56 : vector<1x192x64xbf16> to vector<192x64xbf16>
    %cst_42 = arith.constant dense<0.000000e+00> : vector<256x64xf32>
    %58 = tpu.matmul %55, %57, %cst_42 {dimension_numbers = #tpu.dot_dimension_numbers<[1], [0], [0], [1], [0, 0, 1, 1], [], []>} : vector<256x192xbf16>, vector<192x64xbf16>, vector<256x64xf32> -> vector<256x64xf32>
    %59 = arith.addf %53, %58 : vector<256x64xf32>
    %c2 = arith.constant 2 : index
    %c0_43 = arith.constant 0 : index
    %c0_44 = arith.constant 0 : index
    %60 = vector.load %arg16[%c2, %c0_43, %c0_44] : memref<18x16x192xbf16, #tpu.memory_space<vmem>>, vector<16x16x192xbf16>
    %61 = vector.shape_cast %60 : vector<16x16x192xbf16> to vector<256x192xbf16>
    %c2_45 = arith.constant 2 : index
    %c0_46 = arith.constant 0 : index
    %c0_47 = arith.constant 0 : index
    %62 = vector.load %arg7[%c2_45, %c0_46, %c0_47] : memref<3x192x64xbf16, #tpu.memory_space<vmem>>, vector<1x192x64xbf16>
    %63 = vector.shape_cast %62 : vector<1x192x64xbf16> to vector<192x64xbf16>
    %cst_48 = arith.constant dense<0.000000e+00> : vector<256x64xf32>
    %64 = tpu.matmul %61, %63, %cst_48 {dimension_numbers = #tpu.dot_dimension_numbers<[1], [0], [0], [1], [0, 0, 1, 1], [], []>} : vector<256x192xbf16>, vector<192x64xbf16>, vector<256x64xf32> -> vector<256x64xf32>
    %65 = arith.addf %59, %64 : vector<256x64xf32>
    %c0_49 = arith.constant 0 : index
    %c0_50 = arith.constant 0 : index
    %66 = vector.load %arg8[%c0_49, %c0_50] : memref<1x64xf32, #tpu.memory_space<vmem>>, vector<1x64xf32>
    %67 = vector.broadcast %66 : vector<1x64xf32> to vector<256x64xf32>
    %68 = arith.addf %65, %67 : vector<256x64xf32>
    %c0_51 = arith.constant 0 : index
    %c0_52 = arith.constant 0 : index
    %c0_53 = arith.constant 0 : index
    %69 = vector.load %arg2[%c0_51, %c0_52, %c0_53] : memref<1x1x32xf32, #tpu.memory_space<vmem>>, vector<1x1x32xf32>
    %70 = vector.shape_cast %69 : vector<1x1x32xf32> to vector<1x32xf32>
    %71 = arith.negf %70 : vector<1x32xf32>
    %72 = math.exp %71 : vector<1x32xf32>
    %cst_54 = arith.constant 1.000000e+00 : f32
    %73 = vector.broadcast %cst_54 : f32 to vector<1x32xf32>
    %74 = arith.addf %73, %72 : vector<1x32xf32>
    %75 = arith.divf %73, %74 : vector<1x32xf32>
    %76 = arith.mulf %70, %75 : vector<1x32xf32>
    %c0_55 = arith.constant 0 : index
    %c0_56 = arith.constant 0 : index
    %77 = vector.load %arg9[%c0_55, %c0_56] : memref<32x64xf32, #tpu.memory_space<vmem>>, vector<32x64xf32>
    %cst_57 = arith.constant dense<0.000000e+00> : vector<1x64xf32>
    %78 = tpu.matmul %76, %77, %cst_57 {dimension_numbers = #tpu.dot_dimension_numbers<[1], [0], [0], [1], [0, 0, 1, 1], [], []>} : vector<1x32xf32>, vector<32x64xf32>, vector<1x64xf32> -> vector<1x64xf32>
    %c0_58 = arith.constant 0 : index
    %c0_59 = arith.constant 0 : index
    %79 = vector.load %arg10[%c0_58, %c0_59] : memref<1x64xf32, #tpu.memory_space<vmem>>, vector<1x64xf32>
    %80 = arith.addf %78, %79 : vector<1x64xf32>
    %81 = vector.broadcast %80 : vector<1x64xf32> to vector<256x64xf32>
    %82 = arith.addf %68, %81 : vector<256x64xf32>
    %cst_60 = arith.constant 1.000000e+00 : f32
    %83 = vector.broadcast %cst_60 : f32 to vector<64x1xf32>
    %cst_61 = arith.constant dense<0.000000e+00> : vector<256x1xf32>
    %84 = tpu.matmul %82, %83, %cst_61 {dimension_numbers = #tpu.dot_dimension_numbers<[1], [0], [0], [1], [0, 0, 1, 1], [], []>} : vector<256x64xf32>, vector<64x1xf32>, vector<256x1xf32> -> vector<256x1xf32>
    %cst_62 = arith.constant 1.562500e-02 : f32
    %85 = vector.broadcast %cst_62 : f32 to vector<256x1xf32>
    %86 = arith.mulf %84, %85 : vector<256x1xf32>
    %87 = arith.mulf %82, %82 : vector<256x64xf32>
    %cst_63 = arith.constant dense<0.000000e+00> : vector<256x1xf32>
    %88 = tpu.matmul %87, %83, %cst_63 {dimension_numbers = #tpu.dot_dimension_numbers<[1], [0], [0], [1], [0, 0, 1, 1], [], []>} : vector<256x64xf32>, vector<64x1xf32>, vector<256x1xf32> -> vector<256x1xf32>
    %cst_64 = arith.constant 1.562500e-02 : f32
    %89 = vector.broadcast %cst_64 : f32 to vector<256x1xf32>
    %90 = arith.mulf %88, %89 : vector<256x1xf32>
    %91 = arith.mulf %86, %86 : vector<256x1xf32>
    %92 = arith.subf %90, %91 : vector<256x1xf32>
    %cst_65 = arith.constant 9.99999997E-7 : f32
    %93 = vector.broadcast %cst_65 : f32 to vector<256x1xf32>
    %94 = arith.addf %92, %93 : vector<256x1xf32>
    %95 = math.rsqrt %94 : vector<256x1xf32>
    %96 = vector.broadcast %95 : vector<256x1xf32> to vector<256x64xf32>
    %97 = arith.mulf %82, %96 : vector<256x64xf32>
    %98 = arith.mulf %86, %95 : vector<256x1xf32>
    %99 = vector.broadcast %98 : vector<256x1xf32> to vector<256x64xf32>
    %100 = arith.subf %97, %99 : vector<256x64xf32>
    %c0_66 = arith.constant 0 : index
    %c0_67 = arith.constant 0 : index
    %101 = vector.load %arg11[%c0_66, %c0_67] : memref<1x64xf32, #tpu.memory_space<vmem>>, vector<1x64xf32>
    %102 = vector.broadcast %101 : vector<1x64xf32> to vector<256x64xf32>
    %103 = arith.mulf %100, %102 : vector<256x64xf32>
    %c0_68 = arith.constant 0 : index
    %c0_69 = arith.constant 0 : index
    %104 = vector.load %arg12[%c0_68, %c0_69] : memref<1x64xf32, #tpu.memory_space<vmem>>, vector<1x64xf32>
    %105 = vector.broadcast %104 : vector<1x64xf32> to vector<256x64xf32>
    %106 = arith.addf %103, %105 : vector<256x64xf32>
    %107 = arith.negf %106 : vector<256x64xf32>
    %108 = math.exp %107 : vector<256x64xf32>
    %cst_70 = arith.constant 1.000000e+00 : f32
    %109 = vector.broadcast %cst_70 : f32 to vector<256x64xf32>
    %110 = arith.addf %109, %108 : vector<256x64xf32>
    %111 = arith.divf %109, %110 : vector<256x64xf32>
    %112 = arith.mulf %106, %111 : vector<256x64xf32>
    %113 = arith.truncf %112 : vector<256x64xf32> to vector<256x64xbf16>
    %114 = vector.shape_cast %113 : vector<256x64xbf16> to vector<16x16x64xbf16>
    %cst_71 = arith.constant 0.000000e+00 : bf16
    %115 = vector.broadcast %cst_71 : bf16 to vector<16x1x64xbf16>
    %116 = vector.extract_strided_slice %114 {offsets = [0, 0, 0], sizes = [16, 15, 64], strides = [1, 1, 1]} : vector<16x16x64xbf16> to vector<16x15x64xbf16>
    %117 = tpu.concatenate %115, %116 in 1 : vector<16x1x64xbf16>, vector<16x15x64xbf16> -> vector<16x16x64xbf16>
    %118 = vector.extract_strided_slice %114 {offsets = [0, 1, 0], sizes = [16, 15, 64], strides = [1, 1, 1]} : vector<16x16x64xbf16> to vector<16x15x64xbf16>
    %119 = tpu.concatenate %118, %115 in 1 : vector<16x15x64xbf16>, vector<16x1x64xbf16> -> vector<16x16x64xbf16>
    %120 = tpu.concatenate %117, %114, %119 in 2 : vector<16x16x64xbf16>, vector<16x16x64xbf16>, vector<16x16x64xbf16> -> vector<16x16x192xbf16>
    %cst_72 = arith.constant 0.000000e+00 : bf16
    %121 = vector.broadcast %cst_72 : bf16 to vector<1x16x192xbf16>
    %122 = tpu.concatenate %121, %120, %121 in 0 : vector<1x16x192xbf16>, vector<16x16x192xbf16>, vector<1x16x192xbf16> -> vector<18x16x192xbf16>
    %c0_73 = arith.constant 0 : index
    %c0_74 = arith.constant 0 : index
    %c0_75 = arith.constant 0 : index
    %123 = vector.load %arg17[%c0_73, %c0_74, %c0_75] : memref<18x16x192xbf16, #tpu.memory_space<vmem>>, vector<18x16x192xbf16>
    tpu.vector_store %arg17[%c0_73, %c0_74, %c0_75], %122 {strides = array<i32>} : memref<18x16x192xbf16, #tpu.memory_space<vmem>>, vector<18x16x192xbf16>,
    %c0_76 = arith.constant 0 : index
    %c0_77 = arith.constant 0 : index
    %c0_78 = arith.constant 0 : index
    %124 = vector.load %arg17[%c0_76, %c0_77, %c0_78] : memref<18x16x192xbf16, #tpu.memory_space<vmem>>, vector<16x16x192xbf16>
    %125 = vector.shape_cast %124 : vector<16x16x192xbf16> to vector<256x192xbf16>
    %c0_79 = arith.constant 0 : index
    %c0_80 = arith.constant 0 : index
    %c0_81 = arith.constant 0 : index
    %126 = vector.load %arg13[%c0_79, %c0_80, %c0_81] : memref<3x192x64xbf16, #tpu.memory_space<vmem>>, vector<1x192x64xbf16>
    %127 = vector.shape_cast %126 : vector<1x192x64xbf16> to vector<192x64xbf16>
    %cst_82 = arith.constant dense<0.000000e+00> : vector<256x64xf32>
    %128 = tpu.matmul %125, %127, %cst_82 {dimension_numbers = #tpu.dot_dimension_numbers<[1], [0], [0], [1], [0, 0, 1, 1], [], []>} : vector<256x192xbf16>, vector<192x64xbf16>, vector<256x64xf32> -> vector<256x64xf32>
    %c1_83 = arith.constant 1 : index
    %c0_84 = arith.constant 0 : index
    %c0_85 = arith.constant 0 : index
    %129 = vector.load %arg17[%c1_83, %c0_84, %c0_85] : memref<18x16x192xbf16, #tpu.memory_space<vmem>>, vector<16x16x192xbf16>
    %130 = vector.shape_cast %129 : vector<16x16x192xbf16> to vector<256x192xbf16>
    %c1_86 = arith.constant 1 : index
    %c0_87 = arith.constant 0 : index
    %c0_88 = arith.constant 0 : index
    %131 = vector.load %arg13[%c1_86, %c0_87, %c0_88] : memref<3x192x64xbf16, #tpu.memory_space<vmem>>, vector<1x192x64xbf16>
    %132 = vector.shape_cast %131 : vector<1x192x64xbf16> to vector<192x64xbf16>
    %cst_89 = arith.constant dense<0.000000e+00> : vector<256x64xf32>
    %133 = tpu.matmul %130, %132, %cst_89 {dimension_numbers = #tpu.dot_dimension_numbers<[1], [0], [0], [1], [0, 0, 1, 1], [], []>} : vector<256x192xbf16>, vector<192x64xbf16>, vector<256x64xf32> -> vector<256x64xf32>
    %134 = arith.addf %128, %133 : vector<256x64xf32>
    %c2_90 = arith.constant 2 : index
    %c0_91 = arith.constant 0 : index
    %c0_92 = arith.constant 0 : index
    %135 = vector.load %arg17[%c2_90, %c0_91, %c0_92] : memref<18x16x192xbf16, #tpu.memory_space<vmem>>, vector<16x16x192xbf16>
    %136 = vector.shape_cast %135 : vector<16x16x192xbf16> to vector<256x192xbf16>
    %c2_93 = arith.constant 2 : index
    %c0_94 = arith.constant 0 : index
    %c0_95 = arith.constant 0 : index
    %137 = vector.load %arg13[%c2_93, %c0_94, %c0_95] : memref<3x192x64xbf16, #tpu.memory_space<vmem>>, vector<1x192x64xbf16>
    %138 = vector.shape_cast %137 : vector<1x192x64xbf16> to vector<192x64xbf16>
    %cst_96 = arith.constant dense<0.000000e+00> : vector<256x64xf32>
    %139 = tpu.matmul %136, %138, %cst_96 {dimension_numbers = #tpu.dot_dimension_numbers<[1], [0], [0], [1], [0, 0, 1, 1], [], []>} : vector<256x192xbf16>, vector<192x64xbf16>, vector<256x64xf32> -> vector<256x64xf32>
    %140 = arith.addf %134, %139 : vector<256x64xf32>
    %c0_97 = arith.constant 0 : index
    %c0_98 = arith.constant 0 : index
    %141 = vector.load %arg14[%c0_97, %c0_98] : memref<1x64xf32, #tpu.memory_space<vmem>>, vector<1x64xf32>
    %142 = vector.broadcast %141 : vector<1x64xf32> to vector<256x64xf32>
    %143 = arith.addf %140, %142 : vector<256x64xf32>
    %144 = arith.addf %1, %143 : vector<256x64xf32>
    %145 = vector.shape_cast %144 : vector<256x64xf32> to vector<1x16x16x64xf32>
    %c0_99 = arith.constant 0 : index
    %c0_100 = arith.constant 0 : index
    %c0_101 = arith.constant 0 : index
    %c0_102 = arith.constant 0 : index
    %146 = vector.load %arg15[%c0_99, %c0_100, %c0_101, %c0_102] : memref<1x16x16x64xf32, #tpu.memory_space<vmem>>, vector<1x16x16x64xf32>
    tpu.vector_store %arg15[%c0_99, %c0_100, %c0_101, %c0_102], %145 {strides = array<i32>} : memref<1x16x16x64xf32, #tpu.memory_space<vmem>>, vector<1x16x16x64xf32>,
    return
  }
  func.func @transform_0(%arg0: i32) -> (i32, i32, i32, i32) {
    %c0_i32 = arith.constant 0 : i32
    %c0_i32_0 = arith.constant 0 : i32
    %c0_i32_1 = arith.constant 0 : i32
    %c0_i32_2 = arith.constant 0 : i32
    return %arg0, %c0_i32, %c0_i32_0, %c0_i32_1 : i32, i32, i32, i32
  }
  func.func @transform_1(%arg0: i32) -> (i32, i32, i32) {
    %c0_i32 = arith.constant 0 : i32
    %c0_i32_0 = arith.constant 0 : i32
    %c0_i32_1 = arith.constant 0 : i32
    return %arg0, %c0_i32, %c0_i32_0 : i32, i32, i32
  }
  func.func @transform_2(%arg0: i32) -> (i32, i32) {
    %c0_i32 = arith.constant 0 : i32
    %c0_i32_0 = arith.constant 0 : i32
    %c0_i32_1 = arith.constant 0 : i32
    return %c0_i32, %c0_i32_0 : i32, i32
  }
  func.func @transform_3(%arg0: i32) -> (i32, i32) {
    %c0_i32 = arith.constant 0 : i32
    %c0_i32_0 = arith.constant 0 : i32
    %c0_i32_1 = arith.constant 0 : i32
    return %c0_i32, %c0_i32_0 : i32, i32
  }
  func.func @transform_4(%arg0: i32) -> (i32, i32) {
    %c0_i32 = arith.constant 0 : i32
    %c0_i32_0 = arith.constant 0 : i32
    %c0_i32_1 = arith.constant 0 : i32
    return %c0_i32, %c0_i32_0 : i32, i32
  }
  func.func @transform_5(%arg0: i32) -> (i32, i32) {
    %c0_i32 = arith.constant 0 : i32
    %c0_i32_0 = arith.constant 0 : i32
    %c0_i32_1 = arith.constant 0 : i32
    return %c0_i32, %c0_i32_0 : i32, i32
  }
  func.func @transform_6(%arg0: i32) -> (i32, i32, i32) {
    %c0_i32 = arith.constant 0 : i32
    %c0_i32_0 = arith.constant 0 : i32
    %c0_i32_1 = arith.constant 0 : i32
    %c0_i32_2 = arith.constant 0 : i32
    return %c0_i32, %c0_i32_0, %c0_i32_1 : i32, i32, i32
  }
  func.func @transform_7(%arg0: i32) -> (i32, i32) {
    %c0_i32 = arith.constant 0 : i32
    %c0_i32_0 = arith.constant 0 : i32
    %c0_i32_1 = arith.constant 0 : i32
    return %c0_i32, %c0_i32_0 : i32, i32
  }
  func.func @transform_8(%arg0: i32) -> (i32, i32) {
    %c0_i32 = arith.constant 0 : i32
    %c0_i32_0 = arith.constant 0 : i32
    %c0_i32_1 = arith.constant 0 : i32
    return %c0_i32, %c0_i32_0 : i32, i32
  }
  func.func @transform_9(%arg0: i32) -> (i32, i32) {
    %c0_i32 = arith.constant 0 : i32
    %c0_i32_0 = arith.constant 0 : i32
    %c0_i32_1 = arith.constant 0 : i32
    return %c0_i32, %c0_i32_0 : i32, i32
  }
  func.func @transform_10(%arg0: i32) -> (i32, i32) {
    %c0_i32 = arith.constant 0 : i32
    %c0_i32_0 = arith.constant 0 : i32
    %c0_i32_1 = arith.constant 0 : i32
    return %c0_i32, %c0_i32_0 : i32, i32
  }
  func.func @transform_11(%arg0: i32) -> (i32, i32) {
    %c0_i32 = arith.constant 0 : i32
    %c0_i32_0 = arith.constant 0 : i32
    %c0_i32_1 = arith.constant 0 : i32
    return %c0_i32, %c0_i32_0 : i32, i32
  }
  func.func @transform_12(%arg0: i32) -> (i32, i32, i32) {
    %c0_i32 = arith.constant 0 : i32
    %c0_i32_0 = arith.constant 0 : i32
    %c0_i32_1 = arith.constant 0 : i32
    %c0_i32_2 = arith.constant 0 : i32
    return %c0_i32, %c0_i32_0, %c0_i32_1 : i32, i32, i32
  }
  func.func @transform_13(%arg0: i32) -> (i32, i32) {
    %c0_i32 = arith.constant 0 : i32
    %c0_i32_0 = arith.constant 0 : i32
    %c0_i32_1 = arith.constant 0 : i32
    return %c0_i32, %c0_i32_0 : i32, i32
  }
  func.func @transform_14(%arg0: i32) -> (i32, i32, i32, i32) {
    %c0_i32 = arith.constant 0 : i32
    %c0_i32_0 = arith.constant 0 : i32
    %c0_i32_1 = arith.constant 0 : i32
    %c0_i32_2 = arith.constant 0 : i32
    return %arg0, %c0_i32, %c0_i32_0, %c0_i32_1 : i32, i32, i32, i32
  }
}

</mosaic_0001>

<llo_original>
// kernel: tpu_custom_call.1
$region0: #{tpu_custom_call.1}
  #allocation0 [shape = 'u32[]', space=smem, size = 0x4, offset = 0x4, fixed_abs, tag = 'smem constant byte address 0x4 - core index']
  #allocation1 [shape = 'u32[144,128]{1,0:T(1,128)}', space=vmem, size = 0x12000, scoped, tag = 'internal scratch']
  #allocation2 [shape = 'bf16[18,16,192]{2,1,0:T(8,128)(2,1)}', space=vmem, size = 0x24000, scoped, tag = 'scratch operand']
  #allocation3 [shape = 'bf16[18,16,192]{2,1,0:T(8,128)(2,1)}', space=vmem, size = 0x24000, scoped, tag = 'scratch operand']
  %s0 = inlined_call_operand.vmem [shape: f32[2,16,16,64], index: 0, kind: input, shape index: {}]
  %s1 = inlined_call_operand.vmem [shape: f32[2,1,32], index: 1, kind: input, shape index: {}]
  %s2 = inlined_call_operand.vmem [shape: f32[64,32], index: 2, kind: input, shape index: {}]
  %s3 = inlined_call_operand.vmem [shape: f32[32,64], index: 3, kind: input, shape index: {}]
  %s4 = inlined_call_operand.vmem [shape: f32[1,64], index: 4, kind: input, shape index: {}]
  %s5 = inlined_call_operand.vmem [shape: f32[1,64], index: 5, kind: input, shape index: {}]
  %s6 = inlined_call_operand.vmem [shape: bf16[3,192,64], index: 6, kind: input, shape index: {}]
  %s7 = inlined_call_operand.vmem [shape: f32[1,64], index: 7, kind: input, shape index: {}]
  %s8 = inlined_call_operand.vmem [shape: f32[32,64], index: 8, kind: input, shape index: {}]
  %s9 = inlined_call_operand.vmem [shape: f32[1,64], index: 9, kind: input, shape index: {}]
  %s10 = inlined_call_operand.vmem [shape: f32[1,64], index: 10, kind: input, shape index: {}]
  %s11 = inlined_call_operand.vmem [shape: f32[1,64], index: 11, kind: input, shape index: {}]
  %s12 = inlined_call_operand.vmem [shape: bf16[3,192,64], index: 12, kind: input, shape index: {}]
  %s13 = inlined_call_operand.vmem [shape: f32[1,64], index: 13, kind: input, shape index: {}]
  %s14 = inlined_call_operand.hbm [shape: f32[2,16,16,64], index: 14, kind: output, shape index: {}]
  %s15 = sld [smem:[#allocation0]]
  $region89: #{tpu_custom_call.1} parent=0
    _
  %s17 = ssub.s32 1, %s15
  %s18 = scalar_select 0, %s17, %s15
  $region1: #{tpu_custom_call.1} parent=0
    #allocation4 [shape = 'u8[262144]{0}', space=vmem, size = 0x40000, scoped, tag = 'output window, operand 0']
    #allocation5 [shape = 's32[2]{0}', space=sflag, size = 0x8, scoped, tag = 'scoped memory for tpu_custom_call.1']
    %19 = vsyncpa [#allocation5], 0
    %s20 = scalar_lea.sflag [#allocation5], 1
    %21 = vsyncpa %s20, 0
    loop: start=0, step=1, limit=4
    $region2: #{tpu_custom_call.1} parent=1 // loop_pre_header
      _
    $region3: #{tpu_custom_call.1} parent=1 // loop_header
      %s23 = sphi 0, %s27
      %p24 = scmp.ge.s32.totalorder %s23, 4
      %s33 = sphi 0, %s35
      %s36 = sphi 0, %s33
      %s37 = sphi 0, %s36
      %s53 = sphi 0, %s37
      %s59 = sphi 0, %s61
      %s62 = sphi 0, %s59
      %s63 = sphi 0, %s62
      %s79 = sphi 0, %s63
      %s83 = sphi 0, %s83
      %s85 = sphi 0, %s83
      %s86 = sphi 0, %s85
      %s100 = sphi 0, %s86
      %s104 = sphi 0, %s104
      %s106 = sphi 0, %s104
      %s107 = sphi 0, %s106
      %s121 = sphi 0, %s107
      %s125 = sphi 0, %s125
      %s127 = sphi 0, %s125
      %s128 = sphi 0, %s127
      %s142 = sphi 0, %s128
      %s146 = sphi 0, %s146
      %s148 = sphi 0, %s146
      %s149 = sphi 0, %s148
      %s163 = sphi 0, %s149
      %s167 = sphi 0, %s167
      %s169 = sphi 0, %s167
      %s170 = sphi 0, %s169
      %s184 = sphi 0, %s170
      %s188 = sphi 0, %s188
      %s190 = sphi 0, %s188
      %s191 = sphi 0, %s190
      %s205 = sphi 0, %s191
      %s209 = sphi 0, %s209
      %s211 = sphi 0, %s209
      %s212 = sphi 0, %s211
      %s226 = sphi 0, %s212
      %s230 = sphi 0, %s230
      %s232 = sphi 0, %s230
      %s233 = sphi 0, %s232
      %s247 = sphi 0, %s233
      %s251 = sphi 0, %s251
      %s253 = sphi 0, %s251
      %s254 = sphi 0, %s253
      %s268 = sphi 0, %s254
      %s272 = sphi 0, %s272
      %s274 = sphi 0, %s272
      %s275 = sphi 0, %s274
      %s289 = sphi 0, %s275
      %s293 = sphi 0, %s293
      %s295 = sphi 0, %s293
      %s296 = sphi 0, %s295
      %s310 = sphi 0, %s296
      %s314 = sphi 0, %s314
      %s316 = sphi 0, %s314
      %s317 = sphi 0, %s316
      %s331 = sphi 0, %s317
      %s337 = sphi 0, %s339
      %s340 = sphi 0, %s337
      %s341 = sphi 0, %s340
      %s357 = sphi 0, %s341
    $region4: #{tpu_custom_call.1} parent=1 // loop_header_branch
      %26 = sbr.rel (%p24) target = $region8
    $region5: #{tpu_custom_call.1} parent=1 // loop_body
      %s28 = ssub.s32 %s23, 1
      %s29 = ssub.s32 %s23, 2
      %s30 = sadd.s32 %s23, 1
      %s31 = ssub.s32 %s23, %s30
      %p32 = scmp.eq.s32.totalorder %s31, 0
      %s34 = sadd.s32 %s33, 1
      %s35 = scalar_select %p32, %s33, %s34
      %p38 = pneg %p32
      %p39 = scmp.eq.s32.totalorder %s23, 1
      %p40 = por %p38, %p39
      %p41 = scmp.ne.s32.totalorder %s33, %s36
      %p42 = scmp.eq.s32.totalorder %s23, 0
      %p43 = por %p41, %p42
      %p44 = scmp.ne.s32.totalorder %s33, %s36
      %p45 = scmp.eq.s32.totalorder %s28, 1
      %p46 = por %p44, %p45
      %p47 = scmp.ne.s32.totalorder %s36, %s37
      %p48 = scmp.eq.s32.totalorder %s28, 0
      %p49 = por %p47, %p48
      %p50 = scmp.ne.s32.totalorder %s36, %s37
      %p51 = scmp.eq.s32.totalorder %s29, 1
      %p52 = por %p50, %p51
      %p54 = scmp.ne.s32.totalorder %s37, %s53
      %p55 = scmp.eq.s32.totalorder %s29, 0
      %p56 = por %p54, %p55
      %s57 = ssub.s32 %s23, %s30
      %p58 = scmp.eq.s32.totalorder %s57, 0
      %s60 = sadd.s32 %s59, 1
      %s61 = scalar_select %p58, %s59, %s60
      %p64 = pneg %p58
      %p65 = scmp.eq.s32.totalorder %s23, 1
      %p66 = por %p64, %p65
      %p67 = scmp.ne.s32.totalorder %s59, %s62
      %p68 = scmp.eq.s32.totalorder %s23, 0
      %p69 = por %p67, %p68
      %p70 = scmp.ne.s32.totalorder %s59, %s62
      %p71 = scmp.eq.s32.totalorder %s28, 1
      %p72 = por %p70, %p71
      %p73 = scmp.ne.s32.totalorder %s62, %s63
      %p74 = scmp.eq.s32.totalorder %s28, 0
      %p75 = por %p73, %p74
      %p76 = scmp.ne.s32.totalorder %s62, %s63
      %p77 = scmp.eq.s32.totalorder %s29, 1
      %p78 = por %p76, %p77
      %p80 = scmp.ne.s32.totalorder %s63, %s79
      %p81 = scmp.eq.s32.totalorder %s29, 0
      %p82 = por %p80, %p81
      %s84 = sadd.s32 %s83, 1
      %p87 = scmp.eq.s32.totalorder %s23, 1
      %p88 = scmp.ne.s32.totalorder %s83, %s85
      %p89 = scmp.eq.s32.totalorder %s23, 0
      %p90 = por %p88, %p89
      %p91 = scmp.ne.s32.totalorder %s83, %s85
      %p92 = scmp.eq.s32.totalorder %s28, 1
      %p93 = por %p91, %p92
      %p94 = scmp.ne.s32.totalorder %s85, %s86
      %p95 = scmp.eq.s32.totalorder %s28, 0
      %p96 = por %p94, %p95
      %p97 = scmp.ne.s32.totalorder %s85, %s86
      %p98 = scmp.eq.s32.totalorder %s29, 1
      %p99 = por %p97, %p98
      %p101 = scmp.ne.s32.totalorder %s86, %s100
      %p102 = scmp.eq.s32.totalorder %s29, 0
      %p103 = por %p101, %p102
      %s105 = sadd.s32 %s104, 1
      %p108 = scmp.eq.s32.totalorder %s23, 1
      %p109 = scmp.ne.s32.totalorder %s104, %s106
      %p110 = scmp.eq.s32.totalorder %s23, 0
      %p111 = por %p109, %p110
      %p112 = scmp.ne.s32.totalorder %s104, %s106
      %p113 = scmp.eq.s32.totalorder %s28, 1
      %p114 = por %p112, %p113
      %p115 = scmp.ne.s32.totalorder %s106, %s107
      %p116 = scmp.eq.s32.totalorder %s28, 0
      %p117 = por %p115, %p116
      %p118 = scmp.ne.s32.totalorder %s106, %s107
      %p119 = scmp.eq.s32.totalorder %s29, 1
      %p120 = por %p118, %p119
      %p122 = scmp.ne.s32.totalorder %s107, %s121
      %p123 = scmp.eq.s32.totalorder %s29, 0
      %p124 = por %p122, %p123
      %s126 = sadd.s32 %s125, 1
      %p129 = scmp.eq.s32.totalorder %s23, 1
      %p130 = scmp.ne.s32.totalorder %s125, %s127
      %p131 = scmp.eq.s32.totalorder %s23, 0
      %p132 = por %p130, %p131
      %p133 = scmp.ne.s32.totalorder %s125, %s127
      %p134 = scmp.eq.s32.totalorder %s28, 1
      %p135 = por %p133, %p134
      %p136 = scmp.ne.s32.totalorder %s127, %s128
      %p137 = scmp.eq.s32.totalorder %s28, 0
      %p138 = por %p136, %p137
      %p139 = scmp.ne.s32.totalorder %s127, %s128
      %p140 = scmp.eq.s32.totalorder %s29, 1
      %p141 = por %p139, %p140
      %p143 = scmp.ne.s32.totalorder %s128, %s142
      %p144 = scmp.eq.s32.totalorder %s29, 0
      %p145 = por %p143, %p144
      %s147 = sadd.s32 %s146, 1
      %p150 = scmp.eq.s32.totalorder %s23, 1
      %p151 = scmp.ne.s32.totalorder %s146, %s148
      %p152 = scmp.eq.s32.totalorder %s23, 0
      %p153 = por %p151, %p152
      %p154 = scmp.ne.s32.totalorder %s146, %s148
      %p155 = scmp.eq.s32.totalorder %s28, 1
      %p156 = por %p154, %p155
      %p157 = scmp.ne.s32.totalorder %s148, %s149
      %p158 = scmp.eq.s32.totalorder %s28, 0
      %p159 = por %p157, %p158
      %p160 = scmp.ne.s32.totalorder %s148, %s149
      %p161 = scmp.eq.s32.totalorder %s29, 1
      %p162 = por %p160, %p161
      %p164 = scmp.ne.s32.totalorder %s149, %s163
      %p165 = scmp.eq.s32.totalorder %s29, 0
      %p166 = por %p164, %p165
      %s168 = sadd.s32 %s167, 1
      %p171 = scmp.eq.s32.totalorder %s23, 1
      %p172 = scmp.ne.s32.totalorder %s167, %s169
      %p173 = scmp.eq.s32.totalorder %s23, 0
      %p174 = por %p172, %p173
      %p175 = scmp.ne.s32.totalorder %s167, %s169
      %p176 = scmp.eq.s32.totalorder %s28, 1
      %p177 = por %p175, %p176
      %p178 = scmp.ne.s32.totalorder %s169, %s170
      %p179 = scmp.eq.s32.totalorder %s28, 0
      %p180 = por %p178, %p179
      %p181 = scmp.ne.s32.totalorder %s169, %s170
      %p182 = scmp.eq.s32.totalorder %s29, 1
      %p183 = por %p181, %p182
      %p185 = scmp.ne.s32.totalorder %s170, %s184
      %p186 = scmp.eq.s32.totalorder %s29, 0
      %p187 = por %p185, %p186
      %s189 = sadd.s32 %s188, 1
      %p192 = scmp.eq.s32.totalorder %s23, 1
      %p193 = scmp.ne.s32.totalorder %s188, %s190
      %p194 = scmp.eq.s32.totalorder %s23, 0
      %p195 = por %p193, %p194
      %p196 = scmp.ne.s32.totalorder %s188, %s190
      %p197 = scmp.eq.s32.totalorder %s28, 1
      %p198 = por %p196, %p197
      %p199 = scmp.ne.s32.totalorder %s190, %s191
      %p200 = scmp.eq.s32.totalorder %s28, 0
      %p201 = por %p199, %p200
      %p202 = scmp.ne.s32.totalorder %s190, %s191
      %p203 = scmp.eq.s32.totalorder %s29, 1
      %p204 = por %p202, %p203
      %p206 = scmp.ne.s32.totalorder %s191, %s205
      %p207 = scmp.eq.s32.totalorder %s29, 0
      %p208 = por %p206, %p207
      %s210 = sadd.s32 %s209, 1
      %p213 = scmp.eq.s32.totalorder %s23, 1
      %p214 = scmp.ne.s32.totalorder %s209, %s211
      %p215 = scmp.eq.s32.totalorder %s23, 0
      %p216 = por %p214, %p215
      %p217 = scmp.ne.s32.totalorder %s209, %s211
      %p218 = scmp.eq.s32.totalorder %s28, 1
      %p219 = por %p217, %p218
      %p220 = scmp.ne.s32.totalorder %s211, %s212
      %p221 = scmp.eq.s32.totalorder %s28, 0
      %p222 = por %p220, %p221
      %p223 = scmp.ne.s32.totalorder %s211, %s212
      %p224 = scmp.eq.s32.totalorder %s29, 1
      %p225 = por %p223, %p224
      %p227 = scmp.ne.s32.totalorder %s212, %s226
      %p228 = scmp.eq.s32.totalorder %s29, 0
      %p229 = por %p227, %p228
      %s231 = sadd.s32 %s230, 1
      %p234 = scmp.eq.s32.totalorder %s23, 1
      %p235 = scmp.ne.s32.totalorder %s230, %s232
      %p236 = scmp.eq.s32.totalorder %s23, 0
      %p237 = por %p235, %p236
      %p238 = scmp.ne.s32.totalorder %s230, %s232
      %p239 = scmp.eq.s32.totalorder %s28, 1
      %p240 = por %p238, %p239
      %p241 = scmp.ne.s32.totalorder %s232, %s233
      %p242 = scmp.eq.s32.totalorder %s28, 0
      %p243 = por %p241, %p242
      %p244 = scmp.ne.s32.totalorder %s232, %s233
      %p245 = scmp.eq.s32.totalorder %s29, 1
      %p246 = por %p244, %p245
      %p248 = scmp.ne.s32.totalorder %s233, %s247
      %p249 = scmp.eq.s32.totalorder %s29, 0
      %p250 = por %p248, %p249
      %s252 = sadd.s32 %s251, 1
      %p255 = scmp.eq.s32.totalorder %s23, 1
      %p256 = scmp.ne.s32.totalorder %s251, %s253
      %p257 = scmp.eq.s32.totalorder %s23, 0
      %p258 = por %p256, %p257
      %p259 = scmp.ne.s32.totalorder %s251, %s253
      %p260 = scmp.eq.s32.totalorder %s28, 1
      %p261 = por %p259, %p260
      %p262 = scmp.ne.s32.totalorder %s253, %s254
      %p263 = scmp.eq.s32.totalorder %s28, 0
      %p264 = por %p262, %p263
      %p265 = scmp.ne.s32.totalorder %s253, %s254
      %p266 = scmp.eq.s32.totalorder %s29, 1
      %p267 = por %p265, %p266
      %p269 = scmp.ne.s32.totalorder %s254, %s268
      %p270 = scmp.eq.s32.totalorder %s29, 0
      %p271 = por %p269, %p270
      %s273 = sadd.s32 %s272, 1
      %p276 = scmp.eq.s32.totalorder %s23, 1
      %p277 = scmp.ne.s32.totalorder %s272, %s274
      %p278 = scmp.eq.s32.totalorder %s23, 0
      %p279 = por %p277, %p278
      %p280 = scmp.ne.s32.totalorder %s272, %s274
      %p281 = scmp.eq.s32.totalorder %s28, 1
      %p282 = por %p280, %p281
      %p283 = scmp.ne.s32.totalorder %s274, %s275
      %p284 = scmp.eq.s32.totalorder %s28, 0
      %p285 = por %p283, %p284
      %p286 = scmp.ne.s32.totalorder %s274, %s275
      %p287 = scmp.eq.s32.totalorder %s29, 1
      %p288 = por %p286, %p287
      %p290 = scmp.ne.s32.totalorder %s275, %s289
      %p291 = scmp.eq.s32.totalorder %s29, 0
      %p292 = por %p290, %p291
      %s294 = sadd.s32 %s293, 1
      %p297 = scmp.eq.s32.totalorder %s23, 1
      %p298 = scmp.ne.s32.totalorder %s293, %s295
      %p299 = scmp.eq.s32.totalorder %s23, 0
      %p300 = por %p298, %p299
      %p301 = scmp.ne.s32.totalorder %s293, %s295
      %p302 = scmp.eq.s32.totalorder %s28, 1
      %p303 = por %p301, %p302
      %p304 = scmp.ne.s32.totalorder %s295, %s296
      %p305 = scmp.eq.s32.totalorder %s28, 0
      %p306 = por %p304, %p305
      %p307 = scmp.ne.s32.totalorder %s295, %s296
      %p308 = scmp.eq.s32.totalorder %s29, 1
      %p309 = por %p307, %p308
      %p311 = scmp.ne.s32.totalorder %s296, %s310
      %p312 = scmp.eq.s32.totalorder %s29, 0
      %p313 = por %p311, %p312
      %s315 = sadd.s32 %s314, 1
      %p318 = scmp.eq.s32.totalorder %s23, 1
      %p319 = scmp.ne.s32.totalorder %s314, %s316
      %p320 = scmp.eq.s32.totalorder %s23, 0
      %p321 = por %p319, %p320
      %p322 = scmp.ne.s32.totalorder %s314, %s316
      %p323 = scmp.eq.s32.totalorder %s28, 1
      %p324 = por %p322, %p323
      %p325 = scmp.ne.s32.totalorder %s316, %s317
      %p326 = scmp.eq.s32.totalorder %s28, 0
      %p327 = por %p325, %p326
      %p328 = scmp.ne.s32.totalorder %s316, %s317
      %p329 = scmp.eq.s32.totalorder %s29, 1
      %p330 = por %p328, %p329
      %p332 = scmp.ne.s32.totalorder %s317, %s331
      %p333 = scmp.eq.s32.totalorder %s29, 0
      %p334 = por %p332, %p333
      %s335 = ssub.s32 %s23, %s30
      %p336 = scmp.eq.s32.totalorder %s335, 0
      %s338 = sadd.s32 %s337, 1
      %s339 = scalar_select %p336, %s337, %s338
      %p342 = pneg %p336
      %p343 = scmp.eq.s32.totalorder %s23, 1
      %p344 = por %p342, %p343
      %p345 = scmp.ne.s32.totalorder %s337, %s340
      %p346 = scmp.eq.s32.totalorder %s23, 0
      %p347 = por %p345, %p346
      %p348 = scmp.ne.s32.totalorder %s337, %s340
      %p349 = scmp.eq.s32.totalorder %s28, 1
      %p350 = por %p348, %p349
      %p351 = scmp.ne.s32.totalorder %s340, %s341
      %p352 = scmp.eq.s32.totalorder %s28, 0
      %p353 = por %p351, %p352
      %p354 = scmp.ne.s32.totalorder %s340, %s341
      %p355 = scmp.eq.s32.totalorder %s29, 1
      %p356 = por %p354, %p355
      %p358 = scmp.ne.s32.totalorder %s341, %s357
      %p359 = scmp.eq.s32.totalorder %s29, 0
      %p360 = por %p358, %p359
      %p361 = scmp.le.s32.totalorder 1, %s23
      %p362 = scmp.lt.s32.totalorder %s23, 3
      %p363 = pnand %p361, %p362
      %p364 = pneg %p363
      // Predicated region
      $region9: #{tpu_custom_call.1} parent=5 // pred_check
        _
      $region10: #{tpu_custom_call.1} parent=5 // pred_check_branch
        %366 = sbr.rel (%p363) target = $region12
      $region11: #{tpu_custom_call.1} parent=5 // pred_region
        %s367 = ssub.s32 %s23, 1
        // Predicated region
        $region13: #{tpu_custom_call.1} parent=11 // pred_check
          %p368 = pneg %p96
        $region14: #{tpu_custom_call.1} parent=11 // pred_check_branch
          %370 = sbr.rel (%p368) target = $region16
        $region15: #{tpu_custom_call.1} parent=11 // pred_region
          _
        $region16: #{tpu_custom_call.1} parent=11 // pred_fallthru
          _
        // Predicated region
        $region17: #{tpu_custom_call.1} parent=11 // pred_check
          %p371 = pneg %p117
        $region18: #{tpu_custom_call.1} parent=11 // pred_check_branch
          %373 = sbr.rel (%p371) target = $region20
        $region19: #{tpu_custom_call.1} parent=11 // pred_region
          _
        $region20: #{tpu_custom_call.1} parent=11 // pred_fallthru
          _
        // Predicated region
        $region21: #{tpu_custom_call.1} parent=11 // pred_check
          %p374 = pneg %p138
        $region22: #{tpu_custom_call.1} parent=11 // pred_check_branch
          %376 = sbr.rel (%p374) target = $region24
        $region23: #{tpu_custom_call.1} parent=11 // pred_region
          _
        $region24: #{tpu_custom_call.1} parent=11 // pred_fallthru
          _
        // Predicated region
        $region25: #{tpu_custom_call.1} parent=11 // pred_check
          %p377 = pneg %p159
        $region26: #{tpu_custom_call.1} parent=11 // pred_check_branch
          %379 = sbr.rel (%p377) target = $region28
        $region27: #{tpu_custom_call.1} parent=11 // pred_region
          _
        $region28: #{tpu_custom_call.1} parent=11 // pred_fallthru
          _
        // Predicated region
        $region29: #{tpu_custom_call.1} parent=11 // pred_check
          %p380 = pneg %p180
        $region30: #{tpu_custom_call.1} parent=11 // pred_check_branch
          %382 = sbr.rel (%p380) target = $region32
        $region31: #{tpu_custom_call.1} parent=11 // pred_region
          _
        $region32: #{tpu_custom_call.1} parent=11 // pred_fallthru
          _
        // Predicated region
        $region33: #{tpu_custom_call.1} parent=11 // pred_check
          %p383 = pneg %p201
        $region34: #{tpu_custom_call.1} parent=11 // pred_check_branch
          %385 = sbr.rel (%p383) target = $region36
        $region35: #{tpu_custom_call.1} parent=11 // pred_region
          _
        $region36: #{tpu_custom_call.1} parent=11 // pred_fallthru
          _
        // Predicated region
        $region37: #{tpu_custom_call.1} parent=11 // pred_check
          %p386 = pneg %p222
        $region38: #{tpu_custom_call.1} parent=11 // pred_check_branch
          %388 = sbr.rel (%p386) target = $region40
        $region39: #{tpu_custom_call.1} parent=11 // pred_region
          _
        $region40: #{tpu_custom_call.1} parent=11 // pred_fallthru
          _
        // Predicated region
        $region41: #{tpu_custom_call.1} parent=11 // pred_check
          %p389 = pneg %p243
        $region42: #{tpu_custom_call.1} parent=11 // pred_check_branch
          %391 = sbr.rel (%p389) target = $region44
        $region43: #{tpu_custom_call.1} parent=11 // pred_region
          _
        $region44: #{tpu_custom_call.1} parent=11 // pred_fallthru
          _
        // Predicated region
        $region45: #{tpu_custom_call.1} parent=11 // pred_check
          %p392 = pneg %p264
        $region46: #{tpu_custom_call.1} parent=11 // pred_check_branch
          %394 = sbr.rel (%p392) target = $region48
        $region47: #{tpu_custom_call.1} parent=11 // pred_region
          _
        $region48: #{tpu_custom_call.1} parent=11 // pred_fallthru
          _
        // Predicated region
        $region49: #{tpu_custom_call.1} parent=11 // pred_check
          %p395 = pneg %p285
        $region50: #{tpu_custom_call.1} parent=11 // pred_check_branch
          %397 = sbr.rel (%p395) target = $region52
        $region51: #{tpu_custom_call.1} parent=11 // pred_region
          _
        $region52: #{tpu_custom_call.1} parent=11 // pred_fallthru
          _
        // Predicated region
        $region53: #{tpu_custom_call.1} parent=11 // pred_check
          %p398 = pneg %p306
        $region54: #{tpu_custom_call.1} parent=11 // pred_check_branch
          %400 = sbr.rel (%p398) target = $region56
        $region55: #{tpu_custom_call.1} parent=11 // pred_region
          _
        $region56: #{tpu_custom_call.1} parent=11 // pred_fallthru
          _
        // Predicated region
        $region57: #{tpu_custom_call.1} parent=11 // pred_check
          %p401 = pneg %p327
        $region58: #{tpu_custom_call.1} parent=11 // pred_check_branch
          %403 = sbr.rel (%p401) target = $region60
        $region59: #{tpu_custom_call.1} parent=11 // pred_region
          _
        $region60: #{tpu_custom_call.1} parent=11 // pred_fallthru
          _
      $region12: #{tpu_custom_call.1} parent=5 // pred_fallthru
        _
      %p404 = scmp.lt.s32.totalorder %s23, 2
      // Predicated region
      $region61: #{tpu_custom_call.1} parent=5 // pred_check
        %p405 = pneg %p404
      $region62: #{tpu_custom_call.1} parent=5 // pred_check_branch
        %407 = sbr.rel (%p405) target = $region64
      $region63: #{tpu_custom_call.1} parent=5 // pred_region
        // Predicated region
        $region65: #{tpu_custom_call.1} parent=63 // pred_check
          %p408 = pneg %p43
        $region66: #{tpu_custom_call.1} parent=63 // pred_check_branch
          %410 = sbr.rel (%p408) target = $region68
        $region67: #{tpu_custom_call.1} parent=63 // pred_region
          %p411 = scmp.lt.s32.totalorder %s23, 1
          %s412 = scalar_select %p411, %s23, 1
          %s413 = smul.addr %s412, 32
          %s414 = smul.addr %s413, 8
          %s415 = scalar_lea.vmem %s0, %s414
        $region68: #{tpu_custom_call.1} parent=63 // pred_fallthru
          _
        // Predicated region
        $region69: #{tpu_custom_call.1} parent=63 // pred_check
          %p416 = pneg %p69
        $region70: #{tpu_custom_call.1} parent=63 // pred_check_branch
          %418 = sbr.rel (%p416) target = $region72
        $region71: #{tpu_custom_call.1} parent=63 // pred_region
          %p419 = scmp.lt.s32.totalorder %s23, 1
          %s420 = scalar_select %p419, %s23, 1
          %s421 = scalar_lea.vmem %s1, %s420
        $region72: #{tpu_custom_call.1} parent=63 // pred_fallthru
          _
      $region64: #{tpu_custom_call.1} parent=5 // pred_fallthru
        _
      %p422 = scmp.le.s32.totalorder 1, %s23
      %p423 = scmp.lt.s32.totalorder %s23, 3
      %p424 = pnand %p422, %p423
      %p425 = pneg %p424
      // Predicated region
      $region73: #{tpu_custom_call.1} parent=5 // pred_check
        _
      $region74: #{tpu_custom_call.1} parent=5 // pred_check_branch
        %427 = sbr.rel (%p424) target = $region76
      $region75: #{tpu_custom_call.1} parent=5 // pred_region
        %s428 = ssub.s32 %s23, 1
        %p429 = scmp.lt.s32.totalorder %s28, 1
        %s430 = scalar_select %p429, %s28, 1
        %s431 = smul.addr %s430, 32
        %s432 = smul.addr %s431, 8
        %s433 = scalar_lea.vmem %s0, %s432
        %p434 = pneg %p49
        %p435 = pneg %p46
        %p436 = scmp.lt.s32.totalorder %s28, 1
        %s437 = scalar_select %p436, %s28, 1
        %s438 = scalar_lea.vmem %s1, %s437
        %p439 = pneg %p75
        %p440 = pneg %p72
        %p441 = pneg %p96
        %p442 = pneg %p93
        %p443 = pneg %p117
        %p444 = pneg %p114
        %p445 = pneg %p138
        %p446 = pneg %p135
        %p447 = pneg %p159
        %p448 = pneg %p156
        %p449 = pneg %p180
        %p450 = pneg %p177
        %p451 = pneg %p201
        %p452 = pneg %p198
        %p453 = pneg %p222
        %p454 = pneg %p219
        %p455 = pneg %p243
        %p456 = pneg %p240
        %p457 = pneg %p264
        %p458 = pneg %p261
        %p459 = pneg %p285
        %p460 = pneg %p282
        %p461 = pneg %p306
        %p462 = pneg %p303
        %p463 = pneg %p327
        %p464 = pneg %p324
        %p465 = pneg %p353
        %p466 = pneg %p350
        %s467 = sand.u32 %s340, 1
        %s468 = scalar_lea.sflag [#allocation5], %s467
        %s469 = sand.u32 %s340, 1
        %s470 = smul.addr %s469, 256
        %s471 = scalar_lea.vmem [#allocation4], %s470
        %p472 = scmp.lt.s32.totalorder %s28, 1
        %s473 = scalar_select %p472, %s28, 1
        %s474 = smul.addr %s473, 32
        %s475 = smul.addr %s474, 8
        %s476 = scalar_lea.vmem %s0, %s475
        %p477 = scmp.lt.s32.totalorder %s28, 1
        %s478 = scalar_select %p477, %s28, 1
        %s479 = scalar_lea.vmem %s1, %s478
        %v481 = vld [vmem:[%s476] sm:$0xff]
        %v482 = vld [vmem:[%s476 + $0x8] sm:$0xff]
        %v483 = vld [vmem:[%s476 + $0x10] sm:$0xff]
        %v484 = vld [vmem:[%s476 + $0x18] sm:$0xff]
        %v485 = vld [vmem:[%s476 + $0x20] sm:$0xff]
        %v486 = vld [vmem:[%s476 + $0x28] sm:$0xff]
        %v487 = vld [vmem:[%s476 + $0x30] sm:$0xff]
        %v488 = vld [vmem:[%s476 + $0x38] sm:$0xff]
        %v489 = vld [vmem:[%s476 + $0x40] sm:$0xff]
        %v490 = vld [vmem:[%s476 + $0x48] sm:$0xff]
        %v491 = vld [vmem:[%s476 + $0x50] sm:$0xff]
        %v492 = vld [vmem:[%s476 + $0x58] sm:$0xff]
        %v493 = vld [vmem:[%s476 + $0x60] sm:$0xff]
        %v494 = vld [vmem:[%s476 + $0x68] sm:$0xff]
        %v495 = vld [vmem:[%s476 + $0x70] sm:$0xff]
        %v496 = vld [vmem:[%s476 + $0x78] sm:$0xff]
        %v497 = vld [vmem:[%s476 + $0x80] sm:$0xff]
        %v498 = vld [vmem:[%s476 + $0x88] sm:$0xff]
        %v499 = vld [vmem:[%s476 + $0x90] sm:$0xff]
        %v500 = vld [vmem:[%s476 + $0x98] sm:$0xff]
        %v501 = vld [vmem:[%s476 + $0xa0] sm:$0xff]
        %v502 = vld [vmem:[%s476 + $0xa8] sm:$0xff]
        %v503 = vld [vmem:[%s476 + $0xb0] sm:$0xff]
        %v504 = vld [vmem:[%s476 + $0xb8] sm:$0xff]
        %v505 = vld [vmem:[%s476 + $0xc0] sm:$0xff]
        %v506 = vld [vmem:[%s476 + $0xc8] sm:$0xff]
        %v507 = vld [vmem:[%s476 + $0xd0] sm:$0xff]
        %v508 = vld [vmem:[%s476 + $0xd8] sm:$0xff]
        %v509 = vld [vmem:[%s476 + $0xe0] sm:$0xff]
        %v510 = vld [vmem:[%s476 + $0xe8] sm:$0xff]
        %v511 = vld [vmem:[%s476 + $0xf0] sm:$0xff]
        %v512 = vld [vmem:[%s476 + $0xf8] sm:$0xff]
        %513 = vmatprep.subr.mxu0 0.0
        %514 = vmatpush1.msra.mxu0 %v496
        %515 = vmatprep.subr.mxu0 0.0
        %516 = vmatpush1.msra.mxu0 %v495
        %517 = vmatprep.subr.mxu0 0.0
        %518 = vmatpush1.msra.mxu0 %v494
        %519 = vmatprep.subr.mxu0 0.0
        %520 = vmatpush1.msra.mxu0 %v493
        %521 = vmatprep.subr.mxu0 0.0
        %522 = vmatpush1.msra.mxu0 %v492
        %523 = vmatprep.subr.mxu0 0.0
        %524 = vmatpush1.msra.mxu0 %v491
        %525 = vmatprep.subr.mxu0 0.0
        %526 = vmatpush1.msra.mxu0 %v490
        %527 = vmatprep.subr.mxu0 0.0
        %528 = vmatpush1.msra.mxu0 %v489
        %529 = vmatprep.subr.mxu0 0.0
        %530 = vmatpush1.msra.mxu0 %v488
        %531 = vmatprep.subr.mxu0 0.0
        %532 = vmatpush1.msra.mxu0 %v487
        %533 = vmatprep.subr.mxu0 0.0
        %534 = vmatpush1.msra.mxu0 %v486
        %535 = vmatprep.subr.mxu0 0.0
        %536 = vmatpush1.msra.mxu0 %v485
        %537 = vmatprep.subr.mxu0 0.0
        %538 = vmatpush1.msra.mxu0 %v484
        %539 = vmatprep.subr.mxu0 0.0
        %540 = vmatpush1.msra.mxu0 %v483
        %541 = vmatprep.subr.mxu0 0.0
        %542 = vmatpush1.msra.mxu0 %v482
        %543 = vmatprep.subr.mxu0 0.0
        %544 = vmatpush1.msra.mxu0 %v481
        %545 = vmatprep.subr.mxu0 0.0
        %546 = vmatpush2.msra.mxu0 %v512
        %547 = vmatprep.subr.mxu0 0.0
        %548 = vmatpush2.msra.mxu0 %v511
        %549 = vmatprep.subr.mxu0 0.0
        %550 = vmatpush2.msra.mxu0 %v510
        %551 = vmatprep.subr.mxu0 0.0
        %552 = vmatpush2.msra.mxu0 %v509
        %553 = vmatprep.subr.mxu0 0.0
        %554 = vmatpush2.msra.mxu0 %v508
        %555 = vmatprep.subr.mxu0 0.0
        %556 = vmatpush2.msra.mxu0 %v507
        %557 = vmatprep.subr.mxu0 0.0
        %558 = vmatpush2.msra.mxu0 %v506
        %559 = vmatprep.subr.mxu0 0.0
        %560 = vmatpush2.msra.mxu0 %v505
        %561 = vmatprep.subr.mxu0 0.0
        %562 = vmatpush2.msra.mxu0 %v504
        %563 = vmatprep.subr.mxu0 0.0
        %564 = vmatpush2.msra.mxu0 %v503
        %565 = vmatprep.subr.mxu0 0.0
        %566 = vmatpush2.msra.mxu0 %v502
        %567 = vmatprep.subr.mxu0 0.0
        %568 = vmatpush2.msra.mxu0 %v501
        %569 = vmatprep.subr.mxu0 0.0
        %570 = vmatpush2.msra.mxu0 %v500
        %571 = vmatprep.subr.mxu0 0.0
        %572 = vmatpush2.msra.mxu0 %v499
        %573 = vmatprep.subr.mxu0 0.0
        %574 = vmatpush2.msra.mxu0 %v498
        %575 = vmatprep.subr.mxu0 0.0
        %576 = vmatpush2.msra.mxu0 %v497
        %577 = vmatprep.mubr.f32.mxu0 1.0
        %578 = vmatmul.mubr.f32.gmra.mxu0 1.0
        %v579 = vpop.f32.mrf.mxu0
        %v580 = vadd.f32 0.0, %v579
        %v581 = vpop.f32.mrf.mxu0
        %582 = vdwg.mxu0
        %v583 = vmul.f32 %v481, %v481
        %v584 = vmul.f32 %v482, %v482
        %v585 = vmul.f32 %v483, %v483
        %v586 = vmul.f32 %v484, %v484
        %v587 = vmul.f32 %v485, %v485
        %v588 = vmul.f32 %v486, %v486
        %v589 = vmul.f32 %v487, %v487
        %v590 = vmul.f32 %v488, %v488
        %v591 = vmul.f32 %v489, %v489
        %v592 = vmul.f32 %v490, %v490
        %v593 = vmul.f32 %v491, %v491
        %v594 = vmul.f32 %v492, %v492
        %v595 = vmul.f32 %v493, %v493
        %v596 = vmul.f32 %v494, %v494
        %v597 = vmul.f32 %v495, %v495
        %v598 = vmul.f32 %v496, %v496
        %v599 = vmul.f32 %v497, %v497
        %v600 = vmul.f32 %v498, %v498
        %v601 = vmul.f32 %v499, %v499
        %v602 = vmul.f32 %v500, %v500
        %v603 = vmul.f32 %v501, %v501
        %v604 = vmul.f32 %v502, %v502
        %v605 = vmul.f32 %v503, %v503
        %v606 = vmul.f32 %v504, %v504
        %v607 = vmul.f32 %v505, %v505
        %v608 = vmul.f32 %v506, %v506
        %v609 = vmul.f32 %v507, %v507
        %v610 = vmul.f32 %v508, %v508
        %v611 = vmul.f32 %v509, %v509
        %v612 = vmul.f32 %v510, %v510
        %v613 = vmul.f32 %v511, %v511
        %v614 = vmul.f32 %v512, %v512
        %615 = vmatprep.subr.mxu0 0.0
        %616 = vmatpush1.msra.mxu0 %v598
        %617 = vmatprep.subr.mxu0 0.0
        %618 = vmatpush1.msra.mxu0 %v597
        %619 = vmatprep.subr.mxu0 0.0
        %620 = vmatpush1.msra.mxu0 %v596
        %621 = vmatprep.subr.mxu0 0.0
        %622 = vmatpush1.msra.mxu0 %v595
        %623 = vmatprep.subr.mxu0 0.0
        %624 = vmatpush1.msra.mxu0 %v594
        %625 = vmatprep.subr.mxu0 0.0
        %626 = vmatpush1.msra.mxu0 %v593
        %627 = vmatprep.subr.mxu0 0.0
        %628 = vmatpush1.msra.mxu0 %v592
        %629 = vmatprep.subr.mxu0 0.0
        %630 = vmatpush1.msra.mxu0 %v591
        %631 = vmatprep.subr.mxu0 0.0
        %632 = vmatpush1.msra.mxu0 %v590
        %633 = vmatprep.subr.mxu0 0.0
        %634 = vmatpush1.msra.mxu0 %v589
        %635 = vmatprep.subr.mxu0 0.0
        %636 = vmatpush1.msra.mxu0 %v588
        %637 = vmatprep.subr.mxu0 0.0
        %638 = vmatpush1.msra.mxu0 %v587
        %639 = vmatprep.subr.mxu0 0.0
        %640 = vmatpush1.msra.mxu0 %v586
        %641 = vmatprep.subr.mxu0 0.0
        %642 = vmatpush1.msra.mxu0 %v585
        %643 = vmatprep.subr.mxu0 0.0
        %644 = vmatpush1.msra.mxu0 %v584
        %645 = vmatprep.subr.mxu0 0.0
        %646 = vmatpush1.msra.mxu0 %v583
        %647 = vmatprep.subr.mxu0 0.0
        %648 = vmatpush2.msra.mxu0 %v614
        %649 = vmatprep.subr.mxu0 0.0
        %650 = vmatpush2.msra.mxu0 %v613
        %651 = vmatprep.subr.mxu0 0.0
        %652 = vmatpush2.msra.mxu0 %v612
        %653 = vmatprep.subr.mxu0 0.0
        %654 = vmatpush2.msra.mxu0 %v611
        %655 = vmatprep.subr.mxu0 0.0
        %656 = vmatpush2.msra.mxu0 %v610
        %657 = vmatprep.subr.mxu0 0.0
        %658 = vmatpush2.msra.mxu0 %v609
        %659 = vmatprep.subr.mxu0 0.0
        %660 = vmatpush2.msra.mxu0 %v608
        %661 = vmatprep.subr.mxu0 0.0
        %662 = vmatpush2.msra.mxu0 %v607
        %663 = vmatprep.subr.mxu0 0.0
        %664 = vmatpush2.msra.mxu0 %v606
        %665 = vmatprep.subr.mxu0 0.0
        %666 = vmatpush2.msra.mxu0 %v605
        %667 = vmatprep.subr.mxu0 0.0
        %668 = vmatpush2.msra.mxu0 %v604
        %669 = vmatprep.subr.mxu0 0.0
        %670 = vmatpush2.msra.mxu0 %v603
        %671 = vmatprep.subr.mxu0 0.0
        %672 = vmatpush2.msra.mxu0 %v602
        %673 = vmatprep.subr.mxu0 0.0
        %674 = vmatpush2.msra.mxu0 %v601
        %675 = vmatprep.subr.mxu0 0.0
        %676 = vmatpush2.msra.mxu0 %v600
        %677 = vmatprep.subr.mxu0 0.0
        %678 = vmatpush2.msra.mxu0 %v599
        %679 = vmatprep.mubr.f32.mxu0 1.0
        %680 = vmatmul.mubr.f32.gmra.mxu0 1.0
        %v681 = vpop.f32.mrf.mxu0
        %v682 = vadd.f32 0.0, %v681
        %v683 = vpop.f32.mrf.mxu0
        %684 = vdwg.mxu0
        %v685 = vld [vmem:[%s2] sm:$0xff]
        %v686 = vld [vmem:[%s2 + $0x8] sm:$0xff]
        %v687 = vld [vmem:[%s2 + $0x10] sm:$0xff]
        %v688 = vld [vmem:[%s2 + $0x18] sm:$0xff]
        %v689 = vld [vmem:[%s2 + $0x20] sm:$0xff]
        %v690 = vld [vmem:[%s2 + $0x28] sm:$0xff]
        %v691 = vld [vmem:[%s2 + $0x30] sm:$0xff]
        %v692 = vld [vmem:[%s2 + $0x38] sm:$0xff]
        %vm693 = vcmask 523264
        %v695 = vsel %vm693, %v580, 0
        %697 = vmatprep.subr.mxu0 0.0
        %698 = vmatpush1.msra.mxu0 0.0
        %699 = vmatprep.subr.mxu0 0.0
        %700 = vmatpush1.msra.mxu0 0.0
        %701 = vmatprep.subr.mxu0 0.0
        %702 = vmatpush1.msra.mxu0 0.0
        %703 = vmatprep.subr.mxu0 0.0
        %704 = vmatpush1.msra.mxu0 0.0
        %705 = vmatprep.subr.mxu0 0.0
        %706 = vmatpush1.msra.mxu0 0.0
        %707 = vmatprep.subr.mxu0 0.0
        %708 = vmatpush1.msra.mxu0 0.0
        %709 = vmatprep.subr.mxu0 0.0
        %710 = vmatpush1.msra.mxu0 0.0
        %711 = vmatprep.subr.mxu0 0.0
        %712 = vmatpush1.msra.mxu0 0.0
        %713 = vmatprep.subr.mxu0 0.0
        %714 = vmatpush1.msra.mxu0 %v692
        %715 = vmatprep.subr.mxu0 0.0
        %716 = vmatpush1.msra.mxu0 %v691
        %717 = vmatprep.subr.mxu0 0.0
        %718 = vmatpush1.msra.mxu0 %v690
        %719 = vmatprep.subr.mxu0 0.0
        %720 = vmatpush1.msra.mxu0 %v689
        %721 = vmatprep.subr.mxu0 0.0
        %722 = vmatpush1.msra.mxu0 %v688
        %723 = vmatprep.subr.mxu0 0.0
        %724 = vmatpush1.msra.mxu0 %v687
        %725 = vmatprep.subr.mxu0 0.0
        %726 = vmatpush1.msra.mxu0 %v686
        %727 = vmatprep.subr.mxu0 0.0
        %728 = vmatpush1.msra.mxu0 %v685
        %729 = vmatprep.subr.mxu0 0.0
        %730 = vmatpush2.msra.mxu0 0.0
        %731 = vmatprep.subr.mxu0 0.0
        %732 = vmatpush2.msra.mxu0 0.0
        %733 = vmatprep.subr.mxu0 0.0
        %734 = vmatpush2.msra.mxu0 0.0
        %735 = vmatprep.subr.mxu0 0.0
        %736 = vmatpush2.msra.mxu0 0.0
        %737 = vmatprep.subr.mxu0 0.0
        %738 = vmatpush2.msra.mxu0 0.0
        %739 = vmatprep.subr.mxu0 0.0
        %740 = vmatpush2.msra.mxu0 0.0
        %741 = vmatprep.subr.mxu0 0.0
        %742 = vmatpush2.msra.mxu0 0.0
        %743 = vmatprep.subr.mxu0 0.0
        %744 = vmatpush2.msra.mxu0 0.0
        %745 = vmatprep.subr.mxu0 0.0
        %746 = vmatpush2.msra.mxu0 0.0
        %747 = vmatprep.subr.mxu0 0.0
        %748 = vmatpush2.msra.mxu0 0.0
        %749 = vmatprep.subr.mxu0 0.0
        %750 = vmatpush2.msra.mxu0 0.0
        %751 = vmatprep.subr.mxu0 0.0
        %752 = vmatpush2.msra.mxu0 0.0
        %753 = vmatprep.subr.mxu0 0.0
        %754 = vmatpush2.msra.mxu0 0.0
        %755 = vmatprep.subr.mxu0 0.0
        %756 = vmatpush2.msra.mxu0 0.0
        %757 = vmatprep.subr.mxu0 0.0
        %758 = vmatpush2.msra.mxu0 0.0
        %759 = vmatprep.subr.mxu0 0.0
        %760 = vmatpush2.msra.mxu0 0.0
        %761 = vmatprep.mubr.f32.mxu0 0.0
        %762 = vmatmul.mubr.f32.gmra.mxu0 %v695
        %v763 = vpop.f32.mrf.mxu0
        %v764 = vadd.f32 0.0, %v763
        %v765 = vpop.f32.mrf.mxu0
        %766 = vdwg.mxu0
        %v768 = vsel %vm693, %v682, 0
        %770 = vmatprep.subr.mxu0 0.0
        %771 = vmatpush1.msra.mxu0 0.0
        %772 = vmatprep.subr.mxu0 0.0
        %773 = vmatpush1.msra.mxu0 0.0
        %774 = vmatprep.subr.mxu0 0.0
        %775 = vmatpush1.msra.mxu0 0.0
        %776 = vmatprep.subr.mxu0 0.0
        %777 = vmatpush1.msra.mxu0 0.0
        %778 = vmatprep.subr.mxu0 0.0
        %779 = vmatpush1.msra.mxu0 0.0
        %780 = vmatprep.subr.mxu0 0.0
        %781 = vmatpush1.msra.mxu0 0.0
        %782 = vmatprep.subr.mxu0 0.0
        %783 = vmatpush1.msra.mxu0 0.0
        %784 = vmatprep.subr.mxu0 0.0
        %785 = vmatpush1.msra.mxu0 0.0
        %786 = vmatprep.subr.mxu0 0.0
        %787 = vmatpush1.msra.mxu0 %v692
        %788 = vmatprep.subr.mxu0 0.0
        %789 = vmatpush1.msra.mxu0 %v691
        %790 = vmatprep.subr.mxu0 0.0
        %791 = vmatpush1.msra.mxu0 %v690
        %792 = vmatprep.subr.mxu0 0.0
        %793 = vmatpush1.msra.mxu0 %v689
        %794 = vmatprep.subr.mxu0 0.0
        %795 = vmatpush1.msra.mxu0 %v688
        %796 = vmatprep.subr.mxu0 0.0
        %797 = vmatpush1.msra.mxu0 %v687
        %798 = vmatprep.subr.mxu0 0.0
        %799 = vmatpush1.msra.mxu0 %v686
        %800 = vmatprep.subr.mxu0 0.0
        %801 = vmatpush1.msra.mxu0 %v685
        %802 = vmatprep.subr.mxu0 0.0
        %803 = vmatpush2.msra.mxu0 0.0
        %804 = vmatprep.subr.mxu0 0.0
        %805 = vmatpush2.msra.mxu0 0.0
        %806 = vmatprep.subr.mxu0 0.0
        %807 = vmatpush2.msra.mxu0 0.0
        %808 = vmatprep.subr.mxu0 0.0
        %809 = vmatpush2.msra.mxu0 0.0
        %810 = vmatprep.subr.mxu0 0.0
        %811 = vmatpush2.msra.mxu0 0.0
        %812 = vmatprep.subr.mxu0 0.0
        %813 = vmatpush2.msra.mxu0 0.0
        %814 = vmatprep.subr.mxu0 0.0
        %815 = vmatpush2.msra.mxu0 0.0
        %816 = vmatprep.subr.mxu0 0.0
        %817 = vmatpush2.msra.mxu0 0.0
        %818 = vmatprep.subr.mxu0 0.0
        %819 = vmatpush2.msra.mxu0 0.0
        %820 = vmatprep.subr.mxu0 0.0
        %821 = vmatpush2.msra.mxu0 0.0
        %822 = vmatprep.subr.mxu0 0.0
        %823 = vmatpush2.msra.mxu0 0.0
        %824 = vmatprep.subr.mxu0 0.0
        %825 = vmatpush2.msra.mxu0 0.0
        %826 = vmatprep.subr.mxu0 0.0
        %827 = vmatpush2.msra.mxu0 0.0
        %828 = vmatprep.subr.mxu0 0.0
        %829 = vmatpush2.msra.mxu0 0.0
        %830 = vmatprep.subr.mxu0 0.0
        %831 = vmatpush2.msra.mxu0 0.0
        %832 = vmatprep.subr.mxu0 0.0
        %833 = vmatpush2.msra.mxu0 0.0
        %834 = vmatprep.mubr.f32.mxu0 0.0
        %835 = vmatmul.mubr.f32.gmra.mxu0 %v768
        %v836 = vpop.f32.mrf.mxu0
        %v837 = vadd.f32 0.0, %v836
        %v838 = vpop.f32.mrf.mxu0
        %839 = vdwg.mxu0
        %v840 = vrcp.pop 512.0
        %v841 = vmul.f32 %v764, %v840
        %v842 = vmul.f32 %v837, %v840
        %v843 = vmul.f32 %v841, %v841
        %v844 = vsub.f32 %v842, %v843
        %v845 = vadd.f32 %v844, 1e-05
        %v846 = vrsqrt.pop %v845
        %v847 = vld [vmem:[%s3] sm:$0xff]
        %v848 = vld [vmem:[%s3 + $0x8] sm:$0xff]
        %v849 = vld [vmem:[%s3 + $0x10] sm:$0xff]
        %v850 = vld [vmem:[%s3 + $0x18] sm:$0xff]
        %vm851 = vcmask 261120
        %v853 = vsel %vm851, %v841, 0
        %855 = vmatprep.subr.mxu0 0.0
        %856 = vmatpush1.msra.mxu0 0.0
        %857 = vmatprep.subr.mxu0 0.0
        %858 = vmatpush1.msra.mxu0 0.0
        %859 = vmatprep.subr.mxu0 0.0
        %860 = vmatpush1.msra.mxu0 0.0
        %861 = vmatprep.subr.mxu0 0.0
        %862 = vmatpush1.msra.mxu0 0.0
        %863 = vmatprep.subr.mxu0 0.0
        %864 = vmatpush1.msra.mxu0 0.0
        %865 = vmatprep.subr.mxu0 0.0
        %866 = vmatpush1.msra.mxu0 0.0
        %867 = vmatprep.subr.mxu0 0.0
        %868 = vmatpush1.msra.mxu0 0.0
        %869 = vmatprep.subr.mxu0 0.0
        %870 = vmatpush1.msra.mxu0 0.0
        %871 = vmatprep.subr.mxu0 0.0
        %872 = vmatpush1.msra.mxu0 0.0
        %873 = vmatprep.subr.mxu0 0.0
        %874 = vmatpush1.msra.mxu0 0.0
        %875 = vmatprep.subr.mxu0 0.0
        %876 = vmatpush1.msra.mxu0 0.0
        %877 = vmatprep.subr.mxu0 0.0
        %878 = vmatpush1.msra.mxu0 0.0
        %879 = vmatprep.subr.mxu0 0.0
        %880 = vmatpush1.msra.mxu0 %v850
        %881 = vmatprep.subr.mxu0 0.0
        %882 = vmatpush1.msra.mxu0 %v849
        %883 = vmatprep.subr.mxu0 0.0
        %884 = vmatpush1.msra.mxu0 %v848
        %885 = vmatprep.subr.mxu0 0.0
        %886 = vmatpush1.msra.mxu0 %v847
        %887 = vmatprep.subr.mxu0 0.0
        %888 = vmatpush2.msra.mxu0 0.0
        %889 = vmatprep.subr.mxu0 0.0
        %890 = vmatpush2.msra.mxu0 0.0
        %891 = vmatprep.subr.mxu0 0.0
        %892 = vmatpush2.msra.mxu0 0.0
        %893 = vmatprep.subr.mxu0 0.0
        %894 = vmatpush2.msra.mxu0 0.0
        %895 = vmatprep.subr.mxu0 0.0
        %896 = vmatpush2.msra.mxu0 0.0
        %897 = vmatprep.subr.mxu0 0.0
        %898 = vmatpush2.msra.mxu0 0.0
        %899 = vmatprep.subr.mxu0 0.0
        %900 = vmatpush2.msra.mxu0 0.0
        %901 = vmatprep.subr.mxu0 0.0
        %902 = vmatpush2.msra.mxu0 0.0
        %903 = vmatprep.subr.mxu0 0.0
        %904 = vmatpush2.msra.mxu0 0.0
        %905 = vmatprep.subr.mxu0 0.0
        %906 = vmatpush2.msra.mxu0 0.0
        %907 = vmatprep.subr.mxu0 0.0
        %908 = vmatpush2.msra.mxu0 0.0
        %909 = vmatprep.subr.mxu0 0.0
        %910 = vmatpush2.msra.mxu0 0.0
        %911 = vmatprep.subr.mxu0 0.0
        %912 = vmatpush2.msra.mxu0 0.0
        %913 = vmatprep.subr.mxu0 0.0
        %914 = vmatpush2.msra.mxu0 0.0
        %915 = vmatprep.subr.mxu0 0.0
        %916 = vmatpush2.msra.mxu0 0.0
        %917 = vmatprep.subr.mxu0 0.0
        %918 = vmatpush2.msra.mxu0 0.0
        %919 = vmatprep.mubr.f32.mxu0 0.0
        %920 = vmatmul.mubr.f32.gmra.mxu0 %v853
        %v921 = vpop.f32.mrf.mxu0
        %v922 = vadd.f32 0.0, %v921
        %v923 = vpop.f32.mrf.mxu0
        %924 = vdwg.mxu0
        %v926 = vsel %vm851, %v846, 0
        %928 = vmatprep.subr.mxu0 0.0
        %929 = vmatpush1.msra.mxu0 0.0
        %930 = vmatprep.subr.mxu0 0.0
        %931 = vmatpush1.msra.mxu0 0.0
        %932 = vmatprep.subr.mxu0 0.0
        %933 = vmatpush1.msra.mxu0 0.0
        %934 = vmatprep.subr.mxu0 0.0
        %935 = vmatpush1.msra.mxu0 0.0
        %936 = vmatprep.subr.mxu0 0.0
        %937 = vmatpush1.msra.mxu0 0.0
        %938 = vmatprep.subr.mxu0 0.0
        %939 = vmatpush1.msra.mxu0 0.0
        %940 = vmatprep.subr.mxu0 0.0
        %941 = vmatpush1.msra.mxu0 0.0
        %942 = vmatprep.subr.mxu0 0.0
        %943 = vmatpush1.msra.mxu0 0.0
        %944 = vmatprep.subr.mxu0 0.0
        %945 = vmatpush1.msra.mxu0 0.0
        %946 = vmatprep.subr.mxu0 0.0
        %947 = vmatpush1.msra.mxu0 0.0
        %948 = vmatprep.subr.mxu0 0.0
        %949 = vmatpush1.msra.mxu0 0.0
        %950 = vmatprep.subr.mxu0 0.0
        %951 = vmatpush1.msra.mxu0 0.0
        %952 = vmatprep.subr.mxu0 0.0
        %953 = vmatpush1.msra.mxu0 %v850
        %954 = vmatprep.subr.mxu0 0.0
        %955 = vmatpush1.msra.mxu0 %v849
        %956 = vmatprep.subr.mxu0 0.0
        %957 = vmatpush1.msra.mxu0 %v848
        %958 = vmatprep.subr.mxu0 0.0
        %959 = vmatpush1.msra.mxu0 %v847
        %960 = vmatprep.subr.mxu0 0.0
        %961 = vmatpush2.msra.mxu0 0.0
        %962 = vmatprep.subr.mxu0 0.0
        %963 = vmatpush2.msra.mxu0 0.0
        %964 = vmatprep.subr.mxu0 0.0
        %965 = vmatpush2.msra.mxu0 0.0
        %966 = vmatprep.subr.mxu0 0.0
        %967 = vmatpush2.msra.mxu0 0.0
        %968 = vmatprep.subr.mxu0 0.0
        %969 = vmatpush2.msra.mxu0 0.0
        %970 = vmatprep.subr.mxu0 0.0
        %971 = vmatpush2.msra.mxu0 0.0
        %972 = vmatprep.subr.mxu0 0.0
        %973 = vmatpush2.msra.mxu0 0.0
        %974 = vmatprep.subr.mxu0 0.0
        %975 = vmatpush2.msra.mxu0 0.0
        %976 = vmatprep.subr.mxu0 0.0
        %977 = vmatpush2.msra.mxu0 0.0
        %978 = vmatprep.subr.mxu0 0.0
        %979 = vmatpush2.msra.mxu0 0.0
        %980 = vmatprep.subr.mxu0 0.0
        %981 = vmatpush2.msra.mxu0 0.0
        %982 = vmatprep.subr.mxu0 0.0
        %983 = vmatpush2.msra.mxu0 0.0
        %984 = vmatprep.subr.mxu0 0.0
        %985 = vmatpush2.msra.mxu0 0.0
        %986 = vmatprep.subr.mxu0 0.0
        %987 = vmatpush2.msra.mxu0 0.0
        %988 = vmatprep.subr.mxu0 0.0
        %989 = vmatpush2.msra.mxu0 0.0
        %990 = vmatprep.subr.mxu0 0.0
        %991 = vmatpush2.msra.mxu0 0.0
        %992 = vmatprep.mubr.f32.mxu0 0.0
        %993 = vmatmul.mubr.f32.gmra.mxu0 %v926
        %v994 = vpop.f32.mrf.mxu0
        %v995 = vadd.f32 0.0, %v994
        %v996 = vpop.f32.mrf.mxu0
        %997 = vdwg.mxu0
        %v998 = vld [vmem:[%s4] sm:$0x1]
        %v999 = vmul.f32 %v995, %v998
        %v1000 = vld [vmem:[%s5] sm:$0x1]
        %v1001 = vmul.f32 %v922, %v999
        %v1002 = vsub.f32 %v1000, %v1001
        %v1003 = vlaneseq
        %v1004 = vshrl.u32 %v1003, 7
        %v1005 = vsub.s32 0, %v1004
        %v1006 = vrot.slane %v999, %v1005
        %v1007 = vmul.f32 %v481, %v1006
        %v1008 = vmul.f32 %v482, %v1006
        %v1009 = vmul.f32 %v483, %v1006
        %v1010 = vmul.f32 %v484, %v1006
        %v1011 = vmul.f32 %v485, %v1006
        %v1012 = vmul.f32 %v486, %v1006
        %v1013 = vmul.f32 %v487, %v1006
        %v1014 = vmul.f32 %v488, %v1006
        %v1015 = vmul.f32 %v489, %v1006
        %v1016 = vmul.f32 %v490, %v1006
        %v1017 = vmul.f32 %v491, %v1006
        %v1018 = vmul.f32 %v492, %v1006
        %v1019 = vmul.f32 %v493, %v1006
        %v1020 = vmul.f32 %v494, %v1006
        %v1021 = vmul.f32 %v495, %v1006
        %v1022 = vmul.f32 %v496, %v1006
        %v1023 = vmul.f32 %v497, %v1006
        %v1024 = vmul.f32 %v498, %v1006
        %v1025 = vmul.f32 %v499, %v1006
        %v1026 = vmul.f32 %v500, %v1006
        %v1027 = vmul.f32 %v501, %v1006
        %v1028 = vmul.f32 %v502, %v1006
        %v1029 = vmul.f32 %v503, %v1006
        %v1030 = vmul.f32 %v504, %v1006
        %v1031 = vmul.f32 %v505, %v1006
        %v1032 = vmul.f32 %v506, %v1006
        %v1033 = vmul.f32 %v507, %v1006
        %v1034 = vmul.f32 %v508, %v1006
        %v1035 = vmul.f32 %v509, %v1006
        %v1036 = vmul.f32 %v510, %v1006
        %v1037 = vmul.f32 %v511, %v1006
        %v1038 = vmul.f32 %v512, %v1006
        %v1040 = vlaneseq
        %v1041 = vshrl.u32 %v1040, 7
        %v1042 = vsub.s32 0, %v1041
        %v1043 = vrot.slane %v1002, %v1042
        %v1045 = vadd.f32 %v1007, %v1043
        %v1046 = vadd.f32 %v1008, %v1043
        %v1047 = vadd.f32 %v1009, %v1043
        %v1048 = vadd.f32 %v1010, %v1043
        %v1049 = vadd.f32 %v1011, %v1043
        %v1050 = vadd.f32 %v1012, %v1043
        %v1051 = vadd.f32 %v1013, %v1043
        %v1052 = vadd.f32 %v1014, %v1043
        %v1053 = vadd.f32 %v1015, %v1043
        %v1054 = vadd.f32 %v1016, %v1043
        %v1055 = vadd.f32 %v1017, %v1043
        %v1056 = vadd.f32 %v1018, %v1043
        %v1057 = vadd.f32 %v1019, %v1043
        %v1058 = vadd.f32 %v1020, %v1043
        %v1059 = vadd.f32 %v1021, %v1043
        %v1060 = vadd.f32 %v1022, %v1043
        %v1061 = vadd.f32 %v1023, %v1043
        %v1062 = vadd.f32 %v1024, %v1043
        %v1063 = vadd.f32 %v1025, %v1043
        %v1064 = vadd.f32 %v1026, %v1043
        %v1065 = vadd.f32 %v1027, %v1043
        %v1066 = vadd.f32 %v1028, %v1043
        %v1067 = vadd.f32 %v1029, %v1043
        %v1068 = vadd.f32 %v1030, %v1043
        %v1069 = vadd.f32 %v1031, %v1043
        %v1070 = vadd.f32 %v1032, %v1043
        %v1071 = vadd.f32 %v1033, %v1043
        %v1072 = vadd.f32 %v1034, %v1043
        %v1073 = vadd.f32 %v1035, %v1043
        %v1074 = vadd.f32 %v1036, %v1043
        %v1075 = vadd.f32 %v1037, %v1043
        %v1076 = vadd.f32 %v1038, %v1043
        %v1077 = vxor.u32 %v1045, 2147483648
        %v1078 = vxor.u32 %v1046, 2147483648
        %v1079 = vxor.u32 %v1047, 2147483648
        %v1080 = vxor.u32 %v1048, 2147483648
        %v1081 = vxor.u32 %v1049, 2147483648
        %v1082 = vxor.u32 %v1050, 2147483648
        %v1083 = vxor.u32 %v1051, 2147483648
        %v1084 = vxor.u32 %v1052, 2147483648
        %v1085 = vxor.u32 %v1053, 2147483648
        %v1086 = vxor.u32 %v1054, 2147483648
        %v1087 = vxor.u32 %v1055, 2147483648
        %v1088 = vxor.u32 %v1056, 2147483648
        %v1089 = vxor.u32 %v1057, 2147483648
        %v1090 = vxor.u32 %v1058, 2147483648
        %v1091 = vxor.u32 %v1059, 2147483648
        %v1092 = vxor.u32 %v1060, 2147483648
        %v1093 = vxor.u32 %v1061, 2147483648
        %v1094 = vxor.u32 %v1062, 2147483648
        %v1095 = vxor.u32 %v1063, 2147483648
        %v1096 = vxor.u32 %v1064, 2147483648
        %v1097 = vxor.u32 %v1065, 2147483648
        %v1098 = vxor.u32 %v1066, 2147483648
        %v1099 = vxor.u32 %v1067, 2147483648
        %v1100 = vxor.u32 %v1068, 2147483648
        %v1101 = vxor.u32 %v1069, 2147483648
        %v1102 = vxor.u32 %v1070, 2147483648
        %v1103 = vxor.u32 %v1071, 2147483648
        %v1104 = vxor.u32 %v1072, 2147483648
        %v1105 = vxor.u32 %v1073, 2147483648
        %v1106 = vxor.u32 %v1074, 2147483648
        %v1107 = vxor.u32 %v1075, 2147483648
        %v1108 = vxor.u32 %v1076, 2147483648
        %v1109 = vmul.f32 %v1077, 1.442695
        %v1110 = vpow.pop %v1109
        %v1111 = vmul.f32 %v1078, 1.442695
        %v1112 = vpow.pop %v1111
        %v1113 = vmul.f32 %v1079, 1.442695
        %v1114 = vpow.pop %v1113
        %v1115 = vmul.f32 %v1080, 1.442695
        %v1116 = vpow.pop %v1115
        %v1117 = vmul.f32 %v1081, 1.442695
        %v1118 = vpow.pop %v1117
        %v1119 = vmul.f32 %v1082, 1.442695
        %v1120 = vpow.pop %v1119
        %v1121 = vmul.f32 %v1083, 1.442695
        %v1122 = vpow.pop %v1121
        %v1123 = vmul.f32 %v1084, 1.442695
        %v1124 = vpow.pop %v1123
        %v1125 = vmul.f32 %v1085, 1.442695
        %v1126 = vpow.pop %v1125
        %v1127 = vmul.f32 %v1086, 1.442695
        %v1128 = vpow.pop %v1127
        %v1129 = vmul.f32 %v1087, 1.442695
        %v1130 = vpow.pop %v1129
        %v1131 = vmul.f32 %v1088, 1.442695
        %v1132 = vpow.pop %v1131
        %v1133 = vmul.f32 %v1089, 1.442695
        %v1134 = vpow.pop %v1133
        %v1135 = vmul.f32 %v1090, 1.442695
        %v1136 = vpow.pop %v1135
        %v1137 = vmul.f32 %v1091, 1.442695
        %v1138 = vpow.pop %v1137
        %v1139 = vmul.f32 %v1092, 1.442695
        %v1140 = vpow.pop %v1139
        %v1141 = vmul.f32 %v1093, 1.442695
        %v1142 = vpow.pop %v1141
        %v1143 = vmul.f32 %v1094, 1.442695
        %v1144 = vpow.pop %v1143
        %v1145 = vmul.f32 %v1095, 1.442695
        %v1146 = vpow.pop %v1145
        %v1147 = vmul.f32 %v1096, 1.442695
        %v1148 = vpow.pop %v1147
        %v1149 = vmul.f32 %v1097, 1.442695
        %v1150 = vpow.pop %v1149
        %v1151 = vmul.f32 %v1098, 1.442695
        %v1152 = vpow.pop %v1151
        %v1153 = vmul.f32 %v1099, 1.442695
        %v1154 = vpow.pop %v1153
        %v1155 = vmul.f32 %v1100, 1.442695
        %v1156 = vpow.pop %v1155
        %v1157 = vmul.f32 %v1101, 1.442695
        %v1158 = vpow.pop %v1157
        %v1159 = vmul.f32 %v1102, 1.442695
        %v1160 = vpow.pop %v1159
        %v1161 = vmul.f32 %v1103, 1.442695
        %v1162 = vpow.pop %v1161
        %v1163 = vmul.f32 %v1104, 1.442695
        %v1164 = vpow.pop %v1163
        %v1165 = vmul.f32 %v1105, 1.442695
        %v1166 = vpow.pop %v1165
        %v1167 = vmul.f32 %v1106, 1.442695
        %v1168 = vpow.pop %v1167
        %v1169 = vmul.f32 %v1107, 1.442695
        %v1170 = vpow.pop %v1169
        %v1171 = vmul.f32 %v1108, 1.442695
        %v1172 = vpow.pop %v1171
        %v1173 = vadd.f32 %v1110, 1.0
        %v1174 = vadd.f32 %v1112, 1.0
        %v1175 = vadd.f32 %v1114, 1.0
        %v1176 = vadd.f32 %v1116, 1.0
        %v1177 = vadd.f32 %v1118, 1.0
        %v1178 = vadd.f32 %v1120, 1.0
        %v1179 = vadd.f32 %v1122, 1.0
        %v1180 = vadd.f32 %v1124, 1.0
        %v1181 = vadd.f32 %v1126, 1.0
        %v1182 = vadd.f32 %v1128, 1.0
        %v1183 = vadd.f32 %v1130, 1.0
        %v1184 = vadd.f32 %v1132, 1.0
        %v1185 = vadd.f32 %v1134, 1.0
        %v1186 = vadd.f32 %v1136, 1.0
        %v1187 = vadd.f32 %v1138, 1.0
        %v1188 = vadd.f32 %v1140, 1.0
        %v1189 = vadd.f32 %v1142, 1.0
        %v1190 = vadd.f32 %v1144, 1.0
        %v1191 = vadd.f32 %v1146, 1.0
        %v1192 = vadd.f32 %v1148, 1.0
        %v1193 = vadd.f32 %v1150, 1.0
        %v1194 = vadd.f32 %v1152, 1.0
        %v1195 = vadd.f32 %v1154, 1.0
        %v1196 = vadd.f32 %v1156, 1.0
        %v1197 = vadd.f32 %v1158, 1.0
        %v1198 = vadd.f32 %v1160, 1.0
        %v1199 = vadd.f32 %v1162, 1.0
        %v1200 = vadd.f32 %v1164, 1.0
        %v1201 = vadd.f32 %v1166, 1.0
        %v1202 = vadd.f32 %v1168, 1.0
        %v1203 = vadd.f32 %v1170, 1.0
        %v1204 = vadd.f32 %v1172, 1.0
        %v1205 = vrcp.pop %v1173
        %v1206 = vmul.f32 1.0, %v1205
        %v1207 = vrcp.pop %v1174
        %v1208 = vmul.f32 1.0, %v1207
        %v1209 = vrcp.pop %v1175
        %v1210 = vmul.f32 1.0, %v1209
        %v1211 = vrcp.pop %v1176
        %v1212 = vmul.f32 1.0, %v1211
        %v1213 = vrcp.pop %v1177
        %v1214 = vmul.f32 1.0, %v1213
        %v1215 = vrcp.pop %v1178
        %v1216 = vmul.f32 1.0, %v1215
        %v1217 = vrcp.pop %v1179
        %v1218 = vmul.f32 1.0, %v1217
        %v1219 = vrcp.pop %v1180
        %v1220 = vmul.f32 1.0, %v1219
        %v1221 = vrcp.pop %v1181
        %v1222 = vmul.f32 1.0, %v1221
        %v1223 = vrcp.pop %v1182
        %v1224 = vmul.f32 1.0, %v1223
        %v1225 = vrcp.pop %v1183
        %v1226 = vmul.f32 1.0, %v1225
        %v1227 = vrcp.pop %v1184
        %v1228 = vmul.f32 1.0, %v1227
        %v1229 = vrcp.pop %v1185
        %v1230 = vmul.f32 1.0, %v1229
        %v1231 = vrcp.pop %v1186
        %v1232 = vmul.f32 1.0, %v1231
        %v1233 = vrcp.pop %v1187
        %v1234 = vmul.f32 1.0, %v1233
        %v1235 = vrcp.pop %v1188
        %v1236 = vmul.f32 1.0, %v1235
        %v1237 = vrcp.pop %v1189
        %v1238 = vmul.f32 1.0, %v1237
        %v1239 = vrcp.pop %v1190
        %v1240 = vmul.f32 1.0, %v1239
        %v1241 = vrcp.pop %v1191
        %v1242 = vmul.f32 1.0, %v1241
        %v1243 = vrcp.pop %v1192
        %v1244 = vmul.f32 1.0, %v1243
        %v1245 = vrcp.pop %v1193
        %v1246 = vmul.f32 1.0, %v1245
        %v1247 = vrcp.pop %v1194
        %v1248 = vmul.f32 1.0, %v1247
        %v1249 = vrcp.pop %v1195
        %v1250 = vmul.f32 1.0, %v1249
        %v1251 = vrcp.pop %v1196
        %v1252 = vmul.f32 1.0, %v1251
        %v1253 = vrcp.pop %v1197
        %v1254 = vmul.f32 1.0, %v1253
        %v1255 = vrcp.pop %v1198
        %v1256 = vmul.f32 1.0, %v1255
        %v1257 = vrcp.pop %v1199
        %v1258 = vmul.f32 1.0, %v1257
        %v1259 = vrcp.pop %v1200
        %v1260 = vmul.f32 1.0, %v1259
        %v1261 = vrcp.pop %v1201
        %v1262 = vmul.f32 1.0, %v1261
        %v1263 = vrcp.pop %v1202
        %v1264 = vmul.f32 1.0, %v1263
        %v1265 = vrcp.pop %v1203
        %v1266 = vmul.f32 1.0, %v1265
        %v1267 = vrcp.pop %v1204
        %v1268 = vmul.f32 1.0, %v1267
        %v1269 = vmul.f32 %v1045, %v1206
        %v1270 = vmul.f32 %v1046, %v1208
        %v1271 = vmul.f32 %v1047, %v1210
        %v1272 = vmul.f32 %v1048, %v1212
        %v1273 = vmul.f32 %v1049, %v1214
        %v1274 = vmul.f32 %v1050, %v1216
        %v1275 = vmul.f32 %v1051, %v1218
        %v1276 = vmul.f32 %v1052, %v1220
        %v1277 = vmul.f32 %v1053, %v1222
        %v1278 = vmul.f32 %v1054, %v1224
        %v1279 = vmul.f32 %v1055, %v1226
        %v1280 = vmul.f32 %v1056, %v1228
        %v1281 = vmul.f32 %v1057, %v1230
        %v1282 = vmul.f32 %v1058, %v1232
        %v1283 = vmul.f32 %v1059, %v1234
        %v1284 = vmul.f32 %v1060, %v1236
        %v1285 = vmul.f32 %v1061, %v1238
        %v1286 = vmul.f32 %v1062, %v1240
        %v1287 = vmul.f32 %v1063, %v1242
        %v1288 = vmul.f32 %v1064, %v1244
        %v1289 = vmul.f32 %v1065, %v1246
        %v1290 = vmul.f32 %v1066, %v1248
        %v1291 = vmul.f32 %v1067, %v1250
        %v1292 = vmul.f32 %v1068, %v1252
        %v1293 = vmul.f32 %v1069, %v1254
        %v1294 = vmul.f32 %v1070, %v1256
        %v1295 = vmul.f32 %v1071, %v1258
        %v1296 = vmul.f32 %v1072, %v1260
        %v1297 = vmul.f32 %v1073, %v1262
        %v1298 = vmul.f32 %v1074, %v1264
        %v1299 = vmul.f32 %v1075, %v1266
        %v1300 = vmul.f32 %v1076, %v1268
        %v1301 = vpack.c.bf16 %v1270, %v1269
        %v1302 = vpack.c.bf16 %v1272, %v1271
        %v1303 = vpack.c.bf16 %v1274, %v1273
        %v1304 = vpack.c.bf16 %v1276, %v1275
        %v1305 = vpack.c.bf16 %v1278, %v1277
        %v1306 = vpack.c.bf16 %v1280, %v1279
        %v1307 = vpack.c.bf16 %v1282, %v1281
        %v1308 = vpack.c.bf16 %v1284, %v1283
        %v1309 = vpack.c.bf16 %v1286, %v1285
        %v1310 = vpack.c.bf16 %v1288, %v1287
        %v1311 = vpack.c.bf16 %v1290, %v1289
        %v1312 = vpack.c.bf16 %v1292, %v1291
        %v1313 = vpack.c.bf16 %v1294, %v1293
        %v1314 = vpack.c.bf16 %v1296, %v1295
        %v1315 = vpack.c.bf16 %v1298, %v1297
        %v1316 = vpack.c.bf16 %v1300, %v1299
        %v1318 = vshrl.u32 %v1301, 16
        %v1320 = vrot.slane %v1318, 7
        %v1321 = vshll.u32 %v1301, 16
        %v1323 = vor.u32 %v1320, %v1321
        %v1325 = vshrl.u32 %v1302, 16
        %v1327 = vrot.slane %v1325, 7
        %v1328 = vshll.u32 %v1302, 16
        %v1330 = vor.u32 %v1327, %v1328
        %v1332 = vshrl.u32 %v1303, 16
        %v1334 = vrot.slane %v1332, 7
        %v1335 = vshll.u32 %v1303, 16
        %v1337 = vor.u32 %v1334, %v1335
        %v1339 = vshrl.u32 %v1304, 16
        %v1341 = vrot.slane %v1339, 7
        %v1342 = vshll.u32 %v1304, 16
        %v1344 = vor.u32 %v1341, %v1342
        %v1346 = vshrl.u32 %v1305, 16
        %v1348 = vrot.slane %v1346, 7
        %v1349 = vshll.u32 %v1305, 16
        %v1351 = vor.u32 %v1348, %v1349
        %v1353 = vshrl.u32 %v1306, 16
        %v1355 = vrot.slane %v1353, 7
        %v1356 = vshll.u32 %v1306, 16
        %v1358 = vor.u32 %v1355, %v1356
        %v1360 = vshrl.u32 %v1307, 16
        %v1362 = vrot.slane %v1360, 7
        %v1363 = vshll.u32 %v1307, 16
        %v1365 = vor.u32 %v1362, %v1363
        %v1367 = vshrl.u32 %v1308, 16
        %v1369 = vrot.slane %v1367, 7
        %v1370 = vshll.u32 %v1308, 16
        %v1372 = vor.u32 %v1369, %v1370
        %v1374 = vshrl.u32 %v1309, 16
        %v1376 = vrot.slane %v1374, 7
        %v1377 = vshll.u32 %v1309, 16
        %v1379 = vor.u32 %v1376, %v1377
        %v1381 = vshrl.u32 %v1310, 16
        %v1383 = vrot.slane %v1381, 7
        %v1384 = vshll.u32 %v1310, 16
        %v1386 = vor.u32 %v1383, %v1384
        %v1388 = vshrl.u32 %v1311, 16
        %v1390 = vrot.slane %v1388, 7
        %v1391 = vshll.u32 %v1311, 16
        %v1393 = vor.u32 %v1390, %v1391
        %v1395 = vshrl.u32 %v1312, 16
        %v1397 = vrot.slane %v1395, 7
        %v1398 = vshll.u32 %v1312, 16
        %v1400 = vor.u32 %v1397, %v1398
        %v1402 = vshrl.u32 %v1313, 16
        %v1404 = vrot.slane %v1402, 7
        %v1405 = vshll.u32 %v1313, 16
        %v1407 = vor.u32 %v1404, %v1405
        %v1409 = vshrl.u32 %v1314, 16
        %v1411 = vrot.slane %v1409, 7
        %v1412 = vshll.u32 %v1314, 16
        %v1414 = vor.u32 %v1411, %v1412
        %v1416 = vshrl.u32 %v1315, 16
        %v1418 = vrot.slane %v1416, 7
        %v1419 = vshll.u32 %v1315, 16
        %v1421 = vor.u32 %v1418, %v1419
        %v1423 = vshrl.u32 %v1316, 16
        %v1425 = vrot.slane %v1423, 7
        %v1426 = vshll.u32 %v1316, 16
        %v1428 = vor.u32 %v1425, %v1426
        %vm1445 = vcmask 1040384
        %vm1446 = vsmask.f32 256
        %vm1447 = vmand %vm1445, %vm1446
        %v1448 = vsel %vm1447, 0, %v1323
        %v1449 = vsel %vm1447, 0, %v1330
        %v1450 = vsel %vm1447, 0, %v1337
        %v1451 = vsel %vm1447, 0, %v1344
        %v1452 = vsel %vm1447, 0, %v1351
        %v1453 = vsel %vm1447, 0, %v1358
        %v1454 = vsel %vm1447, 0, %v1365
        %v1455 = vsel %vm1447, 0, %v1372
        %v1456 = vsel %vm1447, 0, %v1379
        %v1457 = vsel %vm1447, 0, %v1386
        %v1458 = vsel %vm1447, 0, %v1393
        %v1459 = vsel %vm1447, 0, %v1400
        %v1460 = vsel %vm1447, 0, %v1407
        %v1461 = vsel %vm1447, 0, %v1414
        %v1462 = vsel %vm1447, 0, %v1421
        %v1463 = vsel %vm1447, 0, %v1428
        %v1464 = vrot.slane %v1321, 1
        %v1465 = vor.u32 %v1318, %v1464
        %v1466 = vrot.slane %v1328, 1
        %v1467 = vor.u32 %v1325, %v1466
        %v1468 = vrot.slane %v1335, 1
        %v1469 = vor.u32 %v1332, %v1468
        %v1470 = vrot.slane %v1342, 1
        %v1471 = vor.u32 %v1339, %v1470
        %v1472 = vrot.slane %v1349, 1
        %v1473 = vor.u32 %v1346, %v1472
        %v1474 = vrot.slane %v1356, 1
        %v1475 = vor.u32 %v1353, %v1474
        %v1476 = vrot.slane %v1363, 1
        %v1477 = vor.u32 %v1360, %v1476
        %v1478 = vrot.slane %v1370, 1
        %v1479 = vor.u32 %v1367, %v1478
        %v1480 = vrot.slane %v1377, 1
        %v1481 = vor.u32 %v1374, %v1480
        %v1482 = vrot.slane %v1384, 1
        %v1483 = vor.u32 %v1381, %v1482
        %v1484 = vrot.slane %v1391, 1
        %v1485 = vor.u32 %v1388, %v1484
        %v1486 = vrot.slane %v1398, 1
        %v1487 = vor.u32 %v1395, %v1486
        %v1488 = vrot.slane %v1405, 1
        %v1489 = vor.u32 %v1402, %v1488
        %v1490 = vrot.slane %v1412, 1
        %v1491 = vor.u32 %v1409, %v1490
        %v1492 = vrot.slane %v1419, 1
        %v1493 = vor.u32 %v1416, %v1492
        %v1494 = vrot.slane %v1426, 1
        %v1495 = vor.u32 %v1423, %v1494
        %vm1512 = vcmask 1047552
        %vm1513 = vsmask.f32 7424
        %vm1514 = vmand %vm1512, %vm1513
        %v1515 = vsel %vm1514, %v1465, 0
        %v1516 = vsel %vm1514, %v1467, 0
        %v1517 = vsel %vm1514, %v1469, 0
        %v1518 = vsel %vm1514, %v1471, 0
        %v1519 = vsel %vm1514, %v1473, 0
        %v1520 = vsel %vm1514, %v1475, 0
        %v1521 = vsel %vm1514, %v1477, 0
        %v1522 = vsel %vm1514, %v1479, 0
        %v1523 = vsel %vm1514, %v1481, 0
        %v1524 = vsel %vm1514, %v1483, 0
        %v1525 = vsel %vm1514, %v1485, 0
        %v1526 = vsel %vm1514, %v1487, 0
        %v1527 = vsel %vm1514, %v1489, 0
        %v1528 = vsel %vm1514, %v1491, 0
        %v1529 = vsel %vm1514, %v1493, 0
        %v1530 = vsel %vm1514, %v1495, 0
        %1547 = vrot.lane.b32.xlu0 %v1301, 64
        %v1548 = vpop.permute.xlu0 %1547
        %1549 = vrot.lane.b32.xlu0 %v1302, 64
        %v1550 = vpop.permute.xlu0 %1549
        %1551 = vrot.lane.b32.xlu0 %v1303, 64
        %v1552 = vpop.permute.xlu0 %1551
        %1553 = vrot.lane.b32.xlu0 %v1304, 64
        %v1554 = vpop.permute.xlu0 %1553
        %1555 = vrot.lane.b32.xlu0 %v1305, 64
        %v1556 = vpop.permute.xlu0 %1555
        %1557 = vrot.lane.b32.xlu0 %v1306, 64
        %v1558 = vpop.permute.xlu0 %1557
        %1559 = vrot.lane.b32.xlu0 %v1307, 64
        %v1560 = vpop.permute.xlu0 %1559
        %1561 = vrot.lane.b32.xlu0 %v1308, 64
        %v1562 = vpop.permute.xlu0 %1561
        %1563 = vrot.lane.b32.xlu0 %v1309, 64
        %v1564 = vpop.permute.xlu0 %1563
        %1565 = vrot.lane.b32.xlu0 %v1310, 64
        %v1566 = vpop.permute.xlu0 %1565
        %1567 = vrot.lane.b32.xlu0 %v1311, 64
        %v1568 = vpop.permute.xlu0 %1567
        %1569 = vrot.lane.b32.xlu0 %v1312, 64
        %v1570 = vpop.permute.xlu0 %1569
        %1571 = vrot.lane.b32.xlu0 %v1313, 64
        %v1572 = vpop.permute.xlu0 %1571
        %1573 = vrot.lane.b32.xlu0 %v1314, 64
        %v1574 = vpop.permute.xlu0 %1573
        %1575 = vrot.lane.b32.xlu0 %v1315, 64
        %v1576 = vpop.permute.xlu0 %1575
        %1577 = vrot.lane.b32.xlu0 %v1316, 64
        %v1578 = vpop.permute.xlu0 %1577
        %v1581 = vsel %vm693, %v1448, %v1548
        %v1584 = vsel %vm693, %v1449, %v1550
        %v1587 = vsel %vm693, %v1450, %v1552
        %v1590 = vsel %vm693, %v1451, %v1554
        %v1593 = vsel %vm693, %v1452, %v1556
        %v1596 = vsel %vm693, %v1453, %v1558
        %v1599 = vsel %vm693, %v1454, %v1560
        %v1602 = vsel %vm693, %v1455, %v1562
        %v1605 = vsel %vm693, %v1456, %v1564
        %v1608 = vsel %vm693, %v1457, %v1566
        %v1611 = vsel %vm693, %v1458, %v1568
        %v1614 = vsel %vm693, %v1459, %v1570
        %v1617 = vsel %vm693, %v1460, %v1572
        %v1620 = vsel %vm693, %v1461, %v1574
        %v1623 = vsel %vm693, %v1462, %v1576
        %v1626 = vsel %vm693, %v1463, %v1578
        %v1660 = vunpack.c.l.b16 0
        %v1661 = vunpack.c.h.b16 0
        %v1662 = vunpack.c.l.b16 %v1581
        %v1663 = vunpack.c.l.b16 %v1515
        %v1664 = vunpack.c.h.b16 %v1581
        %v1665 = vunpack.c.h.b16 %v1515
        %v1666 = vunpack.c.l.b16 %v1584
        %v1667 = vunpack.c.l.b16 %v1516
        %v1668 = vunpack.c.h.b16 %v1584
        %v1669 = vunpack.c.h.b16 %v1516
        %v1670 = vunpack.c.l.b16 %v1587
        %v1671 = vunpack.c.l.b16 %v1517
        %v1672 = vunpack.c.h.b16 %v1587
        %v1673 = vunpack.c.h.b16 %v1517
        %v1674 = vunpack.c.l.b16 %v1590
        %v1675 = vunpack.c.l.b16 %v1518
        %v1676 = vunpack.c.h.b16 %v1590
        %v1677 = vunpack.c.h.b16 %v1518
        %v1678 = vunpack.c.l.b16 %v1593
        %v1679 = vunpack.c.l.b16 %v1519
        %v1680 = vunpack.c.h.b16 %v1593
        %v1681 = vunpack.c.h.b16 %v1519
        %v1682 = vunpack.c.l.b16 %v1596
        %v1683 = vunpack.c.l.b16 %v1520
        %v1684 = vunpack.c.h.b16 %v1596
        %v1685 = vunpack.c.h.b16 %v1520
        %v1686 = vunpack.c.l.b16 %v1599
        %v1687 = vunpack.c.l.b16 %v1521
        %v1688 = vunpack.c.h.b16 %v1599
        %v1689 = vunpack.c.h.b16 %v1521
        %v1690 = vunpack.c.l.b16 %v1602
        %v1691 = vunpack.c.l.b16 %v1522
        %v1692 = vunpack.c.h.b16 %v1602
        %v1693 = vunpack.c.h.b16 %v1522
        %v1694 = vunpack.c.l.b16 %v1605
        %v1695 = vunpack.c.l.b16 %v1523
        %v1696 = vunpack.c.h.b16 %v1605
        %v1697 = vunpack.c.h.b16 %v1523
        %v1698 = vunpack.c.l.b16 %v1608
        %v1699 = vunpack.c.l.b16 %v1524
        %v1700 = vunpack.c.h.b16 %v1608
        %v1701 = vunpack.c.h.b16 %v1524
        %v1702 = vunpack.c.l.b16 %v1611
        %v1703 = vunpack.c.l.b16 %v1525
        %v1704 = vunpack.c.h.b16 %v1611
        %v1705 = vunpack.c.h.b16 %v1525
        %v1706 = vunpack.c.l.b16 %v1614
        %v1707 = vunpack.c.l.b16 %v1526
        %v1708 = vunpack.c.h.b16 %v1614
        %v1709 = vunpack.c.h.b16 %v1526
        %v1710 = vunpack.c.l.b16 %v1617
        %v1711 = vunpack.c.l.b16 %v1527
        %v1712 = vunpack.c.h.b16 %v1617
        %v1713 = vunpack.c.h.b16 %v1527
        %v1714 = vunpack.c.l.b16 %v1620
        %v1715 = vunpack.c.l.b16 %v1528
        %v1716 = vunpack.c.h.b16 %v1620
        %v1717 = vunpack.c.h.b16 %v1528
        %v1718 = vunpack.c.l.b16 %v1623
        %v1719 = vunpack.c.l.b16 %v1529
        %v1720 = vunpack.c.h.b16 %v1623
        %v1721 = vunpack.c.h.b16 %v1529
        %v1722 = vunpack.c.l.b16 %v1626
        %v1723 = vunpack.c.l.b16 %v1530
        %v1724 = vunpack.c.h.b16 %v1626
        %v1725 = vunpack.c.h.b16 %v1530
        %v1726 = vpack.c.b16 %v1660, %v1660
        %v1727 = vpack.c.b16 %v1661, %v1661
        %v1728 = vpack.c.b16 %v1663, %v1662
        %v1729 = vpack.c.b16 %v1665, %v1664
        %v1730 = vpack.c.b16 %v1667, %v1666
        %v1731 = vpack.c.b16 %v1669, %v1668
        %v1732 = vpack.c.b16 %v1671, %v1670
        %v1733 = vpack.c.b16 %v1673, %v1672
        %v1734 = vpack.c.b16 %v1675, %v1674
        %v1735 = vpack.c.b16 %v1677, %v1676
        %v1736 = vpack.c.b16 %v1679, %v1678
        %v1737 = vpack.c.b16 %v1681, %v1680
        %v1738 = vpack.c.b16 %v1683, %v1682
        %v1739 = vpack.c.b16 %v1685, %v1684
        %v1740 = vpack.c.b16 %v1687, %v1686
        %v1741 = vpack.c.b16 %v1689, %v1688
        %v1742 = vpack.c.b16 %v1691, %v1690
        %v1743 = vpack.c.b16 %v1693, %v1692
        %v1744 = vpack.c.b16 %v1695, %v1694
        %v1745 = vpack.c.b16 %v1697, %v1696
        %v1746 = vpack.c.b16 %v1699, %v1698
        %v1747 = vpack.c.b16 %v1701, %v1700
        %v1748 = vpack.c.b16 %v1703, %v1702
        %v1749 = vpack.c.b16 %v1705, %v1704
        %v1750 = vpack.c.b16 %v1707, %v1706
        %v1751 = vpack.c.b16 %v1709, %v1708
        %v1752 = vpack.c.b16 %v1711, %v1710
        %v1753 = vpack.c.b16 %v1713, %v1712
        %v1754 = vpack.c.b16 %v1715, %v1714
        %v1755 = vpack.c.b16 %v1717, %v1716
        %v1756 = vpack.c.b16 %v1719, %v1718
        %v1757 = vpack.c.b16 %v1721, %v1720
        %v1758 = vpack.c.b16 %v1723, %v1722
        %v1759 = vpack.c.b16 %v1725, %v1724
        %vm1794 = vcmask 1043456
        %vm1795 = vcmask 523268
        %vm1796 = vmor %vm1795, %vm1794
        %1797 = vst.msk [vmem:[#allocation2] sm:$0xff] %vm1796, %v1726
        %1798 = vst.msk [vmem:[#allocation2 + $0x8] sm:$0xff] %vm1796, %v1727
        %1799 = vst.msk [vmem:[#allocation2 + $0x10] sm:$0xff] %vm1796, %v1728
        %1800 = vst.msk [vmem:[#allocation2 + $0x18] sm:$0xff] %vm1796, %v1729
        %1801 = vst.msk [vmem:[#allocation2 + $0x20] sm:$0xff] %vm1796, %v1730
        %1802 = vst.msk [vmem:[#allocation2 + $0x28] sm:$0xff] %vm1796, %v1731
        %1803 = vst.msk [vmem:[#allocation2 + $0x30] sm:$0xff] %vm1796, %v1732
        %1804 = vst.msk [vmem:[#allocation2 + $0x38] sm:$0xff] %vm1796, %v1733
        %1805 = vst.msk [vmem:[#allocation2 + $0x40] sm:$0xff] %vm1796, %v1734
        %1806 = vst.msk [vmem:[#allocation2 + $0x48] sm:$0xff] %vm1796, %v1735
        %1807 = vst.msk [vmem:[#allocation2 + $0x50] sm:$0xff] %vm1796, %v1736
        %1808 = vst.msk [vmem:[#allocation2 + $0x58] sm:$0xff] %vm1796, %v1737
        %1809 = vst.msk [vmem:[#allocation2 + $0x60] sm:$0xff] %vm1796, %v1738
        %1810 = vst.msk [vmem:[#allocation2 + $0x68] sm:$0xff] %vm1796, %v1739
        %1811 = vst.msk [vmem:[#allocation2 + $0x70] sm:$0xff] %vm1796, %v1740
        %1812 = vst.msk [vmem:[#allocation2 + $0x78] sm:$0xff] %vm1796, %v1741
        %1813 = vst.msk [vmem:[#allocation2 + $0x80] sm:$0xff] %vm1796, %v1742
        %1814 = vst.msk [vmem:[#allocation2 + $0x88] sm:$0xff] %vm1796, %v1743
        %1815 = vst.msk [vmem:[#allocation2 + $0x90] sm:$0xff] %vm1796, %v1744
        %1816 = vst.msk [vmem:[#allocation2 + $0x98] sm:$0xff] %vm1796, %v1745
        %1817 = vst.msk [vmem:[#allocation2 + $0xa0] sm:$0xff] %vm1796, %v1746
        %1818 = vst.msk [vmem:[#allocation2 + $0xa8] sm:$0xff] %vm1796, %v1747
        %1819 = vst.msk [vmem:[#allocation2 + $0xb0] sm:$0xff] %vm1796, %v1748
        %1820 = vst.msk [vmem:[#allocation2 + $0xb8] sm:$0xff] %vm1796, %v1749
        %1821 = vst.msk [vmem:[#allocation2 + $0xc0] sm:$0xff] %vm1796, %v1750
        %1822 = vst.msk [vmem:[#allocation2 + $0xc8] sm:$0xff] %vm1796, %v1751
        %1823 = vst.msk [vmem:[#allocation2 + $0xd0] sm:$0xff] %vm1796, %v1752
        %1824 = vst.msk [vmem:[#allocation2 + $0xd8] sm:$0xff] %vm1796, %v1753
        %1825 = vst.msk [vmem:[#allocation2 + $0xe0] sm:$0xff] %vm1796, %v1754
        %1826 = vst.msk [vmem:[#allocation2 + $0xe8] sm:$0xff] %vm1796, %v1755
        %1827 = vst.msk [vmem:[#allocation2 + $0xf0] sm:$0xff] %vm1796, %v1756
        %1828 = vst.msk [vmem:[#allocation2 + $0xf8] sm:$0xff] %vm1796, %v1757
        %1829 = vst.msk [vmem:[#allocation2 + $0x100] sm:$0xff] %vm1796, %v1758
        %1830 = vst.msk [vmem:[#allocation2 + $0x108] sm:$0xff] %vm1796, %v1759
        %1831 = vst.msk [vmem:[#allocation2 + $0x110] sm:$0xff] %vm1796, %v1726
        %1832 = vst.msk [vmem:[#allocation2 + $0x118] sm:$0xff] %vm1796, %v1727
        %v1833 = vld [vmem:[#allocation2] sm:$0xff]
        %v1834 = vld [vmem:[#allocation2 + $0x8] sm:$0xff]
        %v1835 = vld [vmem:[#allocation2 + $0x10] sm:$0xff]
        %v1836 = vld [vmem:[#allocation2 + $0x18] sm:$0xff]
        %v1837 = vld [vmem:[#allocation2 + $0x20] sm:$0xff]
        %v1838 = vld [vmem:[#allocation2 + $0x28] sm:$0xff]
        %v1839 = vld [vmem:[#allocation2 + $0x30] sm:$0xff]
        %v1840 = vld [vmem:[#allocation2 + $0x38] sm:$0xff]
        %v1841 = vld [vmem:[#allocation2 + $0x40] sm:$0xff]
        %v1842 = vld [vmem:[#allocation2 + $0x48] sm:$0xff]
        %v1843 = vld [vmem:[#allocation2 + $0x50] sm:$0xff]
        %v1844 = vld [vmem:[#allocation2 + $0x58] sm:$0xff]
        %v1845 = vld [vmem:[#allocation2 + $0x60] sm:$0xff]
        %v1846 = vld [vmem:[#allocation2 + $0x68] sm:$0xff]
        %v1847 = vld [vmem:[#allocation2 + $0x70] sm:$0xff]
        %v1848 = vld [vmem:[#allocation2 + $0x78] sm:$0xff]
        %v1849 = vld [vmem:[#allocation2 + $0x80] sm:$0xff]
        %v1850 = vld [vmem:[#allocation2 + $0x88] sm:$0xff]
        %v1851 = vld [vmem:[#allocation2 + $0x90] sm:$0xff]
        %v1852 = vld [vmem:[#allocation2 + $0x98] sm:$0xff]
        %v1853 = vld [vmem:[#allocation2 + $0xa0] sm:$0xff]
        %v1854 = vld [vmem:[#allocation2 + $0xa8] sm:$0xff]
        %v1855 = vld [vmem:[#allocation2 + $0xb0] sm:$0xff]
        %v1856 = vld [vmem:[#allocation2 + $0xb8] sm:$0xff]
        %v1857 = vld [vmem:[#allocation2 + $0xc0] sm:$0xff]
        %v1858 = vld [vmem:[#allocation2 + $0xc8] sm:$0xff]
        %v1859 = vld [vmem:[#allocation2 + $0xd0] sm:$0xff]
        %v1860 = vld [vmem:[#allocation2 + $0xd8] sm:$0xff]
        %v1861 = vld [vmem:[#allocation2 + $0xe0] sm:$0xff]
        %v1862 = vld [vmem:[#allocation2 + $0xe8] sm:$0xff]
        %v1863 = vld [vmem:[#allocation2 + $0xf0] sm:$0xff]
        %v1864 = vld [vmem:[#allocation2 + $0xf8] sm:$0xff]
        %v1865 = vld [vmem:[%s6] sm:$0xf]
        %v1866 = vld [vmem:[%s6 + $0x4] sm:$0xf]
        %v1867 = vld [vmem:[%s6 + $0x8] sm:$0xf]
        %v1868 = vld [vmem:[%s6 + $0xc] sm:$0xf]
        %v1869 = vld [vmem:[%s6 + $0x10] sm:$0xf]
        %v1870 = vld [vmem:[%s6 + $0x14] sm:$0xf]
        %v1871 = vld [vmem:[%s6 + $0x18] sm:$0xf]
        %v1872 = vld [vmem:[%s6 + $0x1c] sm:$0xf]
        %v1873 = vld [vmem:[%s6 + $0x20] sm:$0xf]
        %v1874 = vld [vmem:[%s6 + $0x24] sm:$0xf]
        %v1875 = vld [vmem:[%s6 + $0x28] sm:$0xf]
        %v1876 = vld [vmem:[%s6 + $0x2c] sm:$0xf]
        %v1877 = vld [vmem:[%s6 + $0x30] sm:$0xf]
        %v1878 = vld [vmem:[%s6 + $0x34] sm:$0xf]
        %v1879 = vld [vmem:[%s6 + $0x38] sm:$0xf]
        %v1880 = vld [vmem:[%s6 + $0x3c] sm:$0xf]
        %v1881 = vld [vmem:[%s6 + $0x40] sm:$0xf]
        %v1882 = vld [vmem:[%s6 + $0x44] sm:$0xf]
        %v1883 = vld [vmem:[%s6 + $0x48] sm:$0xf]
        %v1884 = vld [vmem:[%s6 + $0x4c] sm:$0xf]
        %v1885 = vld [vmem:[%s6 + $0x50] sm:$0xf]
        %v1886 = vld [vmem:[%s6 + $0x54] sm:$0xf]
        %v1887 = vld [vmem:[%s6 + $0x58] sm:$0xf]
        %v1888 = vld [vmem:[%s6 + $0x5c] sm:$0xf]
        %s1889 = scalar_lea.vmem [#allocation2], 16
        %v1890 = vld [vmem:[%s1889] sm:$0xff]
        %v1891 = vld [vmem:[%s1889 + $0x8] sm:$0xff]
        %v1892 = vld [vmem:[%s1889 + $0x10] sm:$0xff]
        %v1893 = vld [vmem:[%s1889 + $0x18] sm:$0xff]
        %v1894 = vld [vmem:[%s1889 + $0x20] sm:$0xff]
        %v1895 = vld [vmem:[%s1889 + $0x28] sm:$0xff]
        %v1896 = vld [vmem:[%s1889 + $0x30] sm:$0xff]
        %v1897 = vld [vmem:[%s1889 + $0x38] sm:$0xff]
        %v1898 = vld [vmem:[%s1889 + $0x40] sm:$0xff]
        %v1899 = vld [vmem:[%s1889 + $0x48] sm:$0xff]
        %v1900 = vld [vmem:[%s1889 + $0x50] sm:$0xff]
        %v1901 = vld [vmem:[%s1889 + $0x58] sm:$0xff]
        %v1902 = vld [vmem:[%s1889 + $0x60] sm:$0xff]
        %v1903 = vld [vmem:[%s1889 + $0x68] sm:$0xff]
        %v1904 = vld [vmem:[%s1889 + $0x70] sm:$0xff]
        %v1905 = vld [vmem:[%s1889 + $0x78] sm:$0xff]
        %v1906 = vld [vmem:[%s1889 + $0x80] sm:$0xff]
        %v1907 = vld [vmem:[%s1889 + $0x88] sm:$0xff]
        %v1908 = vld [vmem:[%s1889 + $0x90] sm:$0xff]
        %v1909 = vld [vmem:[%s1889 + $0x98] sm:$0xff]
        %v1910 = vld [vmem:[%s1889 + $0xa0] sm:$0xff]
        %v1911 = vld [vmem:[%s1889 + $0xa8] sm:$0xff]
        %v1912 = vld [vmem:[%s1889 + $0xb0] sm:$0xff]
        %v1913 = vld [vmem:[%s1889 + $0xb8] sm:$0xff]
        %v1914 = vld [vmem:[%s1889 + $0xc0] sm:$0xff]
        %v1915 = vld [vmem:[%s1889 + $0xc8] sm:$0xff]
        %v1916 = vld [vmem:[%s1889 + $0xd0] sm:$0xff]
        %v1917 = vld [vmem:[%s1889 + $0xd8] sm:$0xff]
        %v1918 = vld [vmem:[%s1889 + $0xe0] sm:$0xff]
        %v1919 = vld [vmem:[%s1889 + $0xe8] sm:$0xff]
        %v1920 = vld [vmem:[%s1889 + $0xf0] sm:$0xff]
        %v1921 = vld [vmem:[%s1889 + $0xf8] sm:$0xff]
        %s1922 = scalar_lea.vmem %s6, 96
        %v1923 = vld [vmem:[%s1922] sm:$0xf]
        %v1924 = vld [vmem:[%s1922 + $0x4] sm:$0xf]
        %v1925 = vld [vmem:[%s1922 + $0x8] sm:$0xf]
        %v1926 = vld [vmem:[%s1922 + $0xc] sm:$0xf]
        %v1927 = vld [vmem:[%s1922 + $0x10] sm:$0xf]
        %v1928 = vld [vmem:[%s1922 + $0x14] sm:$0xf]
        %v1929 = vld [vmem:[%s1922 + $0x18] sm:$0xf]
        %v1930 = vld [vmem:[%s1922 + $0x1c] sm:$0xf]
        %v1931 = vld [vmem:[%s1922 + $0x20] sm:$0xf]
        %v1932 = vld [vmem:[%s1922 + $0x24] sm:$0xf]
        %v1933 = vld [vmem:[%s1922 + $0x28] sm:$0xf]
        %v1934 = vld [vmem:[%s1922 + $0x2c] sm:$0xf]
        %v1935 = vld [vmem:[%s1922 + $0x30] sm:$0xf]
        %v1936 = vld [vmem:[%s1922 + $0x34] sm:$0xf]
        %v1937 = vld [vmem:[%s1922 + $0x38] sm:$0xf]
        %v1938 = vld [vmem:[%s1922 + $0x3c] sm:$0xf]
        %v1939 = vld [vmem:[%s1922 + $0x40] sm:$0xf]
        %v1940 = vld [vmem:[%s1922 + $0x44] sm:$0xf]
        %v1941 = vld [vmem:[%s1922 + $0x48] sm:$0xf]
        %v1942 = vld [vmem:[%s1922 + $0x4c] sm:$0xf]
        %v1943 = vld [vmem:[%s1922 + $0x50] sm:$0xf]
        %v1944 = vld [vmem:[%s1922 + $0x54] sm:$0xf]
        %v1945 = vld [vmem:[%s1922 + $0x58] sm:$0xf]
        %v1946 = vld [vmem:[%s1922 + $0x5c] sm:$0xf]
        %v1979 = vunpack.c.l.b16 %v1890
        %v1980 = vunpack.c.h.b16 %v1890
        %v1981 = vunpack.c.l.b16 %v1891
        %v1982 = vunpack.c.h.b16 %v1891
        %v1983 = vunpack.c.l.b16 %v1892
        %v1984 = vunpack.c.h.b16 %v1892
        %v1985 = vunpack.c.l.b16 %v1893
        %v1986 = vunpack.c.h.b16 %v1893
        %v1987 = vunpack.c.l.b16 %v1894
        %v1988 = vunpack.c.h.b16 %v1894
        %v1989 = vunpack.c.l.b16 %v1895
        %v1990 = vunpack.c.h.b16 %v1895
        %v1991 = vunpack.c.l.b16 %v1896
        %v1992 = vunpack.c.h.b16 %v1896
        %v1993 = vunpack.c.l.b16 %v1897
        %v1994 = vunpack.c.h.b16 %v1897
        %v1995 = vunpack.c.l.b16 %v1898
        %v1996 = vunpack.c.h.b16 %v1898
        %v1997 = vunpack.c.l.b16 %v1899
        %v1998 = vunpack.c.h.b16 %v1899
        %v1999 = vunpack.c.l.b16 %v1900
        %v2000 = vunpack.c.h.b16 %v1900
        %v2001 = vunpack.c.l.b16 %v1901
        %v2002 = vunpack.c.h.b16 %v1901
        %v2003 = vunpack.c.l.b16 %v1902
        %v2004 = vunpack.c.h.b16 %v1902
        %v2005 = vunpack.c.l.b16 %v1903
        %v2006 = vunpack.c.h.b16 %v1903
        %v2007 = vunpack.c.l.b16 %v1904
        %v2008 = vunpack.c.h.b16 %v1904
        %v2009 = vunpack.c.l.b16 %v1905
        %v2010 = vunpack.c.h.b16 %v1905
        %v2011 = vunpack.c.l.b16 %v1906
        %v2012 = vunpack.c.h.b16 %v1906
        %v2013 = vunpack.c.l.b16 %v1907
        %v2014 = vunpack.c.h.b16 %v1907
        %v2015 = vunpack.c.l.b16 %v1908
        %v2016 = vunpack.c.h.b16 %v1908
        %v2017 = vunpack.c.l.b16 %v1909
        %v2018 = vunpack.c.h.b16 %v1909
        %v2019 = vunpack.c.l.b16 %v1910
        %v2020 = vunpack.c.h.b16 %v1910
        %v2021 = vunpack.c.l.b16 %v1911
        %v2022 = vunpack.c.h.b16 %v1911
        %v2023 = vunpack.c.l.b16 %v1912
        %v2024 = vunpack.c.h.b16 %v1912
        %v2025 = vunpack.c.l.b16 %v1913
        %v2026 = vunpack.c.h.b16 %v1913
        %v2027 = vunpack.c.l.b16 %v1914
        %v2028 = vunpack.c.h.b16 %v1914
        %v2029 = vunpack.c.l.b16 %v1915
        %v2030 = vunpack.c.h.b16 %v1915
        %v2031 = vunpack.c.l.b16 %v1916
        %v2032 = vunpack.c.h.b16 %v1916
        %v2033 = vunpack.c.l.b16 %v1917
        %v2034 = vunpack.c.h.b16 %v1917
        %v2035 = vunpack.c.l.b16 %v1918
        %v2036 = vunpack.c.h.b16 %v1918
        %v2037 = vunpack.c.l.b16 %v1919
        %v2038 = vunpack.c.h.b16 %v1919
        %v2039 = vunpack.c.l.b16 %v1920
        %v2040 = vunpack.c.h.b16 %v1920
        %v2041 = vunpack.c.l.b16 %v1921
        %v2042 = vunpack.c.h.b16 %v1921
        %v2043 = vpack.c.b16 %v1981, %v1979
        %v2044 = vpack.c.b16 %v1982, %v1980
        %v2045 = vpack.c.b16 %v1985, %v1983
        %v2046 = vpack.c.b16 %v1986, %v1984
        %v2047 = vpack.c.b16 %v1989, %v1987
        %v2048 = vpack.c.b16 %v1990, %v1988
        %v2049 = vpack.c.b16 %v1993, %v1991
        %v2050 = vpack.c.b16 %v1994, %v1992
        %v2051 = vpack.c.b16 %v1997, %v1995
        %v2052 = vpack.c.b16 %v1998, %v1996
        %v2053 = vpack.c.b16 %v2001, %v1999
        %v2054 = vpack.c.b16 %v2002, %v2000
        %v2055 = vpack.c.b16 %v2005, %v2003
        %v2056 = vpack.c.b16 %v2006, %v2004
        %v2057 = vpack.c.b16 %v2009, %v2007
        %v2058 = vpack.c.b16 %v2010, %v2008
        %v2059 = vpack.c.b16 %v2013, %v2011
        %v2060 = vpack.c.b16 %v2014, %v2012
        %v2061 = vpack.c.b16 %v2017, %v2015
        %v2062 = vpack.c.b16 %v2018, %v2016
        %v2063 = vpack.c.b16 %v2021, %v2019
        %v2064 = vpack.c.b16 %v2022, %v2020
        %v2065 = vpack.c.b16 %v2025, %v2023
        %v2066 = vpack.c.b16 %v2026, %v2024
        %v2067 = vpack.c.b16 %v2029, %v2027
        %v2068 = vpack.c.b16 %v2030, %v2028
        %v2069 = vpack.c.b16 %v2033, %v2031
        %v2070 = vpack.c.b16 %v2034, %v2032
        %v2071 = vpack.c.b16 %v2037, %v2035
        %v2072 = vpack.c.b16 %v2038, %v2036
        %v2073 = vpack.c.b16 %v2041, %v2039
        %v2074 = vpack.c.b16 %v2042, %v2040
        %v2115 = vunpack.c.l.b16 %v1923
        %v2116 = vunpack.c.l.b16 %v1924
        %v2117 = vunpack.c.l.b16 %v1925
        %v2118 = vunpack.c.l.b16 %v1926
        %v2119 = vunpack.c.l.b16 %v1927
        %v2120 = vunpack.c.l.b16 %v1928
        %v2121 = vunpack.c.l.b16 %v1929
        %v2122 = vunpack.c.l.b16 %v1930
        %v2123 = vunpack.c.l.b16 %v1931
        %v2124 = vunpack.c.l.b16 %v1932
        %v2125 = vunpack.c.l.b16 %v1933
        %v2126 = vunpack.c.l.b16 %v1934
        %v2127 = vunpack.c.l.b16 %v1935
        %v2128 = vunpack.c.l.b16 %v1936
        %v2129 = vunpack.c.l.b16 %v1937
        %v2130 = vunpack.c.l.b16 %v1938
        %v2131 = vunpack.c.l.b16 %v1939
        %v2132 = vunpack.c.l.b16 %v1940
        %v2133 = vunpack.c.l.b16 %v1941
        %v2134 = vunpack.c.l.b16 %v1942
        %v2135 = vunpack.c.l.b16 %v1943
        %v2136 = vunpack.c.l.b16 %v1944
        %v2137 = vunpack.c.l.b16 %v1945
        %v2138 = vunpack.c.l.b16 %v1946
        %v2139 = vpack.c.b16 %v2116, %v2115
        %v2140 = vpack.c.b16 %v2118, %v2117
        %v2141 = vpack.c.b16 %v2120, %v2119
        %v2142 = vpack.c.b16 %v2122, %v2121
        %v2143 = vpack.c.b16 %v2124, %v2123
        %v2144 = vpack.c.b16 %v2126, %v2125
        %v2145 = vpack.c.b16 %v2128, %v2127
        %v2146 = vpack.c.b16 %v2130, %v2129
        %v2147 = vpack.c.b16 %v2132, %v2131
        %v2148 = vpack.c.b16 %v2134, %v2133
        %v2149 = vpack.c.b16 %v2136, %v2135
        %v2150 = vpack.c.b16 %v2138, %v2137
        %v2164 = vsel %vm693, %v2044, 0
        %v2167 = vsel %vm693, %v2046, 0
        %v2170 = vsel %vm693, %v2048, 0
        %v2173 = vsel %vm693, %v2050, 0
        %v2176 = vsel %vm693, %v2052, 0
        %v2179 = vsel %vm693, %v2054, 0
        %v2182 = vsel %vm693, %v2056, 0
        %v2185 = vsel %vm693, %v2058, 0
        %v2188 = vsel %vm693, %v2060, 0
        %v2191 = vsel %vm693, %v2062, 0
        %v2194 = vsel %vm693, %v2064, 0
        %v2197 = vsel %vm693, %v2066, 0
        %v2200 = vsel %vm693, %v2068, 0
        %v2203 = vsel %vm693, %v2070, 0
        %v2206 = vsel %vm693, %v2072, 0
        %v2209 = vsel %vm693, %v2074, 0
        %2211 = vmatprep.subr.bf16.mxu0 0
        %2212 = vmatpush1.bf16.msra.mxu0 %v2146
        %2213 = vmatprep.subr.bf16.mxu0 0
        %2214 = vmatpush1.bf16.msra.mxu0 %v2145
        %2215 = vmatprep.subr.bf16.mxu0 0
        %2216 = vmatpush1.bf16.msra.mxu0 %v2144
        %2217 = vmatprep.subr.bf16.mxu0 0
        %2218 = vmatpush1.bf16.msra.mxu0 %v2143
        %2219 = vmatprep.subr.bf16.mxu0 0
        %2220 = vmatpush1.bf16.msra.mxu0 %v2142
        %2221 = vmatprep.subr.bf16.mxu0 0
        %2222 = vmatpush1.bf16.msra.mxu0 %v2141
        %2223 = vmatprep.subr.bf16.mxu0 0
        %2224 = vmatpush1.bf16.msra.mxu0 %v2140
        %2225 = vmatprep.subr.bf16.mxu0 0
        %2226 = vmatpush1.bf16.msra.mxu0 %v2139
        %2227 = vmatprep.subr.bf16.mxu0 0
        %2228 = vmatpush2.bf16.msra.mxu0 0
        %2229 = vmatprep.subr.bf16.mxu0 0
        %2230 = vmatpush2.bf16.msra.mxu0 0
        %2231 = vmatprep.subr.bf16.mxu0 0
        %2232 = vmatpush2.bf16.msra.mxu0 0
        %2233 = vmatprep.subr.bf16.mxu0 0
        %2234 = vmatpush2.bf16.msra.mxu0 0
        %2235 = vmatprep.subr.bf16.mxu0 0
        %2236 = vmatpush2.bf16.msra.mxu0 %v2150
        %2237 = vmatprep.subr.bf16.mxu0 0
        %2238 = vmatpush2.bf16.msra.mxu0 %v2149
        %2239 = vmatprep.subr.bf16.mxu0 0
        %2240 = vmatpush2.bf16.msra.mxu0 %v2148
        %2241 = vmatprep.subr.bf16.mxu0 0
        %2242 = vmatpush2.bf16.msra.mxu0 %v2147
        %2243 = vmatprep.mubr.bf16.mxu0 %v2164
        %2244 = vmatmul.mubr.bf16.gmra.mxu0 %v2043
        %v2245 = vpop.f32.mrf.mxu0
        %v2246 = vadd.f32 0.0, %v2245
        %v2247 = vpop.f32.mrf.mxu0
        %v2248 = vpop.f32.mrf.mxu0
        %v2249 = vadd.f32 0.0, %v2248
        %v2250 = vpop.f32.mrf.mxu0
        %2251 = vmatprep.mubr.bf16.mxu0 %v2167
        %2252 = vmatmul.mubr.bf16.gmra.mxu0 %v2045
        %v2253 = vpop.f32.mrf.mxu0
        %v2254 = vadd.f32 0.0, %v2253
        %v2255 = vpop.f32.mrf.mxu0
        %v2256 = vpop.f32.mrf.mxu0
        %v2257 = vadd.f32 0.0, %v2256
        %v2258 = vpop.f32.mrf.mxu0
        %2259 = vmatprep.mubr.bf16.mxu0 %v2170
        %2260 = vmatmul.mubr.bf16.gmra.mxu0 %v2047
        %v2261 = vpop.f32.mrf.mxu0
        %v2262 = vadd.f32 0.0, %v2261
        %v2263 = vpop.f32.mrf.mxu0
        %v2264 = vpop.f32.mrf.mxu0
        %v2265 = vadd.f32 0.0, %v2264
        %v2266 = vpop.f32.mrf.mxu0
        %2267 = vmatprep.mubr.bf16.mxu0 %v2173
        %2268 = vmatmul.mubr.bf16.gmra.mxu0 %v2049
        %v2269 = vpop.f32.mrf.mxu0
        %v2270 = vadd.f32 0.0, %v2269
        %v2271 = vpop.f32.mrf.mxu0
        %v2272 = vpop.f32.mrf.mxu0
        %v2273 = vadd.f32 0.0, %v2272
        %v2274 = vpop.f32.mrf.mxu0
        %2275 = vmatprep.mubr.bf16.mxu0 %v2176
        %2276 = vmatmul.mubr.bf16.gmra.mxu0 %v2051
        %v2277 = vpop.f32.mrf.mxu0
        %v2278 = vadd.f32 0.0, %v2277
        %v2279 = vpop.f32.mrf.mxu0
        %v2280 = vpop.f32.mrf.mxu0
        %v2281 = vadd.f32 0.0, %v2280
        %v2282 = vpop.f32.mrf.mxu0
        %2283 = vmatprep.mubr.bf16.mxu0 %v2179
        %2284 = vmatmul.mubr.bf16.gmra.mxu0 %v2053
        %v2285 = vpop.f32.mrf.mxu0
        %v2286 = vadd.f32 0.0, %v2285
        %v2287 = vpop.f32.mrf.mxu0
        %v2288 = vpop.f32.mrf.mxu0
        %v2289 = vadd.f32 0.0, %v2288
        %v2290 = vpop.f32.mrf.mxu0
        %2291 = vmatprep.mubr.bf16.mxu0 %v2182
        %2292 = vmatmul.mubr.bf16.gmra.mxu0 %v2055
        %v2293 = vpop.f32.mrf.mxu0
        %v2294 = vadd.f32 0.0, %v2293
        %v2295 = vpop.f32.mrf.mxu0
        %v2296 = vpop.f32.mrf.mxu0
        %v2297 = vadd.f32 0.0, %v2296
        %v2298 = vpop.f32.mrf.mxu0
        %2299 = vmatprep.mubr.bf16.mxu0 %v2185
        %2300 = vmatmul.mubr.bf16.gmra.mxu0 %v2057
        %v2301 = vpop.f32.mrf.mxu0
        %v2302 = vadd.f32 0.0, %v2301
        %v2303 = vpop.f32.mrf.mxu0
        %v2304 = vpop.f32.mrf.mxu0
        %v2305 = vadd.f32 0.0, %v2304
        %v2306 = vpop.f32.mrf.mxu0
        %2307 = vmatprep.mubr.bf16.mxu0 %v2188
        %2308 = vmatmul.mubr.bf16.gmra.mxu0 %v2059
        %v2309 = vpop.f32.mrf.mxu0
        %v2310 = vadd.f32 0.0, %v2309
        %v2311 = vpop.f32.mrf.mxu0
        %v2312 = vpop.f32.mrf.mxu0
        %v2313 = vadd.f32 0.0, %v2312
        %v2314 = vpop.f32.mrf.mxu0
        %2315 = vmatprep.mubr.bf16.mxu0 %v2191
        %2316 = vmatmul.mubr.bf16.gmra.mxu0 %v2061
        %v2317 = vpop.f32.mrf.mxu0
        %v2318 = vadd.f32 0.0, %v2317
        %v2319 = vpop.f32.mrf.mxu0
        %v2320 = vpop.f32.mrf.mxu0
        %v2321 = vadd.f32 0.0, %v2320
        %v2322 = vpop.f32.mrf.mxu0
        %2323 = vmatprep.mubr.bf16.mxu0 %v2194
        %2324 = vmatmul.mubr.bf16.gmra.mxu0 %v2063
        %v2325 = vpop.f32.mrf.mxu0
        %v2326 = vadd.f32 0.0, %v2325
        %v2327 = vpop.f32.mrf.mxu0
        %v2328 = vpop.f32.mrf.mxu0
        %v2329 = vadd.f32 0.0, %v2328
        %v2330 = vpop.f32.mrf.mxu0
        %2331 = vmatprep.mubr.bf16.mxu0 %v2197
        %2332 = vmatmul.mubr.bf16.gmra.mxu0 %v2065
        %v2333 = vpop.f32.mrf.mxu0
        %v2334 = vadd.f32 0.0, %v2333
        %v2335 = vpop.f32.mrf.mxu0
        %v2336 = vpop.f32.mrf.mxu0
        %v2337 = vadd.f32 0.0, %v2336
        %v2338 = vpop.f32.mrf.mxu0
        %2339 = vmatprep.mubr.bf16.mxu0 %v2200
        %2340 = vmatmul.mubr.bf16.gmra.mxu0 %v2067
        %v2341 = vpop.f32.mrf.mxu0
        %v2342 = vadd.f32 0.0, %v2341
        %v2343 = vpop.f32.mrf.mxu0
        %v2344 = vpop.f32.mrf.mxu0
        %v2345 = vadd.f32 0.0, %v2344
        %v2346 = vpop.f32.mrf.mxu0
        %2347 = vmatprep.mubr.bf16.mxu0 %v2203
        %2348 = vmatmul.mubr.bf16.gmra.mxu0 %v2069
        %v2349 = vpop.f32.mrf.mxu0
        %v2350 = vadd.f32 0.0, %v2349
        %v2351 = vpop.f32.mrf.mxu0
        %v2352 = vpop.f32.mrf.mxu0
        %v2353 = vadd.f32 0.0, %v2352
        %v2354 = vpop.f32.mrf.mxu0
        %2355 = vmatprep.mubr.bf16.mxu0 %v2206
        %2356 = vmatmul.mubr.bf16.gmra.mxu0 %v2071
        %v2357 = vpop.f32.mrf.mxu0
        %v2358 = vadd.f32 0.0, %v2357
        %v2359 = vpop.f32.mrf.mxu0
        %v2360 = vpop.f32.mrf.mxu0
        %v2361 = vadd.f32 0.0, %v2360
        %v2362 = vpop.f32.mrf.mxu0
        %2363 = vmatprep.mubr.bf16.mxu0 %v2209
        %2364 = vmatmul.mubr.bf16.gmra.mxu0 %v2073
        %v2365 = vpop.f32.mrf.mxu0
        %v2366 = vadd.f32 0.0, %v2365
        %v2367 = vpop.f32.mrf.mxu0
        %v2368 = vpop.f32.mrf.mxu0
        %v2369 = vadd.f32 0.0, %v2368
        %v2370 = vpop.f32.mrf.mxu0
        %2371 = vdwg.mxu0
        %v2404 = vunpack.c.l.b16 %v1833
        %v2405 = vunpack.c.h.b16 %v1833
        %v2406 = vunpack.c.l.b16 %v1834
        %v2407 = vunpack.c.h.b16 %v1834
        %v2408 = vunpack.c.l.b16 %v1835
        %v2409 = vunpack.c.h.b16 %v1835
        %v2410 = vunpack.c.l.b16 %v1836
        %v2411 = vunpack.c.h.b16 %v1836
        %v2412 = vunpack.c.l.b16 %v1837
        %v2413 = vunpack.c.h.b16 %v1837
        %v2414 = vunpack.c.l.b16 %v1838
        %v2415 = vunpack.c.h.b16 %v1838
        %v2416 = vunpack.c.l.b16 %v1839
        %v2417 = vunpack.c.h.b16 %v1839
        %v2418 = vunpack.c.l.b16 %v1840
        %v2419 = vunpack.c.h.b16 %v1840
        %v2420 = vunpack.c.l.b16 %v1841
        %v2421 = vunpack.c.h.b16 %v1841
        %v2422 = vunpack.c.l.b16 %v1842
        %v2423 = vunpack.c.h.b16 %v1842
        %v2424 = vunpack.c.l.b16 %v1843
        %v2425 = vunpack.c.h.b16 %v1843
        %v2426 = vunpack.c.l.b16 %v1844
        %v2427 = vunpack.c.h.b16 %v1844
        %v2428 = vunpack.c.l.b16 %v1845
        %v2429 = vunpack.c.h.b16 %v1845
        %v2430 = vunpack.c.l.b16 %v1846
        %v2431 = vunpack.c.h.b16 %v1846
        %v2432 = vunpack.c.l.b16 %v1847
        %v2433 = vunpack.c.h.b16 %v1847
        %v2434 = vunpack.c.l.b16 %v1848
        %v2435 = vunpack.c.h.b16 %v1848
        %v2436 = vunpack.c.l.b16 %v1849
        %v2437 = vunpack.c.h.b16 %v1849
        %v2438 = vunpack.c.l.b16 %v1850
        %v2439 = vunpack.c.h.b16 %v1850
        %v2440 = vunpack.c.l.b16 %v1851
        %v2441 = vunpack.c.h.b16 %v1851
        %v2442 = vunpack.c.l.b16 %v1852
        %v2443 = vunpack.c.h.b16 %v1852
        %v2444 = vunpack.c.l.b16 %v1853
        %v2445 = vunpack.c.h.b16 %v1853
        %v2446 = vunpack.c.l.b16 %v1854
        %v2447 = vunpack.c.h.b16 %v1854
        %v2448 = vunpack.c.l.b16 %v1855
        %v2449 = vunpack.c.h.b16 %v1855
        %v2450 = vunpack.c.l.b16 %v1856
        %v2451 = vunpack.c.h.b16 %v1856
        %v2452 = vunpack.c.l.b16 %v1857
        %v2453 = vunpack.c.h.b16 %v1857
        %v2454 = vunpack.c.l.b16 %v1858
        %v2455 = vunpack.c.h.b16 %v1858
        %v2456 = vunpack.c.l.b16 %v1859
        %v2457 = vunpack.c.h.b16 %v1859
        %v2458 = vunpack.c.l.b16 %v1860
        %v2459 = vunpack.c.h.b16 %v1860
        %v2460 = vunpack.c.l.b16 %v1861
        %v2461 = vunpack.c.h.b16 %v1861
        %v2462 = vunpack.c.l.b16 %v1862
        %v2463 = vunpack.c.h.b16 %v1862
        %v2464 = vunpack.c.l.b16 %v1863
        %v2465 = vunpack.c.h.b16 %v1863
        %v2466 = vunpack.c.l.b16 %v1864
        %v2467 = vunpack.c.h.b16 %v1864
        %v2468 = vpack.c.b16 %v2406, %v2404
        %v2469 = vpack.c.b16 %v2407, %v2405
        %v2470 = vpack.c.b16 %v2410, %v2408
        %v2471 = vpack.c.b16 %v2411, %v2409
        %v2472 = vpack.c.b16 %v2414, %v2412
        %v2473 = vpack.c.b16 %v2415, %v2413
        %v2474 = vpack.c.b16 %v2418, %v2416
        %v2475 = vpack.c.b16 %v2419, %v2417
        %v2476 = vpack.c.b16 %v2422, %v2420
        %v2477 = vpack.c.b16 %v2423, %v2421
        %v2478 = vpack.c.b16 %v2426, %v2424
        %v2479 = vpack.c.b16 %v2427, %v2425
        %v2480 = vpack.c.b16 %v2430, %v2428
        %v2481 = vpack.c.b16 %v2431, %v2429
        %v2482 = vpack.c.b16 %v2434, %v2432
        %v2483 = vpack.c.b16 %v2435, %v2433
        %v2484 = vpack.c.b16 %v2438, %v2436
        %v2485 = vpack.c.b16 %v2439, %v2437
        %v2486 = vpack.c.b16 %v2442, %v2440
        %v2487 = vpack.c.b16 %v2443, %v2441
        %v2488 = vpack.c.b16 %v2446, %v2444
        %v2489 = vpack.c.b16 %v2447, %v2445
        %v2490 = vpack.c.b16 %v2450, %v2448
        %v2491 = vpack.c.b16 %v2451, %v2449
        %v2492 = vpack.c.b16 %v2454, %v2452
        %v2493 = vpack.c.b16 %v2455, %v2453
        %v2494 = vpack.c.b16 %v2458, %v2456
        %v2495 = vpack.c.b16 %v2459, %v2457
        %v2496 = vpack.c.b16 %v2462, %v2460
        %v2497 = vpack.c.b16 %v2463, %v2461
        %v2498 = vpack.c.b16 %v2466, %v2464
        %v2499 = vpack.c.b16 %v2467, %v2465
        %v2540 = vunpack.c.l.b16 %v1865
        %v2541 = vunpack.c.l.b16 %v1866
        %v2542 = vunpack.c.l.b16 %v1867
        %v2543 = vunpack.c.l.b16 %v1868
        %v2544 = vunpack.c.l.b16 %v1869
        %v2545 = vunpack.c.l.b16 %v1870
        %v2546 = vunpack.c.l.b16 %v1871
        %v2547 = vunpack.c.l.b16 %v1872
        %v2548 = vunpack.c.l.b16 %v1873
        %v2549 = vunpack.c.l.b16 %v1874
        %v2550 = vunpack.c.l.b16 %v1875
        %v2551 = vunpack.c.l.b16 %v1876
        %v2552 = vunpack.c.l.b16 %v1877
        %v2553 = vunpack.c.l.b16 %v1878
        %v2554 = vunpack.c.l.b16 %v1879
        %v2555 = vunpack.c.l.b16 %v1880
        %v2556 = vunpack.c.l.b16 %v1881
        %v2557 = vunpack.c.l.b16 %v1882
        %v2558 = vunpack.c.l.b16 %v1883
        %v2559 = vunpack.c.l.b16 %v1884
        %v2560 = vunpack.c.l.b16 %v1885
        %v2561 = vunpack.c.l.b16 %v1886
        %v2562 = vunpack.c.l.b16 %v1887
        %v2563 = vunpack.c.l.b16 %v1888
        %v2564 = vpack.c.b16 %v2541, %v2540
        %v2565 = vpack.c.b16 %v2543, %v2542
        %v2566 = vpack.c.b16 %v2545, %v2544
        %v2567 = vpack.c.b16 %v2547, %v2546
        %v2568 = vpack.c.b16 %v2549, %v2548
        %v2569 = vpack.c.b16 %v2551, %v2550
        %v2570 = vpack.c.b16 %v2553, %v2552
        %v2571 = vpack.c.b16 %v2555, %v2554
        %v2572 = vpack.c.b16 %v2557, %v2556
        %v2573 = vpack.c.b16 %v2559, %v2558
        %v2574 = vpack.c.b16 %v2561, %v2560
        %v2575 = vpack.c.b16 %v2563, %v2562
        %v2589 = vsel %vm693, %v2469, 0
        %v2592 = vsel %vm693, %v2471, 0
        %v2595 = vsel %vm693, %v2473, 0
        %v2598 = vsel %vm693, %v2475, 0
        %v2601 = vsel %vm693, %v2477, 0
        %v2604 = vsel %vm693, %v2479, 0
        %v2607 = vsel %vm693, %v2481, 0
        %v2610 = vsel %vm693, %v2483, 0
        %v2613 = vsel %vm693, %v2485, 0
        %v2616 = vsel %vm693, %v2487, 0
        %v2619 = vsel %vm693, %v2489, 0
        %v2622 = vsel %vm693, %v2491, 0
        %v2625 = vsel %vm693, %v2493, 0
        %v2628 = vsel %vm693, %v2495, 0
        %v2631 = vsel %vm693, %v2497, 0
        %v2634 = vsel %vm693, %v2499, 0
        %2636 = vmatprep.subr.bf16.mxu0 0
        %2637 = vmatpush1.bf16.msra.mxu0 %v2571
        %2638 = vmatprep.subr.bf16.mxu0 0
        %2639 = vmatpush1.bf16.msra.mxu0 %v2570
        %2640 = vmatprep.subr.bf16.mxu0 0
        %2641 = vmatpush1.bf16.msra.mxu0 %v2569
        %2642 = vmatprep.subr.bf16.mxu0 0
        %2643 = vmatpush1.bf16.msra.mxu0 %v2568
        %2644 = vmatprep.subr.bf16.mxu0 0
        %2645 = vmatpush1.bf16.msra.mxu0 %v2567
        %2646 = vmatprep.subr.bf16.mxu0 0
        %2647 = vmatpush1.bf16.msra.mxu0 %v2566
        %2648 = vmatprep.subr.bf16.mxu0 0
        %2649 = vmatpush1.bf16.msra.mxu0 %v2565
        %2650 = vmatprep.subr.bf16.mxu0 0
        %2651 = vmatpush1.bf16.msra.mxu0 %v2564
        %2652 = vmatprep.subr.bf16.mxu0 0
        %2653 = vmatpush2.bf16.msra.mxu0 0
        %2654 = vmatprep.subr.bf16.mxu0 0
        %2655 = vmatpush2.bf16.msra.mxu0 0
        %2656 = vmatprep.subr.bf16.mxu0 0
        %2657 = vmatpush2.bf16.msra.mxu0 0
        %2658 = vmatprep.subr.bf16.mxu0 0
        %2659 = vmatpush2.bf16.msra.mxu0 0
        %2660 = vmatprep.subr.bf16.mxu0 0
        %2661 = vmatpush2.bf16.msra.mxu0 %v2575
        %2662 = vmatprep.subr.bf16.mxu0 0
        %2663 = vmatpush2.bf16.msra.mxu0 %v2574
        %2664 = vmatprep.subr.bf16.mxu0 0
        %2665 = vmatpush2.bf16.msra.mxu0 %v2573
        %2666 = vmatprep.subr.bf16.mxu0 0
        %2667 = vmatpush2.bf16.msra.mxu0 %v2572
        %2668 = vmatprep.mubr.bf16.mxu0 %v2589
        %2669 = vmatmul.mubr.bf16.gmra.mxu0 %v2468
        %v2670 = vpop.f32.mrf.mxu0
        %v2671 = vadd.f32 %v2246, %v2670
        %v2672 = vpop.f32.mrf.mxu0
        %v2673 = vpop.f32.mrf.mxu0
        %v2674 = vadd.f32 %v2249, %v2673
        %v2675 = vpop.f32.mrf.mxu0
        %2676 = vmatprep.mubr.bf16.mxu0 %v2592
        %2677 = vmatmul.mubr.bf16.gmra.mxu0 %v2470
        %v2678 = vpop.f32.mrf.mxu0
        %v2679 = vadd.f32 %v2254, %v2678
        %v2680 = vpop.f32.mrf.mxu0
        %v2681 = vpop.f32.mrf.mxu0
        %v2682 = vadd.f32 %v2257, %v2681
        %v2683 = vpop.f32.mrf.mxu0
        %2684 = vmatprep.mubr.bf16.mxu0 %v2595
        %2685 = vmatmul.mubr.bf16.gmra.mxu0 %v2472
        %v2686 = vpop.f32.mrf.mxu0
        %v2687 = vadd.f32 %v2262, %v2686
        %v2688 = vpop.f32.mrf.mxu0
        %v2689 = vpop.f32.mrf.mxu0
        %v2690 = vadd.f32 %v2265, %v2689
        %v2691 = vpop.f32.mrf.mxu0
        %2692 = vmatprep.mubr.bf16.mxu0 %v2598
        %2693 = vmatmul.mubr.bf16.gmra.mxu0 %v2474
        %v2694 = vpop.f32.mrf.mxu0
        %v2695 = vadd.f32 %v2270, %v2694
        %v2696 = vpop.f32.mrf.mxu0
        %v2697 = vpop.f32.mrf.mxu0
        %v2698 = vadd.f32 %v2273, %v2697
        %v2699 = vpop.f32.mrf.mxu0
        %2700 = vmatprep.mubr.bf16.mxu0 %v2601
        %2701 = vmatmul.mubr.bf16.gmra.mxu0 %v2476
        %v2702 = vpop.f32.mrf.mxu0
        %v2703 = vadd.f32 %v2278, %v2702
        %v2704 = vpop.f32.mrf.mxu0
        %v2705 = vpop.f32.mrf.mxu0
        %v2706 = vadd.f32 %v2281, %v2705
        %v2707 = vpop.f32.mrf.mxu0
        %2708 = vmatprep.mubr.bf16.mxu0 %v2604
        %2709 = vmatmul.mubr.bf16.gmra.mxu0 %v2478
        %v2710 = vpop.f32.mrf.mxu0
        %v2711 = vadd.f32 %v2286, %v2710
        %v2712 = vpop.f32.mrf.mxu0
        %v2713 = vpop.f32.mrf.mxu0
        %v2714 = vadd.f32 %v2289, %v2713
        %v2715 = vpop.f32.mrf.mxu0
        %2716 = vmatprep.mubr.bf16.mxu0 %v2607
        %2717 = vmatmul.mubr.bf16.gmra.mxu0 %v2480
        %v2718 = vpop.f32.mrf.mxu0
        %v2719 = vadd.f32 %v2294, %v2718
        %v2720 = vpop.f32.mrf.mxu0
        %v2721 = vpop.f32.mrf.mxu0
        %v2722 = vadd.f32 %v2297, %v2721
        %v2723 = vpop.f32.mrf.mxu0
        %2724 = vmatprep.mubr.bf16.mxu0 %v2610
        %2725 = vmatmul.mubr.bf16.gmra.mxu0 %v2482
        %v2726 = vpop.f32.mrf.mxu0
        %v2727 = vadd.f32 %v2302, %v2726
        %v2728 = vpop.f32.mrf.mxu0
        %v2729 = vpop.f32.mrf.mxu0
        %v2730 = vadd.f32 %v2305, %v2729
        %v2731 = vpop.f32.mrf.mxu0
        %2732 = vmatprep.mubr.bf16.mxu0 %v2613
        %2733 = vmatmul.mubr.bf16.gmra.mxu0 %v2484
        %v2734 = vpop.f32.mrf.mxu0
        %v2735 = vadd.f32 %v2310, %v2734
        %v2736 = vpop.f32.mrf.mxu0
        %v2737 = vpop.f32.mrf.mxu0
        %v2738 = vadd.f32 %v2313, %v2737
        %v2739 = vpop.f32.mrf.mxu0
        %2740 = vmatprep.mubr.bf16.mxu0 %v2616
        %2741 = vmatmul.mubr.bf16.gmra.mxu0 %v2486
        %v2742 = vpop.f32.mrf.mxu0
        %v2743 = vadd.f32 %v2318, %v2742
        %v2744 = vpop.f32.mrf.mxu0
        %v2745 = vpop.f32.mrf.mxu0
        %v2746 = vadd.f32 %v2321, %v2745
        %v2747 = vpop.f32.mrf.mxu0
        %2748 = vmatprep.mubr.bf16.mxu0 %v2619
        %2749 = vmatmul.mubr.bf16.gmra.mxu0 %v2488
        %v2750 = vpop.f32.mrf.mxu0
        %v2751 = vadd.f32 %v2326, %v2750
        %v2752 = vpop.f32.mrf.mxu0
        %v2753 = vpop.f32.mrf.mxu0
        %v2754 = vadd.f32 %v2329, %v2753
        %v2755 = vpop.f32.mrf.mxu0
        %2756 = vmatprep.mubr.bf16.mxu0 %v2622
        %2757 = vmatmul.mubr.bf16.gmra.mxu0 %v2490
        %v2758 = vpop.f32.mrf.mxu0
        %v2759 = vadd.f32 %v2334, %v2758
        %v2760 = vpop.f32.mrf.mxu0
        %v2761 = vpop.f32.mrf.mxu0
        %v2762 = vadd.f32 %v2337, %v2761
        %v2763 = vpop.f32.mrf.mxu0
        %2764 = vmatprep.mubr.bf16.mxu0 %v2625
        %2765 = vmatmul.mubr.bf16.gmra.mxu0 %v2492
        %v2766 = vpop.f32.mrf.mxu0
        %v2767 = vadd.f32 %v2342, %v2766
        %v2768 = vpop.f32.mrf.mxu0
        %v2769 = vpop.f32.mrf.mxu0
        %v2770 = vadd.f32 %v2345, %v2769
        %v2771 = vpop.f32.mrf.mxu0
        %2772 = vmatprep.mubr.bf16.mxu0 %v2628
        %2773 = vmatmul.mubr.bf16.gmra.mxu0 %v2494
        %v2774 = vpop.f32.mrf.mxu0
        %v2775 = vadd.f32 %v2350, %v2774
        %v2776 = vpop.f32.mrf.mxu0
        %v2777 = vpop.f32.mrf.mxu0
        %v2778 = vadd.f32 %v2353, %v2777
        %v2779 = vpop.f32.mrf.mxu0
        %2780 = vmatprep.mubr.bf16.mxu0 %v2631
        %2781 = vmatmul.mubr.bf16.gmra.mxu0 %v2496
        %v2782 = vpop.f32.mrf.mxu0
        %v2783 = vadd.f32 %v2358, %v2782
        %v2784 = vpop.f32.mrf.mxu0
        %v2785 = vpop.f32.mrf.mxu0
        %v2786 = vadd.f32 %v2361, %v2785
        %v2787 = vpop.f32.mrf.mxu0
        %2788 = vmatprep.mubr.bf16.mxu0 %v2634
        %2789 = vmatmul.mubr.bf16.gmra.mxu0 %v2498
        %v2790 = vpop.f32.mrf.mxu0
        %v2791 = vadd.f32 %v2366, %v2790
        %v2792 = vpop.f32.mrf.mxu0
        %v2793 = vpop.f32.mrf.mxu0
        %v2794 = vadd.f32 %v2369, %v2793
        %v2795 = vpop.f32.mrf.mxu0
        %2796 = vdwg.mxu0
        %s2797 = scalar_lea.vmem [#allocation2], 32
        %v2798 = vld [vmem:[%s2797] sm:$0xff]
        %v2799 = vld [vmem:[%s2797 + $0x8] sm:$0xff]
        %v2800 = vld [vmem:[%s2797 + $0x10] sm:$0xff]
        %v2801 = vld [vmem:[%s2797 + $0x18] sm:$0xff]
        %v2802 = vld [vmem:[%s2797 + $0x20] sm:$0xff]
        %v2803 = vld [vmem:[%s2797 + $0x28] sm:$0xff]
        %v2804 = vld [vmem:[%s2797 + $0x30] sm:$0xff]
        %v2805 = vld [vmem:[%s2797 + $0x38] sm:$0xff]
        %v2806 = vld [vmem:[%s2797 + $0x40] sm:$0xff]
        %v2807 = vld [vmem:[%s2797 + $0x48] sm:$0xff]
        %v2808 = vld [vmem:[%s2797 + $0x50] sm:$0xff]
        %v2809 = vld [vmem:[%s2797 + $0x58] sm:$0xff]
        %v2810 = vld [vmem:[%s2797 + $0x60] sm:$0xff]
        %v2811 = vld [vmem:[%s2797 + $0x68] sm:$0xff]
        %v2812 = vld [vmem:[%s2797 + $0x70] sm:$0xff]
        %v2813 = vld [vmem:[%s2797 + $0x78] sm:$0xff]
        %v2814 = vld [vmem:[%s2797 + $0x80] sm:$0xff]
        %v2815 = vld [vmem:[%s2797 + $0x88] sm:$0xff]
        %v2816 = vld [vmem:[%s2797 + $0x90] sm:$0xff]
        %v2817 = vld [vmem:[%s2797 + $0x98] sm:$0xff]
        %v2818 = vld [vmem:[%s2797 + $0xa0] sm:$0xff]
        %v2819 = vld [vmem:[%s2797 + $0xa8] sm:$0xff]
        %v2820 = vld [vmem:[%s2797 + $0xb0] sm:$0xff]
        %v2821 = vld [vmem:[%s2797 + $0xb8] sm:$0xff]
        %v2822 = vld [vmem:[%s2797 + $0xc0] sm:$0xff]
        %v2823 = vld [vmem:[%s2797 + $0xc8] sm:$0xff]
        %v2824 = vld [vmem:[%s2797 + $0xd0] sm:$0xff]
        %v2825 = vld [vmem:[%s2797 + $0xd8] sm:$0xff]
        %v2826 = vld [vmem:[%s2797 + $0xe0] sm:$0xff]
        %v2827 = vld [vmem:[%s2797 + $0xe8] sm:$0xff]
        %v2828 = vld [vmem:[%s2797 + $0xf0] sm:$0xff]
        %v2829 = vld [vmem:[%s2797 + $0xf8] sm:$0xff]
        %s2830 = scalar_lea.vmem %s6, 192
        %v2831 = vld [vmem:[%s2830] sm:$0xf]
        %v2832 = vld [vmem:[%s2830 + $0x4] sm:$0xf]
        %v2833 = vld [vmem:[%s2830 + $0x8] sm:$0xf]
        %v2834 = vld [vmem:[%s2830 + $0xc] sm:$0xf]
        %v2835 = vld [vmem:[%s2830 + $0x10] sm:$0xf]
        %v2836 = vld [vmem:[%s2830 + $0x14] sm:$0xf]
        %v2837 = vld [vmem:[%s2830 + $0x18] sm:$0xf]
        %v2838 = vld [vmem:[%s2830 + $0x1c] sm:$0xf]
        %v2839 = vld [vmem:[%s2830 + $0x20] sm:$0xf]
        %v2840 = vld [vmem:[%s2830 + $0x24] sm:$0xf]
        %v2841 = vld [vmem:[%s2830 + $0x28] sm:$0xf]
        %v2842 = vld [vmem:[%s2830 + $0x2c] sm:$0xf]
        %v2843 = vld [vmem:[%s2830 + $0x30] sm:$0xf]
        %v2844 = vld [vmem:[%s2830 + $0x34] sm:$0xf]
        %v2845 = vld [vmem:[%s2830 + $0x38] sm:$0xf]
        %v2846 = vld [vmem:[%s2830 + $0x3c] sm:$0xf]
        %v2847 = vld [vmem:[%s2830 + $0x40] sm:$0xf]
        %v2848 = vld [vmem:[%s2830 + $0x44] sm:$0xf]
        %v2849 = vld [vmem:[%s2830 + $0x48] sm:$0xf]
        %v2850 = vld [vmem:[%s2830 + $0x4c] sm:$0xf]
        %v2851 = vld [vmem:[%s2830 + $0x50] sm:$0xf]
        %v2852 = vld [vmem:[%s2830 + $0x54] sm:$0xf]
        %v2853 = vld [vmem:[%s2830 + $0x58] sm:$0xf]
        %v2854 = vld [vmem:[%s2830 + $0x5c] sm:$0xf]
        %v2887 = vunpack.c.l.b16 %v2798
        %v2888 = vunpack.c.h.b16 %v2798
        %v2889 = vunpack.c.l.b16 %v2799
        %v2890 = vunpack.c.h.b16 %v2799
        %v2891 = vunpack.c.l.b16 %v2800
        %v2892 = vunpack.c.h.b16 %v2800
        %v2893 = vunpack.c.l.b16 %v2801
        %v2894 = vunpack.c.h.b16 %v2801
        %v2895 = vunpack.c.l.b16 %v2802
        %v2896 = vunpack.c.h.b16 %v2802
        %v2897 = vunpack.c.l.b16 %v2803
        %v2898 = vunpack.c.h.b16 %v2803
        %v2899 = vunpack.c.l.b16 %v2804
        %v2900 = vunpack.c.h.b16 %v2804
        %v2901 = vunpack.c.l.b16 %v2805
        %v2902 = vunpack.c.h.b16 %v2805
        %v2903 = vunpack.c.l.b16 %v2806
        %v2904 = vunpack.c.h.b16 %v2806
        %v2905 = vunpack.c.l.b16 %v2807
        %v2906 = vunpack.c.h.b16 %v2807
        %v2907 = vunpack.c.l.b16 %v2808
        %v2908 = vunpack.c.h.b16 %v2808
        %v2909 = vunpack.c.l.b16 %v2809
        %v2910 = vunpack.c.h.b16 %v2809
        %v2911 = vunpack.c.l.b16 %v2810
        %v2912 = vunpack.c.h.b16 %v2810
        %v2913 = vunpack.c.l.b16 %v2811
        %v2914 = vunpack.c.h.b16 %v2811
        %v2915 = vunpack.c.l.b16 %v2812
        %v2916 = vunpack.c.h.b16 %v2812
        %v2917 = vunpack.c.l.b16 %v2813
        %v2918 = vunpack.c.h.b16 %v2813
        %v2919 = vunpack.c.l.b16 %v2814
        %v2920 = vunpack.c.h.b16 %v2814
        %v2921 = vunpack.c.l.b16 %v2815
        %v2922 = vunpack.c.h.b16 %v2815
        %v2923 = vunpack.c.l.b16 %v2816
        %v2924 = vunpack.c.h.b16 %v2816
        %v2925 = vunpack.c.l.b16 %v2817
        %v2926 = vunpack.c.h.b16 %v2817
        %v2927 = vunpack.c.l.b16 %v2818
        %v2928 = vunpack.c.h.b16 %v2818
        %v2929 = vunpack.c.l.b16 %v2819
        %v2930 = vunpack.c.h.b16 %v2819
        %v2931 = vunpack.c.l.b16 %v2820
        %v2932 = vunpack.c.h.b16 %v2820
        %v2933 = vunpack.c.l.b16 %v2821
        %v2934 = vunpack.c.h.b16 %v2821
        %v2935 = vunpack.c.l.b16 %v2822
        %v2936 = vunpack.c.h.b16 %v2822
        %v2937 = vunpack.c.l.b16 %v2823
        %v2938 = vunpack.c.h.b16 %v2823
        %v2939 = vunpack.c.l.b16 %v2824
        %v2940 = vunpack.c.h.b16 %v2824
        %v2941 = vunpack.c.l.b16 %v2825
        %v2942 = vunpack.c.h.b16 %v2825
        %v2943 = vunpack.c.l.b16 %v2826
        %v2944 = vunpack.c.h.b16 %v2826
        %v2945 = vunpack.c.l.b16 %v2827
        %v2946 = vunpack.c.h.b16 %v2827
        %v2947 = vunpack.c.l.b16 %v2828
        %v2948 = vunpack.c.h.b16 %v2828
        %v2949 = vunpack.c.l.b16 %v2829
        %v2950 = vunpack.c.h.b16 %v2829
        %v2951 = vpack.c.b16 %v2889, %v2887
        %v2952 = vpack.c.b16 %v2890, %v2888
        %v2953 = vpack.c.b16 %v2893, %v2891
        %v2954 = vpack.c.b16 %v2894, %v2892
        %v2955 = vpack.c.b16 %v2897, %v2895
        %v2956 = vpack.c.b16 %v2898, %v2896
        %v2957 = vpack.c.b16 %v2901, %v2899
        %v2958 = vpack.c.b16 %v2902, %v2900
        %v2959 = vpack.c.b16 %v2905, %v2903
        %v2960 = vpack.c.b16 %v2906, %v2904
        %v2961 = vpack.c.b16 %v2909, %v2907
        %v2962 = vpack.c.b16 %v2910, %v2908
        %v2963 = vpack.c.b16 %v2913, %v2911
        %v2964 = vpack.c.b16 %v2914, %v2912
        %v2965 = vpack.c.b16 %v2917, %v2915
        %v2966 = vpack.c.b16 %v2918, %v2916
        %v2967 = vpack.c.b16 %v2921, %v2919
        %v2968 = vpack.c.b16 %v2922, %v2920
        %v2969 = vpack.c.b16 %v2925, %v2923
        %v2970 = vpack.c.b16 %v2926, %v2924
        %v2971 = vpack.c.b16 %v2929, %v2927
        %v2972 = vpack.c.b16 %v2930, %v2928
        %v2973 = vpack.c.b16 %v2933, %v2931
        %v2974 = vpack.c.b16 %v2934, %v2932
        %v2975 = vpack.c.b16 %v2937, %v2935
        %v2976 = vpack.c.b16 %v2938, %v2936
        %v2977 = vpack.c.b16 %v2941, %v2939
        %v2978 = vpack.c.b16 %v2942, %v2940
        %v2979 = vpack.c.b16 %v2945, %v2943
        %v2980 = vpack.c.b16 %v2946, %v2944
        %v2981 = vpack.c.b16 %v2949, %v2947
        %v2982 = vpack.c.b16 %v2950, %v2948
        %v3023 = vunpack.c.l.b16 %v2831
        %v3024 = vunpack.c.l.b16 %v2832
        %v3025 = vunpack.c.l.b16 %v2833
        %v3026 = vunpack.c.l.b16 %v2834
        %v3027 = vunpack.c.l.b16 %v2835
        %v3028 = vunpack.c.l.b16 %v2836
        %v3029 = vunpack.c.l.b16 %v2837
        %v3030 = vunpack.c.l.b16 %v2838
        %v3031 = vunpack.c.l.b16 %v2839
        %v3032 = vunpack.c.l.b16 %v2840
        %v3033 = vunpack.c.l.b16 %v2841
        %v3034 = vunpack.c.l.b16 %v2842
        %v3035 = vunpack.c.l.b16 %v2843
        %v3036 = vunpack.c.l.b16 %v2844
        %v3037 = vunpack.c.l.b16 %v2845
        %v3038 = vunpack.c.l.b16 %v2846
        %v3039 = vunpack.c.l.b16 %v2847
        %v3040 = vunpack.c.l.b16 %v2848
        %v3041 = vunpack.c.l.b16 %v2849
        %v3042 = vunpack.c.l.b16 %v2850
        %v3043 = vunpack.c.l.b16 %v2851
        %v3044 = vunpack.c.l.b16 %v2852
        %v3045 = vunpack.c.l.b16 %v2853
        %v3046 = vunpack.c.l.b16 %v2854
        %v3047 = vpack.c.b16 %v3024, %v3023
        %v3048 = vpack.c.b16 %v3026, %v3025
        %v3049 = vpack.c.b16 %v3028, %v3027
        %v3050 = vpack.c.b16 %v3030, %v3029
        %v3051 = vpack.c.b16 %v3032, %v3031
        %v3052 = vpack.c.b16 %v3034, %v3033
        %v3053 = vpack.c.b16 %v3036, %v3035
        %v3054 = vpack.c.b16 %v3038, %v3037
        %v3055 = vpack.c.b16 %v3040, %v3039
        %v3056 = vpack.c.b16 %v3042, %v3041
        %v3057 = vpack.c.b16 %v3044, %v3043
        %v3058 = vpack.c.b16 %v3046, %v3045
        %v3072 = vsel %vm693, %v2952, 0
        %v3075 = vsel %vm693, %v2954, 0
        %v3078 = vsel %vm693, %v2956, 0
        %v3081 = vsel %vm693, %v2958, 0
        %v3084 = vsel %vm693, %v2960, 0
        %v3087 = vsel %vm693, %v2962, 0
        %v3090 = vsel %vm693, %v2964, 0
        %v3093 = vsel %vm693, %v2966, 0
        %v3096 = vsel %vm693, %v2968, 0
        %v3099 = vsel %vm693, %v2970, 0
        %v3102 = vsel %vm693, %v2972, 0
        %v3105 = vsel %vm693, %v2974, 0
        %v3108 = vsel %vm693, %v2976, 0
        %v3111 = vsel %vm693, %v2978, 0
        %v3114 = vsel %vm693, %v2980, 0
        %v3117 = vsel %vm693, %v2982, 0
        %3119 = vmatprep.subr.bf16.mxu0 0
        %3120 = vmatpush1.bf16.msra.mxu0 %v3054
        %3121 = vmatprep.subr.bf16.mxu0 0
        %3122 = vmatpush1.bf16.msra.mxu0 %v3053
        %3123 = vmatprep.subr.bf16.mxu0 0
        %3124 = vmatpush1.bf16.msra.mxu0 %v3052
        %3125 = vmatprep.subr.bf16.mxu0 0
        %3126 = vmatpush1.bf16.msra.mxu0 %v3051
        %3127 = vmatprep.subr.bf16.mxu0 0
        %3128 = vmatpush1.bf16.msra.mxu0 %v3050
        %3129 = vmatprep.subr.bf16.mxu0 0
        %3130 = vmatpush1.bf16.msra.mxu0 %v3049
        %3131 = vmatprep.subr.bf16.mxu0 0
        %3132 = vmatpush1.bf16.msra.mxu0 %v3048
        %3133 = vmatprep.subr.bf16.mxu0 0
        %3134 = vmatpush1.bf16.msra.mxu0 %v3047
        %3135 = vmatprep.subr.bf16.mxu0 0
        %3136 = vmatpush2.bf16.msra.mxu0 0
        %3137 = vmatprep.subr.bf16.mxu0 0
        %3138 = vmatpush2.bf16.msra.mxu0 0
        %3139 = vmatprep.subr.bf16.mxu0 0
        %3140 = vmatpush2.bf16.msra.mxu0 0
        %3141 = vmatprep.subr.bf16.mxu0 0
        %3142 = vmatpush2.bf16.msra.mxu0 0
        %3143 = vmatprep.subr.bf16.mxu0 0
        %3144 = vmatpush2.bf16.msra.mxu0 %v3058
        %3145 = vmatprep.subr.bf16.mxu0 0
        %3146 = vmatpush2.bf16.msra.mxu0 %v3057
        %3147 = vmatprep.subr.bf16.mxu0 0
        %3148 = vmatpush2.bf16.msra.mxu0 %v3056
        %3149 = vmatprep.subr.bf16.mxu0 0
        %3150 = vmatpush2.bf16.msra.mxu0 %v3055
        %3151 = vmatprep.mubr.bf16.mxu0 %v3072
        %3152 = vmatmul.mubr.bf16.gmra.mxu0 %v2951
        %v3153 = vpop.f32.mrf.mxu0
        %v3154 = vadd.f32 0.0, %v3153
        %v3155 = vpop.f32.mrf.mxu0
        %v3156 = vpop.f32.mrf.mxu0
        %v3157 = vadd.f32 0.0, %v3156
        %v3158 = vpop.f32.mrf.mxu0
        %3159 = vmatprep.mubr.bf16.mxu0 %v3075
        %3160 = vmatmul.mubr.bf16.gmra.mxu0 %v2953
        %v3161 = vpop.f32.mrf.mxu0
        %v3162 = vadd.f32 0.0, %v3161
        %v3163 = vpop.f32.mrf.mxu0
        %v3164 = vpop.f32.mrf.mxu0
        %v3165 = vadd.f32 0.0, %v3164
        %v3166 = vpop.f32.mrf.mxu0
        %3167 = vmatprep.mubr.bf16.mxu0 %v3078
        %3168 = vmatmul.mubr.bf16.gmra.mxu0 %v2955
        %v3169 = vpop.f32.mrf.mxu0
        %v3170 = vadd.f32 0.0, %v3169
        %v3171 = vpop.f32.mrf.mxu0
        %v3172 = vpop.f32.mrf.mxu0
        %v3173 = vadd.f32 0.0, %v3172
        %v3174 = vpop.f32.mrf.mxu0
        %3175 = vmatprep.mubr.bf16.mxu0 %v3081
        %3176 = vmatmul.mubr.bf16.gmra.mxu0 %v2957
        %v3177 = vpop.f32.mrf.mxu0
        %v3178 = vadd.f32 0.0, %v3177
        %v3179 = vpop.f32.mrf.mxu0
        %v3180 = vpop.f32.mrf.mxu0
        %v3181 = vadd.f32 0.0, %v3180
        %v3182 = vpop.f32.mrf.mxu0
        %3183 = vmatprep.mubr.bf16.mxu0 %v3084
        %3184 = vmatmul.mubr.bf16.gmra.mxu0 %v2959
        %v3185 = vpop.f32.mrf.mxu0
        %v3186 = vadd.f32 0.0, %v3185
        %v3187 = vpop.f32.mrf.mxu0
        %v3188 = vpop.f32.mrf.mxu0
        %v3189 = vadd.f32 0.0, %v3188
        %v3190 = vpop.f32.mrf.mxu0
        %3191 = vmatprep.mubr.bf16.mxu0 %v3087
        %3192 = vmatmul.mubr.bf16.gmra.mxu0 %v2961
        %v3193 = vpop.f32.mrf.mxu0
        %v3194 = vadd.f32 0.0, %v3193
        %v3195 = vpop.f32.mrf.mxu0
        %v3196 = vpop.f32.mrf.mxu0
        %v3197 = vadd.f32 0.0, %v3196
        %v3198 = vpop.f32.mrf.mxu0
        %3199 = vmatprep.mubr.bf16.mxu0 %v3090
        %3200 = vmatmul.mubr.bf16.gmra.mxu0 %v2963
        %v3201 = vpop.f32.mrf.mxu0
        %v3202 = vadd.f32 0.0, %v3201
        %v3203 = vpop.f32.mrf.mxu0
        %v3204 = vpop.f32.mrf.mxu0
        %v3205 = vadd.f32 0.0, %v3204
        %v3206 = vpop.f32.mrf.mxu0
        %3207 = vmatprep.mubr.bf16.mxu0 %v3093
        %3208 = vmatmul.mubr.bf16.gmra.mxu0 %v2965
        %v3209 = vpop.f32.mrf.mxu0
        %v3210 = vadd.f32 0.0, %v3209
        %v3211 = vpop.f32.mrf.mxu0
        %v3212 = vpop.f32.mrf.mxu0
        %v3213 = vadd.f32 0.0, %v3212
        %v3214 = vpop.f32.mrf.mxu0
        %3215 = vmatprep.mubr.bf16.mxu0 %v3096
        %3216 = vmatmul.mubr.bf16.gmra.mxu0 %v2967
        %v3217 = vpop.f32.mrf.mxu0
        %v3218 = vadd.f32 0.0, %v3217
        %v3219 = vpop.f32.mrf.mxu0
        %v3220 = vpop.f32.mrf.mxu0
        %v3221 = vadd.f32 0.0, %v3220
        %v3222 = vpop.f32.mrf.mxu0
        %3223 = vmatprep.mubr.bf16.mxu0 %v3099
        %3224 = vmatmul.mubr.bf16.gmra.mxu0 %v2969
        %v3225 = vpop.f32.mrf.mxu0
        %v3226 = vadd.f32 0.0, %v3225
        %v3227 = vpop.f32.mrf.mxu0
        %v3228 = vpop.f32.mrf.mxu0
        %v3229 = vadd.f32 0.0, %v3228
        %v3230 = vpop.f32.mrf.mxu0
        %3231 = vmatprep.mubr.bf16.mxu0 %v3102
        %3232 = vmatmul.mubr.bf16.gmra.mxu0 %v2971
        %v3233 = vpop.f32.mrf.mxu0
        %v3234 = vadd.f32 0.0, %v3233
        %v3235 = vpop.f32.mrf.mxu0
        %v3236 = vpop.f32.mrf.mxu0
        %v3237 = vadd.f32 0.0, %v3236
        %v3238 = vpop.f32.mrf.mxu0
        %3239 = vmatprep.mubr.bf16.mxu0 %v3105
        %3240 = vmatmul.mubr.bf16.gmra.mxu0 %v2973
        %v3241 = vpop.f32.mrf.mxu0
        %v3242 = vadd.f32 0.0, %v3241
        %v3243 = vpop.f32.mrf.mxu0
        %v3244 = vpop.f32.mrf.mxu0
        %v3245 = vadd.f32 0.0, %v3244
        %v3246 = vpop.f32.mrf.mxu0
        %3247 = vmatprep.mubr.bf16.mxu0 %v3108
        %3248 = vmatmul.mubr.bf16.gmra.mxu0 %v2975
        %v3249 = vpop.f32.mrf.mxu0
        %v3250 = vadd.f32 0.0, %v3249
        %v3251 = vpop.f32.mrf.mxu0
        %v3252 = vpop.f32.mrf.mxu0
        %v3253 = vadd.f32 0.0, %v3252
        %v3254 = vpop.f32.mrf.mxu0
        %3255 = vmatprep.mubr.bf16.mxu0 %v3111
        %3256 = vmatmul.mubr.bf16.gmra.mxu0 %v2977
        %v3257 = vpop.f32.mrf.mxu0
        %v3258 = vadd.f32 0.0, %v3257
        %v3259 = vpop.f32.mrf.mxu0
        %v3260 = vpop.f32.mrf.mxu0
        %v3261 = vadd.f32 0.0, %v3260
        %v3262 = vpop.f32.mrf.mxu0
        %3263 = vmatprep.mubr.bf16.mxu0 %v3114
        %3264 = vmatmul.mubr.bf16.gmra.mxu0 %v2979
        %v3265 = vpop.f32.mrf.mxu0
        %v3266 = vadd.f32 0.0, %v3265
        %v3267 = vpop.f32.mrf.mxu0
        %v3268 = vpop.f32.mrf.mxu0
        %v3269 = vadd.f32 0.0, %v3268
        %v3270 = vpop.f32.mrf.mxu0
        %3271 = vmatprep.mubr.bf16.mxu0 %v3117
        %3272 = vmatmul.mubr.bf16.gmra.mxu0 %v2981
        %v3273 = vpop.f32.mrf.mxu0
        %v3274 = vadd.f32 0.0, %v3273
        %v3275 = vpop.f32.mrf.mxu0
        %v3276 = vpop.f32.mrf.mxu0
        %v3277 = vadd.f32 0.0, %v3276
        %v3278 = vpop.f32.mrf.mxu0
        %3279 = vdwg.mxu0
        %v3280 = vadd.f32 %v2671, %v3154
        %v3281 = vadd.f32 %v2674, %v3157
        %v3282 = vadd.f32 %v2679, %v3162
        %v3283 = vadd.f32 %v2682, %v3165
        %v3284 = vadd.f32 %v2687, %v3170
        %v3285 = vadd.f32 %v2690, %v3173
        %v3286 = vadd.f32 %v2695, %v3178
        %v3287 = vadd.f32 %v2698, %v3181
        %v3288 = vadd.f32 %v2703, %v3186
        %v3289 = vadd.f32 %v2706, %v3189
        %v3290 = vadd.f32 %v2711, %v3194
        %v3291 = vadd.f32 %v2714, %v3197
        %v3292 = vadd.f32 %v2719, %v3202
        %v3293 = vadd.f32 %v2722, %v3205
        %v3294 = vadd.f32 %v2727, %v3210
        %v3295 = vadd.f32 %v2730, %v3213
        %v3296 = vadd.f32 %v2735, %v3218
        %v3297 = vadd.f32 %v2738, %v3221
        %v3298 = vadd.f32 %v2743, %v3226
        %v3299 = vadd.f32 %v2746, %v3229
        %v3300 = vadd.f32 %v2751, %v3234
        %v3301 = vadd.f32 %v2754, %v3237
        %v3302 = vadd.f32 %v2759, %v3242
        %v3303 = vadd.f32 %v2762, %v3245
        %v3304 = vadd.f32 %v2767, %v3250
        %v3305 = vadd.f32 %v2770, %v3253
        %v3306 = vadd.f32 %v2775, %v3258
        %v3307 = vadd.f32 %v2778, %v3261
        %v3308 = vadd.f32 %v2783, %v3266
        %v3309 = vadd.f32 %v2786, %v3269
        %v3310 = vadd.f32 %v2791, %v3274
        %v3311 = vadd.f32 %v2794, %v3277
        %v3312 = vld [vmem:[%s7] sm:$0x1]
        %v3314 = vlaneseq
        %v3315 = vshrl.u32 %v3314, 7
        %v3316 = vsub.s32 0, %v3315
        %v3317 = vrot.slane %v3312, %v3316
        %v3319 = vadd.f32 %v3280, %v3317
        %v3320 = vadd.f32 %v3281, %v3317
        %v3321 = vadd.f32 %v3282, %v3317
        %v3322 = vadd.f32 %v3283, %v3317
        %v3323 = vadd.f32 %v3284, %v3317
        %v3324 = vadd.f32 %v3285, %v3317
        %v3325 = vadd.f32 %v3286, %v3317
        %v3326 = vadd.f32 %v3287, %v3317
        %v3327 = vadd.f32 %v3288, %v3317
        %v3328 = vadd.f32 %v3289, %v3317
        %v3329 = vadd.f32 %v3290, %v3317
        %v3330 = vadd.f32 %v3291, %v3317
        %v3331 = vadd.f32 %v3292, %v3317
        %v3332 = vadd.f32 %v3293, %v3317
        %v3333 = vadd.f32 %v3294, %v3317
        %v3334 = vadd.f32 %v3295, %v3317
        %v3335 = vadd.f32 %v3296, %v3317
        %v3336 = vadd.f32 %v3297, %v3317
        %v3337 = vadd.f32 %v3298, %v3317
        %v3338 = vadd.f32 %v3299, %v3317
        %v3339 = vadd.f32 %v3300, %v3317
        %v3340 = vadd.f32 %v3301, %v3317
        %v3341 = vadd.f32 %v3302, %v3317
        %v3342 = vadd.f32 %v3303, %v3317
        %v3343 = vadd.f32 %v3304, %v3317
        %v3344 = vadd.f32 %v3305, %v3317
        %v3345 = vadd.f32 %v3306, %v3317
        %v3346 = vadd.f32 %v3307, %v3317
        %v3347 = vadd.f32 %v3308, %v3317
        %v3348 = vadd.f32 %v3309, %v3317
        %v3349 = vadd.f32 %v3310, %v3317
        %v3350 = vadd.f32 %v3311, %v3317
        %v3351 = vld [vmem:[%s479] sm:$0x1]
        %v3352 = vxor.u32 %v3351, 2147483648
        %v3353 = vmul.f32 %v3352, 1.442695
        %v3354 = vpow.pop %v3353
        %v3355 = vadd.f32 %v3354, 1.0
        %v3356 = vrcp.pop %v3355
        %v3357 = vmul.f32 1.0, %v3356
        %v3358 = vmul.f32 %v3351, %v3357
        %v3359 = vld [vmem:[%s8] sm:$0xff]
        %v3360 = vld [vmem:[%s8 + $0x8] sm:$0xff]
        %v3361 = vld [vmem:[%s8 + $0x10] sm:$0xff]
        %v3362 = vld [vmem:[%s8 + $0x18] sm:$0xff]
        %v3363 = vld [vmem:[%s9] sm:$0x1]
        %v3365 = vsel %vm851, %v3358, 0
        %3367 = vmatprep.subr.mxu0 0.0
        %3368 = vmatpush1.msra.mxu0 0.0
        %3369 = vmatprep.subr.mxu0 0.0
        %3370 = vmatpush1.msra.mxu0 0.0
        %3371 = vmatprep.subr.mxu0 0.0
        %3372 = vmatpush1.msra.mxu0 0.0
        %3373 = vmatprep.subr.mxu0 0.0
        %3374 = vmatpush1.msra.mxu0 0.0
        %3375 = vmatprep.subr.mxu0 0.0
        %3376 = vmatpush1.msra.mxu0 0.0
        %3377 = vmatprep.subr.mxu0 0.0
        %3378 = vmatpush1.msra.mxu0 0.0
        %3379 = vmatprep.subr.mxu0 0.0
        %3380 = vmatpush1.msra.mxu0 0.0
        %3381 = vmatprep.subr.mxu0 0.0
        %3382 = vmatpush1.msra.mxu0 0.0
        %3383 = vmatprep.subr.mxu0 0.0
        %3384 = vmatpush1.msra.mxu0 0.0
        %3385 = vmatprep.subr.mxu0 0.0
        %3386 = vmatpush1.msra.mxu0 0.0
        %3387 = vmatprep.subr.mxu0 0.0
        %3388 = vmatpush1.msra.mxu0 0.0
        %3389 = vmatprep.subr.mxu0 0.0
        %3390 = vmatpush1.msra.mxu0 0.0
        %3391 = vmatprep.subr.mxu0 0.0
        %3392 = vmatpush1.msra.mxu0 %v3362
        %3393 = vmatprep.subr.mxu0 0.0
        %3394 = vmatpush1.msra.mxu0 %v3361
        %3395 = vmatprep.subr.mxu0 0.0
        %3396 = vmatpush1.msra.mxu0 %v3360
        %3397 = vmatprep.subr.mxu0 0.0
        %3398 = vmatpush1.msra.mxu0 %v3359
        %3399 = vmatprep.subr.mxu0 0.0
        %3400 = vmatpush2.msra.mxu0 0.0
        %3401 = vmatprep.subr.mxu0 0.0
        %3402 = vmatpush2.msra.mxu0 0.0
        %3403 = vmatprep.subr.mxu0 0.0
        %3404 = vmatpush2.msra.mxu0 0.0
        %3405 = vmatprep.subr.mxu0 0.0
        %3406 = vmatpush2.msra.mxu0 0.0
        %3407 = vmatprep.subr.mxu0 0.0
        %3408 = vmatpush2.msra.mxu0 0.0
        %3409 = vmatprep.subr.mxu0 0.0
        %3410 = vmatpush2.msra.mxu0 0.0
        %3411 = vmatprep.subr.mxu0 0.0
        %3412 = vmatpush2.msra.mxu0 0.0
        %3413 = vmatprep.subr.mxu0 0.0
        %3414 = vmatpush2.msra.mxu0 0.0
        %3415 = vmatprep.subr.mxu0 0.0
        %3416 = vmatpush2.msra.mxu0 0.0
        %3417 = vmatprep.subr.mxu0 0.0
        %3418 = vmatpush2.msra.mxu0 0.0
        %3419 = vmatprep.subr.mxu0 0.0
        %3420 = vmatpush2.msra.mxu0 0.0
        %3421 = vmatprep.subr.mxu0 0.0
        %3422 = vmatpush2.msra.mxu0 0.0
        %3423 = vmatprep.subr.mxu0 0.0
        %3424 = vmatpush2.msra.mxu0 0.0
        %3425 = vmatprep.subr.mxu0 0.0
        %3426 = vmatpush2.msra.mxu0 0.0
        %3427 = vmatprep.subr.mxu0 0.0
        %3428 = vmatpush2.msra.mxu0 0.0
        %3429 = vmatprep.subr.mxu0 0.0
        %3430 = vmatpush2.msra.mxu0 0.0
        %3431 = vmatprep.mubr.f32.mxu0 0.0
        %3432 = vmatmul.mubr.f32.gmra.mxu0 %v3365
        %v3433 = vpop.f32.mrf.mxu0
        %v3434 = vadd.f32 %v3363, %v3433
        %v3435 = vpop.f32.mrf.mxu0
        %3436 = vdwg.mxu0
        %v3437 = vlaneseq
        %v3438 = vshrl.u32 %v3437, 7
        %v3439 = vsub.s32 0, %v3438
        %v3440 = vrot.slane %v3434, %v3439
        %v3441 = vadd.f32 %v3319, %v3440
        %v3442 = vadd.f32 %v3320, %v3440
        %v3443 = vadd.f32 %v3321, %v3440
        %v3444 = vadd.f32 %v3322, %v3440
        %v3445 = vadd.f32 %v3323, %v3440
        %v3446 = vadd.f32 %v3324, %v3440
        %v3447 = vadd.f32 %v3325, %v3440
        %v3448 = vadd.f32 %v3326, %v3440
        %v3449 = vadd.f32 %v3327, %v3440
        %v3450 = vadd.f32 %v3328, %v3440
        %v3451 = vadd.f32 %v3329, %v3440
        %v3452 = vadd.f32 %v3330, %v3440
        %v3453 = vadd.f32 %v3331, %v3440
        %v3454 = vadd.f32 %v3332, %v3440
        %v3455 = vadd.f32 %v3333, %v3440
        %v3456 = vadd.f32 %v3334, %v3440
        %v3457 = vadd.f32 %v3335, %v3440
        %v3458 = vadd.f32 %v3336, %v3440
        %v3459 = vadd.f32 %v3337, %v3440
        %v3460 = vadd.f32 %v3338, %v3440
        %v3461 = vadd.f32 %v3339, %v3440
        %v3462 = vadd.f32 %v3340, %v3440
        %v3463 = vadd.f32 %v3341, %v3440
        %v3464 = vadd.f32 %v3342, %v3440
        %v3465 = vadd.f32 %v3343, %v3440
        %v3466 = vadd.f32 %v3344, %v3440
        %v3467 = vadd.f32 %v3345, %v3440
        %v3468 = vadd.f32 %v3346, %v3440
        %v3469 = vadd.f32 %v3347, %v3440
        %v3470 = vadd.f32 %v3348, %v3440
        %v3471 = vadd.f32 %v3349, %v3440
        %v3472 = vadd.f32 %v3350, %v3440
        %v3474 = vsel %vm693, %v3441, 0
        %v3477 = vsel %vm693, %v3442, 0
        %v3480 = vsel %vm693, %v3443, 0
        %v3483 = vsel %vm693, %v3444, 0
        %v3486 = vsel %vm693, %v3445, 0
        %v3489 = vsel %vm693, %v3446, 0
        %v3492 = vsel %vm693, %v3447, 0
        %v3495 = vsel %vm693, %v3448, 0
        %v3498 = vsel %vm693, %v3449, 0
        %v3501 = vsel %vm693, %v3450, 0
        %v3504 = vsel %vm693, %v3451, 0
        %v3507 = vsel %vm693, %v3452, 0
        %v3510 = vsel %vm693, %v3453, 0
        %v3513 = vsel %vm693, %v3454, 0
        %v3516 = vsel %vm693, %v3455, 0
        %v3519 = vsel %vm693, %v3456, 0
        %v3522 = vsel %vm693, %v3457, 0
        %v3525 = vsel %vm693, %v3458, 0
        %v3528 = vsel %vm693, %v3459, 0
        %v3531 = vsel %vm693, %v3460, 0
        %v3534 = vsel %vm693, %v3461, 0
        %v3537 = vsel %vm693, %v3462, 0
        %v3540 = vsel %vm693, %v3463, 0
        %v3543 = vsel %vm693, %v3464, 0
        %v3546 = vsel %vm693, %v3465, 0
        %v3549 = vsel %vm693, %v3466, 0
        %v3552 = vsel %vm693, %v3467, 0
        %v3555 = vsel %vm693, %v3468, 0
        %v3558 = vsel %vm693, %v3469, 0
        %v3561 = vsel %vm693, %v3470, 0
        %v3564 = vsel %vm693, %v3471, 0
        %v3567 = vsel %vm693, %v3472, 0
        %3569 = vmatprep.subr.mxu0 0.0
        %3570 = vmatpush1.msra.mxu0 0.0
        %3571 = vmatprep.subr.mxu0 0.0
        %3572 = vmatpush1.msra.mxu0 0.0
        %3573 = vmatprep.subr.mxu0 0.0
        %3574 = vmatpush1.msra.mxu0 0.0
        %3575 = vmatprep.subr.mxu0 0.0
        %3576 = vmatpush1.msra.mxu0 0.0
        %3577 = vmatprep.subr.mxu0 0.0
        %3578 = vmatpush1.msra.mxu0 0.0
        %3579 = vmatprep.subr.mxu0 0.0
        %3580 = vmatpush1.msra.mxu0 0.0
        %3581 = vmatprep.subr.mxu0 0.0
        %3582 = vmatpush1.msra.mxu0 0.0
        %3583 = vmatprep.subr.mxu0 0.0
        %3584 = vmatpush1.msra.mxu0 0.0
        %3585 = vmatprep.subr.mxu0 0.0
        %3586 = vmatpush1.msra.mxu0 1.0
        %3587 = vmatprep.subr.mxu0 0.0
        %3588 = vmatpush1.msra.mxu0 1.0
        %3589 = vmatprep.subr.mxu0 0.0
        %3590 = vmatpush1.msra.mxu0 1.0
        %3591 = vmatprep.subr.mxu0 0.0
        %3592 = vmatpush1.msra.mxu0 1.0
        %3593 = vmatprep.subr.mxu0 0.0
        %3594 = vmatpush1.msra.mxu0 1.0
        %3595 = vmatprep.subr.mxu0 0.0
        %3596 = vmatpush1.msra.mxu0 1.0
        %3597 = vmatprep.subr.mxu0 0.0
        %3598 = vmatpush1.msra.mxu0 1.0
        %3599 = vmatprep.subr.mxu0 0.0
        %3600 = vmatpush1.msra.mxu0 1.0
        %3601 = vmatprep.subr.mxu0 0.0
        %3602 = vmatpush2.msra.mxu0 0.0
        %3603 = vmatprep.subr.mxu0 0.0
        %3604 = vmatpush2.msra.mxu0 0.0
        %3605 = vmatprep.subr.mxu0 0.0
        %3606 = vmatpush2.msra.mxu0 0.0
        %3607 = vmatprep.subr.mxu0 0.0
        %3608 = vmatpush2.msra.mxu0 0.0
        %3609 = vmatprep.subr.mxu0 0.0
        %3610 = vmatpush2.msra.mxu0 0.0
        %3611 = vmatprep.subr.mxu0 0.0
        %3612 = vmatpush2.msra.mxu0 0.0
        %3613 = vmatprep.subr.mxu0 0.0
        %3614 = vmatpush2.msra.mxu0 0.0
        %3615 = vmatprep.subr.mxu0 0.0
        %3616 = vmatpush2.msra.mxu0 0.0
        %3617 = vmatprep.subr.mxu0 0.0
        %3618 = vmatpush2.msra.mxu0 0.0
        %3619 = vmatprep.subr.mxu0 0.0
        %3620 = vmatpush2.msra.mxu0 0.0
        %3621 = vmatprep.subr.mxu0 0.0
        %3622 = vmatpush2.msra.mxu0 0.0
        %3623 = vmatprep.subr.mxu0 0.0
        %3624 = vmatpush2.msra.mxu0 0.0
        %3625 = vmatprep.subr.mxu0 0.0
        %3626 = vmatpush2.msra.mxu0 0.0
        %3627 = vmatprep.subr.mxu0 0.0
        %3628 = vmatpush2.msra.mxu0 0.0
        %3629 = vmatprep.subr.mxu0 0.0
        %3630 = vmatpush2.msra.mxu0 0.0
        %3631 = vmatprep.subr.mxu0 0.0
        %3632 = vmatpush2.msra.mxu0 0.0
        %3633 = vmatprep.mubr.f32.mxu0 0.0
        %3634 = vmatmul.mubr.f32.gmra.mxu0 %v3474
        %v3635 = vpop.f32.mrf.mxu0
        %v3636 = vadd.f32 0.0, %v3635
        %v3637 = vpop.f32.mrf.mxu0
        %3638 = vmatprep.mubr.f32.mxu0 0.0
        %3639 = vmatmul.mubr.f32.gmra.mxu0 %v3477
        %v3640 = vpop.f32.mrf.mxu0
        %v3641 = vadd.f32 0.0, %v3640
        %v3642 = vpop.f32.mrf.mxu0
        %3643 = vmatprep.mubr.f32.mxu0 0.0
        %3644 = vmatmul.mubr.f32.gmra.mxu0 %v3480
        %v3645 = vpop.f32.mrf.mxu0
        %v3646 = vadd.f32 0.0, %v3645
        %v3647 = vpop.f32.mrf.mxu0
        %3648 = vmatprep.mubr.f32.mxu0 0.0
        %3649 = vmatmul.mubr.f32.gmra.mxu0 %v3483
        %v3650 = vpop.f32.mrf.mxu0
        %v3651 = vadd.f32 0.0, %v3650
        %v3652 = vpop.f32.mrf.mxu0
        %3653 = vmatprep.mubr.f32.mxu0 0.0
        %3654 = vmatmul.mubr.f32.gmra.mxu0 %v3486
        %v3655 = vpop.f32.mrf.mxu0
        %v3656 = vadd.f32 0.0, %v3655
        %v3657 = vpop.f32.mrf.mxu0
        %3658 = vmatprep.mubr.f32.mxu0 0.0
        %3659 = vmatmul.mubr.f32.gmra.mxu0 %v3489
        %v3660 = vpop.f32.mrf.mxu0
        %v3661 = vadd.f32 0.0, %v3660
        %v3662 = vpop.f32.mrf.mxu0
        %3663 = vmatprep.mubr.f32.mxu0 0.0
        %3664 = vmatmul.mubr.f32.gmra.mxu0 %v3492
        %v3665 = vpop.f32.mrf.mxu0
        %v3666 = vadd.f32 0.0, %v3665
        %v3667 = vpop.f32.mrf.mxu0
        %3668 = vmatprep.mubr.f32.mxu0 0.0
        %3669 = vmatmul.mubr.f32.gmra.mxu0 %v3495
        %v3670 = vpop.f32.mrf.mxu0
        %v3671 = vadd.f32 0.0, %v3670
        %v3672 = vpop.f32.mrf.mxu0
        %3673 = vmatprep.mubr.f32.mxu0 0.0
        %3674 = vmatmul.mubr.f32.gmra.mxu0 %v3498
        %v3675 = vpop.f32.mrf.mxu0
        %v3676 = vadd.f32 0.0, %v3675
        %v3677 = vpop.f32.mrf.mxu0
        %3678 = vmatprep.mubr.f32.mxu0 0.0
        %3679 = vmatmul.mubr.f32.gmra.mxu0 %v3501
        %v3680 = vpop.f32.mrf.mxu0
        %v3681 = vadd.f32 0.0, %v3680
        %v3682 = vpop.f32.mrf.mxu0
        %3683 = vmatprep.mubr.f32.mxu0 0.0
        %3684 = vmatmul.mubr.f32.gmra.mxu0 %v3504
        %v3685 = vpop.f32.mrf.mxu0
        %v3686 = vadd.f32 0.0, %v3685
        %v3687 = vpop.f32.mrf.mxu0
        %3688 = vmatprep.mubr.f32.mxu0 0.0
        %3689 = vmatmul.mubr.f32.gmra.mxu0 %v3507
        %v3690 = vpop.f32.mrf.mxu0
        %v3691 = vadd.f32 0.0, %v3690
        %v3692 = vpop.f32.mrf.mxu0
        %3693 = vmatprep.mubr.f32.mxu0 0.0
        %3694 = vmatmul.mubr.f32.gmra.mxu0 %v3510
        %v3695 = vpop.f32.mrf.mxu0
        %v3696 = vadd.f32 0.0, %v3695
        %v3697 = vpop.f32.mrf.mxu0
        %3698 = vmatprep.mubr.f32.mxu0 0.0
        %3699 = vmatmul.mubr.f32.gmra.mxu0 %v3513
        %v3700 = vpop.f32.mrf.mxu0
        %v3701 = vadd.f32 0.0, %v3700
        %v3702 = vpop.f32.mrf.mxu0
        %3703 = vmatprep.mubr.f32.mxu0 0.0
        %3704 = vmatmul.mubr.f32.gmra.mxu0 %v3516
        %v3705 = vpop.f32.mrf.mxu0
        %v3706 = vadd.f32 0.0, %v3705
        %v3707 = vpop.f32.mrf.mxu0
        %3708 = vmatprep.mubr.f32.mxu0 0.0
        %3709 = vmatmul.mubr.f32.gmra.mxu0 %v3519
        %v3710 = vpop.f32.mrf.mxu0
        %v3711 = vadd.f32 0.0, %v3710
        %v3712 = vpop.f32.mrf.mxu0
        %3713 = vmatprep.mubr.f32.mxu0 0.0
        %3714 = vmatmul.mubr.f32.gmra.mxu0 %v3522
        %v3715 = vpop.f32.mrf.mxu0
        %v3716 = vadd.f32 0.0, %v3715
        %v3717 = vpop.f32.mrf.mxu0
        %3718 = vmatprep.mubr.f32.mxu0 0.0
        %3719 = vmatmul.mubr.f32.gmra.mxu0 %v3525
        %v3720 = vpop.f32.mrf.mxu0
        %v3721 = vadd.f32 0.0, %v3720
        %v3722 = vpop.f32.mrf.mxu0
        %3723 = vmatprep.mubr.f32.mxu0 0.0
        %3724 = vmatmul.mubr.f32.gmra.mxu0 %v3528
        %v3725 = vpop.f32.mrf.mxu0
        %v3726 = vadd.f32 0.0, %v3725
        %v3727 = vpop.f32.mrf.mxu0
        %3728 = vmatprep.mubr.f32.mxu0 0.0
        %3729 = vmatmul.mubr.f32.gmra.mxu0 %v3531
        %v3730 = vpop.f32.mrf.mxu0
        %v3731 = vadd.f32 0.0, %v3730
        %v3732 = vpop.f32.mrf.mxu0
        %3733 = vmatprep.mubr.f32.mxu0 0.0
        %3734 = vmatmul.mubr.f32.gmra.mxu0 %v3534
        %v3735 = vpop.f32.mrf.mxu0
        %v3736 = vadd.f32 0.0, %v3735
        %v3737 = vpop.f32.mrf.mxu0
        %3738 = vmatprep.mubr.f32.mxu0 0.0
        %3739 = vmatmul.mubr.f32.gmra.mxu0 %v3537
        %v3740 = vpop.f32.mrf.mxu0
        %v3741 = vadd.f32 0.0, %v3740
        %v3742 = vpop.f32.mrf.mxu0
        %3743 = vmatprep.mubr.f32.mxu0 0.0
        %3744 = vmatmul.mubr.f32.gmra.mxu0 %v3540
        %v3745 = vpop.f32.mrf.mxu0
        %v3746 = vadd.f32 0.0, %v3745
        %v3747 = vpop.f32.mrf.mxu0
        %3748 = vmatprep.mubr.f32.mxu0 0.0
        %3749 = vmatmul.mubr.f32.gmra.mxu0 %v3543
        %v3750 = vpop.f32.mrf.mxu0
        %v3751 = vadd.f32 0.0, %v3750
        %v3752 = vpop.f32.mrf.mxu0
        %3753 = vmatprep.mubr.f32.mxu0 0.0
        %3754 = vmatmul.mubr.f32.gmra.mxu0 %v3546
        %v3755 = vpop.f32.mrf.mxu0
        %v3756 = vadd.f32 0.0, %v3755
        %v3757 = vpop.f32.mrf.mxu0
        %3758 = vmatprep.mubr.f32.mxu0 0.0
        %3759 = vmatmul.mubr.f32.gmra.mxu0 %v3549
        %v3760 = vpop.f32.mrf.mxu0
        %v3761 = vadd.f32 0.0, %v3760
        %v3762 = vpop.f32.mrf.mxu0
        %3763 = vmatprep.mubr.f32.mxu0 0.0
        %3764 = vmatmul.mubr.f32.gmra.mxu0 %v3552
        %v3765 = vpop.f32.mrf.mxu0
        %v3766 = vadd.f32 0.0, %v3765
        %v3767 = vpop.f32.mrf.mxu0
        %3768 = vmatprep.mubr.f32.mxu0 0.0
        %3769 = vmatmul.mubr.f32.gmra.mxu0 %v3555
        %v3770 = vpop.f32.mrf.mxu0
        %v3771 = vadd.f32 0.0, %v3770
        %v3772 = vpop.f32.mrf.mxu0
        %3773 = vmatprep.mubr.f32.mxu0 0.0
        %3774 = vmatmul.mubr.f32.gmra.mxu0 %v3558
        %v3775 = vpop.f32.mrf.mxu0
        %v3776 = vadd.f32 0.0, %v3775
        %v3777 = vpop.f32.mrf.mxu0
        %3778 = vmatprep.mubr.f32.mxu0 0.0
        %3779 = vmatmul.mubr.f32.gmra.mxu0 %v3561
        %v3780 = vpop.f32.mrf.mxu0
        %v3781 = vadd.f32 0.0, %v3780
        %v3782 = vpop.f32.mrf.mxu0
        %3783 = vmatprep.mubr.f32.mxu0 0.0
        %3784 = vmatmul.mubr.f32.gmra.mxu0 %v3564
        %v3785 = vpop.f32.mrf.mxu0
        %v3786 = vadd.f32 0.0, %v3785
        %v3787 = vpop.f32.mrf.mxu0
        %3788 = vmatprep.mubr.f32.mxu0 0.0
        %3789 = vmatmul.mubr.f32.gmra.mxu0 %v3567
        %v3790 = vpop.f32.mrf.mxu0
        %v3791 = vadd.f32 0.0, %v3790
        %v3792 = vpop.f32.mrf.mxu0
        %3793 = vdwg.mxu0
        %v3794 = vmul.f32 %v3636, 0.015625
        %v3795 = vmul.f32 %v3641, 0.015625
        %v3796 = vmul.f32 %v3646, 0.015625
        %v3797 = vmul.f32 %v3651, 0.015625
        %v3798 = vmul.f32 %v3656, 0.015625
        %v3799 = vmul.f32 %v3661, 0.015625
        %v3800 = vmul.f32 %v3666, 0.015625
        %v3801 = vmul.f32 %v3671, 0.015625
        %v3802 = vmul.f32 %v3676, 0.015625
        %v3803 = vmul.f32 %v3681, 0.015625
        %v3804 = vmul.f32 %v3686, 0.015625
        %v3805 = vmul.f32 %v3691, 0.015625
        %v3806 = vmul.f32 %v3696, 0.015625
        %v3807 = vmul.f32 %v3701, 0.015625
        %v3808 = vmul.f32 %v3706, 0.015625
        %v3809 = vmul.f32 %v3711, 0.015625
        %v3810 = vmul.f32 %v3716, 0.015625
        %v3811 = vmul.f32 %v3721, 0.015625
        %v3812 = vmul.f32 %v3726, 0.015625
        %v3813 = vmul.f32 %v3731, 0.015625
        %v3814 = vmul.f32 %v3736, 0.015625
        %v3815 = vmul.f32 %v3741, 0.015625
        %v3816 = vmul.f32 %v3746, 0.015625
        %v3817 = vmul.f32 %v3751, 0.015625
        %v3818 = vmul.f32 %v3756, 0.015625
        %v3819 = vmul.f32 %v3761, 0.015625
        %v3820 = vmul.f32 %v3766, 0.015625
        %v3821 = vmul.f32 %v3771, 0.015625
        %v3822 = vmul.f32 %v3776, 0.015625
        %v3823 = vmul.f32 %v3781, 0.015625
        %v3824 = vmul.f32 %v3786, 0.015625
        %v3825 = vmul.f32 %v3791, 0.015625
        %v3826 = vmul.f32 %v3441, %v3441
        %v3827 = vmul.f32 %v3442, %v3442
        %v3828 = vmul.f32 %v3443, %v3443
        %v3829 = vmul.f32 %v3444, %v3444
        %v3830 = vmul.f32 %v3445, %v3445
        %v3831 = vmul.f32 %v3446, %v3446
        %v3832 = vmul.f32 %v3447, %v3447
        %v3833 = vmul.f32 %v3448, %v3448
        %v3834 = vmul.f32 %v3449, %v3449
        %v3835 = vmul.f32 %v3450, %v3450
        %v3836 = vmul.f32 %v3451, %v3451
        %v3837 = vmul.f32 %v3452, %v3452
        %v3838 = vmul.f32 %v3453, %v3453
        %v3839 = vmul.f32 %v3454, %v3454
        %v3840 = vmul.f32 %v3455, %v3455
        %v3841 = vmul.f32 %v3456, %v3456
        %v3842 = vmul.f32 %v3457, %v3457
        %v3843 = vmul.f32 %v3458, %v3458
        %v3844 = vmul.f32 %v3459, %v3459
        %v3845 = vmul.f32 %v3460, %v3460
        %v3846 = vmul.f32 %v3461, %v3461
        %v3847 = vmul.f32 %v3462, %v3462
        %v3848 = vmul.f32 %v3463, %v3463
        %v3849 = vmul.f32 %v3464, %v3464
        %v3850 = vmul.f32 %v3465, %v3465
        %v3851 = vmul.f32 %v3466, %v3466
        %v3852 = vmul.f32 %v3467, %v3467
        %v3853 = vmul.f32 %v3468, %v3468
        %v3854 = vmul.f32 %v3469, %v3469
        %v3855 = vmul.f32 %v3470, %v3470
        %v3856 = vmul.f32 %v3471, %v3471
        %v3857 = vmul.f32 %v3472, %v3472
        %v3859 = vsel %vm693, %v3826, 0
        %v3862 = vsel %vm693, %v3827, 0
        %v3865 = vsel %vm693, %v3828, 0
        %v3868 = vsel %vm693, %v3829, 0
        %v3871 = vsel %vm693, %v3830, 0
        %v3874 = vsel %vm693, %v3831, 0
        %v3877 = vsel %vm693, %v3832, 0
        %v3880 = vsel %vm693, %v3833, 0
        %v3883 = vsel %vm693, %v3834, 0
        %v3886 = vsel %vm693, %v3835, 0
        %v3889 = vsel %vm693, %v3836, 0
        %v3892 = vsel %vm693, %v3837, 0
        %v3895 = vsel %vm693, %v3838, 0
        %v3898 = vsel %vm693, %v3839, 0
        %v3901 = vsel %vm693, %v3840, 0
        %v3904 = vsel %vm693, %v3841, 0
        %v3907 = vsel %vm693, %v3842, 0
        %v3910 = vsel %vm693, %v3843, 0
        %v3913 = vsel %vm693, %v3844, 0
        %v3916 = vsel %vm693, %v3845, 0
        %v3919 = vsel %vm693, %v3846, 0
        %v3922 = vsel %vm693, %v3847, 0
        %v3925 = vsel %vm693, %v3848, 0
        %v3928 = vsel %vm693, %v3849, 0
        %v3931 = vsel %vm693, %v3850, 0
        %v3934 = vsel %vm693, %v3851, 0
        %v3937 = vsel %vm693, %v3852, 0
        %v3940 = vsel %vm693, %v3853, 0
        %v3943 = vsel %vm693, %v3854, 0
        %v3946 = vsel %vm693, %v3855, 0
        %v3949 = vsel %vm693, %v3856, 0
        %v3952 = vsel %vm693, %v3857, 0
        %3954 = vmatprep.subr.mxu0 0.0
        %3955 = vmatpush1.msra.mxu0 0.0
        %3956 = vmatprep.subr.mxu0 0.0
        %3957 = vmatpush1.msra.mxu0 0.0
        %3958 = vmatprep.subr.mxu0 0.0
        %3959 = vmatpush1.msra.mxu0 0.0
        %3960 = vmatprep.subr.mxu0 0.0
        %3961 = vmatpush1.msra.mxu0 0.0
        %3962 = vmatprep.subr.mxu0 0.0
        %3963 = vmatpush1.msra.mxu0 0.0
        %3964 = vmatprep.subr.mxu0 0.0
        %3965 = vmatpush1.msra.mxu0 0.0
        %3966 = vmatprep.subr.mxu0 0.0
        %3967 = vmatpush1.msra.mxu0 0.0
        %3968 = vmatprep.subr.mxu0 0.0
        %3969 = vmatpush1.msra.mxu0 0.0
        %3970 = vmatprep.subr.mxu0 0.0
        %3971 = vmatpush1.msra.mxu0 1.0
        %3972 = vmatprep.subr.mxu0 0.0
        %3973 = vmatpush1.msra.mxu0 1.0
        %3974 = vmatprep.subr.mxu0 0.0
        %3975 = vmatpush1.msra.mxu0 1.0
        %3976 = vmatprep.subr.mxu0 0.0
        %3977 = vmatpush1.msra.mxu0 1.0
        %3978 = vmatprep.subr.mxu0 0.0
        %3979 = vmatpush1.msra.mxu0 1.0
        %3980 = vmatprep.subr.mxu0 0.0
        %3981 = vmatpush1.msra.mxu0 1.0
        %3982 = vmatprep.subr.mxu0 0.0
        %3983 = vmatpush1.msra.mxu0 1.0
        %3984 = vmatprep.subr.mxu0 0.0
        %3985 = vmatpush1.msra.mxu0 1.0
        %3986 = vmatprep.subr.mxu0 0.0
        %3987 = vmatpush2.msra.mxu0 0.0
        %3988 = vmatprep.subr.mxu0 0.0
        %3989 = vmatpush2.msra.mxu0 0.0
        %3990 = vmatprep.subr.mxu0 0.0
        %3991 = vmatpush2.msra.mxu0 0.0
        %3992 = vmatprep.subr.mxu0 0.0
        %3993 = vmatpush2.msra.mxu0 0.0
        %3994 = vmatprep.subr.mxu0 0.0
        %3995 = vmatpush2.msra.mxu0 0.0
        %3996 = vmatprep.subr.mxu0 0.0
        %3997 = vmatpush2.msra.mxu0 0.0
        %3998 = vmatprep.subr.mxu0 0.0
        %3999 = vmatpush2.msra.mxu0 0.0
        %4000 = vmatprep.subr.mxu0 0.0
        %4001 = vmatpush2.msra.mxu0 0.0
        %4002 = vmatprep.subr.mxu0 0.0
        %4003 = vmatpush2.msra.mxu0 0.0
        %4004 = vmatprep.subr.mxu0 0.0
        %4005 = vmatpush2.msra.mxu0 0.0
        %4006 = vmatprep.subr.mxu0 0.0
        %4007 = vmatpush2.msra.mxu0 0.0
        %4008 = vmatprep.subr.mxu0 0.0
        %4009 = vmatpush2.msra.mxu0 0.0
        %4010 = vmatprep.subr.mxu0 0.0
        %4011 = vmatpush2.msra.mxu0 0.0
        %4012 = vmatprep.subr.mxu0 0.0
        %4013 = vmatpush2.msra.mxu0 0.0
        %4014 = vmatprep.subr.mxu0 0.0
        %4015 = vmatpush2.msra.mxu0 0.0
        %4016 = vmatprep.subr.mxu0 0.0
        %4017 = vmatpush2.msra.mxu0 0.0
        %4018 = vmatprep.mubr.f32.mxu0 0.0
        %4019 = vmatmul.mubr.f32.gmra.mxu0 %v3859
        %v4020 = vpop.f32.mrf.mxu0
        %v4021 = vadd.f32 0.0, %v4020
        %v4022 = vpop.f32.mrf.mxu0
        %4023 = vmatprep.mubr.f32.mxu0 0.0
        %4024 = vmatmul.mubr.f32.gmra.mxu0 %v3862
        %v4025 = vpop.f32.mrf.mxu0
        %v4026 = vadd.f32 0.0, %v4025
        %v4027 = vpop.f32.mrf.mxu0
        %4028 = vmatprep.mubr.f32.mxu0 0.0
        %4029 = vmatmul.mubr.f32.gmra.mxu0 %v3865
        %v4030 = vpop.f32.mrf.mxu0
        %v4031 = vadd.f32 0.0, %v4030
        %v4032 = vpop.f32.mrf.mxu0
        %4033 = vmatprep.mubr.f32.mxu0 0.0
        %4034 = vmatmul.mubr.f32.gmra.mxu0 %v3868
        %v4035 = vpop.f32.mrf.mxu0
        %v4036 = vadd.f32 0.0, %v4035
        %v4037 = vpop.f32.mrf.mxu0
        %4038 = vmatprep.mubr.f32.mxu0 0.0
        %4039 = vmatmul.mubr.f32.gmra.mxu0 %v3871
        %v4040 = vpop.f32.mrf.mxu0
        %v4041 = vadd.f32 0.0, %v4040
        %v4042 = vpop.f32.mrf.mxu0
        %4043 = vmatprep.mubr.f32.mxu0 0.0
        %4044 = vmatmul.mubr.f32.gmra.mxu0 %v3874
        %v4045 = vpop.f32.mrf.mxu0
        %v4046 = vadd.f32 0.0, %v4045
        %v4047 = vpop.f32.mrf.mxu0
        %4048 = vmatprep.mubr.f32.mxu0 0.0
        %4049 = vmatmul.mubr.f32.gmra.mxu0 %v3877
        %v4050 = vpop.f32.mrf.mxu0
        %v4051 = vadd.f32 0.0, %v4050
        %v4052 = vpop.f32.mrf.mxu0
        %4053 = vmatprep.mubr.f32.mxu0 0.0
        %4054 = vmatmul.mubr.f32.gmra.mxu0 %v3880
        %v4055 = vpop.f32.mrf.mxu0
        %v4056 = vadd.f32 0.0, %v4055
        %v4057 = vpop.f32.mrf.mxu0
        %4058 = vmatprep.mubr.f32.mxu0 0.0
        %4059 = vmatmul.mubr.f32.gmra.mxu0 %v3883
        %v4060 = vpop.f32.mrf.mxu0
        %v4061 = vadd.f32 0.0, %v4060
        %v4062 = vpop.f32.mrf.mxu0
        %4063 = vmatprep.mubr.f32.mxu0 0.0
        %4064 = vmatmul.mubr.f32.gmra.mxu0 %v3886
        %v4065 = vpop.f32.mrf.mxu0
        %v4066 = vadd.f32 0.0, %v4065
        %v4067 = vpop.f32.mrf.mxu0
        %4068 = vmatprep.mubr.f32.mxu0 0.0
        %4069 = vmatmul.mubr.f32.gmra.mxu0 %v3889
        %v4070 = vpop.f32.mrf.mxu0
        %v4071 = vadd.f32 0.0, %v4070
        %v4072 = vpop.f32.mrf.mxu0
        %4073 = vmatprep.mubr.f32.mxu0 0.0
        %4074 = vmatmul.mubr.f32.gmra.mxu0 %v3892
        %v4075 = vpop.f32.mrf.mxu0
        %v4076 = vadd.f32 0.0, %v4075
        %v4077 = vpop.f32.mrf.mxu0
        %4078 = vmatprep.mubr.f32.mxu0 0.0
        %4079 = vmatmul.mubr.f32.gmra.mxu0 %v3895
        %v4080 = vpop.f32.mrf.mxu0
        %v4081 = vadd.f32 0.0, %v4080
        %v4082 = vpop.f32.mrf.mxu0
        %4083 = vmatprep.mubr.f32.mxu0 0.0
        %4084 = vmatmul.mubr.f32.gmra.mxu0 %v3898
        %v4085 = vpop.f32.mrf.mxu0
        %v4086 = vadd.f32 0.0, %v4085
        %v4087 = vpop.f32.mrf.mxu0
        %4088 = vmatprep.mubr.f32.mxu0 0.0
        %4089 = vmatmul.mubr.f32.gmra.mxu0 %v3901
        %v4090 = vpop.f32.mrf.mxu0
        %v4091 = vadd.f32 0.0, %v4090
        %v4092 = vpop.f32.mrf.mxu0
        %4093 = vmatprep.mubr.f32.mxu0 0.0
        %4094 = vmatmul.mubr.f32.gmra.mxu0 %v3904
        %v4095 = vpop.f32.mrf.mxu0
        %v4096 = vadd.f32 0.0, %v4095
        %v4097 = vpop.f32.mrf.mxu0
        %4098 = vmatprep.mubr.f32.mxu0 0.0
        %4099 = vmatmul.mubr.f32.gmra.mxu0 %v3907
        %v4100 = vpop.f32.mrf.mxu0
        %v4101 = vadd.f32 0.0, %v4100
        %v4102 = vpop.f32.mrf.mxu0
        %4103 = vmatprep.mubr.f32.mxu0 0.0
        %4104 = vmatmul.mubr.f32.gmra.mxu0 %v3910
        %v4105 = vpop.f32.mrf.mxu0
        %v4106 = vadd.f32 0.0, %v4105
        %v4107 = vpop.f32.mrf.mxu0
        %4108 = vmatprep.mubr.f32.mxu0 0.0
        %4109 = vmatmul.mubr.f32.gmra.mxu0 %v3913
        %v4110 = vpop.f32.mrf.mxu0
        %v4111 = vadd.f32 0.0, %v4110
        %v4112 = vpop.f32.mrf.mxu0
        %4113 = vmatprep.mubr.f32.mxu0 0.0
        %4114 = vmatmul.mubr.f32.gmra.mxu0 %v3916
        %v4115 = vpop.f32.mrf.mxu0
        %v4116 = vadd.f32 0.0, %v4115
        %v4117 = vpop.f32.mrf.mxu0
        %4118 = vmatprep.mubr.f32.mxu0 0.0
        %4119 = vmatmul.mubr.f32.gmra.mxu0 %v3919
        %v4120 = vpop.f32.mrf.mxu0
        %v4121 = vadd.f32 0.0, %v4120
        %v4122 = vpop.f32.mrf.mxu0
        %4123 = vmatprep.mubr.f32.mxu0 0.0
        %4124 = vmatmul.mubr.f32.gmra.mxu0 %v3922
        %v4125 = vpop.f32.mrf.mxu0
        %v4126 = vadd.f32 0.0, %v4125
        %v4127 = vpop.f32.mrf.mxu0
        %4128 = vmatprep.mubr.f32.mxu0 0.0
        %4129 = vmatmul.mubr.f32.gmra.mxu0 %v3925
        %v4130 = vpop.f32.mrf.mxu0
        %v4131 = vadd.f32 0.0, %v4130
        %v4132 = vpop.f32.mrf.mxu0
        %4133 = vmatprep.mubr.f32.mxu0 0.0
        %4134 = vmatmul.mubr.f32.gmra.mxu0 %v3928
        %v4135 = vpop.f32.mrf.mxu0
        %v4136 = vadd.f32 0.0, %v4135
        %v4137 = vpop.f32.mrf.mxu0
        %4138 = vmatprep.mubr.f32.mxu0 0.0
        %4139 = vmatmul.mubr.f32.gmra.mxu0 %v3931
        %v4140 = vpop.f32.mrf.mxu0
        %v4141 = vadd.f32 0.0, %v4140
        %v4142 = vpop.f32.mrf.mxu0
        %4143 = vmatprep.mubr.f32.mxu0 0.0
        %4144 = vmatmul.mubr.f32.gmra.mxu0 %v3934
        %v4145 = vpop.f32.mrf.mxu0
        %v4146 = vadd.f32 0.0, %v4145
        %v4147 = vpop.f32.mrf.mxu0
        %4148 = vmatprep.mubr.f32.mxu0 0.0
        %4149 = vmatmul.mubr.f32.gmra.mxu0 %v3937
        %v4150 = vpop.f32.mrf.mxu0
        %v4151 = vadd.f32 0.0, %v4150
        %v4152 = vpop.f32.mrf.mxu0
        %4153 = vmatprep.mubr.f32.mxu0 0.0
        %4154 = vmatmul.mubr.f32.gmra.mxu0 %v3940
        %v4155 = vpop.f32.mrf.mxu0
        %v4156 = vadd.f32 0.0, %v4155
        %v4157 = vpop.f32.mrf.mxu0
        %4158 = vmatprep.mubr.f32.mxu0 0.0
        %4159 = vmatmul.mubr.f32.gmra.mxu0 %v3943
        %v4160 = vpop.f32.mrf.mxu0
        %v4161 = vadd.f32 0.0, %v4160
        %v4162 = vpop.f32.mrf.mxu0
        %4163 = vmatprep.mubr.f32.mxu0 0.0
        %4164 = vmatmul.mubr.f32.gmra.mxu0 %v3946
        %v4165 = vpop.f32.mrf.mxu0
        %v4166 = vadd.f32 0.0, %v4165
        %v4167 = vpop.f32.mrf.mxu0
        %4168 = vmatprep.mubr.f32.mxu0 0.0
        %4169 = vmatmul.mubr.f32.gmra.mxu0 %v3949
        %v4170 = vpop.f32.mrf.mxu0
        %v4171 = vadd.f32 0.0, %v4170
        %v4172 = vpop.f32.mrf.mxu0
        %4173 = vmatprep.mubr.f32.mxu0 0.0
        %4174 = vmatmul.mubr.f32.gmra.mxu0 %v3952
        %v4175 = vpop.f32.mrf.mxu0
        %v4176 = vadd.f32 0.0, %v4175
        %v4177 = vpop.f32.mrf.mxu0
        %4178 = vdwg.mxu0
        %v4179 = vmul.f32 %v4021, 0.015625
        %v4180 = vmul.f32 %v4026, 0.015625
        %v4181 = vmul.f32 %v4031, 0.015625
        %v4182 = vmul.f32 %v4036, 0.015625
        %v4183 = vmul.f32 %v4041, 0.015625
        %v4184 = vmul.f32 %v4046, 0.015625
        %v4185 = vmul.f32 %v4051, 0.015625
        %v4186 = vmul.f32 %v4056, 0.015625
        %v4187 = vmul.f32 %v4061, 0.015625
        %v4188 = vmul.f32 %v4066, 0.015625
        %v4189 = vmul.f32 %v4071, 0.015625
        %v4190 = vmul.f32 %v4076, 0.015625
        %v4191 = vmul.f32 %v4081, 0.015625
        %v4192 = vmul.f32 %v4086, 0.015625
        %v4193 = vmul.f32 %v4091, 0.015625
        %v4194 = vmul.f32 %v4096, 0.015625
        %v4195 = vmul.f32 %v4101, 0.015625
        %v4196 = vmul.f32 %v4106, 0.015625
        %v4197 = vmul.f32 %v4111, 0.015625
        %v4198 = vmul.f32 %v4116, 0.015625
        %v4199 = vmul.f32 %v4121, 0.015625
        %v4200 = vmul.f32 %v4126, 0.015625
        %v4201 = vmul.f32 %v4131, 0.015625
        %v4202 = vmul.f32 %v4136, 0.015625
        %v4203 = vmul.f32 %v4141, 0.015625
        %v4204 = vmul.f32 %v4146, 0.015625
        %v4205 = vmul.f32 %v4151, 0.015625
        %v4206 = vmul.f32 %v4156, 0.015625
        %v4207 = vmul.f32 %v4161, 0.015625
        %v4208 = vmul.f32 %v4166, 0.015625
        %v4209 = vmul.f32 %v4171, 0.015625
        %v4210 = vmul.f32 %v4176, 0.015625
        %v4211 = vmul.f32 %v3794, %v3794
        %v4212 = vmul.f32 %v3795, %v3795
        %v4213 = vmul.f32 %v3796, %v3796
        %v4214 = vmul.f32 %v3797, %v3797
        %v4215 = vmul.f32 %v3798, %v3798
        %v4216 = vmul.f32 %v3799, %v3799
        %v4217 = vmul.f32 %v3800, %v3800
        %v4218 = vmul.f32 %v3801, %v3801
        %v4219 = vmul.f32 %v3802, %v3802
        %v4220 = vmul.f32 %v3803, %v3803
        %v4221 = vmul.f32 %v3804, %v3804
        %v4222 = vmul.f32 %v3805, %v3805
        %v4223 = vmul.f32 %v3806, %v3806
        %v4224 = vmul.f32 %v3807, %v3807
        %v4225 = vmul.f32 %v3808, %v3808
        %v4226 = vmul.f32 %v3809, %v3809
        %v4227 = vmul.f32 %v3810, %v3810
        %v4228 = vmul.f32 %v3811, %v3811
        %v4229 = vmul.f32 %v3812, %v3812
        %v4230 = vmul.f32 %v3813, %v3813
        %v4231 = vmul.f32 %v3814, %v3814
        %v4232 = vmul.f32 %v3815, %v3815
        %v4233 = vmul.f32 %v3816, %v3816
        %v4234 = vmul.f32 %v3817, %v3817
        %v4235 = vmul.f32 %v3818, %v3818
        %v4236 = vmul.f32 %v3819, %v3819
        %v4237 = vmul.f32 %v3820, %v3820
        %v4238 = vmul.f32 %v3821, %v3821
        %v4239 = vmul.f32 %v3822, %v3822
        %v4240 = vmul.f32 %v3823, %v3823
        %v4241 = vmul.f32 %v3824, %v3824
        %v4242 = vmul.f32 %v3825, %v3825
        %v4243 = vsub.f32 %v4179, %v4211
        %v4244 = vsub.f32 %v4180, %v4212
        %v4245 = vsub.f32 %v4181, %v4213
        %v4246 = vsub.f32 %v4182, %v4214
        %v4247 = vsub.f32 %v4183, %v4215
        %v4248 = vsub.f32 %v4184, %v4216
        %v4249 = vsub.f32 %v4185, %v4217
        %v4250 = vsub.f32 %v4186, %v4218
        %v4251 = vsub.f32 %v4187, %v4219
        %v4252 = vsub.f32 %v4188, %v4220
        %v4253 = vsub.f32 %v4189, %v4221
        %v4254 = vsub.f32 %v4190, %v4222
        %v4255 = vsub.f32 %v4191, %v4223
        %v4256 = vsub.f32 %v4192, %v4224
        %v4257 = vsub.f32 %v4193, %v4225
        %v4258 = vsub.f32 %v4194, %v4226
        %v4259 = vsub.f32 %v4195, %v4227
        %v4260 = vsub.f32 %v4196, %v4228
        %v4261 = vsub.f32 %v4197, %v4229
        %v4262 = vsub.f32 %v4198, %v4230
        %v4263 = vsub.f32 %v4199, %v4231
        %v4264 = vsub.f32 %v4200, %v4232
        %v4265 = vsub.f32 %v4201, %v4233
        %v4266 = vsub.f32 %v4202, %v4234
        %v4267 = vsub.f32 %v4203, %v4235
        %v4268 = vsub.f32 %v4204, %v4236
        %v4269 = vsub.f32 %v4205, %v4237
        %v4270 = vsub.f32 %v4206, %v4238
        %v4271 = vsub.f32 %v4207, %v4239
        %v4272 = vsub.f32 %v4208, %v4240
        %v4273 = vsub.f32 %v4209, %v4241
        %v4274 = vsub.f32 %v4210, %v4242
        %v4275 = vadd.f32 %v4243, 1e-06
        %v4276 = vadd.f32 %v4244, 1e-06
        %v4277 = vadd.f32 %v4245, 1e-06
        %v4278 = vadd.f32 %v4246, 1e-06
        %v4279 = vadd.f32 %v4247, 1e-06
        %v4280 = vadd.f32 %v4248, 1e-06
        %v4281 = vadd.f32 %v4249, 1e-06
        %v4282 = vadd.f32 %v4250, 1e-06
        %v4283 = vadd.f32 %v4251, 1e-06
        %v4284 = vadd.f32 %v4252, 1e-06
        %v4285 = vadd.f32 %v4253, 1e-06
        %v4286 = vadd.f32 %v4254, 1e-06
        %v4287 = vadd.f32 %v4255, 1e-06
        %v4288 = vadd.f32 %v4256, 1e-06
        %v4289 = vadd.f32 %v4257, 1e-06
        %v4290 = vadd.f32 %v4258, 1e-06
        %v4291 = vadd.f32 %v4259, 1e-06
        %v4292 = vadd.f32 %v4260, 1e-06
        %v4293 = vadd.f32 %v4261, 1e-06
        %v4294 = vadd.f32 %v4262, 1e-06
        %v4295 = vadd.f32 %v4263, 1e-06
        %v4296 = vadd.f32 %v4264, 1e-06
        %v4297 = vadd.f32 %v4265, 1e-06
        %v4298 = vadd.f32 %v4266, 1e-06
        %v4299 = vadd.f32 %v4267, 1e-06
        %v4300 = vadd.f32 %v4268, 1e-06
        %v4301 = vadd.f32 %v4269, 1e-06
        %v4302 = vadd.f32 %v4270, 1e-06
        %v4303 = vadd.f32 %v4271, 1e-06
        %v4304 = vadd.f32 %v4272, 1e-06
        %v4305 = vadd.f32 %v4273, 1e-06
        %v4306 = vadd.f32 %v4274, 1e-06
        %v4307 = vrsqrt.pop %v4275
        %v4308 = vrsqrt.pop %v4276
        %v4309 = vrsqrt.pop %v4277
        %v4310 = vrsqrt.pop %v4278
        %v4311 = vrsqrt.pop %v4279
        %v4312 = vrsqrt.pop %v4280
        %v4313 = vrsqrt.pop %v4281
        %v4314 = vrsqrt.pop %v4282
        %v4315 = vrsqrt.pop %v4283
        %v4316 = vrsqrt.pop %v4284
        %v4317 = vrsqrt.pop %v4285
        %v4318 = vrsqrt.pop %v4286
        %v4319 = vrsqrt.pop %v4287
        %v4320 = vrsqrt.pop %v4288
        %v4321 = vrsqrt.pop %v4289
        %v4322 = vrsqrt.pop %v4290
        %v4323 = vrsqrt.pop %v4291
        %v4324 = vrsqrt.pop %v4292
        %v4325 = vrsqrt.pop %v4293
        %v4326 = vrsqrt.pop %v4294
        %v4327 = vrsqrt.pop %v4295
        %v4328 = vrsqrt.pop %v4296
        %v4329 = vrsqrt.pop %v4297
        %v4330 = vrsqrt.pop %v4298
        %v4331 = vrsqrt.pop %v4299
        %v4332 = vrsqrt.pop %v4300
        %v4333 = vrsqrt.pop %v4301
        %v4334 = vrsqrt.pop %v4302
        %v4335 = vrsqrt.pop %v4303
        %v4336 = vrsqrt.pop %v4304
        %v4337 = vrsqrt.pop %v4305
        %v4338 = vrsqrt.pop %v4306
        %4340 = vset.pattern.permute.xlu0 0
        %4341 = vperm.xlu0 %4340, %v4307
        %v4342 = vpop.permute.xlu0 %4341
        %4345 = vset.pattern.permute.xlu0 0
        %4346 = vperm.xlu0 %4345, %v4308
        %v4347 = vpop.permute.xlu0 %4346
        %4350 = vset.pattern.permute.xlu0 0
        %4351 = vperm.xlu0 %4350, %v4309
        %v4352 = vpop.permute.xlu0 %4351
        %4355 = vset.pattern.permute.xlu0 0
        %4356 = vperm.xlu0 %4355, %v4310
        %v4357 = vpop.permute.xlu0 %4356
        %4360 = vset.pattern.permute.xlu0 0
        %4361 = vperm.xlu0 %4360, %v4311
        %v4362 = vpop.permute.xlu0 %4361
        %4365 = vset.pattern.permute.xlu0 0
        %4366 = vperm.xlu0 %4365, %v4312
        %v4367 = vpop.permute.xlu0 %4366
        %4370 = vset.pattern.permute.xlu0 0
        %4371 = vperm.xlu0 %4370, %v4313
        %v4372 = vpop.permute.xlu0 %4371
        %4375 = vset.pattern.permute.xlu0 0
        %4376 = vperm.xlu0 %4375, %v4314
        %v4377 = vpop.permute.xlu0 %4376
        %4380 = vset.pattern.permute.xlu0 0
        %4381 = vperm.xlu0 %4380, %v4315
        %v4382 = vpop.permute.xlu0 %4381
        %4385 = vset.pattern.permute.xlu0 0
        %4386 = vperm.xlu0 %4385, %v4316
        %v4387 = vpop.permute.xlu0 %4386
        %4390 = vset.pattern.permute.xlu0 0
        %4391 = vperm.xlu0 %4390, %v4317
        %v4392 = vpop.permute.xlu0 %4391
        %4395 = vset.pattern.permute.xlu0 0
        %4396 = vperm.xlu0 %4395, %v4318
        %v4397 = vpop.permute.xlu0 %4396
        %4400 = vset.pattern.permute.xlu0 0
        %4401 = vperm.xlu0 %4400, %v4319
        %v4402 = vpop.permute.xlu0 %4401
        %4405 = vset.pattern.permute.xlu0 0
        %4406 = vperm.xlu0 %4405, %v4320
        %v4407 = vpop.permute.xlu0 %4406
        %4410 = vset.pattern.permute.xlu0 0
        %4411 = vperm.xlu0 %4410, %v4321
        %v4412 = vpop.permute.xlu0 %4411
        %4415 = vset.pattern.permute.xlu0 0
        %4416 = vperm.xlu0 %4415, %v4322
        %v4417 = vpop.permute.xlu0 %4416
        %4420 = vset.pattern.permute.xlu0 0
        %4421 = vperm.xlu0 %4420, %v4323
        %v4422 = vpop.permute.xlu0 %4421
        %4425 = vset.pattern.permute.xlu0 0
        %4426 = vperm.xlu0 %4425, %v4324
        %v4427 = vpop.permute.xlu0 %4426
        %4430 = vset.pattern.permute.xlu0 0
        %4431 = vperm.xlu0 %4430, %v4325
        %v4432 = vpop.permute.xlu0 %4431
        %4435 = vset.pattern.permute.xlu0 0
        %4436 = vperm.xlu0 %4435, %v4326
        %v4437 = vpop.permute.xlu0 %4436
        %4440 = vset.pattern.permute.xlu0 0
        %4441 = vperm.xlu0 %4440, %v4327
        %v4442 = vpop.permute.xlu0 %4441
        %4445 = vset.pattern.permute.xlu0 0
        %4446 = vperm.xlu0 %4445, %v4328
        %v4447 = vpop.permute.xlu0 %4446
        %4450 = vset.pattern.permute.xlu0 0
        %4451 = vperm.xlu0 %4450, %v4329
        %v4452 = vpop.permute.xlu0 %4451
        %4455 = vset.pattern.permute.xlu0 0
        %4456 = vperm.xlu0 %4455, %v4330
        %v4457 = vpop.permute.xlu0 %4456
        %4460 = vset.pattern.permute.xlu0 0
        %4461 = vperm.xlu0 %4460, %v4331
        %v4462 = vpop.permute.xlu0 %4461
        %4465 = vset.pattern.permute.xlu0 0
        %4466 = vperm.xlu0 %4465, %v4332
        %v4467 = vpop.permute.xlu0 %4466
        %4470 = vset.pattern.permute.xlu0 0
        %4471 = vperm.xlu0 %4470, %v4333
        %v4472 = vpop.permute.xlu0 %4471
        %4475 = vset.pattern.permute.xlu0 0
        %4476 = vperm.xlu0 %4475, %v4334
        %v4477 = vpop.permute.xlu0 %4476
        %4480 = vset.pattern.permute.xlu0 0
        %4481 = vperm.xlu0 %4480, %v4335
        %v4482 = vpop.permute.xlu0 %4481
        %4485 = vset.pattern.permute.xlu0 0
        %4486 = vperm.xlu0 %4485, %v4336
        %v4487 = vpop.permute.xlu0 %4486
        %4490 = vset.pattern.permute.xlu0 0
        %4491 = vperm.xlu0 %4490, %v4337
        %v4492 = vpop.permute.xlu0 %4491
        %4495 = vset.pattern.permute.xlu0 0
        %4496 = vperm.xlu0 %4495, %v4338
        %v4497 = vpop.permute.xlu0 %4496
        %v4499 = vmul.f32 %v3441, %v4342
        %v4500 = vmul.f32 %v3442, %v4347
        %v4501 = vmul.f32 %v3443, %v4352
        %v4502 = vmul.f32 %v3444, %v4357
        %v4503 = vmul.f32 %v3445, %v4362
        %v4504 = vmul.f32 %v3446, %v4367
        %v4505 = vmul.f32 %v3447, %v4372
        %v4506 = vmul.f32 %v3448, %v4377
        %v4507 = vmul.f32 %v3449, %v4382
        %v4508 = vmul.f32 %v3450, %v4387
        %v4509 = vmul.f32 %v3451, %v4392
        %v4510 = vmul.f32 %v3452, %v4397
        %v4511 = vmul.f32 %v3453, %v4402
        %v4512 = vmul.f32 %v3454, %v4407
        %v4513 = vmul.f32 %v3455, %v4412
        %v4514 = vmul.f32 %v3456, %v4417
        %v4515 = vmul.f32 %v3457, %v4422
        %v4516 = vmul.f32 %v3458, %v4427
        %v4517 = vmul.f32 %v3459, %v4432
        %v4518 = vmul.f32 %v3460, %v4437
        %v4519 = vmul.f32 %v3461, %v4442
        %v4520 = vmul.f32 %v3462, %v4447
        %v4521 = vmul.f32 %v3463, %v4452
        %v4522 = vmul.f32 %v3464, %v4457
        %v4523 = vmul.f32 %v3465, %v4462
        %v4524 = vmul.f32 %v3466, %v4467
        %v4525 = vmul.f32 %v3467, %v4472
        %v4526 = vmul.f32 %v3468, %v4477
        %v4527 = vmul.f32 %v3469, %v4482
        %v4528 = vmul.f32 %v3470, %v4487
        %v4529 = vmul.f32 %v3471, %v4492
        %v4530 = vmul.f32 %v3472, %v4497
        %v4531 = vmul.f32 %v3794, %v4307
        %v4532 = vmul.f32 %v3795, %v4308
        %v4533 = vmul.f32 %v3796, %v4309
        %v4534 = vmul.f32 %v3797, %v4310
        %v4535 = vmul.f32 %v3798, %v4311
        %v4536 = vmul.f32 %v3799, %v4312
        %v4537 = vmul.f32 %v3800, %v4313
        %v4538 = vmul.f32 %v3801, %v4314
        %v4539 = vmul.f32 %v3802, %v4315
        %v4540 = vmul.f32 %v3803, %v4316
        %v4541 = vmul.f32 %v3804, %v4317
        %v4542 = vmul.f32 %v3805, %v4318
        %v4543 = vmul.f32 %v3806, %v4319
        %v4544 = vmul.f32 %v3807, %v4320
        %v4545 = vmul.f32 %v3808, %v4321
        %v4546 = vmul.f32 %v3809, %v4322
        %v4547 = vmul.f32 %v3810, %v4323
        %v4548 = vmul.f32 %v3811, %v4324
        %v4549 = vmul.f32 %v3812, %v4325
        %v4550 = vmul.f32 %v3813, %v4326
        %v4551 = vmul.f32 %v3814, %v4327
        %v4552 = vmul.f32 %v3815, %v4328
        %v4553 = vmul.f32 %v3816, %v4329
        %v4554 = vmul.f32 %v3817, %v4330
        %v4555 = vmul.f32 %v3818, %v4331
        %v4556 = vmul.f32 %v3819, %v4332
        %v4557 = vmul.f32 %v3820, %v4333
        %v4558 = vmul.f32 %v3821, %v4334
        %v4559 = vmul.f32 %v3822, %v4335
        %v4560 = vmul.f32 %v3823, %v4336
        %v4561 = vmul.f32 %v3824, %v4337
        %v4562 = vmul.f32 %v3825, %v4338
        %4564 = vset.pattern.permute.xlu0 0
        %4565 = vperm.xlu0 %4564, %v4531
        %v4566 = vpop.permute.xlu0 %4565
        %4569 = vset.pattern.permute.xlu0 0
        %4570 = vperm.xlu0 %4569, %v4532
        %v4571 = vpop.permute.xlu0 %4570
        %4574 = vset.pattern.permute.xlu0 0
        %4575 = vperm.xlu0 %4574, %v4533
        %v4576 = vpop.permute.xlu0 %4575
        %4579 = vset.pattern.permute.xlu0 0
        %4580 = vperm.xlu0 %4579, %v4534
        %v4581 = vpop.permute.xlu0 %4580
        %4584 = vset.pattern.permute.xlu0 0
        %4585 = vperm.xlu0 %4584, %v4535
        %v4586 = vpop.permute.xlu0 %4585
        %4589 = vset.pattern.permute.xlu0 0
        %4590 = vperm.xlu0 %4589, %v4536
        %v4591 = vpop.permute.xlu0 %4590
        %4594 = vset.pattern.permute.xlu0 0
        %4595 = vperm.xlu0 %4594, %v4537
        %v4596 = vpop.permute.xlu0 %4595
        %4599 = vset.pattern.permute.xlu0 0
        %4600 = vperm.xlu0 %4599, %v4538
        %v4601 = vpop.permute.xlu0 %4600
        %4604 = vset.pattern.permute.xlu0 0
        %4605 = vperm.xlu0 %4604, %v4539
        %v4606 = vpop.permute.xlu0 %4605
        %4609 = vset.pattern.permute.xlu0 0
        %4610 = vperm.xlu0 %4609, %v4540
        %v4611 = vpop.permute.xlu0 %4610
        %4614 = vset.pattern.permute.xlu0 0
        %4615 = vperm.xlu0 %4614, %v4541
        %v4616 = vpop.permute.xlu0 %4615
        %4619 = vset.pattern.permute.xlu0 0
        %4620 = vperm.xlu0 %4619, %v4542
        %v4621 = vpop.permute.xlu0 %4620
        %4624 = vset.pattern.permute.xlu0 0
        %4625 = vperm.xlu0 %4624, %v4543
        %v4626 = vpop.permute.xlu0 %4625
        %4629 = vset.pattern.permute.xlu0 0
        %4630 = vperm.xlu0 %4629, %v4544
        %v4631 = vpop.permute.xlu0 %4630
        %4634 = vset.pattern.permute.xlu0 0
        %4635 = vperm.xlu0 %4634, %v4545
        %v4636 = vpop.permute.xlu0 %4635
        %4639 = vset.pattern.permute.xlu0 0
        %4640 = vperm.xlu0 %4639, %v4546
        %v4641 = vpop.permute.xlu0 %4640
        %4644 = vset.pattern.permute.xlu0 0
        %4645 = vperm.xlu0 %4644, %v4547
        %v4646 = vpop.permute.xlu0 %4645
        %4649 = vset.pattern.permute.xlu0 0
        %4650 = vperm.xlu0 %4649, %v4548
        %v4651 = vpop.permute.xlu0 %4650
        %4654 = vset.pattern.permute.xlu0 0
        %4655 = vperm.xlu0 %4654, %v4549
        %v4656 = vpop.permute.xlu0 %4655
        %4659 = vset.pattern.permute.xlu0 0
        %4660 = vperm.xlu0 %4659, %v4550
        %v4661 = vpop.permute.xlu0 %4660
        %4664 = vset.pattern.permute.xlu0 0
        %4665 = vperm.xlu0 %4664, %v4551
        %v4666 = vpop.permute.xlu0 %4665
        %4669 = vset.pattern.permute.xlu0 0
        %4670 = vperm.xlu0 %4669, %v4552
        %v4671 = vpop.permute.xlu0 %4670
        %4674 = vset.pattern.permute.xlu0 0
        %4675 = vperm.xlu0 %4674, %v4553
        %v4676 = vpop.permute.xlu0 %4675
        %4679 = vset.pattern.permute.xlu0 0
        %4680 = vperm.xlu0 %4679, %v4554
        %v4681 = vpop.permute.xlu0 %4680
        %4684 = vset.pattern.permute.xlu0 0
        %4685 = vperm.xlu0 %4684, %v4555
        %v4686 = vpop.permute.xlu0 %4685
        %4689 = vset.pattern.permute.xlu0 0
        %4690 = vperm.xlu0 %4689, %v4556
        %v4691 = vpop.permute.xlu0 %4690
        %4694 = vset.pattern.permute.xlu0 0
        %4695 = vperm.xlu0 %4694, %v4557
        %v4696 = vpop.permute.xlu0 %4695
        %4699 = vset.pattern.permute.xlu0 0
        %4700 = vperm.xlu0 %4699, %v4558
        %v4701 = vpop.permute.xlu0 %4700
        %4704 = vset.pattern.permute.xlu0 0
        %4705 = vperm.xlu0 %4704, %v4559
        %v4706 = vpop.permute.xlu0 %4705
        %4709 = vset.pattern.permute.xlu0 0
        %4710 = vperm.xlu0 %4709, %v4560
        %v4711 = vpop.permute.xlu0 %4710
        %4714 = vset.pattern.permute.xlu0 0
        %4715 = vperm.xlu0 %4714, %v4561
        %v4716 = vpop.permute.xlu0 %4715
        %4719 = vset.pattern.permute.xlu0 0
        %4720 = vperm.xlu0 %4719, %v4562
        %v4721 = vpop.permute.xlu0 %4720
        %v4723 = vsub.f32 %v4499, %v4566
        %v4724 = vsub.f32 %v4500, %v4571
        %v4725 = vsub.f32 %v4501, %v4576
        %v4726 = vsub.f32 %v4502, %v4581
        %v4727 = vsub.f32 %v4503, %v4586
        %v4728 = vsub.f32 %v4504, %v4591
        %v4729 = vsub.f32 %v4505, %v4596
        %v4730 = vsub.f32 %v4506, %v4601
        %v4731 = vsub.f32 %v4507, %v4606
        %v4732 = vsub.f32 %v4508, %v4611
        %v4733 = vsub.f32 %v4509, %v4616
        %v4734 = vsub.f32 %v4510, %v4621
        %v4735 = vsub.f32 %v4511, %v4626
        %v4736 = vsub.f32 %v4512, %v4631
        %v4737 = vsub.f32 %v4513, %v4636
        %v4738 = vsub.f32 %v4514, %v4641
        %v4739 = vsub.f32 %v4515, %v4646
        %v4740 = vsub.f32 %v4516, %v4651
        %v4741 = vsub.f32 %v4517, %v4656
        %v4742 = vsub.f32 %v4518, %v4661
        %v4743 = vsub.f32 %v4519, %v4666
        %v4744 = vsub.f32 %v4520, %v4671
        %v4745 = vsub.f32 %v4521, %v4676
        %v4746 = vsub.f32 %v4522, %v4681
        %v4747 = vsub.f32 %v4523, %v4686
        %v4748 = vsub.f32 %v4524, %v4691
        %v4749 = vsub.f32 %v4525, %v4696
        %v4750 = vsub.f32 %v4526, %v4701
        %v4751 = vsub.f32 %v4527, %v4706
        %v4752 = vsub.f32 %v4528, %v4711
        %v4753 = vsub.f32 %v4529, %v4716
        %v4754 = vsub.f32 %v4530, %v4721
        %v4755 = vld [vmem:[%s10] sm:$0x1]
        %v4757 = vlaneseq
        %v4758 = vshrl.u32 %v4757, 7
        %v4759 = vsub.s32 0, %v4758
        %v4760 = vrot.slane %v4755, %v4759
        %v4762 = vmul.f32 %v4723, %v4760
        %v4763 = vmul.f32 %v4724, %v4760
        %v4764 = vmul.f32 %v4725, %v4760
        %v4765 = vmul.f32 %v4726, %v4760
        %v4766 = vmul.f32 %v4727, %v4760
        %v4767 = vmul.f32 %v4728, %v4760
        %v4768 = vmul.f32 %v4729, %v4760
        %v4769 = vmul.f32 %v4730, %v4760
        %v4770 = vmul.f32 %v4731, %v4760
        %v4771 = vmul.f32 %v4732, %v4760
        %v4772 = vmul.f32 %v4733, %v4760
        %v4773 = vmul.f32 %v4734, %v4760
        %v4774 = vmul.f32 %v4735, %v4760
        %v4775 = vmul.f32 %v4736, %v4760
        %v4776 = vmul.f32 %v4737, %v4760
        %v4777 = vmul.f32 %v4738, %v4760
        %v4778 = vmul.f32 %v4739, %v4760
        %v4779 = vmul.f32 %v4740, %v4760
        %v4780 = vmul.f32 %v4741, %v4760
        %v4781 = vmul.f32 %v4742, %v4760
        %v4782 = vmul.f32 %v4743, %v4760
        %v4783 = vmul.f32 %v4744, %v4760
        %v4784 = vmul.f32 %v4745, %v4760
        %v4785 = vmul.f32 %v4746, %v4760
        %v4786 = vmul.f32 %v4747, %v4760
        %v4787 = vmul.f32 %v4748, %v4760
        %v4788 = vmul.f32 %v4749, %v4760
        %v4789 = vmul.f32 %v4750, %v4760
        %v4790 = vmul.f32 %v4751, %v4760
        %v4791 = vmul.f32 %v4752, %v4760
        %v4792 = vmul.f32 %v4753, %v4760
        %v4793 = vmul.f32 %v4754, %v4760
        %v4794 = vld [vmem:[%s11] sm:$0x1]
        %v4796 = vlaneseq
        %v4797 = vshrl.u32 %v4796, 7
        %v4798 = vsub.s32 0, %v4797
        %v4799 = vrot.slane %v4794, %v4798
        %v4801 = vadd.f32 %v4762, %v4799
        %v4802 = vadd.f32 %v4763, %v4799
        %v4803 = vadd.f32 %v4764, %v4799
        %v4804 = vadd.f32 %v4765, %v4799
        %v4805 = vadd.f32 %v4766, %v4799
        %v4806 = vadd.f32 %v4767, %v4799
        %v4807 = vadd.f32 %v4768, %v4799
        %v4808 = vadd.f32 %v4769, %v4799
        %v4809 = vadd.f32 %v4770, %v4799
        %v4810 = vadd.f32 %v4771, %v4799
        %v4811 = vadd.f32 %v4772, %v4799
        %v4812 = vadd.f32 %v4773, %v4799
        %v4813 = vadd.f32 %v4774, %v4799
        %v4814 = vadd.f32 %v4775, %v4799
        %v4815 = vadd.f32 %v4776, %v4799
        %v4816 = vadd.f32 %v4777, %v4799
        %v4817 = vadd.f32 %v4778, %v4799
        %v4818 = vadd.f32 %v4779, %v4799
        %v4819 = vadd.f32 %v4780, %v4799
        %v4820 = vadd.f32 %v4781, %v4799
        %v4821 = vadd.f32 %v4782, %v4799
        %v4822 = vadd.f32 %v4783, %v4799
        %v4823 = vadd.f32 %v4784, %v4799
        %v4824 = vadd.f32 %v4785, %v4799
        %v4825 = vadd.f32 %v4786, %v4799
        %v4826 = vadd.f32 %v4787, %v4799
        %v4827 = vadd.f32 %v4788, %v4799
        %v4828 = vadd.f32 %v4789, %v4799
        %v4829 = vadd.f32 %v4790, %v4799
        %v4830 = vadd.f32 %v4791, %v4799
        %v4831 = vadd.f32 %v4792, %v4799
        %v4832 = vadd.f32 %v4793, %v4799
        %v4833 = vxor.u32 %v4801, 2147483648
        %v4834 = vxor.u32 %v4802, 2147483648
        %v4835 = vxor.u32 %v4803, 2147483648
        %v4836 = vxor.u32 %v4804, 2147483648
        %v4837 = vxor.u32 %v4805, 2147483648
        %v4838 = vxor.u32 %v4806, 2147483648
        %v4839 = vxor.u32 %v4807, 2147483648
        %v4840 = vxor.u32 %v4808, 2147483648
        %v4841 = vxor.u32 %v4809, 2147483648
        %v4842 = vxor.u32 %v4810, 2147483648
        %v4843 = vxor.u32 %v4811, 2147483648
        %v4844 = vxor.u32 %v4812, 2147483648
        %v4845 = vxor.u32 %v4813, 2147483648
        %v4846 = vxor.u32 %v4814, 2147483648
        %v4847 = vxor.u32 %v4815, 2147483648
        %v4848 = vxor.u32 %v4816, 2147483648
        %v4849 = vxor.u32 %v4817, 2147483648
        %v4850 = vxor.u32 %v4818, 2147483648
        %v4851 = vxor.u32 %v4819, 2147483648
        %v4852 = vxor.u32 %v4820, 2147483648
        %v4853 = vxor.u32 %v4821, 2147483648
        %v4854 = vxor.u32 %v4822, 2147483648
        %v4855 = vxor.u32 %v4823, 2147483648
        %v4856 = vxor.u32 %v4824, 2147483648
        %v4857 = vxor.u32 %v4825, 2147483648
        %v4858 = vxor.u32 %v4826, 2147483648
        %v4859 = vxor.u32 %v4827, 2147483648
        %v4860 = vxor.u32 %v4828, 2147483648
        %v4861 = vxor.u32 %v4829, 2147483648
        %v4862 = vxor.u32 %v4830, 2147483648
        %v4863 = vxor.u32 %v4831, 2147483648
        %v4864 = vxor.u32 %v4832, 2147483648
        %v4865 = vmul.f32 %v4833, 1.442695
        %v4866 = vpow.pop %v4865
        %v4867 = vmul.f32 %v4834, 1.442695
        %v4868 = vpow.pop %v4867
        %v4869 = vmul.f32 %v4835, 1.442695
        %v4870 = vpow.pop %v4869
        %v4871 = vmul.f32 %v4836, 1.442695
        %v4872 = vpow.pop %v4871
        %v4873 = vmul.f32 %v4837, 1.442695
        %v4874 = vpow.pop %v4873
        %v4875 = vmul.f32 %v4838, 1.442695
        %v4876 = vpow.pop %v4875
        %v4877 = vmul.f32 %v4839, 1.442695
        %v4878 = vpow.pop %v4877
        %v4879 = vmul.f32 %v4840, 1.442695
        %v4880 = vpow.pop %v4879
        %v4881 = vmul.f32 %v4841, 1.442695
        %v4882 = vpow.pop %v4881
        %v4883 = vmul.f32 %v4842, 1.442695
        %v4884 = vpow.pop %v4883
        %v4885 = vmul.f32 %v4843, 1.442695
        %v4886 = vpow.pop %v4885
        %v4887 = vmul.f32 %v4844, 1.442695
        %v4888 = vpow.pop %v4887
        %v4889 = vmul.f32 %v4845, 1.442695
        %v4890 = vpow.pop %v4889
        %v4891 = vmul.f32 %v4846, 1.442695
        %v4892 = vpow.pop %v4891
        %v4893 = vmul.f32 %v4847, 1.442695
        %v4894 = vpow.pop %v4893
        %v4895 = vmul.f32 %v4848, 1.442695
        %v4896 = vpow.pop %v4895
        %v4897 = vmul.f32 %v4849, 1.442695
        %v4898 = vpow.pop %v4897
        %v4899 = vmul.f32 %v4850, 1.442695
        %v4900 = vpow.pop %v4899
        %v4901 = vmul.f32 %v4851, 1.442695
        %v4902 = vpow.pop %v4901
        %v4903 = vmul.f32 %v4852, 1.442695
        %v4904 = vpow.pop %v4903
        %v4905 = vmul.f32 %v4853, 1.442695
        %v4906 = vpow.pop %v4905
        %v4907 = vmul.f32 %v4854, 1.442695
        %v4908 = vpow.pop %v4907
        %v4909 = vmul.f32 %v4855, 1.442695
        %v4910 = vpow.pop %v4909
        %v4911 = vmul.f32 %v4856, 1.442695
        %v4912 = vpow.pop %v4911
        %v4913 = vmul.f32 %v4857, 1.442695
        %v4914 = vpow.pop %v4913
        %v4915 = vmul.f32 %v4858, 1.442695
        %v4916 = vpow.pop %v4915
        %v4917 = vmul.f32 %v4859, 1.442695
        %v4918 = vpow.pop %v4917
        %v4919 = vmul.f32 %v4860, 1.442695
        %v4920 = vpow.pop %v4919
        %v4921 = vmul.f32 %v4861, 1.442695
        %v4922 = vpow.pop %v4921
        %v4923 = vmul.f32 %v4862, 1.442695
        %v4924 = vpow.pop %v4923
        %v4925 = vmul.f32 %v4863, 1.442695
        %v4926 = vpow.pop %v4925
        %v4927 = vmul.f32 %v4864, 1.442695
        %v4928 = vpow.pop %v4927
        %v4929 = vadd.f32 %v4866, 1.0
        %v4930 = vadd.f32 %v4868, 1.0
        %v4931 = vadd.f32 %v4870, 1.0
        %v4932 = vadd.f32 %v4872, 1.0
        %v4933 = vadd.f32 %v4874, 1.0
        %v4934 = vadd.f32 %v4876, 1.0
        %v4935 = vadd.f32 %v4878, 1.0
        %v4936 = vadd.f32 %v4880, 1.0
        %v4937 = vadd.f32 %v4882, 1.0
        %v4938 = vadd.f32 %v4884, 1.0
        %v4939 = vadd.f32 %v4886, 1.0
        %v4940 = vadd.f32 %v4888, 1.0
        %v4941 = vadd.f32 %v4890, 1.0
        %v4942 = vadd.f32 %v4892, 1.0
        %v4943 = vadd.f32 %v4894, 1.0
        %v4944 = vadd.f32 %v4896, 1.0
        %v4945 = vadd.f32 %v4898, 1.0
        %v4946 = vadd.f32 %v4900, 1.0
        %v4947 = vadd.f32 %v4902, 1.0
        %v4948 = vadd.f32 %v4904, 1.0
        %v4949 = vadd.f32 %v4906, 1.0
        %v4950 = vadd.f32 %v4908, 1.0
        %v4951 = vadd.f32 %v4910, 1.0
        %v4952 = vadd.f32 %v4912, 1.0
        %v4953 = vadd.f32 %v4914, 1.0
        %v4954 = vadd.f32 %v4916, 1.0
        %v4955 = vadd.f32 %v4918, 1.0
        %v4956 = vadd.f32 %v4920, 1.0
        %v4957 = vadd.f32 %v4922, 1.0
        %v4958 = vadd.f32 %v4924, 1.0
        %v4959 = vadd.f32 %v4926, 1.0
        %v4960 = vadd.f32 %v4928, 1.0
        %v4961 = vrcp.pop %v4929
        %v4962 = vmul.f32 1.0, %v4961
        %v4963 = vrcp.pop %v4930
        %v4964 = vmul.f32 1.0, %v4963
        %v4965 = vrcp.pop %v4931
        %v4966 = vmul.f32 1.0, %v4965
        %v4967 = vrcp.pop %v4932
        %v4968 = vmul.f32 1.0, %v4967
        %v4969 = vrcp.pop %v4933
        %v4970 = vmul.f32 1.0, %v4969
        %v4971 = vrcp.pop %v4934
        %v4972 = vmul.f32 1.0, %v4971
        %v4973 = vrcp.pop %v4935
        %v4974 = vmul.f32 1.0, %v4973
        %v4975 = vrcp.pop %v4936
        %v4976 = vmul.f32 1.0, %v4975
        %v4977 = vrcp.pop %v4937
        %v4978 = vmul.f32 1.0, %v4977
        %v4979 = vrcp.pop %v4938
        %v4980 = vmul.f32 1.0, %v4979
        %v4981 = vrcp.pop %v4939
        %v4982 = vmul.f32 1.0, %v4981
        %v4983 = vrcp.pop %v4940
        %v4984 = vmul.f32 1.0, %v4983
        %v4985 = vrcp.pop %v4941
        %v4986 = vmul.f32 1.0, %v4985
        %v4987 = vrcp.pop %v4942
        %v4988 = vmul.f32 1.0, %v4987
        %v4989 = vrcp.pop %v4943
        %v4990 = vmul.f32 1.0, %v4989
        %v4991 = vrcp.pop %v4944
        %v4992 = vmul.f32 1.0, %v4991
        %v4993 = vrcp.pop %v4945
        %v4994 = vmul.f32 1.0, %v4993
        %v4995 = vrcp.pop %v4946
        %v4996 = vmul.f32 1.0, %v4995
        %v4997 = vrcp.pop %v4947
        %v4998 = vmul.f32 1.0, %v4997
        %v4999 = vrcp.pop %v4948
        %v5000 = vmul.f32 1.0, %v4999
        %v5001 = vrcp.pop %v4949
        %v5002 = vmul.f32 1.0, %v5001
        %v5003 = vrcp.pop %v4950
        %v5004 = vmul.f32 1.0, %v5003
        %v5005 = vrcp.pop %v4951
        %v5006 = vmul.f32 1.0, %v5005
        %v5007 = vrcp.pop %v4952
        %v5008 = vmul.f32 1.0, %v5007
        %v5009 = vrcp.pop %v4953
        %v5010 = vmul.f32 1.0, %v5009
        %v5011 = vrcp.pop %v4954
        %v5012 = vmul.f32 1.0, %v5011
        %v5013 = vrcp.pop %v4955
        %v5014 = vmul.f32 1.0, %v5013
        %v5015 = vrcp.pop %v4956
        %v5016 = vmul.f32 1.0, %v5015
        %v5017 = vrcp.pop %v4957
        %v5018 = vmul.f32 1.0, %v5017
        %v5019 = vrcp.pop %v4958
        %v5020 = vmul.f32 1.0, %v5019
        %v5021 = vrcp.pop %v4959
        %v5022 = vmul.f32 1.0, %v5021
        %v5023 = vrcp.pop %v4960
        %v5024 = vmul.f32 1.0, %v5023
        %v5025 = vmul.f32 %v4801, %v4962
        %v5026 = vmul.f32 %v4802, %v4964
        %v5027 = vmul.f32 %v4803, %v4966
        %v5028 = vmul.f32 %v4804, %v4968
        %v5029 = vmul.f32 %v4805, %v4970
        %v5030 = vmul.f32 %v4806, %v4972
        %v5031 = vmul.f32 %v4807, %v4974
        %v5032 = vmul.f32 %v4808, %v4976
        %v5033 = vmul.f32 %v4809, %v4978
        %v5034 = vmul.f32 %v4810, %v4980
        %v5035 = vmul.f32 %v4811, %v4982
        %v5036 = vmul.f32 %v4812, %v4984
        %v5037 = vmul.f32 %v4813, %v4986
        %v5038 = vmul.f32 %v4814, %v4988
        %v5039 = vmul.f32 %v4815, %v4990
        %v5040 = vmul.f32 %v4816, %v4992
        %v5041 = vmul.f32 %v4817, %v4994
        %v5042 = vmul.f32 %v4818, %v4996
        %v5043 = vmul.f32 %v4819, %v4998
        %v5044 = vmul.f32 %v4820, %v5000
        %v5045 = vmul.f32 %v4821, %v5002
        %v5046 = vmul.f32 %v4822, %v5004
        %v5047 = vmul.f32 %v4823, %v5006
        %v5048 = vmul.f32 %v4824, %v5008
        %v5049 = vmul.f32 %v4825, %v5010
        %v5050 = vmul.f32 %v4826, %v5012
        %v5051 = vmul.f32 %v4827, %v5014
        %v5052 = vmul.f32 %v4828, %v5016
        %v5053 = vmul.f32 %v4829, %v5018
        %v5054 = vmul.f32 %v4830, %v5020
        %v5055 = vmul.f32 %v4831, %v5022
        %v5056 = vmul.f32 %v4832, %v5024
        %v5057 = vpack.c.bf16 %v5026, %v5025
        %v5058 = vpack.c.bf16 %v5028, %v5027
        %v5059 = vpack.c.bf16 %v5030, %v5029
        %v5060 = vpack.c.bf16 %v5032, %v5031
        %v5061 = vpack.c.bf16 %v5034, %v5033
        %v5062 = vpack.c.bf16 %v5036, %v5035
        %v5063 = vpack.c.bf16 %v5038, %v5037
        %v5064 = vpack.c.bf16 %v5040, %v5039
        %v5065 = vpack.c.bf16 %v5042, %v5041
        %v5066 = vpack.c.bf16 %v5044, %v5043
        %v5067 = vpack.c.bf16 %v5046, %v5045
        %v5068 = vpack.c.bf16 %v5048, %v5047
        %v5069 = vpack.c.bf16 %v5050, %v5049
        %v5070 = vpack.c.bf16 %v5052, %v5051
        %v5071 = vpack.c.bf16 %v5054, %v5053
        %v5072 = vpack.c.bf16 %v5056, %v5055
        %v5074 = vshrl.u32 %v5057, 16
        %v5076 = vrot.slane %v5074, 7
        %v5077 = vshll.u32 %v5057, 16
        %v5079 = vor.u32 %v5076, %v5077
        %v5081 = vshrl.u32 %v5058, 16
        %v5083 = vrot.slane %v5081, 7
        %v5084 = vshll.u32 %v5058, 16
        %v5086 = vor.u32 %v5083, %v5084
        %v5088 = vshrl.u32 %v5059, 16
        %v5090 = vrot.slane %v5088, 7
        %v5091 = vshll.u32 %v5059, 16
        %v5093 = vor.u32 %v5090, %v5091
        %v5095 = vshrl.u32 %v5060, 16
        %v5097 = vrot.slane %v5095, 7
        %v5098 = vshll.u32 %v5060, 16
        %v5100 = vor.u32 %v5097, %v5098
        %v5102 = vshrl.u32 %v5061, 16
        %v5104 = vrot.slane %v5102, 7
        %v5105 = vshll.u32 %v5061, 16
        %v5107 = vor.u32 %v5104, %v5105
        %v5109 = vshrl.u32 %v5062, 16
        %v5111 = vrot.slane %v5109, 7
        %v5112 = vshll.u32 %v5062, 16
        %v5114 = vor.u32 %v5111, %v5112
        %v5116 = vshrl.u32 %v5063, 16
        %v5118 = vrot.slane %v5116, 7
        %v5119 = vshll.u32 %v5063, 16
        %v5121 = vor.u32 %v5118, %v5119
        %v5123 = vshrl.u32 %v5064, 16
        %v5125 = vrot.slane %v5123, 7
        %v5126 = vshll.u32 %v5064, 16
        %v5128 = vor.u32 %v5125, %v5126
        %v5130 = vshrl.u32 %v5065, 16
        %v5132 = vrot.slane %v5130, 7
        %v5133 = vshll.u32 %v5065, 16
        %v5135 = vor.u32 %v5132, %v5133
        %v5137 = vshrl.u32 %v5066, 16
        %v5139 = vrot.slane %v5137, 7
        %v5140 = vshll.u32 %v5066, 16
        %v5142 = vor.u32 %v5139, %v5140
        %v5144 = vshrl.u32 %v5067, 16
        %v5146 = vrot.slane %v5144, 7
        %v5147 = vshll.u32 %v5067, 16
        %v5149 = vor.u32 %v5146, %v5147
        %v5151 = vshrl.u32 %v5068, 16
        %v5153 = vrot.slane %v5151, 7
        %v5154 = vshll.u32 %v5068, 16
        %v5156 = vor.u32 %v5153, %v5154
        %v5158 = vshrl.u32 %v5069, 16
        %v5160 = vrot.slane %v5158, 7
        %v5161 = vshll.u32 %v5069, 16
        %v5163 = vor.u32 %v5160, %v5161
        %v5165 = vshrl.u32 %v5070, 16
        %v5167 = vrot.slane %v5165, 7
        %v5168 = vshll.u32 %v5070, 16
        %v5170 = vor.u32 %v5167, %v5168
        %v5172 = vshrl.u32 %v5071, 16
        %v5174 = vrot.slane %v5172, 7
        %v5175 = vshll.u32 %v5071, 16
        %v5177 = vor.u32 %v5174, %v5175
        %v5179 = vshrl.u32 %v5072, 16
        %v5181 = vrot.slane %v5179, 7
        %v5182 = vshll.u32 %v5072, 16
        %v5184 = vor.u32 %v5181, %v5182
        %v5201 = vsel %vm1447, 0, %v5079
        %v5202 = vsel %vm1447, 0, %v5086
        %v5203 = vsel %vm1447, 0, %v5093
        %v5204 = vsel %vm1447, 0, %v5100
        %v5205 = vsel %vm1447, 0, %v5107
        %v5206 = vsel %vm1447, 0, %v5114
        %v5207 = vsel %vm1447, 0, %v5121
        %v5208 = vsel %vm1447, 0, %v5128
        %v5209 = vsel %vm1447, 0, %v5135
        %v5210 = vsel %vm1447, 0, %v5142
        %v5211 = vsel %vm1447, 0, %v5149
        %v5212 = vsel %vm1447, 0, %v5156
        %v5213 = vsel %vm1447, 0, %v5163
        %v5214 = vsel %vm1447, 0, %v5170
        %v5215 = vsel %vm1447, 0, %v5177
        %v5216 = vsel %vm1447, 0, %v5184
        %v5217 = vrot.slane %v5077, 1
        %v5218 = vor.u32 %v5074, %v5217
        %v5219 = vrot.slane %v5084, 1
        %v5220 = vor.u32 %v5081, %v5219
        %v5221 = vrot.slane %v5091, 1
        %v5222 = vor.u32 %v5088, %v5221
        %v5223 = vrot.slane %v5098, 1
        %v5224 = vor.u32 %v5095, %v5223
        %v5225 = vrot.slane %v5105, 1
        %v5226 = vor.u32 %v5102, %v5225
        %v5227 = vrot.slane %v5112, 1
        %v5228 = vor.u32 %v5109, %v5227
        %v5229 = vrot.slane %v5119, 1
        %v5230 = vor.u32 %v5116, %v5229
        %v5231 = vrot.slane %v5126, 1
        %v5232 = vor.u32 %v5123, %v5231
        %v5233 = vrot.slane %v5133, 1
        %v5234 = vor.u32 %v5130, %v5233
        %v5235 = vrot.slane %v5140, 1
        %v5236 = vor.u32 %v5137, %v5235
        %v5237 = vrot.slane %v5147, 1
        %v5238 = vor.u32 %v5144, %v5237
        %v5239 = vrot.slane %v5154, 1
        %v5240 = vor.u32 %v5151, %v5239
        %v5241 = vrot.slane %v5161, 1
        %v5242 = vor.u32 %v5158, %v5241
        %v5243 = vrot.slane %v5168, 1
        %v5244 = vor.u32 %v5165, %v5243
        %v5245 = vrot.slane %v5175, 1
        %v5246 = vor.u32 %v5172, %v5245
        %v5247 = vrot.slane %v5182, 1
        %v5248 = vor.u32 %v5179, %v5247
        %v5265 = vsel %vm1514, %v5218, 0
        %v5266 = vsel %vm1514, %v5220, 0
        %v5267 = vsel %vm1514, %v5222, 0
        %v5268 = vsel %vm1514, %v5224, 0
        %v5269 = vsel %vm1514, %v5226, 0
        %v5270 = vsel %vm1514, %v5228, 0
        %v5271 = vsel %vm1514, %v5230, 0
        %v5272 = vsel %vm1514, %v5232, 0
        %v5273 = vsel %vm1514, %v5234, 0
        %v5274 = vsel %vm1514, %v5236, 0
        %v5275 = vsel %vm1514, %v5238, 0
        %v5276 = vsel %vm1514, %v5240, 0
        %v5277 = vsel %vm1514, %v5242, 0
        %v5278 = vsel %vm1514, %v5244, 0
        %v5279 = vsel %vm1514, %v5246, 0
        %v5280 = vsel %vm1514, %v5248, 0
        %5297 = vrot.lane.b32.xlu0 %v5057, 64
        %v5298 = vpop.permute.xlu0 %5297
        %5299 = vrot.lane.b32.xlu0 %v5058, 64
        %v5300 = vpop.permute.xlu0 %5299
        %5301 = vrot.lane.b32.xlu0 %v5059, 64
        %v5302 = vpop.permute.xlu0 %5301
        %5303 = vrot.lane.b32.xlu0 %v5060, 64
        %v5304 = vpop.permute.xlu0 %5303
        %5305 = vrot.lane.b32.xlu0 %v5061, 64
        %v5306 = vpop.permute.xlu0 %5305
        %5307 = vrot.lane.b32.xlu0 %v5062, 64
        %v5308 = vpop.permute.xlu0 %5307
        %5309 = vrot.lane.b32.xlu0 %v5063, 64
        %v5310 = vpop.permute.xlu0 %5309
        %5311 = vrot.lane.b32.xlu0 %v5064, 64
        %v5312 = vpop.permute.xlu0 %5311
        %5313 = vrot.lane.b32.xlu0 %v5065, 64
        %v5314 = vpop.permute.xlu0 %5313
        %5315 = vrot.lane.b32.xlu0 %v5066, 64
        %v5316 = vpop.permute.xlu0 %5315
        %5317 = vrot.lane.b32.xlu0 %v5067, 64
        %v5318 = vpop.permute.xlu0 %5317
        %5319 = vrot.lane.b32.xlu0 %v5068, 64
        %v5320 = vpop.permute.xlu0 %5319
        %5321 = vrot.lane.b32.xlu0 %v5069, 64
        %v5322 = vpop.permute.xlu0 %5321
        %5323 = vrot.lane.b32.xlu0 %v5070, 64
        %v5324 = vpop.permute.xlu0 %5323
        %5325 = vrot.lane.b32.xlu0 %v5071, 64
        %v5326 = vpop.permute.xlu0 %5325
        %5327 = vrot.lane.b32.xlu0 %v5072, 64
        %v5328 = vpop.permute.xlu0 %5327
        %v5331 = vsel %vm693, %v5201, %v5298
        %v5334 = vsel %vm693, %v5202, %v5300
        %v5337 = vsel %vm693, %v5203, %v5302
        %v5340 = vsel %vm693, %v5204, %v5304
        %v5343 = vsel %vm693, %v5205, %v5306
        %v5346 = vsel %vm693, %v5206, %v5308
        %v5349 = vsel %vm693, %v5207, %v5310
        %v5352 = vsel %vm693, %v5208, %v5312
        %v5355 = vsel %vm693, %v5209, %v5314
        %v5358 = vsel %vm693, %v5210, %v5316
        %v5361 = vsel %vm693, %v5211, %v5318
        %v5364 = vsel %vm693, %v5212, %v5320
        %v5367 = vsel %vm693, %v5213, %v5322
        %v5370 = vsel %vm693, %v5214, %v5324
        %v5373 = vsel %vm693, %v5215, %v5326
        %v5376 = vsel %vm693, %v5216, %v5328
        %v5409 = vunpack.c.l.b16 %v5331
        %v5410 = vunpack.c.l.b16 %v5265
        %v5411 = vunpack.c.h.b16 %v5331
        %v5412 = vunpack.c.h.b16 %v5265
        %v5413 = vunpack.c.l.b16 %v5334
        %v5414 = vunpack.c.l.b16 %v5266
        %v5415 = vunpack.c.h.b16 %v5334
        %v5416 = vunpack.c.h.b16 %v5266
        %v5417 = vunpack.c.l.b16 %v5337
        %v5418 = vunpack.c.l.b16 %v5267
        %v5419 = vunpack.c.h.b16 %v5337
        %v5420 = vunpack.c.h.b16 %v5267
        %v5421 = vunpack.c.l.b16 %v5340
        %v5422 = vunpack.c.l.b16 %v5268
        %v5423 = vunpack.c.h.b16 %v5340
        %v5424 = vunpack.c.h.b16 %v5268
        %v5425 = vunpack.c.l.b16 %v5343
        %v5426 = vunpack.c.l.b16 %v5269
        %v5427 = vunpack.c.h.b16 %v5343
        %v5428 = vunpack.c.h.b16 %v5269
        %v5429 = vunpack.c.l.b16 %v5346
        %v5430 = vunpack.c.l.b16 %v5270
        %v5431 = vunpack.c.h.b16 %v5346
        %v5432 = vunpack.c.h.b16 %v5270
        %v5433 = vunpack.c.l.b16 %v5349
        %v5434 = vunpack.c.l.b16 %v5271
        %v5435 = vunpack.c.h.b16 %v5349
        %v5436 = vunpack.c.h.b16 %v5271
        %v5437 = vunpack.c.l.b16 %v5352
        %v5438 = vunpack.c.l.b16 %v5272
        %v5439 = vunpack.c.h.b16 %v5352
        %v5440 = vunpack.c.h.b16 %v5272
        %v5441 = vunpack.c.l.b16 %v5355
        %v5442 = vunpack.c.l.b16 %v5273
        %v5443 = vunpack.c.h.b16 %v5355
        %v5444 = vunpack.c.h.b16 %v5273
        %v5445 = vunpack.c.l.b16 %v5358
        %v5446 = vunpack.c.l.b16 %v5274
        %v5447 = vunpack.c.h.b16 %v5358
        %v5448 = vunpack.c.h.b16 %v5274
        %v5449 = vunpack.c.l.b16 %v5361
        %v5450 = vunpack.c.l.b16 %v5275
        %v5451 = vunpack.c.h.b16 %v5361
        %v5452 = vunpack.c.h.b16 %v5275
        %v5453 = vunpack.c.l.b16 %v5364
        %v5454 = vunpack.c.l.b16 %v5276
        %v5455 = vunpack.c.h.b16 %v5364
        %v5456 = vunpack.c.h.b16 %v5276
        %v5457 = vunpack.c.l.b16 %v5367
        %v5458 = vunpack.c.l.b16 %v5277
        %v5459 = vunpack.c.h.b16 %v5367
        %v5460 = vunpack.c.h.b16 %v5277
        %v5461 = vunpack.c.l.b16 %v5370
        %v5462 = vunpack.c.l.b16 %v5278
        %v5463 = vunpack.c.h.b16 %v5370
        %v5464 = vunpack.c.h.b16 %v5278
        %v5465 = vunpack.c.l.b16 %v5373
        %v5466 = vunpack.c.l.b16 %v5279
        %v5467 = vunpack.c.h.b16 %v5373
        %v5468 = vunpack.c.h.b16 %v5279
        %v5469 = vunpack.c.l.b16 %v5376
        %v5470 = vunpack.c.l.b16 %v5280
        %v5471 = vunpack.c.h.b16 %v5376
        %v5472 = vunpack.c.h.b16 %v5280
        %v5473 = vpack.c.b16 %v5410, %v5409
        %v5474 = vpack.c.b16 %v5412, %v5411
        %v5475 = vpack.c.b16 %v5414, %v5413
        %v5476 = vpack.c.b16 %v5416, %v5415
        %v5477 = vpack.c.b16 %v5418, %v5417
        %v5478 = vpack.c.b16 %v5420, %v5419
        %v5479 = vpack.c.b16 %v5422, %v5421
        %v5480 = vpack.c.b16 %v5424, %v5423
        %v5481 = vpack.c.b16 %v5426, %v5425
        %v5482 = vpack.c.b16 %v5428, %v5427
        %v5483 = vpack.c.b16 %v5430, %v5429
        %v5484 = vpack.c.b16 %v5432, %v5431
        %v5485 = vpack.c.b16 %v5434, %v5433
        %v5486 = vpack.c.b16 %v5436, %v5435
        %v5487 = vpack.c.b16 %v5438, %v5437
        %v5488 = vpack.c.b16 %v5440, %v5439
        %v5489 = vpack.c.b16 %v5442, %v5441
        %v5490 = vpack.c.b16 %v5444, %v5443
        %v5491 = vpack.c.b16 %v5446, %v5445
        %v5492 = vpack.c.b16 %v5448, %v5447
        %v5493 = vpack.c.b16 %v5450, %v5449
        %v5494 = vpack.c.b16 %v5452, %v5451
        %v5495 = vpack.c.b16 %v5454, %v5453
        %v5496 = vpack.c.b16 %v5456, %v5455
        %v5497 = vpack.c.b16 %v5458, %v5457
        %v5498 = vpack.c.b16 %v5460, %v5459
        %v5499 = vpack.c.b16 %v5462, %v5461
        %v5500 = vpack.c.b16 %v5464, %v5463
        %v5501 = vpack.c.b16 %v5466, %v5465
        %v5502 = vpack.c.b16 %v5468, %v5467
        %v5503 = vpack.c.b16 %v5470, %v5469
        %v5504 = vpack.c.b16 %v5472, %v5471
        %5537 = vst.msk [vmem:[#allocation3] sm:$0xff] %vm1796, %v1726
        %5538 = vst.msk [vmem:[#allocation3 + $0x8] sm:$0xff] %vm1796, %v1727
        %5539 = vst.msk [vmem:[#allocation3 + $0x10] sm:$0xff] %vm1796, %v5473
        %5540 = vst.msk [vmem:[#allocation3 + $0x18] sm:$0xff] %vm1796, %v5474
        %5541 = vst.msk [vmem:[#allocation3 + $0x20] sm:$0xff] %vm1796, %v5475
        %5542 = vst.msk [vmem:[#allocation3 + $0x28] sm:$0xff] %vm1796, %v5476
        %5543 = vst.msk [vmem:[#allocation3 + $0x30] sm:$0xff] %vm1796, %v5477
        %5544 = vst.msk [vmem:[#allocation3 + $0x38] sm:$0xff] %vm1796, %v5478
        %5545 = vst.msk [vmem:[#allocation3 + $0x40] sm:$0xff] %vm1796, %v5479
        %5546 = vst.msk [vmem:[#allocation3 + $0x48] sm:$0xff] %vm1796, %v5480
        %5547 = vst.msk [vmem:[#allocation3 + $0x50] sm:$0xff] %vm1796, %v5481
        %5548 = vst.msk [vmem:[#allocation3 + $0x58] sm:$0xff] %vm1796, %v5482
        %5549 = vst.msk [vmem:[#allocation3 + $0x60] sm:$0xff] %vm1796, %v5483
        %5550 = vst.msk [vmem:[#allocation3 + $0x68] sm:$0xff] %vm1796, %v5484
        %5551 = vst.msk [vmem:[#allocation3 + $0x70] sm:$0xff] %vm1796, %v5485
        %5552 = vst.msk [vmem:[#allocation3 + $0x78] sm:$0xff] %vm1796, %v5486
        %5553 = vst.msk [vmem:[#allocation3 + $0x80] sm:$0xff] %vm1796, %v5487
        %5554 = vst.msk [vmem:[#allocation3 + $0x88] sm:$0xff] %vm1796, %v5488
        %5555 = vst.msk [vmem:[#allocation3 + $0x90] sm:$0xff] %vm1796, %v5489
        %5556 = vst.msk [vmem:[#allocation3 + $0x98] sm:$0xff] %vm1796, %v5490
        %5557 = vst.msk [vmem:[#allocation3 + $0xa0] sm:$0xff] %vm1796, %v5491
        %5558 = vst.msk [vmem:[#allocation3 + $0xa8] sm:$0xff] %vm1796, %v5492
        %5559 = vst.msk [vmem:[#allocation3 + $0xb0] sm:$0xff] %vm1796, %v5493
        %5560 = vst.msk [vmem:[#allocation3 + $0xb8] sm:$0xff] %vm1796, %v5494
        %5561 = vst.msk [vmem:[#allocation3 + $0xc0] sm:$0xff] %vm1796, %v5495
        %5562 = vst.msk [vmem:[#allocation3 + $0xc8] sm:$0xff] %vm1796, %v5496
        %5563 = vst.msk [vmem:[#allocation3 + $0xd0] sm:$0xff] %vm1796, %v5497
        %5564 = vst.msk [vmem:[#allocation3 + $0xd8] sm:$0xff] %vm1796, %v5498
        %5565 = vst.msk [vmem:[#allocation3 + $0xe0] sm:$0xff] %vm1796, %v5499
        %5566 = vst.msk [vmem:[#allocation3 + $0xe8] sm:$0xff] %vm1796, %v5500
        %5567 = vst.msk [vmem:[#allocation3 + $0xf0] sm:$0xff] %vm1796, %v5501
        %5568 = vst.msk [vmem:[#allocation3 + $0xf8] sm:$0xff] %vm1796, %v5502
        %5569 = vst.msk [vmem:[#allocation3 + $0x100] sm:$0xff] %vm1796, %v5503
        %5570 = vst.msk [vmem:[#allocation3 + $0x108] sm:$0xff] %vm1796, %v5504
        %5571 = vst.msk [vmem:[#allocation3 + $0x110] sm:$0xff] %vm1796, %v1726
        %5572 = vst.msk [vmem:[#allocation3 + $0x118] sm:$0xff] %vm1796, %v1727
        %v5573 = vld [vmem:[#allocation3] sm:$0xff]
        %v5574 = vld [vmem:[#allocation3 + $0x8] sm:$0xff]
        %v5575 = vld [vmem:[#allocation3 + $0x10] sm:$0xff]
        %v5576 = vld [vmem:[#allocation3 + $0x18] sm:$0xff]
        %v5577 = vld [vmem:[#allocation3 + $0x20] sm:$0xff]
        %v5578 = vld [vmem:[#allocation3 + $0x28] sm:$0xff]
        %v5579 = vld [vmem:[#allocation3 + $0x30] sm:$0xff]
        %v5580 = vld [vmem:[#allocation3 + $0x38] sm:$0xff]
        %v5581 = vld [vmem:[#allocation3 + $0x40] sm:$0xff]
        %v5582 = vld [vmem:[#allocation3 + $0x48] sm:$0xff]
        %v5583 = vld [vmem:[#allocation3 + $0x50] sm:$0xff]
        %v5584 = vld [vmem:[#allocation3 + $0x58] sm:$0xff]
        %v5585 = vld [vmem:[#allocation3 + $0x60] sm:$0xff]
        %v5586 = vld [vmem:[#allocation3 + $0x68] sm:$0xff]
        %v5587 = vld [vmem:[#allocation3 + $0x70] sm:$0xff]
        %v5588 = vld [vmem:[#allocation3 + $0x78] sm:$0xff]
        %v5589 = vld [vmem:[#allocation3 + $0x80] sm:$0xff]
        %v5590 = vld [vmem:[#allocation3 + $0x88] sm:$0xff]
        %v5591 = vld [vmem:[#allocation3 + $0x90] sm:$0xff]
        %v5592 = vld [vmem:[#allocation3 + $0x98] sm:$0xff]
        %v5593 = vld [vmem:[#allocation3 + $0xa0] sm:$0xff]
        %v5594 = vld [vmem:[#allocation3 + $0xa8] sm:$0xff]
        %v5595 = vld [vmem:[#allocation3 + $0xb0] sm:$0xff]
        %v5596 = vld [vmem:[#allocation3 + $0xb8] sm:$0xff]
        %v5597 = vld [vmem:[#allocation3 + $0xc0] sm:$0xff]
        %v5598 = vld [vmem:[#allocation3 + $0xc8] sm:$0xff]
        %v5599 = vld [vmem:[#allocation3 + $0xd0] sm:$0xff]
        %v5600 = vld [vmem:[#allocation3 + $0xd8] sm:$0xff]
        %v5601 = vld [vmem:[#allocation3 + $0xe0] sm:$0xff]
        %v5602 = vld [vmem:[#allocation3 + $0xe8] sm:$0xff]
        %v5603 = vld [vmem:[#allocation3 + $0xf0] sm:$0xff]
        %v5604 = vld [vmem:[#allocation3 + $0xf8] sm:$0xff]
        %v5605 = vld [vmem:[%s12] sm:$0xf]
        %v5606 = vld [vmem:[%s12 + $0x4] sm:$0xf]
        %v5607 = vld [vmem:[%s12 + $0x8] sm:$0xf]
        %v5608 = vld [vmem:[%s12 + $0xc] sm:$0xf]
        %v5609 = vld [vmem:[%s12 + $0x10] sm:$0xf]
        %v5610 = vld [vmem:[%s12 + $0x14] sm:$0xf]
        %v5611 = vld [vmem:[%s12 + $0x18] sm:$0xf]
        %v5612 = vld [vmem:[%s12 + $0x1c] sm:$0xf]
        %v5613 = vld [vmem:[%s12 + $0x20] sm:$0xf]
        %v5614 = vld [vmem:[%s12 + $0x24] sm:$0xf]
        %v5615 = vld [vmem:[%s12 + $0x28] sm:$0xf]
        %v5616 = vld [vmem:[%s12 + $0x2c] sm:$0xf]
        %v5617 = vld [vmem:[%s12 + $0x30] sm:$0xf]
        %v5618 = vld [vmem:[%s12 + $0x34] sm:$0xf]
        %v5619 = vld [vmem:[%s12 + $0x38] sm:$0xf]
        %v5620 = vld [vmem:[%s12 + $0x3c] sm:$0xf]
        %v5621 = vld [vmem:[%s12 + $0x40] sm:$0xf]
        %v5622 = vld [vmem:[%s12 + $0x44] sm:$0xf]
        %v5623 = vld [vmem:[%s12 + $0x48] sm:$0xf]
        %v5624 = vld [vmem:[%s12 + $0x4c] sm:$0xf]
        %v5625 = vld [vmem:[%s12 + $0x50] sm:$0xf]
        %v5626 = vld [vmem:[%s12 + $0x54] sm:$0xf]
        %v5627 = vld [vmem:[%s12 + $0x58] sm:$0xf]
        %v5628 = vld [vmem:[%s12 + $0x5c] sm:$0xf]
        %s5629 = scalar_lea.vmem [#allocation3], 16
        %v5630 = vld [vmem:[%s5629] sm:$0xff]
        %v5631 = vld [vmem:[%s5629 + $0x8] sm:$0xff]
        %v5632 = vld [vmem:[%s5629 + $0x10] sm:$0xff]
        %v5633 = vld [vmem:[%s5629 + $0x18] sm:$0xff]
        %v5634 = vld [vmem:[%s5629 + $0x20] sm:$0xff]
        %v5635 = vld [vmem:[%s5629 + $0x28] sm:$0xff]
        %v5636 = vld [vmem:[%s5629 + $0x30] sm:$0xff]
        %v5637 = vld [vmem:[%s5629 + $0x38] sm:$0xff]
        %v5638 = vld [vmem:[%s5629 + $0x40] sm:$0xff]
        %v5639 = vld [vmem:[%s5629 + $0x48] sm:$0xff]
        %v5640 = vld [vmem:[%s5629 + $0x50] sm:$0xff]
        %v5641 = vld [vmem:[%s5629 + $0x58] sm:$0xff]
        %v5642 = vld [vmem:[%s5629 + $0x60] sm:$0xff]
        %v5643 = vld [vmem:[%s5629 + $0x68] sm:$0xff]
        %v5644 = vld [vmem:[%s5629 + $0x70] sm:$0xff]
        %v5645 = vld [vmem:[%s5629 + $0x78] sm:$0xff]
        %v5646 = vld [vmem:[%s5629 + $0x80] sm:$0xff]
        %v5647 = vld [vmem:[%s5629 + $0x88] sm:$0xff]
        %v5648 = vld [vmem:[%s5629 + $0x90] sm:$0xff]
        %v5649 = vld [vmem:[%s5629 + $0x98] sm:$0xff]
        %v5650 = vld [vmem:[%s5629 + $0xa0] sm:$0xff]
        %v5651 = vld [vmem:[%s5629 + $0xa8] sm:$0xff]
        %v5652 = vld [vmem:[%s5629 + $0xb0] sm:$0xff]
        %v5653 = vld [vmem:[%s5629 + $0xb8] sm:$0xff]
        %v5654 = vld [vmem:[%s5629 + $0xc0] sm:$0xff]
        %v5655 = vld [vmem:[%s5629 + $0xc8] sm:$0xff]
        %v5656 = vld [vmem:[%s5629 + $0xd0] sm:$0xff]
        %v5657 = vld [vmem:[%s5629 + $0xd8] sm:$0xff]
        %v5658 = vld [vmem:[%s5629 + $0xe0] sm:$0xff]
        %v5659 = vld [vmem:[%s5629 + $0xe8] sm:$0xff]
        %v5660 = vld [vmem:[%s5629 + $0xf0] sm:$0xff]
        %v5661 = vld [vmem:[%s5629 + $0xf8] sm:$0xff]
        %s5662 = scalar_lea.vmem %s12, 96
        %v5663 = vld [vmem:[%s5662] sm:$0xf]
        %v5664 = vld [vmem:[%s5662 + $0x4] sm:$0xf]
        %v5665 = vld [vmem:[%s5662 + $0x8] sm:$0xf]
        %v5666 = vld [vmem:[%s5662 + $0xc] sm:$0xf]
        %v5667 = vld [vmem:[%s5662 + $0x10] sm:$0xf]
        %v5668 = vld [vmem:[%s5662 + $0x14] sm:$0xf]
        %v5669 = vld [vmem:[%s5662 + $0x18] sm:$0xf]
        %v5670 = vld [vmem:[%s5662 + $0x1c] sm:$0xf]
        %v5671 = vld [vmem:[%s5662 + $0x20] sm:$0xf]
        %v5672 = vld [vmem:[%s5662 + $0x24] sm:$0xf]
        %v5673 = vld [vmem:[%s5662 + $0x28] sm:$0xf]
        %v5674 = vld [vmem:[%s5662 + $0x2c] sm:$0xf]
        %v5675 = vld [vmem:[%s5662 + $0x30] sm:$0xf]
        %v5676 = vld [vmem:[%s5662 + $0x34] sm:$0xf]
        %v5677 = vld [vmem:[%s5662 + $0x38] sm:$0xf]
        %v5678 = vld [vmem:[%s5662 + $0x3c] sm:$0xf]
        %v5679 = vld [vmem:[%s5662 + $0x40] sm:$0xf]
        %v5680 = vld [vmem:[%s5662 + $0x44] sm:$0xf]
        %v5681 = vld [vmem:[%s5662 + $0x48] sm:$0xf]
        %v5682 = vld [vmem:[%s5662 + $0x4c] sm:$0xf]
        %v5683 = vld [vmem:[%s5662 + $0x50] sm:$0xf]
        %v5684 = vld [vmem:[%s5662 + $0x54] sm:$0xf]
        %v5685 = vld [vmem:[%s5662 + $0x58] sm:$0xf]
        %v5686 = vld [vmem:[%s5662 + $0x5c] sm:$0xf]
        %v5719 = vunpack.c.l.b16 %v5630
        %v5720 = vunpack.c.h.b16 %v5630
        %v5721 = vunpack.c.l.b16 %v5631
        %v5722 = vunpack.c.h.b16 %v5631
        %v5723 = vunpack.c.l.b16 %v5632
        %v5724 = vunpack.c.h.b16 %v5632
        %v5725 = vunpack.c.l.b16 %v5633
        %v5726 = vunpack.c.h.b16 %v5633
        %v5727 = vunpack.c.l.b16 %v5634
        %v5728 = vunpack.c.h.b16 %v5634
        %v5729 = vunpack.c.l.b16 %v5635
        %v5730 = vunpack.c.h.b16 %v5635
        %v5731 = vunpack.c.l.b16 %v5636
        %v5732 = vunpack.c.h.b16 %v5636
        %v5733 = vunpack.c.l.b16 %v5637
        %v5734 = vunpack.c.h.b16 %v5637
        %v5735 = vunpack.c.l.b16 %v5638
        %v5736 = vunpack.c.h.b16 %v5638
        %v5737 = vunpack.c.l.b16 %v5639
        %v5738 = vunpack.c.h.b16 %v5639
        %v5739 = vunpack.c.l.b16 %v5640
        %v5740 = vunpack.c.h.b16 %v5640
        %v5741 = vunpack.c.l.b16 %v5641
        %v5742 = vunpack.c.h.b16 %v5641
        %v5743 = vunpack.c.l.b16 %v5642
        %v5744 = vunpack.c.h.b16 %v5642
        %v5745 = vunpack.c.l.b16 %v5643
        %v5746 = vunpack.c.h.b16 %v5643
        %v5747 = vunpack.c.l.b16 %v5644
        %v5748 = vunpack.c.h.b16 %v5644
        %v5749 = vunpack.c.l.b16 %v5645
        %v5750 = vunpack.c.h.b16 %v5645
        %v5751 = vunpack.c.l.b16 %v5646
        %v5752 = vunpack.c.h.b16 %v5646
        %v5753 = vunpack.c.l.b16 %v5647
        %v5754 = vunpack.c.h.b16 %v5647
        %v5755 = vunpack.c.l.b16 %v5648
        %v5756 = vunpack.c.h.b16 %v5648
        %v5757 = vunpack.c.l.b16 %v5649
        %v5758 = vunpack.c.h.b16 %v5649
        %v5759 = vunpack.c.l.b16 %v5650
        %v5760 = vunpack.c.h.b16 %v5650
        %v5761 = vunpack.c.l.b16 %v5651
        %v5762 = vunpack.c.h.b16 %v5651
        %v5763 = vunpack.c.l.b16 %v5652
        %v5764 = vunpack.c.h.b16 %v5652
        %v5765 = vunpack.c.l.b16 %v5653
        %v5766 = vunpack.c.h.b16 %v5653
        %v5767 = vunpack.c.l.b16 %v5654
        %v5768 = vunpack.c.h.b16 %v5654
        %v5769 = vunpack.c.l.b16 %v5655
        %v5770 = vunpack.c.h.b16 %v5655
        %v5771 = vunpack.c.l.b16 %v5656
        %v5772 = vunpack.c.h.b16 %v5656
        %v5773 = vunpack.c.l.b16 %v5657
        %v5774 = vunpack.c.h.b16 %v5657
        %v5775 = vunpack.c.l.b16 %v5658
        %v5776 = vunpack.c.h.b16 %v5658
        %v5777 = vunpack.c.l.b16 %v5659
        %v5778 = vunpack.c.h.b16 %v5659
        %v5779 = vunpack.c.l.b16 %v5660
        %v5780 = vunpack.c.h.b16 %v5660
        %v5781 = vunpack.c.l.b16 %v5661
        %v5782 = vunpack.c.h.b16 %v5661
        %v5783 = vpack.c.b16 %v5721, %v5719
        %v5784 = vpack.c.b16 %v5722, %v5720
        %v5785 = vpack.c.b16 %v5725, %v5723
        %v5786 = vpack.c.b16 %v5726, %v5724
        %v5787 = vpack.c.b16 %v5729, %v5727
        %v5788 = vpack.c.b16 %v5730, %v5728
        %v5789 = vpack.c.b16 %v5733, %v5731
        %v5790 = vpack.c.b16 %v5734, %v5732
        %v5791 = vpack.c.b16 %v5737, %v5735
        %v5792 = vpack.c.b16 %v5738, %v5736
        %v5793 = vpack.c.b16 %v5741, %v5739
        %v5794 = vpack.c.b16 %v5742, %v5740
        %v5795 = vpack.c.b16 %v5745, %v5743
        %v5796 = vpack.c.b16 %v5746, %v5744
        %v5797 = vpack.c.b16 %v5749, %v5747
        %v5798 = vpack.c.b16 %v5750, %v5748
        %v5799 = vpack.c.b16 %v5753, %v5751
        %v5800 = vpack.c.b16 %v5754, %v5752
        %v5801 = vpack.c.b16 %v5757, %v5755
        %v5802 = vpack.c.b16 %v5758, %v5756
        %v5803 = vpack.c.b16 %v5761, %v5759
        %v5804 = vpack.c.b16 %v5762, %v5760
        %v5805 = vpack.c.b16 %v5765, %v5763
        %v5806 = vpack.c.b16 %v5766, %v5764
        %v5807 = vpack.c.b16 %v5769, %v5767
        %v5808 = vpack.c.b16 %v5770, %v5768
        %v5809 = vpack.c.b16 %v5773, %v5771
        %v5810 = vpack.c.b16 %v5774, %v5772
        %v5811 = vpack.c.b16 %v5777, %v5775
        %v5812 = vpack.c.b16 %v5778, %v5776
        %v5813 = vpack.c.b16 %v5781, %v5779
        %v5814 = vpack.c.b16 %v5782, %v5780
        %v5855 = vunpack.c.l.b16 %v5663
        %v5856 = vunpack.c.l.b16 %v5664
        %v5857 = vunpack.c.l.b16 %v5665
        %v5858 = vunpack.c.l.b16 %v5666
        %v5859 = vunpack.c.l.b16 %v5667
        %v5860 = vunpack.c.l.b16 %v5668
        %v5861 = vunpack.c.l.b16 %v5669
        %v5862 = vunpack.c.l.b16 %v5670
        %v5863 = vunpack.c.l.b16 %v5671
        %v5864 = vunpack.c.l.b16 %v5672
        %v5865 = vunpack.c.l.b16 %v5673
        %v5866 = vunpack.c.l.b16 %v5674
        %v5867 = vunpack.c.l.b16 %v5675
        %v5868 = vunpack.c.l.b16 %v5676
        %v5869 = vunpack.c.l.b16 %v5677
        %v5870 = vunpack.c.l.b16 %v5678
        %v5871 = vunpack.c.l.b16 %v5679
        %v5872 = vunpack.c.l.b16 %v5680
        %v5873 = vunpack.c.l.b16 %v5681
        %v5874 = vunpack.c.l.b16 %v5682
        %v5875 = vunpack.c.l.b16 %v5683
        %v5876 = vunpack.c.l.b16 %v5684
        %v5877 = vunpack.c.l.b16 %v5685
        %v5878 = vunpack.c.l.b16 %v5686
        %v5879 = vpack.c.b16 %v5856, %v5855
        %v5880 = vpack.c.b16 %v5858, %v5857
        %v5881 = vpack.c.b16 %v5860, %v5859
        %v5882 = vpack.c.b16 %v5862, %v5861
        %v5883 = vpack.c.b16 %v5864, %v5863
        %v5884 = vpack.c.b16 %v5866, %v5865
        %v5885 = vpack.c.b16 %v5868, %v5867
        %v5886 = vpack.c.b16 %v5870, %v5869
        %v5887 = vpack.c.b16 %v5872, %v5871
        %v5888 = vpack.c.b16 %v5874, %v5873
        %v5889 = vpack.c.b16 %v5876, %v5875
        %v5890 = vpack.c.b16 %v5878, %v5877
        %v5904 = vsel %vm693, %v5784, 0
        %v5907 = vsel %vm693, %v5786, 0
        %v5910 = vsel %vm693, %v5788, 0
        %v5913 = vsel %vm693, %v5790, 0
        %v5916 = vsel %vm693, %v5792, 0
        %v5919 = vsel %vm693, %v5794, 0
        %v5922 = vsel %vm693, %v5796, 0
        %v5925 = vsel %vm693, %v5798, 0
        %v5928 = vsel %vm693, %v5800, 0
        %v5931 = vsel %vm693, %v5802, 0
        %v5934 = vsel %vm693, %v5804, 0
        %v5937 = vsel %vm693, %v5806, 0
        %v5940 = vsel %vm693, %v5808, 0
        %v5943 = vsel %vm693, %v5810, 0
        %v5946 = vsel %vm693, %v5812, 0
        %v5949 = vsel %vm693, %v5814, 0
        %5951 = vmatprep.subr.bf16.mxu0 0
        %5952 = vmatpush1.bf16.msra.mxu0 %v5886
        %5953 = vmatprep.subr.bf16.mxu0 0
        %5954 = vmatpush1.bf16.msra.mxu0 %v5885
        %5955 = vmatprep.subr.bf16.mxu0 0
        %5956 = vmatpush1.bf16.msra.mxu0 %v5884
        %5957 = vmatprep.subr.bf16.mxu0 0
        %5958 = vmatpush1.bf16.msra.mxu0 %v5883
        %5959 = vmatprep.subr.bf16.mxu0 0
        %5960 = vmatpush1.bf16.msra.mxu0 %v5882
        %5961 = vmatprep.subr.bf16.mxu0 0
        %5962 = vmatpush1.bf16.msra.mxu0 %v5881
        %5963 = vmatprep.subr.bf16.mxu0 0
        %5964 = vmatpush1.bf16.msra.mxu0 %v5880
        %5965 = vmatprep.subr.bf16.mxu0 0
        %5966 = vmatpush1.bf16.msra.mxu0 %v5879
        %5967 = vmatprep.subr.bf16.mxu0 0
        %5968 = vmatpush2.bf16.msra.mxu0 0
        %5969 = vmatprep.subr.bf16.mxu0 0
        %5970 = vmatpush2.bf16.msra.mxu0 0
        %5971 = vmatprep.subr.bf16.mxu0 0
        %5972 = vmatpush2.bf16.msra.mxu0 0
        %5973 = vmatprep.subr.bf16.mxu0 0
        %5974 = vmatpush2.bf16.msra.mxu0 0
        %5975 = vmatprep.subr.bf16.mxu0 0
        %5976 = vmatpush2.bf16.msra.mxu0 %v5890
        %5977 = vmatprep.subr.bf16.mxu0 0
        %5978 = vmatpush2.bf16.msra.mxu0 %v5889
        %5979 = vmatprep.subr.bf16.mxu0 0
        %5980 = vmatpush2.bf16.msra.mxu0 %v5888
        %5981 = vmatprep.subr.bf16.mxu0 0
        %5982 = vmatpush2.bf16.msra.mxu0 %v5887
        %5983 = vmatprep.mubr.bf16.mxu0 %v5904
        %5984 = vmatmul.mubr.bf16.gmra.mxu0 %v5783
        %v5985 = vpop.f32.mrf.mxu0
        %v5986 = vadd.f32 0.0, %v5985
        %v5987 = vpop.f32.mrf.mxu0
        %v5988 = vpop.f32.mrf.mxu0
        %v5989 = vadd.f32 0.0, %v5988
        %v5990 = vpop.f32.mrf.mxu0
        %5991 = vmatprep.mubr.bf16.mxu0 %v5907
        %5992 = vmatmul.mubr.bf16.gmra.mxu0 %v5785
        %v5993 = vpop.f32.mrf.mxu0
        %v5994 = vadd.f32 0.0, %v5993
        %v5995 = vpop.f32.mrf.mxu0
        %v5996 = vpop.f32.mrf.mxu0
        %v5997 = vadd.f32 0.0, %v5996
        %v5998 = vpop.f32.mrf.mxu0
        %5999 = vmatprep.mubr.bf16.mxu0 %v5910
        %6000 = vmatmul.mubr.bf16.gmra.mxu0 %v5787
        %v6001 = vpop.f32.mrf.mxu0
        %v6002 = vadd.f32 0.0, %v6001
        %v6003 = vpop.f32.mrf.mxu0
        %v6004 = vpop.f32.mrf.mxu0
        %v6005 = vadd.f32 0.0, %v6004
        %v6006 = vpop.f32.mrf.mxu0
        %6007 = vmatprep.mubr.bf16.mxu0 %v5913
        %6008 = vmatmul.mubr.bf16.gmra.mxu0 %v5789
        %v6009 = vpop.f32.mrf.mxu0
        %v6010 = vadd.f32 0.0, %v6009
        %v6011 = vpop.f32.mrf.mxu0
        %v6012 = vpop.f32.mrf.mxu0
        %v6013 = vadd.f32 0.0, %v6012
        %v6014 = vpop.f32.mrf.mxu0
        %6015 = vmatprep.mubr.bf16.mxu0 %v5916
        %6016 = vmatmul.mubr.bf16.gmra.mxu0 %v5791
        %v6017 = vpop.f32.mrf.mxu0
        %v6018 = vadd.f32 0.0, %v6017
        %v6019 = vpop.f32.mrf.mxu0
        %v6020 = vpop.f32.mrf.mxu0
        %v6021 = vadd.f32 0.0, %v6020
        %v6022 = vpop.f32.mrf.mxu0
        %6023 = vmatprep.mubr.bf16.mxu0 %v5919
        %6024 = vmatmul.mubr.bf16.gmra.mxu0 %v5793
        %v6025 = vpop.f32.mrf.mxu0
        %v6026 = vadd.f32 0.0, %v6025
        %v6027 = vpop.f32.mrf.mxu0
        %v6028 = vpop.f32.mrf.mxu0
        %v6029 = vadd.f32 0.0, %v6028
        %v6030 = vpop.f32.mrf.mxu0
        %6031 = vmatprep.mubr.bf16.mxu0 %v5922
        %6032 = vmatmul.mubr.bf16.gmra.mxu0 %v5795
        %v6033 = vpop.f32.mrf.mxu0
        %v6034 = vadd.f32 0.0, %v6033
        %v6035 = vpop.f32.mrf.mxu0
        %v6036 = vpop.f32.mrf.mxu0
        %v6037 = vadd.f32 0.0, %v6036
        %v6038 = vpop.f32.mrf.mxu0
        %6039 = vmatprep.mubr.bf16.mxu0 %v5925
        %6040 = vmatmul.mubr.bf16.gmra.mxu0 %v5797
        %v6041 = vpop.f32.mrf.mxu0
        %v6042 = vadd.f32 0.0, %v6041
        %v6043 = vpop.f32.mrf.mxu0
        %v6044 = vpop.f32.mrf.mxu0
        %v6045 = vadd.f32 0.0, %v6044
        %v6046 = vpop.f32.mrf.mxu0
        %6047 = vmatprep.mubr.bf16.mxu0 %v5928
        %6048 = vmatmul.mubr.bf16.gmra.mxu0 %v5799
        %v6049 = vpop.f32.mrf.mxu0
        %v6050 = vadd.f32 0.0, %v6049
        %v6051 = vpop.f32.mrf.mxu0
        %v6052 = vpop.f32.mrf.mxu0
        %v6053 = vadd.f32 0.0, %v6052
        %v6054 = vpop.f32.mrf.mxu0
        %6055 = vmatprep.mubr.bf16.mxu0 %v5931
        %6056 = vmatmul.mubr.bf16.gmra.mxu0 %v5801
        %v6057 = vpop.f32.mrf.mxu0
        %v6058 = vadd.f32 0.0, %v6057
        %v6059 = vpop.f32.mrf.mxu0
        %v6060 = vpop.f32.mrf.mxu0
        %v6061 = vadd.f32 0.0, %v6060
        %v6062 = vpop.f32.mrf.mxu0
        %6063 = vmatprep.mubr.bf16.mxu0 %v5934
        %6064 = vmatmul.mubr.bf16.gmra.mxu0 %v5803
        %v6065 = vpop.f32.mrf.mxu0
        %v6066 = vadd.f32 0.0, %v6065
        %v6067 = vpop.f32.mrf.mxu0
        %v6068 = vpop.f32.mrf.mxu0
        %v6069 = vadd.f32 0.0, %v6068
        %v6070 = vpop.f32.mrf.mxu0
        %6071 = vmatprep.mubr.bf16.mxu0 %v5937
        %6072 = vmatmul.mubr.bf16.gmra.mxu0 %v5805
        %v6073 = vpop.f32.mrf.mxu0
        %v6074 = vadd.f32 0.0, %v6073
        %v6075 = vpop.f32.mrf.mxu0
        %v6076 = vpop.f32.mrf.mxu0
        %v6077 = vadd.f32 0.0, %v6076
        %v6078 = vpop.f32.mrf.mxu0
        %6079 = vmatprep.mubr.bf16.mxu0 %v5940
        %6080 = vmatmul.mubr.bf16.gmra.mxu0 %v5807
        %v6081 = vpop.f32.mrf.mxu0
        %v6082 = vadd.f32 0.0, %v6081
        %v6083 = vpop.f32.mrf.mxu0
        %v6084 = vpop.f32.mrf.mxu0
        %v6085 = vadd.f32 0.0, %v6084
        %v6086 = vpop.f32.mrf.mxu0
        %6087 = vmatprep.mubr.bf16.mxu0 %v5943
        %6088 = vmatmul.mubr.bf16.gmra.mxu0 %v5809
        %v6089 = vpop.f32.mrf.mxu0
        %v6090 = vadd.f32 0.0, %v6089
        %v6091 = vpop.f32.mrf.mxu0
        %v6092 = vpop.f32.mrf.mxu0
        %v6093 = vadd.f32 0.0, %v6092
        %v6094 = vpop.f32.mrf.mxu0
        %6095 = vmatprep.mubr.bf16.mxu0 %v5946
        %6096 = vmatmul.mubr.bf16.gmra.mxu0 %v5811
        %v6097 = vpop.f32.mrf.mxu0
        %v6098 = vadd.f32 0.0, %v6097
        %v6099 = vpop.f32.mrf.mxu0
        %v6100 = vpop.f32.mrf.mxu0
        %v6101 = vadd.f32 0.0, %v6100
        %v6102 = vpop.f32.mrf.mxu0
        %6103 = vmatprep.mubr.bf16.mxu0 %v5949
        %6104 = vmatmul.mubr.bf16.gmra.mxu0 %v5813
        %v6105 = vpop.f32.mrf.mxu0
        %v6106 = vadd.f32 0.0, %v6105
        %v6107 = vpop.f32.mrf.mxu0
        %v6108 = vpop.f32.mrf.mxu0
        %v6109 = vadd.f32 0.0, %v6108
        %v6110 = vpop.f32.mrf.mxu0
        %6111 = vdwg.mxu0
        %v6144 = vunpack.c.l.b16 %v5573
        %v6145 = vunpack.c.h.b16 %v5573
        %v6146 = vunpack.c.l.b16 %v5574
        %v6147 = vunpack.c.h.b16 %v5574
        %v6148 = vunpack.c.l.b16 %v5575
        %v6149 = vunpack.c.h.b16 %v5575
        %v6150 = vunpack.c.l.b16 %v5576
        %v6151 = vunpack.c.h.b16 %v5576
        %v6152 = vunpack.c.l.b16 %v5577
        %v6153 = vunpack.c.h.b16 %v5577
        %v6154 = vunpack.c.l.b16 %v5578
        %v6155 = vunpack.c.h.b16 %v5578
        %v6156 = vunpack.c.l.b16 %v5579
        %v6157 = vunpack.c.h.b16 %v5579
        %v6158 = vunpack.c.l.b16 %v5580
        %v6159 = vunpack.c.h.b16 %v5580
        %v6160 = vunpack.c.l.b16 %v5581
        %v6161 = vunpack.c.h.b16 %v5581
        %v6162 = vunpack.c.l.b16 %v5582
        %v6163 = vunpack.c.h.b16 %v5582
        %v6164 = vunpack.c.l.b16 %v5583
        %v6165 = vunpack.c.h.b16 %v5583
        %v6166 = vunpack.c.l.b16 %v5584
        %v6167 = vunpack.c.h.b16 %v5584
        %v6168 = vunpack.c.l.b16 %v5585
        %v6169 = vunpack.c.h.b16 %v5585
        %v6170 = vunpack.c.l.b16 %v5586
        %v6171 = vunpack.c.h.b16 %v5586
        %v6172 = vunpack.c.l.b16 %v5587
        %v6173 = vunpack.c.h.b16 %v5587
        %v6174 = vunpack.c.l.b16 %v5588
        %v6175 = vunpack.c.h.b16 %v5588
        %v6176 = vunpack.c.l.b16 %v5589
        %v6177 = vunpack.c.h.b16 %v5589
        %v6178 = vunpack.c.l.b16 %v5590
        %v6179 = vunpack.c.h.b16 %v5590
        %v6180 = vunpack.c.l.b16 %v5591
        %v6181 = vunpack.c.h.b16 %v5591
        %v6182 = vunpack.c.l.b16 %v5592
        %v6183 = vunpack.c.h.b16 %v5592
        %v6184 = vunpack.c.l.b16 %v5593
        %v6185 = vunpack.c.h.b16 %v5593
        %v6186 = vunpack.c.l.b16 %v5594
        %v6187 = vunpack.c.h.b16 %v5594
        %v6188 = vunpack.c.l.b16 %v5595
        %v6189 = vunpack.c.h.b16 %v5595
        %v6190 = vunpack.c.l.b16 %v5596
        %v6191 = vunpack.c.h.b16 %v5596
        %v6192 = vunpack.c.l.b16 %v5597
        %v6193 = vunpack.c.h.b16 %v5597
        %v6194 = vunpack.c.l.b16 %v5598
        %v6195 = vunpack.c.h.b16 %v5598
        %v6196 = vunpack.c.l.b16 %v5599
        %v6197 = vunpack.c.h.b16 %v5599
        %v6198 = vunpack.c.l.b16 %v5600
        %v6199 = vunpack.c.h.b16 %v5600
        %v6200 = vunpack.c.l.b16 %v5601
        %v6201 = vunpack.c.h.b16 %v5601
        %v6202 = vunpack.c.l.b16 %v5602
        %v6203 = vunpack.c.h.b16 %v5602
        %v6204 = vunpack.c.l.b16 %v5603
        %v6205 = vunpack.c.h.b16 %v5603
        %v6206 = vunpack.c.l.b16 %v5604
        %v6207 = vunpack.c.h.b16 %v5604
        %v6208 = vpack.c.b16 %v6146, %v6144
        %v6209 = vpack.c.b16 %v6147, %v6145
        %v6210 = vpack.c.b16 %v6150, %v6148
        %v6211 = vpack.c.b16 %v6151, %v6149
        %v6212 = vpack.c.b16 %v6154, %v6152
        %v6213 = vpack.c.b16 %v6155, %v6153
        %v6214 = vpack.c.b16 %v6158, %v6156
        %v6215 = vpack.c.b16 %v6159, %v6157
        %v6216 = vpack.c.b16 %v6162, %v6160
        %v6217 = vpack.c.b16 %v6163, %v6161
        %v6218 = vpack.c.b16 %v6166, %v6164
        %v6219 = vpack.c.b16 %v6167, %v6165
        %v6220 = vpack.c.b16 %v6170, %v6168
        %v6221 = vpack.c.b16 %v6171, %v6169
        %v6222 = vpack.c.b16 %v6174, %v6172
        %v6223 = vpack.c.b16 %v6175, %v6173
        %v6224 = vpack.c.b16 %v6178, %v6176
        %v6225 = vpack.c.b16 %v6179, %v6177
        %v6226 = vpack.c.b16 %v6182, %v6180
        %v6227 = vpack.c.b16 %v6183, %v6181
        %v6228 = vpack.c.b16 %v6186, %v6184
        %v6229 = vpack.c.b16 %v6187, %v6185
        %v6230 = vpack.c.b16 %v6190, %v6188
        %v6231 = vpack.c.b16 %v6191, %v6189
        %v6232 = vpack.c.b16 %v6194, %v6192
        %v6233 = vpack.c.b16 %v6195, %v6193
        %v6234 = vpack.c.b16 %v6198, %v6196
        %v6235 = vpack.c.b16 %v6199, %v6197
        %v6236 = vpack.c.b16 %v6202, %v6200
        %v6237 = vpack.c.b16 %v6203, %v6201
        %v6238 = vpack.c.b16 %v6206, %v6204
        %v6239 = vpack.c.b16 %v6207, %v6205
        %v6280 = vunpack.c.l.b16 %v5605
        %v6281 = vunpack.c.l.b16 %v5606
        %v6282 = vunpack.c.l.b16 %v5607
        %v6283 = vunpack.c.l.b16 %v5608
        %v6284 = vunpack.c.l.b16 %v5609
        %v6285 = vunpack.c.l.b16 %v5610
        %v6286 = vunpack.c.l.b16 %v5611
        %v6287 = vunpack.c.l.b16 %v5612
        %v6288 = vunpack.c.l.b16 %v5613
        %v6289 = vunpack.c.l.b16 %v5614
        %v6290 = vunpack.c.l.b16 %v5615
        %v6291 = vunpack.c.l.b16 %v5616
        %v6292 = vunpack.c.l.b16 %v5617
        %v6293 = vunpack.c.l.b16 %v5618
        %v6294 = vunpack.c.l.b16 %v5619
        %v6295 = vunpack.c.l.b16 %v5620
        %v6296 = vunpack.c.l.b16 %v5621
        %v6297 = vunpack.c.l.b16 %v5622
        %v6298 = vunpack.c.l.b16 %v5623
        %v6299 = vunpack.c.l.b16 %v5624
        %v6300 = vunpack.c.l.b16 %v5625
        %v6301 = vunpack.c.l.b16 %v5626
        %v6302 = vunpack.c.l.b16 %v5627
        %v6303 = vunpack.c.l.b16 %v5628
        %v6304 = vpack.c.b16 %v6281, %v6280
        %v6305 = vpack.c.b16 %v6283, %v6282
        %v6306 = vpack.c.b16 %v6285, %v6284
        %v6307 = vpack.c.b16 %v6287, %v6286
        %v6308 = vpack.c.b16 %v6289, %v6288
        %v6309 = vpack.c.b16 %v6291, %v6290
        %v6310 = vpack.c.b16 %v6293, %v6292
        %v6311 = vpack.c.b16 %v6295, %v6294
        %v6312 = vpack.c.b16 %v6297, %v6296
        %v6313 = vpack.c.b16 %v6299, %v6298
        %v6314 = vpack.c.b16 %v6301, %v6300
        %v6315 = vpack.c.b16 %v6303, %v6302
        %v6329 = vsel %vm693, %v6209, 0
        %v6332 = vsel %vm693, %v6211, 0
        %v6335 = vsel %vm693, %v6213, 0
        %v6338 = vsel %vm693, %v6215, 0
        %v6341 = vsel %vm693, %v6217, 0
        %v6344 = vsel %vm693, %v6219, 0
        %v6347 = vsel %vm693, %v6221, 0
        %v6350 = vsel %vm693, %v6223, 0
        %v6353 = vsel %vm693, %v6225, 0
        %v6356 = vsel %vm693, %v6227, 0
        %v6359 = vsel %vm693, %v6229, 0
        %v6362 = vsel %vm693, %v6231, 0
        %v6365 = vsel %vm693, %v6233, 0
        %v6368 = vsel %vm693, %v6235, 0
        %v6371 = vsel %vm693, %v6237, 0
        %v6374 = vsel %vm693, %v6239, 0
        %6376 = vmatprep.subr.bf16.mxu0 0
        %6377 = vmatpush1.bf16.msra.mxu0 %v6311
        %6378 = vmatprep.subr.bf16.mxu0 0
        %6379 = vmatpush1.bf16.msra.mxu0 %v6310
        %6380 = vmatprep.subr.bf16.mxu0 0
        %6381 = vmatpush1.bf16.msra.mxu0 %v6309
        %6382 = vmatprep.subr.bf16.mxu0 0
        %6383 = vmatpush1.bf16.msra.mxu0 %v6308
        %6384 = vmatprep.subr.bf16.mxu0 0
        %6385 = vmatpush1.bf16.msra.mxu0 %v6307
        %6386 = vmatprep.subr.bf16.mxu0 0
        %6387 = vmatpush1.bf16.msra.mxu0 %v6306
        %6388 = vmatprep.subr.bf16.mxu0 0
        %6389 = vmatpush1.bf16.msra.mxu0 %v6305
        %6390 = vmatprep.subr.bf16.mxu0 0
        %6391 = vmatpush1.bf16.msra.mxu0 %v6304
        %6392 = vmatprep.subr.bf16.mxu0 0
        %6393 = vmatpush2.bf16.msra.mxu0 0
        %6394 = vmatprep.subr.bf16.mxu0 0
        %6395 = vmatpush2.bf16.msra.mxu0 0
        %6396 = vmatprep.subr.bf16.mxu0 0
        %6397 = vmatpush2.bf16.msra.mxu0 0
        %6398 = vmatprep.subr.bf16.mxu0 0
        %6399 = vmatpush2.bf16.msra.mxu0 0
        %6400 = vmatprep.subr.bf16.mxu0 0
        %6401 = vmatpush2.bf16.msra.mxu0 %v6315
        %6402 = vmatprep.subr.bf16.mxu0 0
        %6403 = vmatpush2.bf16.msra.mxu0 %v6314
        %6404 = vmatprep.subr.bf16.mxu0 0
        %6405 = vmatpush2.bf16.msra.mxu0 %v6313
        %6406 = vmatprep.subr.bf16.mxu0 0
        %6407 = vmatpush2.bf16.msra.mxu0 %v6312
        %6408 = vmatprep.mubr.bf16.mxu0 %v6329
        %6409 = vmatmul.mubr.bf16.gmra.mxu0 %v6208
        %v6410 = vpop.f32.mrf.mxu0
        %v6411 = vadd.f32 %v5986, %v6410
        %v6412 = vpop.f32.mrf.mxu0
        %v6413 = vpop.f32.mrf.mxu0
        %v6414 = vadd.f32 %v5989, %v6413
        %v6415 = vpop.f32.mrf.mxu0
        %6416 = vmatprep.mubr.bf16.mxu0 %v6332
        %6417 = vmatmul.mubr.bf16.gmra.mxu0 %v6210
        %v6418 = vpop.f32.mrf.mxu0
        %v6419 = vadd.f32 %v5994, %v6418
        %v6420 = vpop.f32.mrf.mxu0
        %v6421 = vpop.f32.mrf.mxu0
        %v6422 = vadd.f32 %v5997, %v6421
        %v6423 = vpop.f32.mrf.mxu0
        %6424 = vmatprep.mubr.bf16.mxu0 %v6335
        %6425 = vmatmul.mubr.bf16.gmra.mxu0 %v6212
        %v6426 = vpop.f32.mrf.mxu0
        %v6427 = vadd.f32 %v6002, %v6426
        %v6428 = vpop.f32.mrf.mxu0
        %v6429 = vpop.f32.mrf.mxu0
        %v6430 = vadd.f32 %v6005, %v6429
        %v6431 = vpop.f32.mrf.mxu0
        %6432 = vmatprep.mubr.bf16.mxu0 %v6338
        %6433 = vmatmul.mubr.bf16.gmra.mxu0 %v6214
        %v6434 = vpop.f32.mrf.mxu0
        %v6435 = vadd.f32 %v6010, %v6434
        %v6436 = vpop.f32.mrf.mxu0
        %v6437 = vpop.f32.mrf.mxu0
        %v6438 = vadd.f32 %v6013, %v6437
        %v6439 = vpop.f32.mrf.mxu0
        %6440 = vmatprep.mubr.bf16.mxu0 %v6341
        %6441 = vmatmul.mubr.bf16.gmra.mxu0 %v6216
        %v6442 = vpop.f32.mrf.mxu0
        %v6443 = vadd.f32 %v6018, %v6442
        %v6444 = vpop.f32.mrf.mxu0
        %v6445 = vpop.f32.mrf.mxu0
        %v6446 = vadd.f32 %v6021, %v6445
        %v6447 = vpop.f32.mrf.mxu0
        %6448 = vmatprep.mubr.bf16.mxu0 %v6344
        %6449 = vmatmul.mubr.bf16.gmra.mxu0 %v6218
        %v6450 = vpop.f32.mrf.mxu0
        %v6451 = vadd.f32 %v6026, %v6450
        %v6452 = vpop.f32.mrf.mxu0
        %v6453 = vpop.f32.mrf.mxu0
        %v6454 = vadd.f32 %v6029, %v6453
        %v6455 = vpop.f32.mrf.mxu0
        %6456 = vmatprep.mubr.bf16.mxu0 %v6347
        %6457 = vmatmul.mubr.bf16.gmra.mxu0 %v6220
        %v6458 = vpop.f32.mrf.mxu0
        %v6459 = vadd.f32 %v6034, %v6458
        %v6460 = vpop.f32.mrf.mxu0
        %v6461 = vpop.f32.mrf.mxu0
        %v6462 = vadd.f32 %v6037, %v6461
        %v6463 = vpop.f32.mrf.mxu0
        %6464 = vmatprep.mubr.bf16.mxu0 %v6350
        %6465 = vmatmul.mubr.bf16.gmra.mxu0 %v6222
        %v6466 = vpop.f32.mrf.mxu0
        %v6467 = vadd.f32 %v6042, %v6466
        %v6468 = vpop.f32.mrf.mxu0
        %v6469 = vpop.f32.mrf.mxu0
        %v6470 = vadd.f32 %v6045, %v6469
        %v6471 = vpop.f32.mrf.mxu0
        %6472 = vmatprep.mubr.bf16.mxu0 %v6353
        %6473 = vmatmul.mubr.bf16.gmra.mxu0 %v6224
        %v6474 = vpop.f32.mrf.mxu0
        %v6475 = vadd.f32 %v6050, %v6474
        %v6476 = vpop.f32.mrf.mxu0
        %v6477 = vpop.f32.mrf.mxu0
        %v6478 = vadd.f32 %v6053, %v6477
        %v6479 = vpop.f32.mrf.mxu0
        %6480 = vmatprep.mubr.bf16.mxu0 %v6356
        %6481 = vmatmul.mubr.bf16.gmra.mxu0 %v6226
        %v6482 = vpop.f32.mrf.mxu0
        %v6483 = vadd.f32 %v6058, %v6482
        %v6484 = vpop.f32.mrf.mxu0
        %v6485 = vpop.f32.mrf.mxu0
        %v6486 = vadd.f32 %v6061, %v6485
        %v6487 = vpop.f32.mrf.mxu0
        %6488 = vmatprep.mubr.bf16.mxu0 %v6359
        %6489 = vmatmul.mubr.bf16.gmra.mxu0 %v6228
        %v6490 = vpop.f32.mrf.mxu0
        %v6491 = vadd.f32 %v6066, %v6490
        %v6492 = vpop.f32.mrf.mxu0
        %v6493 = vpop.f32.mrf.mxu0
        %v6494 = vadd.f32 %v6069, %v6493
        %v6495 = vpop.f32.mrf.mxu0
        %6496 = vmatprep.mubr.bf16.mxu0 %v6362
        %6497 = vmatmul.mubr.bf16.gmra.mxu0 %v6230
        %v6498 = vpop.f32.mrf.mxu0
        %v6499 = vadd.f32 %v6074, %v6498
        %v6500 = vpop.f32.mrf.mxu0
        %v6501 = vpop.f32.mrf.mxu0
        %v6502 = vadd.f32 %v6077, %v6501
        %v6503 = vpop.f32.mrf.mxu0
        %6504 = vmatprep.mubr.bf16.mxu0 %v6365
        %6505 = vmatmul.mubr.bf16.gmra.mxu0 %v6232
        %v6506 = vpop.f32.mrf.mxu0
        %v6507 = vadd.f32 %v6082, %v6506
        %v6508 = vpop.f32.mrf.mxu0
        %v6509 = vpop.f32.mrf.mxu0
        %v6510 = vadd.f32 %v6085, %v6509
        %v6511 = vpop.f32.mrf.mxu0
        %6512 = vmatprep.mubr.bf16.mxu0 %v6368
        %6513 = vmatmul.mubr.bf16.gmra.mxu0 %v6234
        %v6514 = vpop.f32.mrf.mxu0
        %v6515 = vadd.f32 %v6090, %v6514
        %v6516 = vpop.f32.mrf.mxu0
        %v6517 = vpop.f32.mrf.mxu0
        %v6518 = vadd.f32 %v6093, %v6517
        %v6519 = vpop.f32.mrf.mxu0
        %6520 = vmatprep.mubr.bf16.mxu0 %v6371
        %6521 = vmatmul.mubr.bf16.gmra.mxu0 %v6236
        %v6522 = vpop.f32.mrf.mxu0
        %v6523 = vadd.f32 %v6098, %v6522
        %v6524 = vpop.f32.mrf.mxu0
        %v6525 = vpop.f32.mrf.mxu0
        %v6526 = vadd.f32 %v6101, %v6525
        %v6527 = vpop.f32.mrf.mxu0
        %6528 = vmatprep.mubr.bf16.mxu0 %v6374
        %6529 = vmatmul.mubr.bf16.gmra.mxu0 %v6238
        %v6530 = vpop.f32.mrf.mxu0
        %v6531 = vadd.f32 %v6106, %v6530
        %v6532 = vpop.f32.mrf.mxu0
        %v6533 = vpop.f32.mrf.mxu0
        %v6534 = vadd.f32 %v6109, %v6533
        %v6535 = vpop.f32.mrf.mxu0
        %6536 = vdwg.mxu0
        %s6537 = scalar_lea.vmem [#allocation3], 32
        %v6538 = vld [vmem:[%s6537] sm:$0xff]
        %v6539 = vld [vmem:[%s6537 + $0x8] sm:$0xff]
        %v6540 = vld [vmem:[%s6537 + $0x10] sm:$0xff]
        %v6541 = vld [vmem:[%s6537 + $0x18] sm:$0xff]
        %v6542 = vld [vmem:[%s6537 + $0x20] sm:$0xff]
        %v6543 = vld [vmem:[%s6537 + $0x28] sm:$0xff]
        %v6544 = vld [vmem:[%s6537 + $0x30] sm:$0xff]
        %v6545 = vld [vmem:[%s6537 + $0x38] sm:$0xff]
        %v6546 = vld [vmem:[%s6537 + $0x40] sm:$0xff]
        %v6547 = vld [vmem:[%s6537 + $0x48] sm:$0xff]
        %v6548 = vld [vmem:[%s6537 + $0x50] sm:$0xff]
        %v6549 = vld [vmem:[%s6537 + $0x58] sm:$0xff]
        %v6550 = vld [vmem:[%s6537 + $0x60] sm:$0xff]
        %v6551 = vld [vmem:[%s6537 + $0x68] sm:$0xff]
        %v6552 = vld [vmem:[%s6537 + $0x70] sm:$0xff]
        %v6553 = vld [vmem:[%s6537 + $0x78] sm:$0xff]
        %v6554 = vld [vmem:[%s6537 + $0x80] sm:$0xff]
        %v6555 = vld [vmem:[%s6537 + $0x88] sm:$0xff]
        %v6556 = vld [vmem:[%s6537 + $0x90] sm:$0xff]
        %v6557 = vld [vmem:[%s6537 + $0x98] sm:$0xff]
        %v6558 = vld [vmem:[%s6537 + $0xa0] sm:$0xff]
        %v6559 = vld [vmem:[%s6537 + $0xa8] sm:$0xff]
        %v6560 = vld [vmem:[%s6537 + $0xb0] sm:$0xff]
        %v6561 = vld [vmem:[%s6537 + $0xb8] sm:$0xff]
        %v6562 = vld [vmem:[%s6537 + $0xc0] sm:$0xff]
        %v6563 = vld [vmem:[%s6537 + $0xc8] sm:$0xff]
        %v6564 = vld [vmem:[%s6537 + $0xd0] sm:$0xff]
        %v6565 = vld [vmem:[%s6537 + $0xd8] sm:$0xff]
        %v6566 = vld [vmem:[%s6537 + $0xe0] sm:$0xff]
        %v6567 = vld [vmem:[%s6537 + $0xe8] sm:$0xff]
        %v6568 = vld [vmem:[%s6537 + $0xf0] sm:$0xff]
        %v6569 = vld [vmem:[%s6537 + $0xf8] sm:$0xff]
        %s6570 = scalar_lea.vmem %s12, 192
        %v6571 = vld [vmem:[%s6570] sm:$0xf]
        %v6572 = vld [vmem:[%s6570 + $0x4] sm:$0xf]
        %v6573 = vld [vmem:[%s6570 + $0x8] sm:$0xf]
        %v6574 = vld [vmem:[%s6570 + $0xc] sm:$0xf]
        %v6575 = vld [vmem:[%s6570 + $0x10] sm:$0xf]
        %v6576 = vld [vmem:[%s6570 + $0x14] sm:$0xf]
        %v6577 = vld [vmem:[%s6570 + $0x18] sm:$0xf]
        %v6578 = vld [vmem:[%s6570 + $0x1c] sm:$0xf]
        %v6579 = vld [vmem:[%s6570 + $0x20] sm:$0xf]
        %v6580 = vld [vmem:[%s6570 + $0x24] sm:$0xf]
        %v6581 = vld [vmem:[%s6570 + $0x28] sm:$0xf]
        %v6582 = vld [vmem:[%s6570 + $0x2c] sm:$0xf]
        %v6583 = vld [vmem:[%s6570 + $0x30] sm:$0xf]
        %v6584 = vld [vmem:[%s6570 + $0x34] sm:$0xf]
        %v6585 = vld [vmem:[%s6570 + $0x38] sm:$0xf]
        %v6586 = vld [vmem:[%s6570 + $0x3c] sm:$0xf]
        %v6587 = vld [vmem:[%s6570 + $0x40] sm:$0xf]
        %v6588 = vld [vmem:[%s6570 + $0x44] sm:$0xf]
        %v6589 = vld [vmem:[%s6570 + $0x48] sm:$0xf]
        %v6590 = vld [vmem:[%s6570 + $0x4c] sm:$0xf]
        %v6591 = vld [vmem:[%s6570 + $0x50] sm:$0xf]
        %v6592 = vld [vmem:[%s6570 + $0x54] sm:$0xf]
        %v6593 = vld [vmem:[%s6570 + $0x58] sm:$0xf]
        %v6594 = vld [vmem:[%s6570 + $0x5c] sm:$0xf]
        %v6627 = vunpack.c.l.b16 %v6538
        %v6628 = vunpack.c.h.b16 %v6538
        %v6629 = vunpack.c.l.b16 %v6539
        %v6630 = vunpack.c.h.b16 %v6539
        %v6631 = vunpack.c.l.b16 %v6540
        %v6632 = vunpack.c.h.b16 %v6540
        %v6633 = vunpack.c.l.b16 %v6541
        %v6634 = vunpack.c.h.b16 %v6541
        %v6635 = vunpack.c.l.b16 %v6542
        %v6636 = vunpack.c.h.b16 %v6542
        %v6637 = vunpack.c.l.b16 %v6543
        %v6638 = vunpack.c.h.b16 %v6543
        %v6639 = vunpack.c.l.b16 %v6544
        %v6640 = vunpack.c.h.b16 %v6544
        %v6641 = vunpack.c.l.b16 %v6545
        %v6642 = vunpack.c.h.b16 %v6545
        %v6643 = vunpack.c.l.b16 %v6546
        %v6644 = vunpack.c.h.b16 %v6546
        %v6645 = vunpack.c.l.b16 %v6547
        %v6646 = vunpack.c.h.b16 %v6547
        %v6647 = vunpack.c.l.b16 %v6548
        %v6648 = vunpack.c.h.b16 %v6548
        %v6649 = vunpack.c.l.b16 %v6549
        %v6650 = vunpack.c.h.b16 %v6549
        %v6651 = vunpack.c.l.b16 %v6550
        %v6652 = vunpack.c.h.b16 %v6550
        %v6653 = vunpack.c.l.b16 %v6551
        %v6654 = vunpack.c.h.b16 %v6551
        %v6655 = vunpack.c.l.b16 %v6552
        %v6656 = vunpack.c.h.b16 %v6552
        %v6657 = vunpack.c.l.b16 %v6553
        %v6658 = vunpack.c.h.b16 %v6553
        %v6659 = vunpack.c.l.b16 %v6554
        %v6660 = vunpack.c.h.b16 %v6554
        %v6661 = vunpack.c.l.b16 %v6555
        %v6662 = vunpack.c.h.b16 %v6555
        %v6663 = vunpack.c.l.b16 %v6556
        %v6664 = vunpack.c.h.b16 %v6556
        %v6665 = vunpack.c.l.b16 %v6557
        %v6666 = vunpack.c.h.b16 %v6557
        %v6667 = vunpack.c.l.b16 %v6558
        %v6668 = vunpack.c.h.b16 %v6558
        %v6669 = vunpack.c.l.b16 %v6559
        %v6670 = vunpack.c.h.b16 %v6559
        %v6671 = vunpack.c.l.b16 %v6560
        %v6672 = vunpack.c.h.b16 %v6560
        %v6673 = vunpack.c.l.b16 %v6561
        %v6674 = vunpack.c.h.b16 %v6561
        %v6675 = vunpack.c.l.b16 %v6562
        %v6676 = vunpack.c.h.b16 %v6562
        %v6677 = vunpack.c.l.b16 %v6563
        %v6678 = vunpack.c.h.b16 %v6563
        %v6679 = vunpack.c.l.b16 %v6564
        %v6680 = vunpack.c.h.b16 %v6564
        %v6681 = vunpack.c.l.b16 %v6565
        %v6682 = vunpack.c.h.b16 %v6565
        %v6683 = vunpack.c.l.b16 %v6566
        %v6684 = vunpack.c.h.b16 %v6566
        %v6685 = vunpack.c.l.b16 %v6567
        %v6686 = vunpack.c.h.b16 %v6567
        %v6687 = vunpack.c.l.b16 %v6568
        %v6688 = vunpack.c.h.b16 %v6568
        %v6689 = vunpack.c.l.b16 %v6569
        %v6690 = vunpack.c.h.b16 %v6569
        %v6691 = vpack.c.b16 %v6629, %v6627
        %v6692 = vpack.c.b16 %v6630, %v6628
        %v6693 = vpack.c.b16 %v6633, %v6631
        %v6694 = vpack.c.b16 %v6634, %v6632
        %v6695 = vpack.c.b16 %v6637, %v6635
        %v6696 = vpack.c.b16 %v6638, %v6636
        %v6697 = vpack.c.b16 %v6641, %v6639
        %v6698 = vpack.c.b16 %v6642, %v6640
        %v6699 = vpack.c.b16 %v6645, %v6643
        %v6700 = vpack.c.b16 %v6646, %v6644
        %v6701 = vpack.c.b16 %v6649, %v6647
        %v6702 = vpack.c.b16 %v6650, %v6648
        %v6703 = vpack.c.b16 %v6653, %v6651
        %v6704 = vpack.c.b16 %v6654, %v6652
        %v6705 = vpack.c.b16 %v6657, %v6655
        %v6706 = vpack.c.b16 %v6658, %v6656
        %v6707 = vpack.c.b16 %v6661, %v6659
        %v6708 = vpack.c.b16 %v6662, %v6660
        %v6709 = vpack.c.b16 %v6665, %v6663
        %v6710 = vpack.c.b16 %v6666, %v6664
        %v6711 = vpack.c.b16 %v6669, %v6667
        %v6712 = vpack.c.b16 %v6670, %v6668
        %v6713 = vpack.c.b16 %v6673, %v6671
        %v6714 = vpack.c.b16 %v6674, %v6672
        %v6715 = vpack.c.b16 %v6677, %v6675
        %v6716 = vpack.c.b16 %v6678, %v6676
        %v6717 = vpack.c.b16 %v6681, %v6679
        %v6718 = vpack.c.b16 %v6682, %v6680
        %v6719 = vpack.c.b16 %v6685, %v6683
        %v6720 = vpack.c.b16 %v6686, %v6684
        %v6721 = vpack.c.b16 %v6689, %v6687
        %v6722 = vpack.c.b16 %v6690, %v6688
        %v6763 = vunpack.c.l.b16 %v6571
        %v6764 = vunpack.c.l.b16 %v6572
        %v6765 = vunpack.c.l.b16 %v6573
        %v6766 = vunpack.c.l.b16 %v6574
        %v6767 = vunpack.c.l.b16 %v6575
        %v6768 = vunpack.c.l.b16 %v6576
        %v6769 = vunpack.c.l.b16 %v6577
        %v6770 = vunpack.c.l.b16 %v6578
        %v6771 = vunpack.c.l.b16 %v6579
        %v6772 = vunpack.c.l.b16 %v6580
        %v6773 = vunpack.c.l.b16 %v6581
        %v6774 = vunpack.c.l.b16 %v6582
        %v6775 = vunpack.c.l.b16 %v6583
        %v6776 = vunpack.c.l.b16 %v6584
        %v6777 = vunpack.c.l.b16 %v6585
        %v6778 = vunpack.c.l.b16 %v6586
        %v6779 = vunpack.c.l.b16 %v6587
        %v6780 = vunpack.c.l.b16 %v6588
        %v6781 = vunpack.c.l.b16 %v6589
        %v6782 = vunpack.c.l.b16 %v6590
        %v6783 = vunpack.c.l.b16 %v6591
        %v6784 = vunpack.c.l.b16 %v6592
        %v6785 = vunpack.c.l.b16 %v6593
        %v6786 = vunpack.c.l.b16 %v6594
        %v6787 = vpack.c.b16 %v6764, %v6763
        %v6788 = vpack.c.b16 %v6766, %v6765
        %v6789 = vpack.c.b16 %v6768, %v6767
        %v6790 = vpack.c.b16 %v6770, %v6769
        %v6791 = vpack.c.b16 %v6772, %v6771
        %v6792 = vpack.c.b16 %v6774, %v6773
        %v6793 = vpack.c.b16 %v6776, %v6775
        %v6794 = vpack.c.b16 %v6778, %v6777
        %v6795 = vpack.c.b16 %v6780, %v6779
        %v6796 = vpack.c.b16 %v6782, %v6781
        %v6797 = vpack.c.b16 %v6784, %v6783
        %v6798 = vpack.c.b16 %v6786, %v6785
        %v6812 = vsel %vm693, %v6692, 0
        %v6815 = vsel %vm693, %v6694, 0
        %v6818 = vsel %vm693, %v6696, 0
        %v6821 = vsel %vm693, %v6698, 0
        %v6824 = vsel %vm693, %v6700, 0
        %v6827 = vsel %vm693, %v6702, 0
        %v6830 = vsel %vm693, %v6704, 0
        %v6833 = vsel %vm693, %v6706, 0
        %v6836 = vsel %vm693, %v6708, 0
        %v6839 = vsel %vm693, %v6710, 0
        %v6842 = vsel %vm693, %v6712, 0
        %v6845 = vsel %vm693, %v6714, 0
        %v6848 = vsel %vm693, %v6716, 0
        %v6851 = vsel %vm693, %v6718, 0
        %v6854 = vsel %vm693, %v6720, 0
        %v6857 = vsel %vm693, %v6722, 0
        %6859 = vmatprep.subr.bf16.mxu0 0
        %6860 = vmatpush1.bf16.msra.mxu0 %v6794
        %6861 = vmatprep.subr.bf16.mxu0 0
        %6862 = vmatpush1.bf16.msra.mxu0 %v6793
        %6863 = vmatprep.subr.bf16.mxu0 0
        %6864 = vmatpush1.bf16.msra.mxu0 %v6792
        %6865 = vmatprep.subr.bf16.mxu0 0
        %6866 = vmatpush1.bf16.msra.mxu0 %v6791
        %6867 = vmatprep.subr.bf16.mxu0 0
        %6868 = vmatpush1.bf16.msra.mxu0 %v6790
        %6869 = vmatprep.subr.bf16.mxu0 0
        %6870 = vmatpush1.bf16.msra.mxu0 %v6789
        %6871 = vmatprep.subr.bf16.mxu0 0
        %6872 = vmatpush1.bf16.msra.mxu0 %v6788
        %6873 = vmatprep.subr.bf16.mxu0 0
        %6874 = vmatpush1.bf16.msra.mxu0 %v6787
        %6875 = vmatprep.subr.bf16.mxu0 0
        %6876 = vmatpush2.bf16.msra.mxu0 0
        %6877 = vmatprep.subr.bf16.mxu0 0
        %6878 = vmatpush2.bf16.msra.mxu0 0
        %6879 = vmatprep.subr.bf16.mxu0 0
        %6880 = vmatpush2.bf16.msra.mxu0 0
        %6881 = vmatprep.subr.bf16.mxu0 0
        %6882 = vmatpush2.bf16.msra.mxu0 0
        %6883 = vmatprep.subr.bf16.mxu0 0
        %6884 = vmatpush2.bf16.msra.mxu0 %v6798
        %6885 = vmatprep.subr.bf16.mxu0 0
        %6886 = vmatpush2.bf16.msra.mxu0 %v6797
        %6887 = vmatprep.subr.bf16.mxu0 0
        %6888 = vmatpush2.bf16.msra.mxu0 %v6796
        %6889 = vmatprep.subr.bf16.mxu0 0
        %6890 = vmatpush2.bf16.msra.mxu0 %v6795
        %6891 = vmatprep.mubr.bf16.mxu0 %v6812
        %6892 = vmatmul.mubr.bf16.gmra.mxu0 %v6691
        %v6893 = vpop.f32.mrf.mxu0
        %v6894 = vadd.f32 0.0, %v6893
        %v6895 = vpop.f32.mrf.mxu0
        %v6896 = vpop.f32.mrf.mxu0
        %v6897 = vadd.f32 0.0, %v6896
        %v6898 = vpop.f32.mrf.mxu0
        %6899 = vmatprep.mubr.bf16.mxu0 %v6815
        %6900 = vmatmul.mubr.bf16.gmra.mxu0 %v6693
        %v6901 = vpop.f32.mrf.mxu0
        %v6902 = vadd.f32 0.0, %v6901
        %v6903 = vpop.f32.mrf.mxu0
        %v6904 = vpop.f32.mrf.mxu0
        %v6905 = vadd.f32 0.0, %v6904
        %v6906 = vpop.f32.mrf.mxu0
        %6907 = vmatprep.mubr.bf16.mxu0 %v6818
        %6908 = vmatmul.mubr.bf16.gmra.mxu0 %v6695
        %v6909 = vpop.f32.mrf.mxu0
        %v6910 = vadd.f32 0.0, %v6909
        %v6911 = vpop.f32.mrf.mxu0
        %v6912 = vpop.f32.mrf.mxu0
        %v6913 = vadd.f32 0.0, %v6912
        %v6914 = vpop.f32.mrf.mxu0
        %6915 = vmatprep.mubr.bf16.mxu0 %v6821
        %6916 = vmatmul.mubr.bf16.gmra.mxu0 %v6697
        %v6917 = vpop.f32.mrf.mxu0
        %v6918 = vadd.f32 0.0, %v6917
        %v6919 = vpop.f32.mrf.mxu0
        %v6920 = vpop.f32.mrf.mxu0
        %v6921 = vadd.f32 0.0, %v6920
        %v6922 = vpop.f32.mrf.mxu0
        %6923 = vmatprep.mubr.bf16.mxu0 %v6824
        %6924 = vmatmul.mubr.bf16.gmra.mxu0 %v6699
        %v6925 = vpop.f32.mrf.mxu0
        %v6926 = vadd.f32 0.0, %v6925
        %v6927 = vpop.f32.mrf.mxu0
        %v6928 = vpop.f32.mrf.mxu0
        %v6929 = vadd.f32 0.0, %v6928
        %v6930 = vpop.f32.mrf.mxu0
        %6931 = vmatprep.mubr.bf16.mxu0 %v6827
        %6932 = vmatmul.mubr.bf16.gmra.mxu0 %v6701
        %v6933 = vpop.f32.mrf.mxu0
        %v6934 = vadd.f32 0.0, %v6933
        %v6935 = vpop.f32.mrf.mxu0
        %v6936 = vpop.f32.mrf.mxu0
        %v6937 = vadd.f32 0.0, %v6936
        %v6938 = vpop.f32.mrf.mxu0
        %6939 = vmatprep.mubr.bf16.mxu0 %v6830
        %6940 = vmatmul.mubr.bf16.gmra.mxu0 %v6703
        %v6941 = vpop.f32.mrf.mxu0
        %v6942 = vadd.f32 0.0, %v6941
        %v6943 = vpop.f32.mrf.mxu0
        %v6944 = vpop.f32.mrf.mxu0
        %v6945 = vadd.f32 0.0, %v6944
        %v6946 = vpop.f32.mrf.mxu0
        %6947 = vmatprep.mubr.bf16.mxu0 %v6833
        %6948 = vmatmul.mubr.bf16.gmra.mxu0 %v6705
        %v6949 = vpop.f32.mrf.mxu0
        %v6950 = vadd.f32 0.0, %v6949
        %v6951 = vpop.f32.mrf.mxu0
        %v6952 = vpop.f32.mrf.mxu0
        %v6953 = vadd.f32 0.0, %v6952
        %v6954 = vpop.f32.mrf.mxu0
        %6955 = vmatprep.mubr.bf16.mxu0 %v6836
        %6956 = vmatmul.mubr.bf16.gmra.mxu0 %v6707
        %v6957 = vpop.f32.mrf.mxu0
        %v6958 = vadd.f32 0.0, %v6957
        %v6959 = vpop.f32.mrf.mxu0
        %v6960 = vpop.f32.mrf.mxu0
        %v6961 = vadd.f32 0.0, %v6960
        %v6962 = vpop.f32.mrf.mxu0
        %6963 = vmatprep.mubr.bf16.mxu0 %v6839
        %6964 = vmatmul.mubr.bf16.gmra.mxu0 %v6709
        %v6965 = vpop.f32.mrf.mxu0
        %v6966 = vadd.f32 0.0, %v6965
        %v6967 = vpop.f32.mrf.mxu0
        %v6968 = vpop.f32.mrf.mxu0
        %v6969 = vadd.f32 0.0, %v6968
        %v6970 = vpop.f32.mrf.mxu0
        %6971 = vmatprep.mubr.bf16.mxu0 %v6842
        %6972 = vmatmul.mubr.bf16.gmra.mxu0 %v6711
        %v6973 = vpop.f32.mrf.mxu0
        %v6974 = vadd.f32 0.0, %v6973
        %v6975 = vpop.f32.mrf.mxu0
        %v6976 = vpop.f32.mrf.mxu0
        %v6977 = vadd.f32 0.0, %v6976
        %v6978 = vpop.f32.mrf.mxu0
        %6979 = vmatprep.mubr.bf16.mxu0 %v6845
        %6980 = vmatmul.mubr.bf16.gmra.mxu0 %v6713
        %v6981 = vpop.f32.mrf.mxu0
        %v6982 = vadd.f32 0.0, %v6981
        %v6983 = vpop.f32.mrf.mxu0
        %v6984 = vpop.f32.mrf.mxu0
        %v6985 = vadd.f32 0.0, %v6984
        %v6986 = vpop.f32.mrf.mxu0
        %6987 = vmatprep.mubr.bf16.mxu0 %v6848
        %6988 = vmatmul.mubr.bf16.gmra.mxu0 %v6715
        %v6989 = vpop.f32.mrf.mxu0
        %v6990 = vadd.f32 0.0, %v6989
        %v6991 = vpop.f32.mrf.mxu0
        %v6992 = vpop.f32.mrf.mxu0
        %v6993 = vadd.f32 0.0, %v6992
        %v6994 = vpop.f32.mrf.mxu0
        %6995 = vmatprep.mubr.bf16.mxu0 %v6851
        %6996 = vmatmul.mubr.bf16.gmra.mxu0 %v6717
        %v6997 = vpop.f32.mrf.mxu0
        %v6998 = vadd.f32 0.0, %v6997
        %v6999 = vpop.f32.mrf.mxu0
        %v7000 = vpop.f32.mrf.mxu0
        %v7001 = vadd.f32 0.0, %v7000
        %v7002 = vpop.f32.mrf.mxu0
        %7003 = vmatprep.mubr.bf16.mxu0 %v6854
        %7004 = vmatmul.mubr.bf16.gmra.mxu0 %v6719
        %v7005 = vpop.f32.mrf.mxu0
        %v7006 = vadd.f32 0.0, %v7005
        %v7007 = vpop.f32.mrf.mxu0
        %v7008 = vpop.f32.mrf.mxu0
        %v7009 = vadd.f32 0.0, %v7008
        %v7010 = vpop.f32.mrf.mxu0
        %7011 = vmatprep.mubr.bf16.mxu0 %v6857
        %7012 = vmatmul.mubr.bf16.gmra.mxu0 %v6721
        %v7013 = vpop.f32.mrf.mxu0
        %v7014 = vadd.f32 0.0, %v7013
        %v7015 = vpop.f32.mrf.mxu0
        %v7016 = vpop.f32.mrf.mxu0
        %v7017 = vadd.f32 0.0, %v7016
        %v7018 = vpop.f32.mrf.mxu0
        %7019 = vdwg.mxu0
        %v7020 = vadd.f32 %v6411, %v6894
        %v7021 = vadd.f32 %v6414, %v6897
        %v7022 = vadd.f32 %v6419, %v6902
        %v7023 = vadd.f32 %v6422, %v6905
        %v7024 = vadd.f32 %v6427, %v6910
        %v7025 = vadd.f32 %v6430, %v6913
        %v7026 = vadd.f32 %v6435, %v6918
        %v7027 = vadd.f32 %v6438, %v6921
        %v7028 = vadd.f32 %v6443, %v6926
        %v7029 = vadd.f32 %v6446, %v6929
        %v7030 = vadd.f32 %v6451, %v6934
        %v7031 = vadd.f32 %v6454, %v6937
        %v7032 = vadd.f32 %v6459, %v6942
        %v7033 = vadd.f32 %v6462, %v6945
        %v7034 = vadd.f32 %v6467, %v6950
        %v7035 = vadd.f32 %v6470, %v6953
        %v7036 = vadd.f32 %v6475, %v6958
        %v7037 = vadd.f32 %v6478, %v6961
        %v7038 = vadd.f32 %v6483, %v6966
        %v7039 = vadd.f32 %v6486, %v6969
        %v7040 = vadd.f32 %v6491, %v6974
        %v7041 = vadd.f32 %v6494, %v6977
        %v7042 = vadd.f32 %v6499, %v6982
        %v7043 = vadd.f32 %v6502, %v6985
        %v7044 = vadd.f32 %v6507, %v6990
        %v7045 = vadd.f32 %v6510, %v6993
        %v7046 = vadd.f32 %v6515, %v6998
        %v7047 = vadd.f32 %v6518, %v7001
        %v7048 = vadd.f32 %v6523, %v7006
        %v7049 = vadd.f32 %v6526, %v7009
        %v7050 = vadd.f32 %v6531, %v7014
        %v7051 = vadd.f32 %v6534, %v7017
        %v7052 = vld [vmem:[%s13] sm:$0x1]
        %v7054 = vlaneseq
        %v7055 = vshrl.u32 %v7054, 7
        %v7056 = vsub.s32 0, %v7055
        %v7057 = vrot.slane %v7052, %v7056
        %v7059 = vadd.f32 %v7020, %v7057
        %v7060 = vadd.f32 %v7021, %v7057
        %v7061 = vadd.f32 %v7022, %v7057
        %v7062 = vadd.f32 %v7023, %v7057
        %v7063 = vadd.f32 %v7024, %v7057
        %v7064 = vadd.f32 %v7025, %v7057
        %v7065 = vadd.f32 %v7026, %v7057
        %v7066 = vadd.f32 %v7027, %v7057
        %v7067 = vadd.f32 %v7028, %v7057
        %v7068 = vadd.f32 %v7029, %v7057
        %v7069 = vadd.f32 %v7030, %v7057
        %v7070 = vadd.f32 %v7031, %v7057
        %v7071 = vadd.f32 %v7032, %v7057
        %v7072 = vadd.f32 %v7033, %v7057
        %v7073 = vadd.f32 %v7034, %v7057
        %v7074 = vadd.f32 %v7035, %v7057
        %v7075 = vadd.f32 %v7036, %v7057
        %v7076 = vadd.f32 %v7037, %v7057
        %v7077 = vadd.f32 %v7038, %v7057
        %v7078 = vadd.f32 %v7039, %v7057
        %v7079 = vadd.f32 %v7040, %v7057
        %v7080 = vadd.f32 %v7041, %v7057
        %v7081 = vadd.f32 %v7042, %v7057
        %v7082 = vadd.f32 %v7043, %v7057
        %v7083 = vadd.f32 %v7044, %v7057
        %v7084 = vadd.f32 %v7045, %v7057
        %v7085 = vadd.f32 %v7046, %v7057
        %v7086 = vadd.f32 %v7047, %v7057
        %v7087 = vadd.f32 %v7048, %v7057
        %v7088 = vadd.f32 %v7049, %v7057
        %v7089 = vadd.f32 %v7050, %v7057
        %v7090 = vadd.f32 %v7051, %v7057
        %v7091 = vadd.f32 %v481, %v7059
        %v7092 = vadd.f32 %v482, %v7060
        %v7093 = vadd.f32 %v483, %v7061
        %v7094 = vadd.f32 %v484, %v7062
        %v7095 = vadd.f32 %v485, %v7063
        %v7096 = vadd.f32 %v486, %v7064
        %v7097 = vadd.f32 %v487, %v7065
        %v7098 = vadd.f32 %v488, %v7066
        %v7099 = vadd.f32 %v489, %v7067
        %v7100 = vadd.f32 %v490, %v7068
        %v7101 = vadd.f32 %v491, %v7069
        %v7102 = vadd.f32 %v492, %v7070
        %v7103 = vadd.f32 %v493, %v7071
        %v7104 = vadd.f32 %v494, %v7072
        %v7105 = vadd.f32 %v495, %v7073
        %v7106 = vadd.f32 %v496, %v7074
        %v7107 = vadd.f32 %v497, %v7075
        %v7108 = vadd.f32 %v498, %v7076
        %v7109 = vadd.f32 %v499, %v7077
        %v7110 = vadd.f32 %v500, %v7078
        %v7111 = vadd.f32 %v501, %v7079
        %v7112 = vadd.f32 %v502, %v7080
        %v7113 = vadd.f32 %v503, %v7081
        %v7114 = vadd.f32 %v504, %v7082
        %v7115 = vadd.f32 %v505, %v7083
        %v7116 = vadd.f32 %v506, %v7084
        %v7117 = vadd.f32 %v507, %v7085
        %v7118 = vadd.f32 %v508, %v7086
        %v7119 = vadd.f32 %v509, %v7087
        %v7120 = vadd.f32 %v510, %v7088
        %v7121 = vadd.f32 %v511, %v7089
        %v7122 = vadd.f32 %v512, %v7090
        %7123 = vst.msk [vmem:[%s471] sm:$0xff] %vm693, %v7091
        %7124 = vst.msk [vmem:[%s471 + $0x8] sm:$0xff] %vm693, %v7092
        %7125 = vst.msk [vmem:[%s471 + $0x10] sm:$0xff] %vm693, %v7093
        %7126 = vst.msk [vmem:[%s471 + $0x18] sm:$0xff] %vm693, %v7094
        %7127 = vst.msk [vmem:[%s471 + $0x20] sm:$0xff] %vm693, %v7095
        %7128 = vst.msk [vmem:[%s471 + $0x28] sm:$0xff] %vm693, %v7096
        %7129 = vst.msk [vmem:[%s471 + $0x30] sm:$0xff] %vm693, %v7097
        %7130 = vst.msk [vmem:[%s471 + $0x38] sm:$0xff] %vm693, %v7098
        %7131 = vst.msk [vmem:[%s471 + $0x40] sm:$0xff] %vm693, %v7099
        %7132 = vst.msk [vmem:[%s471 + $0x48] sm:$0xff] %vm693, %v7100
        %7133 = vst.msk [vmem:[%s471 + $0x50] sm:$0xff] %vm693, %v7101
        %7134 = vst.msk [vmem:[%s471 + $0x58] sm:$0xff] %vm693, %v7102
        %7135 = vst.msk [vmem:[%s471 + $0x60] sm:$0xff] %vm693, %v7103
        %7136 = vst.msk [vmem:[%s471 + $0x68] sm:$0xff] %vm693, %v7104
        %7137 = vst.msk [vmem:[%s471 + $0x70] sm:$0xff] %vm693, %v7105
        %7138 = vst.msk [vmem:[%s471 + $0x78] sm:$0xff] %vm693, %v7106
        %7139 = vst.msk [vmem:[%s471 + $0x80] sm:$0xff] %vm693, %v7107
        %7140 = vst.msk [vmem:[%s471 + $0x88] sm:$0xff] %vm693, %v7108
        %7141 = vst.msk [vmem:[%s471 + $0x90] sm:$0xff] %vm693, %v7109
        %7142 = vst.msk [vmem:[%s471 + $0x98] sm:$0xff] %vm693, %v7110
        %7143 = vst.msk [vmem:[%s471 + $0xa0] sm:$0xff] %vm693, %v7111
        %7144 = vst.msk [vmem:[%s471 + $0xa8] sm:$0xff] %vm693, %v7112
        %7145 = vst.msk [vmem:[%s471 + $0xb0] sm:$0xff] %vm693, %v7113
        %7146 = vst.msk [vmem:[%s471 + $0xb8] sm:$0xff] %vm693, %v7114
        %7147 = vst.msk [vmem:[%s471 + $0xc0] sm:$0xff] %vm693, %v7115
        %7148 = vst.msk [vmem:[%s471 + $0xc8] sm:$0xff] %vm693, %v7116
        %7149 = vst.msk [vmem:[%s471 + $0xd0] sm:$0xff] %vm693, %v7117
        %7150 = vst.msk [vmem:[%s471 + $0xd8] sm:$0xff] %vm693, %v7118
        %7151 = vst.msk [vmem:[%s471 + $0xe0] sm:$0xff] %vm693, %v7119
        %7152 = vst.msk [vmem:[%s471 + $0xe8] sm:$0xff] %vm693, %v7120
        %7153 = vst.msk [vmem:[%s471 + $0xf0] sm:$0xff] %vm693, %v7121
        %7154 = vst.msk [vmem:[%s471 + $0xf8] sm:$0xff] %vm693, %v7122
        %s7155 = sand.u32 %s340, 1
        %s7156 = scalar_lea.sflag [#allocation5], %s7155
        %s7157 = sand.u32 %s340, 1
        %s7158 = smul.addr %s7157, 256
        %s7159 = scalar_lea.vmem [#allocation4], %s7158
        // Predicated region
        $region77: #{tpu_custom_call.1} parent=75 // pred_check
          %p7160 = pneg %p350
        $region78: #{tpu_custom_call.1} parent=75 // pred_check_branch
          %7162 = sbr.rel (%p7160) target = $region80
        $region79: #{tpu_custom_call.1} parent=75 // pred_region
          %s7164 = ssub.s32 4096, 4096
          %7165 = vsyncadd %s7156, %s7164
          %s7166 = smul.addr %s28, 32
          %s7167 = smul.addr %s7166, 128
          %s7168 = scalar_lea.hbm %s14, %s7167
          %s7169 = sshll.u32 %s7159, 4
          %s7170 = int_to_ptr.vmem [resolvable:$true] %s7169
          %7175 = dma.vmem_to_hbm [thread:$0]  %s7170, 4096, %s7168, %s7156, 128, 128, 8
        $region80: #{tpu_custom_call.1} parent=75 // pred_fallthru
          _
      $region76: #{tpu_custom_call.1} parent=5 // pred_fallthru
        _
      %p7176 = scmp.le.s32.totalorder 2, %s23
      // Predicated region
      $region81: #{tpu_custom_call.1} parent=5 // pred_check
        %p7177 = pneg %p7176
      $region82: #{tpu_custom_call.1} parent=5 // pred_check_branch
        %7179 = sbr.rel (%p7177) target = $region84
      $region83: #{tpu_custom_call.1} parent=5 // pred_region
        %s7180 = ssub.s32 %s23, 2
        // Predicated region
        $region85: #{tpu_custom_call.1} parent=83 // pred_check
          %p7181 = pneg %p356
        $region86: #{tpu_custom_call.1} parent=83 // pred_check_branch
          %7183 = sbr.rel (%p7181) target = $region88
        $region87: #{tpu_custom_call.1} parent=83 // pred_region
          %s7184 = sand.u32 %s341, 1
          %s7185 = scalar_lea.sflag [#allocation5], %s7184
          %s7186 = sand.u32 %s341, 1
          %s7187 = smul.addr %s7186, 256
          %s7188 = scalar_lea.vmem [#allocation4], %s7187
          %7189 = dma.done %s7185, 4096
        $region88: #{tpu_custom_call.1} parent=83 // pred_fallthru
          _
      $region84: #{tpu_custom_call.1} parent=5 // pred_fallthru
        _
    $region6: #{tpu_custom_call.1} parent=1 // loop_footer
      %s27 = sadd.s32 1, %s23
    $region7: #{tpu_custom_call.1} parent=1 // loop_footer_branch
      %22 = sbr.rel target = $region3
    $region8: #{tpu_custom_call.1} parent=1 // loop_exit
      _
    %7190 = vsyncpa [#allocation5], 1
    %s7191 = scalar_lea.sflag [#allocation5], 1
    %7192 = vsyncpa %s7191, 1

</llo_original>
